<compile_context>
chip_gen: v6e
topology: v6e:2x2x1
jax: 0.10.0
libtpu: 0.0.40
codegen_flags: <defaults>
</compile_context>

<pallas_src>
import functools

import jax
import jax.numpy as jnp
from jax import lax
from jax.experimental import pallas as pl
from jax.experimental.pallas import tpu as pltpu


# ----------------------------- small helpers -----------------------------

_PARALLEL_1D = pltpu.CompilerParams(dimension_semantics=("parallel",))


def _round_up(x, m):
    return (x + m - 1) // m * m


def _pick_block(m, cap=512):
    """Row-block size and padded row count (block is a multiple of 8, capped at `cap`)."""
    mp = _round_up(m, 8)
    if mp <= cap:
        return mp, mp                    # single block covering all rows
    return cap, _round_up(mp, cap)


def _pad_rows(x, mp):
    m = x.shape[0]
    if mp == m:
        return x
    return jnp.pad(x, ((0, mp - m), (0, 0)))


# ----------------------------- fused conv matmul kernels -----------------------------

def _mm_bn_kernel(a_ref, b_ref, s_ref, o_ref, *, relu):
    acc = jnp.dot(a_ref[...].astype(jnp.bfloat16), b_ref[...],
                  preferred_element_type=jnp.float32)
    y = acc + s_ref[...]
    if relu:
        y = jnp.maximum(y, 0.0)
    o_ref[...] = y


def _mm_bn_res_kernel(a_ref, b_ref, s_ref, r_ref, o_ref):
    # conv3/downsample epilogue of a bottleneck: BN shift + residual add + ReLU, fused.
    acc = jnp.dot(a_ref[...].astype(jnp.bfloat16), b_ref[...],
                  preferred_element_type=jnp.float32)
    o_ref[...] = jnp.maximum(acc + s_ref[...] + r_ref[...], 0.0)


def fused_matmul_bn(a, b_bf16, shift, relu, residual=None):
    """(M,K) @ (K,N) + shift [+ residual, then ReLU] -> (M,N) f32, row-tiled."""
    m, k = a.shape
    n = b_bf16.shape[1]
    blk, mp = _pick_block(m)
    a = _pad_rows(a, mp)
    shift2 = shift.reshape(1, n).astype(jnp.float32)

    in_specs = [
        pl.BlockSpec((blk, k), lambda i: (i, 0)),
        pl.BlockSpec((k, n), lambda i: (0, 0)),
        pl.BlockSpec((1, n), lambda i: (0, 0)),
    ]
    args = [a, b_bf16, shift2]
    if residual is None:
        kernel = functools.partial(_mm_bn_kernel, relu=relu)
    else:
        # ResNet always applies ReLU after the residual add.
        kernel = _mm_bn_res_kernel
        in_specs.append(pl.BlockSpec((blk, n), lambda i: (i, 0)))
        args.append(_pad_rows(residual.astype(jnp.float32), mp))

    out = pl.pallas_call(
        kernel,
        out_shape=jax.ShapeDtypeStruct((mp, n), jnp.float32),
        grid=(mp // blk,),
        in_specs=in_specs,
        out_specs=pl.BlockSpec((blk, n), lambda i: (i, 0)),
        compiler_params=_PARALLEL_1D,
    )(*args)
    return out if mp == m else out[:m]


def conv_bn(x, w_hwio, bn, stride, padding, relu, residual=None, eps=1e-5):
    """Conv2d (no bias) + eval-mode BatchNorm folded into the matmul, with optional fused
    residual-add + ReLU epilogue.  x: (B,H,W,Cin) NHWC f32; w: (kh,kw,Cin,Cout) HWIO."""
    b, h, w, cin = x.shape
    kh, kw, _, cout = w_hwio.shape
    scale = bn['gamma'] * lax.rsqrt(bn['var'] + eps)            # (Cout,)
    shift = bn['beta'] - bn['mean'] * scale                     # (Cout,)

    if padding > 0:
        x = jnp.pad(x, ((0, 0), (padding, padding), (padding, padding), (0, 0)))
    hp, wp = x.shape[1], x.shape[2]
    ho = (hp - kh) // stride + 1
    wo = (wp - kw) // stride + 1

    if kh == 1 and kw == 1:
        xs = x if stride == 1 else x[:, ::stride, ::stride, :]
        a = xs.reshape(b * ho * wo, cin)                        # f32; cast to bf16 in-kernel
    else:
        # TODO(synk): the im2col slab is still materialized (in bf16); eliminate it via
        # in-kernel shifted-window reads with a K-tap accumulator grid for large resolutions.
        cols = [x[:, i:i + stride * ho:stride, j:j + stride * wo:stride, :]
                for i in range(kh) for j in range(kw)]
        a = jnp.stack(cols, axis=3).reshape(b * ho * wo, kh * kw * cin)
        a = a.astype(jnp.bfloat16)                              # halve slab HBM bytes

    wmat = w_hwio.reshape(kh * kw * cin, cout) * scale[None, :]  # fold BN scale into weights
    kdim = wmat.shape[0]
    kp = _round_up(kdim, 8)                                     # align K (stem: 147 -> 152)
    if kp != kdim:
        a = jnp.pad(a, ((0, 0), (0, kp - kdim)))
        wmat = jnp.pad(wmat, ((0, kp - kdim), (0, 0)))
    wmat = wmat.astype(jnp.bfloat16)

    res2d = None if residual is None else residual.reshape(b * ho * wo, cout)
    out = fused_matmul_bn(a, wmat, shift, relu=relu, residual=res2d)
    return out.reshape(b, ho, wo, cout)


# ----------------------------- maxpool -----------------------------

def _max_reduce_kernel(p_ref, o_ref):
    o_ref[...] = jnp.max(p_ref[...], axis=0)


def maxpool2d(x, k=3, stride=2, padding=1):
    """k x k / stride max-pool: patches gathered in the wrapper, reduced by a gridded,
    lane-dense Pallas kernel."""
    # TODO(synk): replace the wrapper-side patch gather with shifted-window reads inside the
    # kernel to avoid the k*k patch slab at large resolutions.
    b, h, w, c = x.shape
    xp = jnp.pad(x, ((0, 0), (padding, padding), (padding, padding), (0, 0)),
                 constant_values=-jnp.inf)
    hp, wp = xp.shape[1], xp.shape[2]
    ho = (hp - k) // stride + 1
    wo = (wp - k) // stride + 1
    cols = [xp[:, i:i + stride * ho:stride, j:j + stride * wo:stride, :]
            for i in range(k) for j in range(k)]
    patches = jnp.stack(cols, axis=0).reshape(k * k, -1)        # (k*k, B*Ho*Wo*C)
    npts = patches.shape[1]
    lane = 128 if npts % 128 == 0 else c                        # lane-dense layout if possible
    rows = npts // lane
    patches = patches.reshape(k * k, rows, lane)
    blk, rp = _pick_block(rows)
    if rp != rows:
        patches = jnp.pad(patches, ((0, 0), (0, rp - rows), (0, 0)))
    out = pl.pallas_call(
        _max_reduce_kernel,
        out_shape=jax.ShapeDtypeStruct((rp, lane), jnp.float32),
        grid=(rp // blk,),
        in_specs=[pl.BlockSpec((k * k, blk, lane), lambda i: (0, i, 0))],
        out_specs=pl.BlockSpec((blk, lane), lambda i: (i, 0)),
        compiler_params=_PARALLEL_1D,
    )(patches)
    if rp != rows:
        out = out[:rows]
    return out.reshape(b, ho, wo, c)


# ----------------------------- gram + head (merged) -----------------------------

def _gram_head_kernel(x_ref, w_ref, b_ref, gram_ref, logit_ref):
    x = x_ref[0]                                                # (S, C): one batch element
    # l2_normalize over the spatial axis (torch view is (B, C, HW), normalized along dim=2).
    norm = jnp.sqrt(jnp.sum(x * x, axis=0, keepdims=True))      # (1, C)
    norm = jnp.maximum(norm, 1e-8)                              # .clamp(eps)
    y = x / norm
    # gram[i, j] = sum_c y[i, c] * y[j, c]  == bmm(weight^T, weight) in the torch NCHW view.
    gram_ref[0] = lax.dot_general(y, y, (((1,), (1,)), ((), ())),
                                  preferred_element_type=jnp.float32)
    # AdaptiveAvgPool2d(1) + Linear head (reads the same feature slab once).
    pooled = jnp.mean(x, axis=0, keepdims=True)                 # (1, C)
    logit_ref[0] = (jnp.dot(pooled, w_ref[...], preferred_element_type=jnp.float32)
                    + b_ref[...])


def pallas_gram_head(feat, fc_w, fc_b):
    b, s, c = feat.shape
    nc = fc_w.shape[1]
    gram, logits3 = pl.pallas_call(
        _gram_head_kernel,
        out_shape=(jax.ShapeDtypeStruct((b, s, s), jnp.float32),
                   jax.ShapeDtypeStruct((b, 1, nc), jnp.float32)),
        grid=(b,),
        in_specs=[pl.BlockSpec((1, s, c), lambda i: (i, 0, 0)),
                  pl.BlockSpec((c, nc), lambda i: (0, 0)),
                  pl.BlockSpec((1, nc), lambda i: (0, 0))],
        out_specs=(pl.BlockSpec((1, s, s), lambda i: (i, 0, 0)),
                   pl.BlockSpec((1, 1, nc), lambda i: (i, 0, 0))),
        compiler_params=_PARALLEL_1D,
    )(feat, fc_w, fc_b.reshape(1, nc))
    return logits3.reshape(b, nc), gram


# ----------------------------- model definition -----------------------------

def bottleneck_forward(x, p):
    if 'down_w' in p:
        identity = conv_bn(x, p['down_w'], p['down_bn'],
                           stride=p['stride'], padding=0, relu=False)
    else:
        identity = x
    out = conv_bn(x, p['conv1_w'], p['bn1'], stride=1, padding=0, relu=True)
    out = conv_bn(out, p['conv2_w'], p['bn2'], stride=p['stride'], padding=1, relu=True)
    # conv3 + bn3 + residual add + ReLU, all in one fused matmul epilogue
    out = conv_bn(out, p['conv3_w'], p['bn3'], stride=1, padding=0, relu=True,
                  residual=identity)
    return out


def forward(params, x_nchw):
    x = jnp.transpose(x_nchw, (0, 2, 3, 1))                     # NCHW -> NHWC
    x = conv_bn(x, params['conv1_w'], params['bn1'],
                stride=2, padding=3, relu=True)                 # net.conv1 + bn1 + relu, fused
    x = maxpool2d(x, k=3, stride=2, padding=1)                  # net.maxpool
    for stage in ('layer1', 'layer2', 'layer3', 'layer4'):
        for bp in params[stage]:
            x = bottleneck_forward(x, bp)
    b, h, w, c = x.shape
    feat = x.reshape(b, h * w, c)                               # (B, HW, C)
    logits, gram = pallas_gram_head(feat, params['fc_w'], params['fc_b'])
    return logits, gram


# ----------------------------- deterministic init -----------------------------

class KeyGen:
    def __init__(self, key):
        self.key = key

    def __call__(self):
        self.key, sub = jax.random.split(self.key)
        return sub


def init_conv(kg, kh, kw, cin, cout):
    fan_in = kh * kw * cin
    return (jax.random.normal(kg(), (kh, kw, cin, cout), jnp.float32)
            * jnp.sqrt(2.0 / fan_in))


def init_bn(kg, c):
    return dict(
        gamma=1.0 + 0.1 * jax.random.normal(kg(), (c,), jnp.float32),
        beta=0.1 * jax.random.normal(kg(), (c,), jnp.float32),
        mean=0.1 * jax.random.normal(kg(), (c,), jnp.float32),
        var=1.0 + 0.1 * jnp.abs(jax.random.normal(kg(), (c,), jnp.float32)),
    )


def init_bottleneck(kg, cin, width, stride):
    cout = width * 4
    p = dict(
        stride=stride,
        conv1_w=init_conv(kg, 1, 1, cin, width), bn1=init_bn(kg, width),
        conv2_w=init_conv(kg, 3, 3, width, width), bn2=init_bn(kg, width),
        conv3_w=init_conv(kg, 1, 1, width, cout), bn3=init_bn(kg, cout),
    )
    if stride != 1 or cin != cout:
        p['down_w'] = init_conv(kg, 1, 1, cin, cout)
        p['down_bn'] = init_bn(kg, cout)
    return p


def init_params(key, num_classes, base_width=16, layers=(3, 4, 6, 3)):
    # ResNet-50 structure (bottleneck blocks [3,4,6,3]) with scaled-down widths for a small,
    # synthetic test; pretrained weights replaced by deterministic random init.
    kg = KeyGen(key)
    params = dict(conv1_w=init_conv(kg, 7, 7, 3, base_width), bn1=init_bn(kg, base_width))
    cin = base_width
    widths = [base_width, base_width * 2, base_width * 4, base_width * 8]
    strides = [1, 2, 2, 2]
    for li, (nblocks, w, s) in enumerate(zip(layers, widths, strides), start=1):
        blocks = []
        for bi in range(nblocks):
            blocks.append(init_bottleneck(kg, cin, w, s if bi == 0 else 1))
            cin = w * 4
        params[f'layer{li}'] = blocks
    params['fc_w'] = (jax.random.normal(kg(), (cin, num_classes), jnp.float32)
                      * jnp.sqrt(1.0 / cin))
    params['fc_b'] = 0.01 * jax.random.normal(kg(), (num_classes,), jnp.float32)
    return params


# ----------------------------- main -----------------------------

if __name__ == "__main__":
    root = jax.random.PRNGKey(0)
    k_in, k_params = jax.random.split(root)

    num_classes = 10
    params = init_params(k_params, num_classes=num_classes, base_width=16, layers=(3, 4, 6, 3))

    # small input consistent with the module: NCHW, 3 channels, 64x64 spatial
    x = jax.random.normal(k_in, (2, 3, 64, 64), jnp.float32)

    fwd = jax.jit(functools.partial(forward, params))
    logits, gram = fwd(x)
    jax.block_until_ready((logits, gram))

    assert logits.shape == (2, num_classes)
    assert gram.shape == (2, 4, 4)  # final feature map is (2, 512, 2, 2) -> HW = 4
    print("KERNEL_OK")
</pallas_src>

<mosaic_0001>
module attributes {stable_mosaic.version = 11 : i64} {
  func.func @_mm_bn_kernel(%arg0: i32, %arg1: memref<512x152xbf16, #tpu.memory_space<vmem>>, %arg2: memref<152x16xbf16, #tpu.memory_space<vmem>>, %arg3: memref<1x16xf32, #tpu.memory_space<vmem>>, %arg4: memref<512x16xf32, #tpu.memory_space<vmem>>) attributes {dimension_semantics = [#tpu.dimension_semantics<parallel>], iteration_bounds = array<i64: 4>, scalar_prefetch = 0 : i64, scratch_operands = 0 : i64, tpu.core_type = #tpu.core_type<tc>, window_params = [{transform_indices = @transform_0, window_bounds = array<i64: 512, 152>}, {pipeline_mode = #tpu.pipeline_mode<synchronous>, transform_indices = @transform_1, window_bounds = array<i64: 152, 16>}, {pipeline_mode = #tpu.pipeline_mode<synchronous>, transform_indices = @transform_2, window_bounds = array<i64: 1, 16>}, {transform_indices = @transform_3, window_bounds = array<i64: 512, 16>}]} {
    %c0 = arith.constant 0 : index
    %c0_0 = arith.constant 0 : index
    %0 = vector.load %arg1[%c0, %c0_0] : memref<512x152xbf16, #tpu.memory_space<vmem>>, vector<512x152xbf16>
    %c0_1 = arith.constant 0 : index
    %c0_2 = arith.constant 0 : index
    %1 = vector.load %arg2[%c0_1, %c0_2] : memref<152x16xbf16, #tpu.memory_space<vmem>>, vector<152x16xbf16>
    %cst = arith.constant dense<0.000000e+00> : vector<512x16xf32>
    %2 = tpu.matmul %0, %1, %cst {dimension_numbers = #tpu.dot_dimension_numbers<[1], [0], [0], [1], [0, 0, 1, 1], [], []>} : vector<512x152xbf16>, vector<152x16xbf16>, vector<512x16xf32> -> vector<512x16xf32>
    %c0_3 = arith.constant 0 : index
    %c0_4 = arith.constant 0 : index
    %3 = vector.load %arg3[%c0_3, %c0_4] : memref<1x16xf32, #tpu.memory_space<vmem>>, vector<1x16xf32>
    %4 = vector.broadcast %3 : vector<1x16xf32> to vector<512x16xf32>
    %5 = arith.addf %2, %4 : vector<512x16xf32>
    %cst_5 = arith.constant 0.000000e+00 : f32
    %6 = vector.broadcast %cst_5 : f32 to vector<512x16xf32>
    %7 = arith.maximumf %5, %6 : vector<512x16xf32>
    %c0_6 = arith.constant 0 : index
    %c0_7 = arith.constant 0 : index
    %8 = vector.load %arg4[%c0_6, %c0_7] : memref<512x16xf32, #tpu.memory_space<vmem>>, vector<512x16xf32>
    tpu.vector_store %arg4[%c0_6, %c0_7], %7 {strides = array<i32>} : memref<512x16xf32, #tpu.memory_space<vmem>>, vector<512x16xf32>,
    return
  }
  func.func @transform_0(%arg0: i32) -> (i32, i32) {
    %c0_i32 = arith.constant 0 : i32
    %c0_i32_0 = arith.constant 0 : i32
    return %arg0, %c0_i32 : i32, i32
  }
  func.func @transform_1(%arg0: i32) -> (i32, i32) {
    %c0_i32 = arith.constant 0 : i32
    %c0_i32_0 = arith.constant 0 : i32
    %c0_i32_1 = arith.constant 0 : i32
    return %c0_i32, %c0_i32_0 : i32, i32
  }
  func.func @transform_2(%arg0: i32) -> (i32, i32) {
    %c0_i32 = arith.constant 0 : i32
    %c0_i32_0 = arith.constant 0 : i32
    %c0_i32_1 = arith.constant 0 : i32
    return %c0_i32, %c0_i32_0 : i32, i32
  }
  func.func @transform_3(%arg0: i32) -> (i32, i32) {
    %c0_i32 = arith.constant 0 : i32
    %c0_i32_0 = arith.constant 0 : i32
    return %arg0, %c0_i32 : i32, i32
  }
}

module attributes {stable_mosaic.version = 11 : i64} {
  func.func @_max_reduce_kernel(%arg0: i32, %arg1: memref<9x64x128xf32, #tpu.memory_space<vmem>>, %arg2: memref<64x128xf32, #tpu.memory_space<vmem>>) attributes {dimension_semantics = [#tpu.dimension_semantics<parallel>], iteration_bounds = array<i64: 1>, scalar_prefetch = 0 : i64, scratch_operands = 0 : i64, tpu.core_type = #tpu.core_type<tc>, window_params = [{transform_indices = @transform_0, window_bounds = array<i64: 9, 64, 128>}, {transform_indices = @transform_1, window_bounds = array<i64: 64, 128>}]} {
    %c0 = arith.constant 0 : index
    %c0_0 = arith.constant 0 : index
    %c0_1 = arith.constant 0 : index
    %0 = vector.load %arg1[%c0, %c0_0, %c0_1] : memref<9x64x128xf32, #tpu.memory_space<vmem>>, vector<9x64x128xf32>
    %cst = arith.constant dense<0xFF800000> : vector<64x128xf32>
    %1 = vector.multi_reduction <maximumf>, %0, %cst [0] : vector<9x64x128xf32> to vector<64x128xf32>
    %c0_2 = arith.constant 0 : index
    %c0_3 = arith.constant 0 : index
    %2 = vector.load %arg2[%c0_2, %c0_3] : memref<64x128xf32, #tpu.memory_space<vmem>>, vector<64x128xf32>
    tpu.vector_store %arg2[%c0_2, %c0_3], %1 {strides = array<i32>} : memref<64x128xf32, #tpu.memory_space<vmem>>, vector<64x128xf32>,
    return
  }
  func.func @transform_0(%arg0: i32) -> (i32, i32, i32) {
    %c0_i32 = arith.constant 0 : i32
    %c0_i32_0 = arith.constant 0 : i32
    %c0_i32_1 = arith.constant 0 : i32
    return %c0_i32, %arg0, %c0_i32_0 : i32, i32, i32
  }
  func.func @transform_1(%arg0: i32) -> (i32, i32) {
    %c0_i32 = arith.constant 0 : i32
    %c0_i32_0 = arith.constant 0 : i32
    return %arg0, %c0_i32 : i32, i32
  }
}

module attributes {stable_mosaic.version = 11 : i64} {
  func.func @_mm_bn_kernel(%arg0: i32, %arg1: memref<512x16xf32, #tpu.memory_space<vmem>>, %arg2: memref<16x16xbf16, #tpu.memory_space<vmem>>, %arg3: memref<1x16xf32, #tpu.memory_space<vmem>>, %arg4: memref<512x16xf32, #tpu.memory_space<vmem>>) attributes {dimension_semantics = [#tpu.dimension_semantics<parallel>], iteration_bounds = array<i64: 1>, scalar_prefetch = 0 : i64, scratch_operands = 0 : i64, tpu.core_type = #tpu.core_type<tc>, window_params = [{transform_indices = @transform_0, window_bounds = array<i64: 512, 16>}, {pipeline_mode = #tpu.pipeline_mode<synchronous>, transform_indices = @transform_1, window_bounds = array<i64: 16, 16>}, {pipeline_mode = #tpu.pipeline_mode<synchronous>, transform_indices = @transform_2, window_bounds = array<i64: 1, 16>}, {transform_indices = @transform_3, window_bounds = array<i64: 512, 16>}]} {
    %c0 = arith.constant 0 : index
    %c0_0 = arith.constant 0 : index
    %0 = vector.load %arg1[%c0, %c0_0] : memref<512x16xf32, #tpu.memory_space<vmem>>, vector<512x16xf32>
    %1 = arith.truncf %0 : vector<512x16xf32> to vector<512x16xbf16>
    %c0_1 = arith.constant 0 : index
    %c0_2 = arith.constant 0 : index
    %2 = vector.load %arg2[%c0_1, %c0_2] : memref<16x16xbf16, #tpu.memory_space<vmem>>, vector<16x16xbf16>
    %cst = arith.constant dense<0.000000e+00> : vector<512x16xf32>
    %3 = tpu.matmul %1, %2, %cst {dimension_numbers = #tpu.dot_dimension_numbers<[1], [0], [0], [1], [0, 0, 1, 1], [], []>} : vector<512x16xbf16>, vector<16x16xbf16>, vector<512x16xf32> -> vector<512x16xf32>
    %c0_3 = arith.constant 0 : index
    %c0_4 = arith.constant 0 : index
    %4 = vector.load %arg3[%c0_3, %c0_4] : memref<1x16xf32, #tpu.memory_space<vmem>>, vector<1x16xf32>
    %5 = vector.broadcast %4 : vector<1x16xf32> to vector<512x16xf32>
    %6 = arith.addf %3, %5 : vector<512x16xf32>
    %cst_5 = arith.constant 0.000000e+00 : f32
    %7 = vector.broadcast %cst_5 : f32 to vector<512x16xf32>
    %8 = arith.maximumf %6, %7 : vector<512x16xf32>
    %c0_6 = arith.constant 0 : index
    %c0_7 = arith.constant 0 : index
    %9 = vector.load %arg4[%c0_6, %c0_7] : memref<512x16xf32, #tpu.memory_space<vmem>>, vector<512x16xf32>
    tpu.vector_store %arg4[%c0_6, %c0_7], %8 {strides = array<i32>} : memref<512x16xf32, #tpu.memory_space<vmem>>, vector<512x16xf32>,
    return
  }
  func.func @transform_0(%arg0: i32) -> (i32, i32) {
    %c0_i32 = arith.constant 0 : i32
    %c0_i32_0 = arith.constant 0 : i32
    return %arg0, %c0_i32 : i32, i32
  }
  func.func @transform_1(%arg0: i32) -> (i32, i32) {
    %c0_i32 = arith.constant 0 : i32
    %c0_i32_0 = arith.constant 0 : i32
    %c0_i32_1 = arith.constant 0 : i32
    return %c0_i32, %c0_i32_0 : i32, i32
  }
  func.func @transform_2(%arg0: i32) -> (i32, i32) {
    %c0_i32 = arith.constant 0 : i32
    %c0_i32_0 = arith.constant 0 : i32
    %c0_i32_1 = arith.constant 0 : i32
    return %c0_i32, %c0_i32_0 : i32, i32
  }
  func.func @transform_3(%arg0: i32) -> (i32, i32) {
    %c0_i32 = arith.constant 0 : i32
    %c0_i32_0 = arith.constant 0 : i32
    return %arg0, %c0_i32 : i32, i32
  }
}

module attributes {stable_mosaic.version = 11 : i64} {
  func.func @_mm_bn_kernel(%arg0: i32, %arg1: memref<512x144xbf16, #tpu.memory_space<vmem>>, %arg2: memref<144x16xbf16, #tpu.memory_space<vmem>>, %arg3: memref<1x16xf32, #tpu.memory_space<vmem>>, %arg4: memref<512x16xf32, #tpu.memory_space<vmem>>) attributes {dimension_semantics = [#tpu.dimension_semantics<parallel>], iteration_bounds = array<i64: 1>, scalar_prefetch = 0 : i64, scratch_operands = 0 : i64, tpu.core_type = #tpu.core_type<tc>, window_params = [{transform_indices = @transform_0, window_bounds = array<i64: 512, 144>}, {pipeline_mode = #tpu.pipeline_mode<synchronous>, transform_indices = @transform_1, window_bounds = array<i64: 144, 16>}, {pipeline_mode = #tpu.pipeline_mode<synchronous>, transform_indices = @transform_2, window_bounds = array<i64: 1, 16>}, {transform_indices = @transform_3, window_bounds = array<i64: 512, 16>}]} {
    %c0 = arith.constant 0 : index
    %c0_0 = arith.constant 0 : index
    %0 = vector.load %arg1[%c0, %c0_0] : memref<512x144xbf16, #tpu.memory_space<vmem>>, vector<512x144xbf16>
    %c0_1 = arith.constant 0 : index
    %c0_2 = arith.constant 0 : index
    %1 = vector.load %arg2[%c0_1, %c0_2] : memref<144x16xbf16, #tpu.memory_space<vmem>>, vector<144x16xbf16>
    %cst = arith.constant dense<0.000000e+00> : vector<512x16xf32>
    %2 = tpu.matmul %0, %1, %cst {dimension_numbers = #tpu.dot_dimension_numbers<[1], [0], [0], [1], [0, 0, 1, 1], [], []>} : vector<512x144xbf16>, vector<144x16xbf16>, vector<512x16xf32> -> vector<512x16xf32>
    %c0_3 = arith.constant 0 : index
    %c0_4 = arith.constant 0 : index
    %3 = vector.load %arg3[%c0_3, %c0_4] : memref<1x16xf32, #tpu.memory_space<vmem>>, vector<1x16xf32>
    %4 = vector.broadcast %3 : vector<1x16xf32> to vector<512x16xf32>
    %5 = arith.addf %2, %4 : vector<512x16xf32>
    %cst_5 = arith.constant 0.000000e+00 : f32
    %6 = vector.broadcast %cst_5 : f32 to vector<512x16xf32>
    %7 = arith.maximumf %5, %6 : vector<512x16xf32>
    %c0_6 = arith.constant 0 : index
    %c0_7 = arith.constant 0 : index
    %8 = vector.load %arg4[%c0_6, %c0_7] : memref<512x16xf32, #tpu.memory_space<vmem>>, vector<512x16xf32>
    tpu.vector_store %arg4[%c0_6, %c0_7], %7 {strides = array<i32>} : memref<512x16xf32, #tpu.memory_space<vmem>>, vector<512x16xf32>,
    return
  }
  func.func @transform_0(%arg0: i32) -> (i32, i32) {
    %c0_i32 = arith.constant 0 : i32
    %c0_i32_0 = arith.constant 0 : i32
    return %arg0, %c0_i32 : i32, i32
  }
  func.func @transform_1(%arg0: i32) -> (i32, i32) {
    %c0_i32 = arith.constant 0 : i32
    %c0_i32_0 = arith.constant 0 : i32
    %c0_i32_1 = arith.constant 0 : i32
    return %c0_i32, %c0_i32_0 : i32, i32
  }
  func.func @transform_2(%arg0: i32) -> (i32, i32) {
    %c0_i32 = arith.constant 0 : i32
    %c0_i32_0 = arith.constant 0 : i32
    %c0_i32_1 = arith.constant 0 : i32
    return %c0_i32, %c0_i32_0 : i32, i32
  }
  func.func @transform_3(%arg0: i32) -> (i32, i32) {
    %c0_i32 = arith.constant 0 : i32
    %c0_i32_0 = arith.constant 0 : i32
    return %arg0, %c0_i32 : i32, i32
  }
}

module attributes {stable_mosaic.version = 11 : i64} {
  func.func @_mm_bn_kernel(%arg0: i32, %arg1: memref<512x16xf32, #tpu.memory_space<vmem>>, %arg2: memref<16x64xbf16, #tpu.memory_space<vmem>>, %arg3: memref<1x64xf32, #tpu.memory_space<vmem>>, %arg4: memref<512x64xf32, #tpu.memory_space<vmem>>) attributes {dimension_semantics = [#tpu.dimension_semantics<parallel>], iteration_bounds = array<i64: 1>, scalar_prefetch = 0 : i64, scratch_operands = 0 : i64, tpu.core_type = #tpu.core_type<tc>, window_params = [{transform_indices = @transform_0, window_bounds = array<i64: 512, 16>}, {pipeline_mode = #tpu.pipeline_mode<synchronous>, transform_indices = @transform_1, window_bounds = array<i64: 16, 64>}, {pipeline_mode = #tpu.pipeline_mode<synchronous>, transform_indices = @transform_2, window_bounds = array<i64: 1, 64>}, {transform_indices = @transform_3, window_bounds = array<i64: 512, 64>}]} {
    %c0 = arith.constant 0 : index
    %c0_0 = arith.constant 0 : index
    %0 = vector.load %arg1[%c0, %c0_0] : memref<512x16xf32, #tpu.memory_space<vmem>>, vector<512x16xf32>
    %1 = arith.truncf %0 : vector<512x16xf32> to vector<512x16xbf16>
    %c0_1 = arith.constant 0 : index
    %c0_2 = arith.constant 0 : index
    %2 = vector.load %arg2[%c0_1, %c0_2] : memref<16x64xbf16, #tpu.memory_space<vmem>>, vector<16x64xbf16>
    %cst = arith.constant dense<0.000000e+00> : vector<512x64xf32>
    %3 = tpu.matmul %1, %2, %cst {dimension_numbers = #tpu.dot_dimension_numbers<[1], [0], [0], [1], [0, 0, 1, 1], [], []>} : vector<512x16xbf16>, vector<16x64xbf16>, vector<512x64xf32> -> vector<512x64xf32>
    %c0_3 = arith.constant 0 : index
    %c0_4 = arith.constant 0 : index
    %4 = vector.load %arg3[%c0_3, %c0_4] : memref<1x64xf32, #tpu.memory_space<vmem>>, vector<1x64xf32>
    %5 = vector.broadcast %4 : vector<1x64xf32> to vector<512x64xf32>
    %6 = arith.addf %3, %5 : vector<512x64xf32>
    %c0_5 = arith.constant 0 : index
    %c0_6 = arith.constant 0 : index
    %7 = vector.load %arg4[%c0_5, %c0_6] : memref<512x64xf32, #tpu.memory_space<vmem>>, vector<512x64xf32>
    tpu.vector_store %arg4[%c0_5, %c0_6], %6 {strides = array<i32>} : memref<512x64xf32, #tpu.memory_space<vmem>>, vector<512x64xf32>,
    return
  }
  func.func @transform_0(%arg0: i32) -> (i32, i32) {
    %c0_i32 = arith.constant 0 : i32
    %c0_i32_0 = arith.constant 0 : i32
    return %arg0, %c0_i32 : i32, i32
  }
  func.func @transform_1(%arg0: i32) -> (i32, i32) {
    %c0_i32 = arith.constant 0 : i32
    %c0_i32_0 = arith.constant 0 : i32
    %c0_i32_1 = arith.constant 0 : i32
    return %c0_i32, %c0_i32_0 : i32, i32
  }
  func.func @transform_2(%arg0: i32) -> (i32, i32) {
    %c0_i32 = arith.constant 0 : i32
    %c0_i32_0 = arith.constant 0 : i32
    %c0_i32_1 = arith.constant 0 : i32
    return %c0_i32, %c0_i32_0 : i32, i32
  }
  func.func @transform_3(%arg0: i32) -> (i32, i32) {
    %c0_i32 = arith.constant 0 : i32
    %c0_i32_0 = arith.constant 0 : i32
    return %arg0, %c0_i32 : i32, i32
  }
}

module attributes {stable_mosaic.version = 11 : i64} {
  func.func @_mm_bn_res_kernel(%arg0: i32, %arg1: memref<512x16xf32, #tpu.memory_space<vmem>>, %arg2: memref<16x64xbf16, #tpu.memory_space<vmem>>, %arg3: memref<1x64xf32, #tpu.memory_space<vmem>>, %arg4: memref<512x64xf32, #tpu.memory_space<vmem>>, %arg5: memref<512x64xf32, #tpu.memory_space<vmem>>) attributes {dimension_semantics = [#tpu.dimension_semantics<parallel>], iteration_bounds = array<i64: 1>, scalar_prefetch = 0 : i64, scratch_operands = 0 : i64, tpu.core_type = #tpu.core_type<tc>, window_params = [{transform_indices = @transform_0, window_bounds = array<i64: 512, 16>}, {pipeline_mode = #tpu.pipeline_mode<synchronous>, transform_indices = @transform_1, window_bounds = array<i64: 16, 64>}, {pipeline_mode = #tpu.pipeline_mode<synchronous>, transform_indices = @transform_2, window_bounds = array<i64: 1, 64>}, {transform_indices = @transform_3, window_bounds = array<i64: 512, 64>}, {transform_indices = @transform_4, window_bounds = array<i64: 512, 64>}]} {
    %c0 = arith.constant 0 : index
    %c0_0 = arith.constant 0 : index
    %0 = vector.load %arg1[%c0, %c0_0] : memref<512x16xf32, #tpu.memory_space<vmem>>, vector<512x16xf32>
    %1 = arith.truncf %0 : vector<512x16xf32> to vector<512x16xbf16>
    %c0_1 = arith.constant 0 : index
    %c0_2 = arith.constant 0 : index
    %2 = vector.load %arg2[%c0_1, %c0_2] : memref<16x64xbf16, #tpu.memory_space<vmem>>, vector<16x64xbf16>
    %cst = arith.constant dense<0.000000e+00> : vector<512x64xf32>
    %3 = tpu.matmul %1, %2, %cst {dimension_numbers = #tpu.dot_dimension_numbers<[1], [0], [0], [1], [0, 0, 1, 1], [], []>} : vector<512x16xbf16>, vector<16x64xbf16>, vector<512x64xf32> -> vector<512x64xf32>
    %c0_3 = arith.constant 0 : index
    %c0_4 = arith.constant 0 : index
    %4 = vector.load %arg3[%c0_3, %c0_4] : memref<1x64xf32, #tpu.memory_space<vmem>>, vector<1x64xf32>
    %5 = vector.broadcast %4 : vector<1x64xf32> to vector<512x64xf32>
    %6 = arith.addf %3, %5 : vector<512x64xf32>
    %c0_5 = arith.constant 0 : index
    %c0_6 = arith.constant 0 : index
    %7 = vector.load %arg4[%c0_5, %c0_6] : memref<512x64xf32, #tpu.memory_space<vmem>>, vector<512x64xf32>
    %8 = arith.addf %6, %7 : vector<512x64xf32>
    %cst_7 = arith.constant 0.000000e+00 : f32
    %9 = vector.broadcast %cst_7 : f32 to vector<512x64xf32>
    %10 = arith.maximumf %8, %9 : vector<512x64xf32>
    %c0_8 = arith.constant 0 : index
    %c0_9 = arith.constant 0 : index
    %11 = vector.load %arg5[%c0_8, %c0_9] : memref<512x64xf32, #tpu.memory_space<vmem>>, vector<512x64xf32>
    tpu.vector_store %arg5[%c0_8, %c0_9], %10 {strides = array<i32>} : memref<512x64xf32, #tpu.memory_space<vmem>>, vector<512x64xf32>,
    return
  }
  func.func @transform_0(%arg0: i32) -> (i32, i32) {
    %c0_i32 = arith.constant 0 : i32
    %c0_i32_0 = arith.constant 0 : i32
    return %arg0, %c0_i32 : i32, i32
  }
  func.func @transform_1(%arg0: i32) -> (i32, i32) {
    %c0_i32 = arith.constant 0 : i32
    %c0_i32_0 = arith.constant 0 : i32
    %c0_i32_1 = arith.constant 0 : i32
    return %c0_i32, %c0_i32_0 : i32, i32
  }
  func.func @transform_2(%arg0: i32) -> (i32, i32) {
    %c0_i32 = arith.constant 0 : i32
    %c0_i32_0 = arith.constant 0 : i32
    %c0_i32_1 = arith.constant 0 : i32
    return %c0_i32, %c0_i32_0 : i32, i32
  }
  func.func @transform_3(%arg0: i32) -> (i32, i32) {
    %c0_i32 = arith.constant 0 : i32
    %c0_i32_0 = arith.constant 0 : i32
    return %arg0, %c0_i32 : i32, i32
  }
  func.func @transform_4(%arg0: i32) -> (i32, i32) {
    %c0_i32 = arith.constant 0 : i32
    %c0_i32_0 = arith.constant 0 : i32
    return %arg0, %c0_i32 : i32, i32
  }
}

module attributes {stable_mosaic.version = 11 : i64} {
  func.func @_mm_bn_kernel(%arg0: i32, %arg1: memref<512x64xf32, #tpu.memory_space<vmem>>, %arg2: memref<64x16xbf16, #tpu.memory_space<vmem>>, %arg3: memref<1x16xf32, #tpu.memory_space<vmem>>, %arg4: memref<512x16xf32, #tpu.memory_space<vmem>>) attributes {dimension_semantics = [#tpu.dimension_semantics<parallel>], iteration_bounds = array<i64: 1>, scalar_prefetch = 0 : i64, scratch_operands = 0 : i64, tpu.core_type = #tpu.core_type<tc>, window_params = [{transform_indices = @transform_0, window_bounds = array<i64: 512, 64>}, {pipeline_mode = #tpu.pipeline_mode<synchronous>, transform_indices = @transform_1, window_bounds = array<i64: 64, 16>}, {pipeline_mode = #tpu.pipeline_mode<synchronous>, transform_indices = @transform_2, window_bounds = array<i64: 1, 16>}, {transform_indices = @transform_3, window_bounds = array<i64: 512, 16>}]} {
    %c0 = arith.constant 0 : index
    %c0_0 = arith.constant 0 : index
    %0 = vector.load %arg1[%c0, %c0_0] : memref<512x64xf32, #tpu.memory_space<vmem>>, vector<512x64xf32>
    %1 = arith.truncf %0 : vector<512x64xf32> to vector<512x64xbf16>
    %c0_1 = arith.constant 0 : index
    %c0_2 = arith.constant 0 : index
    %2 = vector.load %arg2[%c0_1, %c0_2] : memref<64x16xbf16, #tpu.memory_space<vmem>>, vector<64x16xbf16>
    %cst = arith.constant dense<0.000000e+00> : vector<512x16xf32>
    %3 = tpu.matmul %1, %2, %cst {dimension_numbers = #tpu.dot_dimension_numbers<[1], [0], [0], [1], [0, 0, 1, 1], [], []>} : vector<512x64xbf16>, vector<64x16xbf16>, vector<512x16xf32> -> vector<512x16xf32>
    %c0_3 = arith.constant 0 : index
    %c0_4 = arith.constant 0 : index
    %4 = vector.load %arg3[%c0_3, %c0_4] : memref<1x16xf32, #tpu.memory_space<vmem>>, vector<1x16xf32>
    %5 = vector.broadcast %4 : vector<1x16xf32> to vector<512x16xf32>
    %6 = arith.addf %3, %5 : vector<512x16xf32>
    %cst_5 = arith.constant 0.000000e+00 : f32
    %7 = vector.broadcast %cst_5 : f32 to vector<512x16xf32>
    %8 = arith.maximumf %6, %7 : vector<512x16xf32>
    %c0_6 = arith.constant 0 : index
    %c0_7 = arith.constant 0 : index
    %9 = vector.load %arg4[%c0_6, %c0_7] : memref<512x16xf32, #tpu.memory_space<vmem>>, vector<512x16xf32>
    tpu.vector_store %arg4[%c0_6, %c0_7], %8 {strides = array<i32>} : memref<512x16xf32, #tpu.memory_space<vmem>>, vector<512x16xf32>,
    return
  }
  func.func @transform_0(%arg0: i32) -> (i32, i32) {
    %c0_i32 = arith.constant 0 : i32
    %c0_i32_0 = arith.constant 0 : i32
    return %arg0, %c0_i32 : i32, i32
  }
  func.func @transform_1(%arg0: i32) -> (i32, i32) {
    %c0_i32 = arith.constant 0 : i32
    %c0_i32_0 = arith.constant 0 : i32
    %c0_i32_1 = arith.constant 0 : i32
    return %c0_i32, %c0_i32_0 : i32, i32
  }
  func.func @transform_2(%arg0: i32) -> (i32, i32) {
    %c0_i32 = arith.constant 0 : i32
    %c0_i32_0 = arith.constant 0 : i32
    %c0_i32_1 = arith.constant 0 : i32
    return %c0_i32, %c0_i32_0 : i32, i32
  }
  func.func @transform_3(%arg0: i32) -> (i32, i32) {
    %c0_i32 = arith.constant 0 : i32
    %c0_i32_0 = arith.constant 0 : i32
    return %arg0, %c0_i32 : i32, i32
  }
}

module attributes {stable_mosaic.version = 11 : i64} {
  func.func @_mm_bn_kernel(%arg0: i32, %arg1: memref<512x64xf32, #tpu.memory_space<vmem>>, %arg2: memref<64x32xbf16, #tpu.memory_space<vmem>>, %arg3: memref<1x32xf32, #tpu.memory_space<vmem>>, %arg4: memref<512x32xf32, #tpu.memory_space<vmem>>) attributes {dimension_semantics = [#tpu.dimension_semantics<parallel>], iteration_bounds = array<i64: 1>, scalar_prefetch = 0 : i64, scratch_operands = 0 : i64, tpu.core_type = #tpu.core_type<tc>, window_params = [{transform_indices = @transform_0, window_bounds = array<i64: 512, 64>}, {pipeline_mode = #tpu.pipeline_mode<synchronous>, transform_indices = @transform_1, window_bounds = array<i64: 64, 32>}, {pipeline_mode = #tpu.pipeline_mode<synchronous>, transform_indices = @transform_2, window_bounds = array<i64: 1, 32>}, {transform_indices = @transform_3, window_bounds = array<i64: 512, 32>}]} {
    %c0 = arith.constant 0 : index
    %c0_0 = arith.constant 0 : index
    %0 = vector.load %arg1[%c0, %c0_0] : memref<512x64xf32, #tpu.memory_space<vmem>>, vector<512x64xf32>
    %1 = arith.truncf %0 : vector<512x64xf32> to vector<512x64xbf16>
    %c0_1 = arith.constant 0 : index
    %c0_2 = arith.constant 0 : index
    %2 = vector.load %arg2[%c0_1, %c0_2] : memref<64x32xbf16, #tpu.memory_space<vmem>>, vector<64x32xbf16>
    %cst = arith.constant dense<0.000000e+00> : vector<512x32xf32>
    %3 = tpu.matmul %1, %2, %cst {dimension_numbers = #tpu.dot_dimension_numbers<[1], [0], [0], [1], [0, 0, 1, 1], [], []>} : vector<512x64xbf16>, vector<64x32xbf16>, vector<512x32xf32> -> vector<512x32xf32>
    %c0_3 = arith.constant 0 : index
    %c0_4 = arith.constant 0 : index
    %4 = vector.load %arg3[%c0_3, %c0_4] : memref<1x32xf32, #tpu.memory_space<vmem>>, vector<1x32xf32>
    %5 = vector.broadcast %4 : vector<1x32xf32> to vector<512x32xf32>
    %6 = arith.addf %3, %5 : vector<512x32xf32>
    %cst_5 = arith.constant 0.000000e+00 : f32
    %7 = vector.broadcast %cst_5 : f32 to vector<512x32xf32>
    %8 = arith.maximumf %6, %7 : vector<512x32xf32>
    %c0_6 = arith.constant 0 : index
    %c0_7 = arith.constant 0 : index
    %9 = vector.load %arg4[%c0_6, %c0_7] : memref<512x32xf32, #tpu.memory_space<vmem>>, vector<512x32xf32>
    tpu.vector_store %arg4[%c0_6, %c0_7], %8 {strides = array<i32>} : memref<512x32xf32, #tpu.memory_space<vmem>>, vector<512x32xf32>,
    return
  }
  func.func @transform_0(%arg0: i32) -> (i32, i32) {
    %c0_i32 = arith.constant 0 : i32
    %c0_i32_0 = arith.constant 0 : i32
    return %arg0, %c0_i32 : i32, i32
  }
  func.func @transform_1(%arg0: i32) -> (i32, i32) {
    %c0_i32 = arith.constant 0 : i32
    %c0_i32_0 = arith.constant 0 : i32
    %c0_i32_1 = arith.constant 0 : i32
    return %c0_i32, %c0_i32_0 : i32, i32
  }
  func.func @transform_2(%arg0: i32) -> (i32, i32) {
    %c0_i32 = arith.constant 0 : i32
    %c0_i32_0 = arith.constant 0 : i32
    %c0_i32_1 = arith.constant 0 : i32
    return %c0_i32, %c0_i32_0 : i32, i32
  }
  func.func @transform_3(%arg0: i32) -> (i32, i32) {
    %c0_i32 = arith.constant 0 : i32
    %c0_i32_0 = arith.constant 0 : i32
    return %arg0, %c0_i32 : i32, i32
  }
}

module attributes {stable_mosaic.version = 11 : i64} {
  func.func @_mm_bn_kernel(%arg0: i32, %arg1: memref<128x288xbf16, #tpu.memory_space<vmem>>, %arg2: memref<288x32xbf16, #tpu.memory_space<vmem>>, %arg3: memref<1x32xf32, #tpu.memory_space<vmem>>, %arg4: memref<128x32xf32, #tpu.memory_space<vmem>>) attributes {dimension_semantics = [#tpu.dimension_semantics<parallel>], iteration_bounds = array<i64: 1>, scalar_prefetch = 0 : i64, scratch_operands = 0 : i64, tpu.core_type = #tpu.core_type<tc>, window_params = [{transform_indices = @transform_0, window_bounds = array<i64: 128, 288>}, {pipeline_mode = #tpu.pipeline_mode<synchronous>, transform_indices = @transform_1, window_bounds = array<i64: 288, 32>}, {pipeline_mode = #tpu.pipeline_mode<synchronous>, transform_indices = @transform_2, window_bounds = array<i64: 1, 32>}, {transform_indices = @transform_3, window_bounds = array<i64: 128, 32>}]} {
    %c0 = arith.constant 0 : index
    %c0_0 = arith.constant 0 : index
    %0 = vector.load %arg1[%c0, %c0_0] : memref<128x288xbf16, #tpu.memory_space<vmem>>, vector<128x288xbf16>
    %c0_1 = arith.constant 0 : index
    %c0_2 = arith.constant 0 : index
    %1 = vector.load %arg2[%c0_1, %c0_2] : memref<288x32xbf16, #tpu.memory_space<vmem>>, vector<288x32xbf16>
    %cst = arith.constant dense<0.000000e+00> : vector<128x32xf32>
    %2 = tpu.matmul %0, %1, %cst {dimension_numbers = #tpu.dot_dimension_numbers<[1], [0], [0], [1], [0, 0, 1, 1], [], []>} : vector<128x288xbf16>, vector<288x32xbf16>, vector<128x32xf32> -> vector<128x32xf32>
    %c0_3 = arith.constant 0 : index
    %c0_4 = arith.constant 0 : index
    %3 = vector.load %arg3[%c0_3, %c0_4] : memref<1x32xf32, #tpu.memory_space<vmem>>, vector<1x32xf32>
    %4 = vector.broadcast %3 : vector<1x32xf32> to vector<128x32xf32>
    %5 = arith.addf %2, %4 : vector<128x32xf32>
    %cst_5 = arith.constant 0.000000e+00 : f32
    %6 = vector.broadcast %cst_5 : f32 to vector<128x32xf32>
    %7 = arith.maximumf %5, %6 : vector<128x32xf32>
    %c0_6 = arith.constant 0 : index
    %c0_7 = arith.constant 0 : index
    %8 = vector.load %arg4[%c0_6, %c0_7] : memref<128x32xf32, #tpu.memory_space<vmem>>, vector<128x32xf32>
    tpu.vector_store %arg4[%c0_6, %c0_7], %7 {strides = array<i32>} : memref<128x32xf32, #tpu.memory_space<vmem>>, vector<128x32xf32>,
    return
  }
  func.func @transform_0(%arg0: i32) -> (i32, i32) {
    %c0_i32 = arith.constant 0 : i32
    %c0_i32_0 = arith.constant 0 : i32
    return %arg0, %c0_i32 : i32, i32
  }
  func.func @transform_1(%arg0: i32) -> (i32, i32) {
    %c0_i32 = arith.constant 0 : i32
    %c0_i32_0 = arith.constant 0 : i32
    %c0_i32_1 = arith.constant 0 : i32
    return %c0_i32, %c0_i32_0 : i32, i32
  }
  func.func @transform_2(%arg0: i32) -> (i32, i32) {
    %c0_i32 = arith.constant 0 : i32
    %c0_i32_0 = arith.constant 0 : i32
    %c0_i32_1 = arith.constant 0 : i32
    return %c0_i32, %c0_i32_0 : i32, i32
  }
  func.func @transform_3(%arg0: i32) -> (i32, i32) {
    %c0_i32 = arith.constant 0 : i32
    %c0_i32_0 = arith.constant 0 : i32
    return %arg0, %c0_i32 : i32, i32
  }
}

module attributes {stable_mosaic.version = 11 : i64} {
  func.func @_mm_bn_kernel(%arg0: i32, %arg1: memref<128x64xf32, #tpu.memory_space<vmem>>, %arg2: memref<64x128xbf16, #tpu.memory_space<vmem>>, %arg3: memref<1x128xf32, #tpu.memory_space<vmem>>, %arg4: memref<128x128xf32, #tpu.memory_space<vmem>>) attributes {dimension_semantics = [#tpu.dimension_semantics<parallel>], iteration_bounds = array<i64: 1>, scalar_prefetch = 0 : i64, scratch_operands = 0 : i64, tpu.core_type = #tpu.core_type<tc>, window_params = [{transform_indices = @transform_0, window_bounds = array<i64: 128, 64>}, {pipeline_mode = #tpu.pipeline_mode<synchronous>, transform_indices = @transform_1, window_bounds = array<i64: 64, 128>}, {pipeline_mode = #tpu.pipeline_mode<synchronous>, transform_indices = @transform_2, window_bounds = array<i64: 1, 128>}, {transform_indices = @transform_3, window_bounds = array<i64: 128, 128>}]} {
    %c0 = arith.constant 0 : index
    %c0_0 = arith.constant 0 : index
    %0 = vector.load %arg1[%c0, %c0_0] : memref<128x64xf32, #tpu.memory_space<vmem>>, vector<128x64xf32>
    %1 = arith.truncf %0 : vector<128x64xf32> to vector<128x64xbf16>
    %c0_1 = arith.constant 0 : index
    %c0_2 = arith.constant 0 : index
    %2 = vector.load %arg2[%c0_1, %c0_2] : memref<64x128xbf16, #tpu.memory_space<vmem>>, vector<64x128xbf16>
    %cst = arith.constant dense<0.000000e+00> : vector<128x128xf32>
    %3 = tpu.matmul %1, %2, %cst {dimension_numbers = #tpu.dot_dimension_numbers<[1], [0], [0], [1], [0, 0, 1, 1], [], []>} : vector<128x64xbf16>, vector<64x128xbf16>, vector<128x128xf32> -> vector<128x128xf32>
    %c0_3 = arith.constant 0 : index
    %c0_4 = arith.constant 0 : index
    %4 = vector.load %arg3[%c0_3, %c0_4] : memref<1x128xf32, #tpu.memory_space<vmem>>, vector<1x128xf32>
    %5 = vector.broadcast %4 : vector<1x128xf32> to vector<128x128xf32>
    %6 = arith.addf %3, %5 : vector<128x128xf32>
    %c0_5 = arith.constant 0 : index
    %c0_6 = arith.constant 0 : index
    %7 = vector.load %arg4[%c0_5, %c0_6] : memref<128x128xf32, #tpu.memory_space<vmem>>, vector<128x128xf32>
    tpu.vector_store %arg4[%c0_5, %c0_6], %6 {strides = array<i32>} : memref<128x128xf32, #tpu.memory_space<vmem>>, vector<128x128xf32>,
    return
  }
  func.func @transform_0(%arg0: i32) -> (i32, i32) {
    %c0_i32 = arith.constant 0 : i32
    %c0_i32_0 = arith.constant 0 : i32
    return %arg0, %c0_i32 : i32, i32
  }
  func.func @transform_1(%arg0: i32) -> (i32, i32) {
    %c0_i32 = arith.constant 0 : i32
    %c0_i32_0 = arith.constant 0 : i32
    %c0_i32_1 = arith.constant 0 : i32
    return %c0_i32, %c0_i32_0 : i32, i32
  }
  func.func @transform_2(%arg0: i32) -> (i32, i32) {
    %c0_i32 = arith.constant 0 : i32
    %c0_i32_0 = arith.constant 0 : i32
    %c0_i32_1 = arith.constant 0 : i32
    return %c0_i32, %c0_i32_0 : i32, i32
  }
  func.func @transform_3(%arg0: i32) -> (i32, i32) {
    %c0_i32 = arith.constant 0 : i32
    %c0_i32_0 = arith.constant 0 : i32
    return %arg0, %c0_i32 : i32, i32
  }
}

module attributes {stable_mosaic.version = 11 : i64} {
  func.func @_mm_bn_res_kernel(%arg0: i32, %arg1: memref<128x32xf32, #tpu.memory_space<vmem>>, %arg2: memref<32x128xbf16, #tpu.memory_space<vmem>>, %arg3: memref<1x128xf32, #tpu.memory_space<vmem>>, %arg4: memref<128x128xf32, #tpu.memory_space<vmem>>, %arg5: memref<128x128xf32, #tpu.memory_space<vmem>>) attributes {dimension_semantics = [#tpu.dimension_semantics<parallel>], iteration_bounds = array<i64: 1>, scalar_prefetch = 0 : i64, scratch_operands = 0 : i64, tpu.core_type = #tpu.core_type<tc>, window_params = [{transform_indices = @transform_0, window_bounds = array<i64: 128, 32>}, {pipeline_mode = #tpu.pipeline_mode<synchronous>, transform_indices = @transform_1, window_bounds = array<i64: 32, 128>}, {pipeline_mode = #tpu.pipeline_mode<synchronous>, transform_indices = @transform_2, window_bounds = array<i64: 1, 128>}, {transform_indices = @transform_3, window_bounds = array<i64: 128, 128>}, {transform_indices = @transform_4, window_bounds = array<i64: 128, 128>}]} {
    %c0 = arith.constant 0 : index
    %c0_0 = arith.constant 0 : index
    %0 = vector.load %arg1[%c0, %c0_0] : memref<128x32xf32, #tpu.memory_space<vmem>>, vector<128x32xf32>
    %1 = arith.truncf %0 : vector<128x32xf32> to vector<128x32xbf16>
    %c0_1 = arith.constant 0 : index
    %c0_2 = arith.constant 0 : index
    %2 = vector.load %arg2[%c0_1, %c0_2] : memref<32x128xbf16, #tpu.memory_space<vmem>>, vector<32x128xbf16>
    %cst = arith.constant dense<0.000000e+00> : vector<128x128xf32>
    %3 = tpu.matmul %1, %2, %cst {dimension_numbers = #tpu.dot_dimension_numbers<[1], [0], [0], [1], [0, 0, 1, 1], [], []>} : vector<128x32xbf16>, vector<32x128xbf16>, vector<128x128xf32> -> vector<128x128xf32>
    %c0_3 = arith.constant 0 : index
    %c0_4 = arith.constant 0 : index
    %4 = vector.load %arg3[%c0_3, %c0_4] : memref<1x128xf32, #tpu.memory_space<vmem>>, vector<1x128xf32>
    %5 = vector.broadcast %4 : vector<1x128xf32> to vector<128x128xf32>
    %6 = arith.addf %3, %5 : vector<128x128xf32>
    %c0_5 = arith.constant 0 : index
    %c0_6 = arith.constant 0 : index
    %7 = vector.load %arg4[%c0_5, %c0_6] : memref<128x128xf32, #tpu.memory_space<vmem>>, vector<128x128xf32>
    %8 = arith.addf %6, %7 : vector<128x128xf32>
    %cst_7 = arith.constant 0.000000e+00 : f32
    %9 = vector.broadcast %cst_7 : f32 to vector<128x128xf32>
    %10 = arith.maximumf %8, %9 : vector<128x128xf32>
    %c0_8 = arith.constant 0 : index
    %c0_9 = arith.constant 0 : index
    %11 = vector.load %arg5[%c0_8, %c0_9] : memref<128x128xf32, #tpu.memory_space<vmem>>, vector<128x128xf32>
    tpu.vector_store %arg5[%c0_8, %c0_9], %10 {strides = array<i32>} : memref<128x128xf32, #tpu.memory_space<vmem>>, vector<128x128xf32>,
    return
  }
  func.func @transform_0(%arg0: i32) -> (i32, i32) {
    %c0_i32 = arith.constant 0 : i32
    %c0_i32_0 = arith.constant 0 : i32
    return %arg0, %c0_i32 : i32, i32
  }
  func.func @transform_1(%arg0: i32) -> (i32, i32) {
    %c0_i32 = arith.constant 0 : i32
    %c0_i32_0 = arith.constant 0 : i32
    %c0_i32_1 = arith.constant 0 : i32
    return %c0_i32, %c0_i32_0 : i32, i32
  }
  func.func @transform_2(%arg0: i32) -> (i32, i32) {
    %c0_i32 = arith.constant 0 : i32
    %c0_i32_0 = arith.constant 0 : i32
    %c0_i32_1 = arith.constant 0 : i32
    return %c0_i32, %c0_i32_0 : i32, i32
  }
  func.func @transform_3(%arg0: i32) -> (i32, i32) {
    %c0_i32 = arith.constant 0 : i32
    %c0_i32_0 = arith.constant 0 : i32
    return %arg0, %c0_i32 : i32, i32
  }
  func.func @transform_4(%arg0: i32) -> (i32, i32) {
    %c0_i32 = arith.constant 0 : i32
    %c0_i32_0 = arith.constant 0 : i32
    return %arg0, %c0_i32 : i32, i32
  }
}

module attributes {stable_mosaic.version = 11 : i64} {
  func.func @_mm_bn_kernel(%arg0: i32, %arg1: memref<128x128xf32, #tpu.memory_space<vmem>>, %arg2: memref<128x32xbf16, #tpu.memory_space<vmem>>, %arg3: memref<1x32xf32, #tpu.memory_space<vmem>>, %arg4: memref<128x32xf32, #tpu.memory_space<vmem>>) attributes {dimension_semantics = [#tpu.dimension_semantics<parallel>], iteration_bounds = array<i64: 1>, scalar_prefetch = 0 : i64, scratch_operands = 0 : i64, tpu.core_type = #tpu.core_type<tc>, window_params = [{transform_indices = @transform_0, window_bounds = array<i64: 128, 128>}, {pipeline_mode = #tpu.pipeline_mode<synchronous>, transform_indices = @transform_1, window_bounds = array<i64: 128, 32>}, {pipeline_mode = #tpu.pipeline_mode<synchronous>, transform_indices = @transform_2, window_bounds = array<i64: 1, 32>}, {transform_indices = @transform_3, window_bounds = array<i64: 128, 32>}]} {
    %c0 = arith.constant 0 : index
    %c0_0 = arith.constant 0 : index
    %0 = vector.load %arg1[%c0, %c0_0] : memref<128x128xf32, #tpu.memory_space<vmem>>, vector<128x128xf32>
    %1 = arith.truncf %0 : vector<128x128xf32> to vector<128x128xbf16>
    %c0_1 = arith.constant 0 : index
    %c0_2 = arith.constant 0 : index
    %2 = vector.load %arg2[%c0_1, %c0_2] : memref<128x32xbf16, #tpu.memory_space<vmem>>, vector<128x32xbf16>
    %cst = arith.constant dense<0.000000e+00> : vector<128x32xf32>
    %3 = tpu.matmul %1, %2, %cst {dimension_numbers = #tpu.dot_dimension_numbers<[1], [0], [0], [1], [0, 0, 1, 1], [], []>} : vector<128x128xbf16>, vector<128x32xbf16>, vector<128x32xf32> -> vector<128x32xf32>
    %c0_3 = arith.constant 0 : index
    %c0_4 = arith.constant 0 : index
    %4 = vector.load %arg3[%c0_3, %c0_4] : memref<1x32xf32, #tpu.memory_space<vmem>>, vector<1x32xf32>
    %5 = vector.broadcast %4 : vector<1x32xf32> to vector<128x32xf32>
    %6 = arith.addf %3, %5 : vector<128x32xf32>
    %cst_5 = arith.constant 0.000000e+00 : f32
    %7 = vector.broadcast %cst_5 : f32 to vector<128x32xf32>
    %8 = arith.maximumf %6, %7 : vector<128x32xf32>
    %c0_6 = arith.constant 0 : index
    %c0_7 = arith.constant 0 : index
    %9 = vector.load %arg4[%c0_6, %c0_7] : memref<128x32xf32, #tpu.memory_space<vmem>>, vector<128x32xf32>
    tpu.vector_store %arg4[%c0_6, %c0_7], %8 {strides = array<i32>} : memref<128x32xf32, #tpu.memory_space<vmem>>, vector<128x32xf32>,
    return
  }
  func.func @transform_0(%arg0: i32) -> (i32, i32) {
    %c0_i32 = arith.constant 0 : i32
    %c0_i32_0 = arith.constant 0 : i32
    return %arg0, %c0_i32 : i32, i32
  }
  func.func @transform_1(%arg0: i32) -> (i32, i32) {
    %c0_i32 = arith.constant 0 : i32
    %c0_i32_0 = arith.constant 0 : i32
    %c0_i32_1 = arith.constant 0 : i32
    return %c0_i32, %c0_i32_0 : i32, i32
  }
  func.func @transform_2(%arg0: i32) -> (i32, i32) {
    %c0_i32 = arith.constant 0 : i32
    %c0_i32_0 = arith.constant 0 : i32
    %c0_i32_1 = arith.constant 0 : i32
    return %c0_i32, %c0_i32_0 : i32, i32
  }
  func.func @transform_3(%arg0: i32) -> (i32, i32) {
    %c0_i32 = arith.constant 0 : i32
    %c0_i32_0 = arith.constant 0 : i32
    return %arg0, %c0_i32 : i32, i32
  }
}

module attributes {stable_mosaic.version = 11 : i64} {
  func.func @_mm_bn_kernel(%arg0: i32, %arg1: memref<128x128xf32, #tpu.memory_space<vmem>>, %arg2: memref<128x64xbf16, #tpu.memory_space<vmem>>, %arg3: memref<1x64xf32, #tpu.memory_space<vmem>>, %arg4: memref<128x64xf32, #tpu.memory_space<vmem>>) attributes {dimension_semantics = [#tpu.dimension_semantics<parallel>], iteration_bounds = array<i64: 1>, scalar_prefetch = 0 : i64, scratch_operands = 0 : i64, tpu.core_type = #tpu.core_type<tc>, window_params = [{transform_indices = @transform_0, window_bounds = array<i64: 128, 128>}, {pipeline_mode = #tpu.pipeline_mode<synchronous>, transform_indices = @transform_1, window_bounds = array<i64: 128, 64>}, {pipeline_mode = #tpu.pipeline_mode<synchronous>, transform_indices = @transform_2, window_bounds = array<i64: 1, 64>}, {transform_indices = @transform_3, window_bounds = array<i64: 128, 64>}]} {
    %c0 = arith.constant 0 : index
    %c0_0 = arith.constant 0 : index
    %0 = vector.load %arg1[%c0, %c0_0] : memref<128x128xf32, #tpu.memory_space<vmem>>, vector<128x128xf32>
    %1 = arith.truncf %0 : vector<128x128xf32> to vector<128x128xbf16>
    %c0_1 = arith.constant 0 : index
    %c0_2 = arith.constant 0 : index
    %2 = vector.load %arg2[%c0_1, %c0_2] : memref<128x64xbf16, #tpu.memory_space<vmem>>, vector<128x64xbf16>
    %cst = arith.constant dense<0.000000e+00> : vector<128x64xf32>
    %3 = tpu.matmul %1, %2, %cst {dimension_numbers = #tpu.dot_dimension_numbers<[1], [0], [0], [1], [0, 0, 1, 1], [], []>} : vector<128x128xbf16>, vector<128x64xbf16>, vector<128x64xf32> -> vector<128x64xf32>
    %c0_3 = arith.constant 0 : index
    %c0_4 = arith.constant 0 : index
    %4 = vector.load %arg3[%c0_3, %c0_4] : memref<1x64xf32, #tpu.memory_space<vmem>>, vector<1x64xf32>
    %5 = vector.broadcast %4 : vector<1x64xf32> to vector<128x64xf32>
    %6 = arith.addf %3, %5 : vector<128x64xf32>
    %cst_5 = arith.constant 0.000000e+00 : f32
    %7 = vector.broadcast %cst_5 : f32 to vector<128x64xf32>
    %8 = arith.maximumf %6, %7 : vector<128x64xf32>
    %c0_6 = arith.constant 0 : index
    %c0_7 = arith.constant 0 : index
    %9 = vector.load %arg4[%c0_6, %c0_7] : memref<128x64xf32, #tpu.memory_space<vmem>>, vector<128x64xf32>
    tpu.vector_store %arg4[%c0_6, %c0_7], %8 {strides = array<i32>} : memref<128x64xf32, #tpu.memory_space<vmem>>, vector<128x64xf32>,
    return
  }
  func.func @transform_0(%arg0: i32) -> (i32, i32) {
    %c0_i32 = arith.constant 0 : i32
    %c0_i32_0 = arith.constant 0 : i32
    return %arg0, %c0_i32 : i32, i32
  }
  func.func @transform_1(%arg0: i32) -> (i32, i32) {
    %c0_i32 = arith.constant 0 : i32
    %c0_i32_0 = arith.constant 0 : i32
    %c0_i32_1 = arith.constant 0 : i32
    return %c0_i32, %c0_i32_0 : i32, i32
  }
  func.func @transform_2(%arg0: i32) -> (i32, i32) {
    %c0_i32 = arith.constant 0 : i32
    %c0_i32_0 = arith.constant 0 : i32
    %c0_i32_1 = arith.constant 0 : i32
    return %c0_i32, %c0_i32_0 : i32, i32
  }
  func.func @transform_3(%arg0: i32) -> (i32, i32) {
    %c0_i32 = arith.constant 0 : i32
    %c0_i32_0 = arith.constant 0 : i32
    return %arg0, %c0_i32 : i32, i32
  }
}

module attributes {stable_mosaic.version = 11 : i64} {
  func.func @_mm_bn_kernel(%arg0: i32, %arg1: memref<32x576xbf16, #tpu.memory_space<vmem>>, %arg2: memref<576x64xbf16, #tpu.memory_space<vmem>>, %arg3: memref<1x64xf32, #tpu.memory_space<vmem>>, %arg4: memref<32x64xf32, #tpu.memory_space<vmem>>) attributes {dimension_semantics = [#tpu.dimension_semantics<parallel>], iteration_bounds = array<i64: 1>, scalar_prefetch = 0 : i64, scratch_operands = 0 : i64, tpu.core_type = #tpu.core_type<tc>, window_params = [{transform_indices = @transform_0, window_bounds = array<i64: 32, 576>}, {pipeline_mode = #tpu.pipeline_mode<synchronous>, transform_indices = @transform_1, window_bounds = array<i64: 576, 64>}, {pipeline_mode = #tpu.pipeline_mode<synchronous>, transform_indices = @transform_2, window_bounds = array<i64: 1, 64>}, {transform_indices = @transform_3, window_bounds = array<i64: 32, 64>}]} {
    %c0 = arith.constant 0 : index
    %c0_0 = arith.constant 0 : index
    %0 = vector.load %arg1[%c0, %c0_0] : memref<32x576xbf16, #tpu.memory_space<vmem>>, vector<32x576xbf16>
    %c0_1 = arith.constant 0 : index
    %c0_2 = arith.constant 0 : index
    %1 = vector.load %arg2[%c0_1, %c0_2] : memref<576x64xbf16, #tpu.memory_space<vmem>>, vector<576x64xbf16>
    %cst = arith.constant dense<0.000000e+00> : vector<32x64xf32>
    %2 = tpu.matmul %0, %1, %cst {dimension_numbers = #tpu.dot_dimension_numbers<[1], [0], [0], [1], [0, 0, 1, 1], [], []>} : vector<32x576xbf16>, vector<576x64xbf16>, vector<32x64xf32> -> vector<32x64xf32>
    %c0_3 = arith.constant 0 : index
    %c0_4 = arith.constant 0 : index
    %3 = vector.load %arg3[%c0_3, %c0_4] : memref<1x64xf32, #tpu.memory_space<vmem>>, vector<1x64xf32>
    %4 = vector.broadcast %3 : vector<1x64xf32> to vector<32x64xf32>
    %5 = arith.addf %2, %4 : vector<32x64xf32>
    %cst_5 = arith.constant 0.000000e+00 : f32
    %6 = vector.broadcast %cst_5 : f32 to vector<32x64xf32>
    %7 = arith.maximumf %5, %6 : vector<32x64xf32>
    %c0_6 = arith.constant 0 : index
    %c0_7 = arith.constant 0 : index
    %8 = vector.load %arg4[%c0_6, %c0_7] : memref<32x64xf32, #tpu.memory_space<vmem>>, vector<32x64xf32>
    tpu.vector_store %arg4[%c0_6, %c0_7], %7 {strides = array<i32>} : memref<32x64xf32, #tpu.memory_space<vmem>>, vector<32x64xf32>,
    return
  }
  func.func @transform_0(%arg0: i32) -> (i32, i32) {
    %c0_i32 = arith.constant 0 : i32
    %c0_i32_0 = arith.constant 0 : i32
    return %arg0, %c0_i32 : i32, i32
  }
  func.func @transform_1(%arg0: i32) -> (i32, i32) {
    %c0_i32 = arith.constant 0 : i32
    %c0_i32_0 = arith.constant 0 : i32
    %c0_i32_1 = arith.constant 0 : i32
    return %c0_i32, %c0_i32_0 : i32, i32
  }
  func.func @transform_2(%arg0: i32) -> (i32, i32) {
    %c0_i32 = arith.constant 0 : i32
    %c0_i32_0 = arith.constant 0 : i32
    %c0_i32_1 = arith.constant 0 : i32
    return %c0_i32, %c0_i32_0 : i32, i32
  }
  func.func @transform_3(%arg0: i32) -> (i32, i32) {
    %c0_i32 = arith.constant 0 : i32
    %c0_i32_0 = arith.constant 0 : i32
    return %arg0, %c0_i32 : i32, i32
  }
}

module attributes {stable_mosaic.version = 11 : i64} {
  func.func @_mm_bn_kernel(%arg0: i32, %arg1: memref<32x128xf32, #tpu.memory_space<vmem>>, %arg2: memref<128x256xbf16, #tpu.memory_space<vmem>>, %arg3: memref<1x256xf32, #tpu.memory_space<vmem>>, %arg4: memref<32x256xf32, #tpu.memory_space<vmem>>) attributes {dimension_semantics = [#tpu.dimension_semantics<parallel>], iteration_bounds = array<i64: 1>, scalar_prefetch = 0 : i64, scratch_operands = 0 : i64, tpu.core_type = #tpu.core_type<tc>, window_params = [{transform_indices = @transform_0, window_bounds = array<i64: 32, 128>}, {pipeline_mode = #tpu.pipeline_mode<synchronous>, transform_indices = @transform_1, window_bounds = array<i64: 128, 256>}, {pipeline_mode = #tpu.pipeline_mode<synchronous>, transform_indices = @transform_2, window_bounds = array<i64: 1, 256>}, {transform_indices = @transform_3, window_bounds = array<i64: 32, 256>}]} {
    %c0 = arith.constant 0 : index
    %c0_0 = arith.constant 0 : index
    %0 = vector.load %arg1[%c0, %c0_0] : memref<32x128xf32, #tpu.memory_space<vmem>>, vector<32x128xf32>
    %1 = arith.truncf %0 : vector<32x128xf32> to vector<32x128xbf16>
    %c0_1 = arith.constant 0 : index
    %c0_2 = arith.constant 0 : index
    %2 = vector.load %arg2[%c0_1, %c0_2] : memref<128x256xbf16, #tpu.memory_space<vmem>>, vector<128x256xbf16>
    %cst = arith.constant dense<0.000000e+00> : vector<32x256xf32>
    %3 = tpu.matmul %1, %2, %cst {dimension_numbers = #tpu.dot_dimension_numbers<[1], [0], [0], [1], [0, 0, 1, 1], [], []>} : vector<32x128xbf16>, vector<128x256xbf16>, vector<32x256xf32> -> vector<32x256xf32>
    %c0_3 = arith.constant 0 : index
    %c0_4 = arith.constant 0 : index
    %4 = vector.load %arg3[%c0_3, %c0_4] : memref<1x256xf32, #tpu.memory_space<vmem>>, vector<1x256xf32>
    %5 = vector.broadcast %4 : vector<1x256xf32> to vector<32x256xf32>
    %6 = arith.addf %3, %5 : vector<32x256xf32>
    %c0_5 = arith.constant 0 : index
    %c0_6 = arith.constant 0 : index
    %7 = vector.load %arg4[%c0_5, %c0_6] : memref<32x256xf32, #tpu.memory_space<vmem>>, vector<32x256xf32>
    tpu.vector_store %arg4[%c0_5, %c0_6], %6 {strides = array<i32>} : memref<32x256xf32, #tpu.memory_space<vmem>>, vector<32x256xf32>,
    return
  }
  func.func @transform_0(%arg0: i32) -> (i32, i32) {
    %c0_i32 = arith.constant 0 : i32
    %c0_i32_0 = arith.constant 0 : i32
    return %arg0, %c0_i32 : i32, i32
  }
  func.func @transform_1(%arg0: i32) -> (i32, i32) {
    %c0_i32 = arith.constant 0 : i32
    %c0_i32_0 = arith.constant 0 : i32
    %c0_i32_1 = arith.constant 0 : i32
    return %c0_i32, %c0_i32_0 : i32, i32
  }
  func.func @transform_2(%arg0: i32) -> (i32, i32) {
    %c0_i32 = arith.constant 0 : i32
    %c0_i32_0 = arith.constant 0 : i32
    %c0_i32_1 = arith.constant 0 : i32
    return %c0_i32, %c0_i32_0 : i32, i32
  }
  func.func @transform_3(%arg0: i32) -> (i32, i32) {
    %c0_i32 = arith.constant 0 : i32
    %c0_i32_0 = arith.constant 0 : i32
    return %arg0, %c0_i32 : i32, i32
  }
}

module attributes {stable_mosaic.version = 11 : i64} {
  func.func @_mm_bn_kernel(%arg0: i32, %arg1: memref<32x256xf32, #tpu.memory_space<vmem>>, %arg2: memref<256x64xbf16, #tpu.memory_space<vmem>>, %arg3: memref<1x64xf32, #tpu.memory_space<vmem>>, %arg4: memref<32x64xf32, #tpu.memory_space<vmem>>) attributes {dimension_semantics = [#tpu.dimension_semantics<parallel>], iteration_bounds = array<i64: 1>, scalar_prefetch = 0 : i64, scratch_operands = 0 : i64, tpu.core_type = #tpu.core_type<tc>, window_params = [{transform_indices = @transform_0, window_bounds = array<i64: 32, 256>}, {pipeline_mode = #tpu.pipeline_mode<synchronous>, transform_indices = @transform_1, window_bounds = array<i64: 256, 64>}, {pipeline_mode = #tpu.pipeline_mode<synchronous>, transform_indices = @transform_2, window_bounds = array<i64: 1, 64>}, {transform_indices = @transform_3, window_bounds = array<i64: 32, 64>}]} {
    %c0 = arith.constant 0 : index
    %c0_0 = arith.constant 0 : index
    %0 = vector.load %arg1[%c0, %c0_0] : memref<32x256xf32, #tpu.memory_space<vmem>>, vector<32x256xf32>
    %1 = arith.truncf %0 : vector<32x256xf32> to vector<32x256xbf16>
    %c0_1 = arith.constant 0 : index
    %c0_2 = arith.constant 0 : index
    %2 = vector.load %arg2[%c0_1, %c0_2] : memref<256x64xbf16, #tpu.memory_space<vmem>>, vector<256x64xbf16>
    %cst = arith.constant dense<0.000000e+00> : vector<32x64xf32>
    %3 = tpu.matmul %1, %2, %cst {dimension_numbers = #tpu.dot_dimension_numbers<[1], [0], [0], [1], [0, 0, 1, 1], [], []>} : vector<32x256xbf16>, vector<256x64xbf16>, vector<32x64xf32> -> vector<32x64xf32>
    %c0_3 = arith.constant 0 : index
    %c0_4 = arith.constant 0 : index
    %4 = vector.load %arg3[%c0_3, %c0_4] : memref<1x64xf32, #tpu.memory_space<vmem>>, vector<1x64xf32>
    %5 = vector.broadcast %4 : vector<1x64xf32> to vector<32x64xf32>
    %6 = arith.addf %3, %5 : vector<32x64xf32>
    %cst_5 = arith.constant 0.000000e+00 : f32
    %7 = vector.broadcast %cst_5 : f32 to vector<32x64xf32>
    %8 = arith.maximumf %6, %7 : vector<32x64xf32>
    %c0_6 = arith.constant 0 : index
    %c0_7 = arith.constant 0 : index
    %9 = vector.load %arg4[%c0_6, %c0_7] : memref<32x64xf32, #tpu.memory_space<vmem>>, vector<32x64xf32>
    tpu.vector_store %arg4[%c0_6, %c0_7], %8 {strides = array<i32>} : memref<32x64xf32, #tpu.memory_space<vmem>>, vector<32x64xf32>,
    return
  }
  func.func @transform_0(%arg0: i32) -> (i32, i32) {
    %c0_i32 = arith.constant 0 : i32
    %c0_i32_0 = arith.constant 0 : i32
    return %arg0, %c0_i32 : i32, i32
  }
  func.func @transform_1(%arg0: i32) -> (i32, i32) {
    %c0_i32 = arith.constant 0 : i32
    %c0_i32_0 = arith.constant 0 : i32
    %c0_i32_1 = arith.constant 0 : i32
    return %c0_i32, %c0_i32_0 : i32, i32
  }
  func.func @transform_2(%arg0: i32) -> (i32, i32) {
    %c0_i32 = arith.constant 0 : i32
    %c0_i32_0 = arith.constant 0 : i32
    %c0_i32_1 = arith.constant 0 : i32
    return %c0_i32, %c0_i32_0 : i32, i32
  }
  func.func @transform_3(%arg0: i32) -> (i32, i32) {
    %c0_i32 = arith.constant 0 : i32
    %c0_i32_0 = arith.constant 0 : i32
    return %arg0, %c0_i32 : i32, i32
  }
}

module attributes {stable_mosaic.version = 11 : i64} {
  func.func @_mm_bn_res_kernel(%arg0: i32, %arg1: memref<32x64xf32, #tpu.memory_space<vmem>>, %arg2: memref<64x256xbf16, #tpu.memory_space<vmem>>, %arg3: memref<1x256xf32, #tpu.memory_space<vmem>>, %arg4: memref<32x256xf32, #tpu.memory_space<vmem>>, %arg5: memref<32x256xf32, #tpu.memory_space<vmem>>) attributes {dimension_semantics = [#tpu.dimension_semantics<parallel>], iteration_bounds = array<i64: 1>, scalar_prefetch = 0 : i64, scratch_operands = 0 : i64, tpu.core_type = #tpu.core_type<tc>, window_params = [{transform_indices = @transform_0, window_bounds = array<i64: 32, 64>}, {pipeline_mode = #tpu.pipeline_mode<synchronous>, transform_indices = @transform_1, window_bounds = array<i64: 64, 256>}, {pipeline_mode = #tpu.pipeline_mode<synchronous>, transform_indices = @transform_2, window_bounds = array<i64: 1, 256>}, {transform_indices = @transform_3, window_bounds = array<i64: 32, 256>}, {transform_indices = @transform_4, window_bounds = array<i64: 32, 256>}]} {
    %c0 = arith.constant 0 : index
    %c0_0 = arith.constant 0 : index
    %0 = vector.load %arg1[%c0, %c0_0] : memref<32x64xf32, #tpu.memory_space<vmem>>, vector<32x64xf32>
    %1 = arith.truncf %0 : vector<32x64xf32> to vector<32x64xbf16>
    %c0_1 = arith.constant 0 : index
    %c0_2 = arith.constant 0 : index
    %2 = vector.load %arg2[%c0_1, %c0_2] : memref<64x256xbf16, #tpu.memory_space<vmem>>, vector<64x256xbf16>
    %cst = arith.constant dense<0.000000e+00> : vector<32x256xf32>
    %3 = tpu.matmul %1, %2, %cst {dimension_numbers = #tpu.dot_dimension_numbers<[1], [0], [0], [1], [0, 0, 1, 1], [], []>} : vector<32x64xbf16>, vector<64x256xbf16>, vector<32x256xf32> -> vector<32x256xf32>
    %c0_3 = arith.constant 0 : index
    %c0_4 = arith.constant 0 : index
    %4 = vector.load %arg3[%c0_3, %c0_4] : memref<1x256xf32, #tpu.memory_space<vmem>>, vector<1x256xf32>
    %5 = vector.broadcast %4 : vector<1x256xf32> to vector<32x256xf32>
    %6 = arith.addf %3, %5 : vector<32x256xf32>
    %c0_5 = arith.constant 0 : index
    %c0_6 = arith.constant 0 : index
    %7 = vector.load %arg4[%c0_5, %c0_6] : memref<32x256xf32, #tpu.memory_space<vmem>>, vector<32x256xf32>
    %8 = arith.addf %6, %7 : vector<32x256xf32>
    %cst_7 = arith.constant 0.000000e+00 : f32
    %9 = vector.broadcast %cst_7 : f32 to vector<32x256xf32>
    %10 = arith.maximumf %8, %9 : vector<32x256xf32>
    %c0_8 = arith.constant 0 : index
    %c0_9 = arith.constant 0 : index
    %11 = vector.load %arg5[%c0_8, %c0_9] : memref<32x256xf32, #tpu.memory_space<vmem>>, vector<32x256xf32>
    tpu.vector_store %arg5[%c0_8, %c0_9], %10 {strides = array<i32>} : memref<32x256xf32, #tpu.memory_space<vmem>>, vector<32x256xf32>,
    return
  }
  func.func @transform_0(%arg0: i32) -> (i32, i32) {
    %c0_i32 = arith.constant 0 : i32
    %c0_i32_0 = arith.constant 0 : i32
    return %arg0, %c0_i32 : i32, i32
  }
  func.func @transform_1(%arg0: i32) -> (i32, i32) {
    %c0_i32 = arith.constant 0 : i32
    %c0_i32_0 = arith.constant 0 : i32
    %c0_i32_1 = arith.constant 0 : i32
    return %c0_i32, %c0_i32_0 : i32, i32
  }
  func.func @transform_2(%arg0: i32) -> (i32, i32) {
    %c0_i32 = arith.constant 0 : i32
    %c0_i32_0 = arith.constant 0 : i32
    %c0_i32_1 = arith.constant 0 : i32
    return %c0_i32, %c0_i32_0 : i32, i32
  }
  func.func @transform_3(%arg0: i32) -> (i32, i32) {
    %c0_i32 = arith.constant 0 : i32
    %c0_i32_0 = arith.constant 0 : i32
    return %arg0, %c0_i32 : i32, i32
  }
  func.func @transform_4(%arg0: i32) -> (i32, i32) {
    %c0_i32 = arith.constant 0 : i32
    %c0_i32_0 = arith.constant 0 : i32
    return %arg0, %c0_i32 : i32, i32
  }
}

module attributes {stable_mosaic.version = 11 : i64} {
  func.func @_mm_bn_kernel(%arg0: i32, %arg1: memref<32x256xf32, #tpu.memory_space<vmem>>, %arg2: memref<256x128xbf16, #tpu.memory_space<vmem>>, %arg3: memref<1x128xf32, #tpu.memory_space<vmem>>, %arg4: memref<32x128xf32, #tpu.memory_space<vmem>>) attributes {dimension_semantics = [#tpu.dimension_semantics<parallel>], iteration_bounds = array<i64: 1>, scalar_prefetch = 0 : i64, scratch_operands = 0 : i64, tpu.core_type = #tpu.core_type<tc>, window_params = [{transform_indices = @transform_0, window_bounds = array<i64: 32, 256>}, {pipeline_mode = #tpu.pipeline_mode<synchronous>, transform_indices = @transform_1, window_bounds = array<i64: 256, 128>}, {pipeline_mode = #tpu.pipeline_mode<synchronous>, transform_indices = @transform_2, window_bounds = array<i64: 1, 128>}, {transform_indices = @transform_3, window_bounds = array<i64: 32, 128>}]} {
    %c0 = arith.constant 0 : index
    %c0_0 = arith.constant 0 : index
    %0 = vector.load %arg1[%c0, %c0_0] : memref<32x256xf32, #tpu.memory_space<vmem>>, vector<32x256xf32>
    %1 = arith.truncf %0 : vector<32x256xf32> to vector<32x256xbf16>
    %c0_1 = arith.constant 0 : index
    %c0_2 = arith.constant 0 : index
    %2 = vector.load %arg2[%c0_1, %c0_2] : memref<256x128xbf16, #tpu.memory_space<vmem>>, vector<256x128xbf16>
    %cst = arith.constant dense<0.000000e+00> : vector<32x128xf32>
    %3 = tpu.matmul %1, %2, %cst {dimension_numbers = #tpu.dot_dimension_numbers<[1], [0], [0], [1], [0, 0, 1, 1], [], []>} : vector<32x256xbf16>, vector<256x128xbf16>, vector<32x128xf32> -> vector<32x128xf32>
    %c0_3 = arith.constant 0 : index
    %c0_4 = arith.constant 0 : index
    %4 = vector.load %arg3[%c0_3, %c0_4] : memref<1x128xf32, #tpu.memory_space<vmem>>, vector<1x128xf32>
    %5 = vector.broadcast %4 : vector<1x128xf32> to vector<32x128xf32>
    %6 = arith.addf %3, %5 : vector<32x128xf32>
    %cst_5 = arith.constant 0.000000e+00 : f32
    %7 = vector.broadcast %cst_5 : f32 to vector<32x128xf32>
    %8 = arith.maximumf %6, %7 : vector<32x128xf32>
    %c0_6 = arith.constant 0 : index
    %c0_7 = arith.constant 0 : index
    %9 = vector.load %arg4[%c0_6, %c0_7] : memref<32x128xf32, #tpu.memory_space<vmem>>, vector<32x128xf32>
    tpu.vector_store %arg4[%c0_6, %c0_7], %8 {strides = array<i32>} : memref<32x128xf32, #tpu.memory_space<vmem>>, vector<32x128xf32>,
    return
  }
  func.func @transform_0(%arg0: i32) -> (i32, i32) {
    %c0_i32 = arith.constant 0 : i32
    %c0_i32_0 = arith.constant 0 : i32
    return %arg0, %c0_i32 : i32, i32
  }
  func.func @transform_1(%arg0: i32) -> (i32, i32) {
    %c0_i32 = arith.constant 0 : i32
    %c0_i32_0 = arith.constant 0 : i32
    %c0_i32_1 = arith.constant 0 : i32
    return %c0_i32, %c0_i32_0 : i32, i32
  }
  func.func @transform_2(%arg0: i32) -> (i32, i32) {
    %c0_i32 = arith.constant 0 : i32
    %c0_i32_0 = arith.constant 0 : i32
    %c0_i32_1 = arith.constant 0 : i32
    return %c0_i32, %c0_i32_0 : i32, i32
  }
  func.func @transform_3(%arg0: i32) -> (i32, i32) {
    %c0_i32 = arith.constant 0 : i32
    %c0_i32_0 = arith.constant 0 : i32
    return %arg0, %c0_i32 : i32, i32
  }
}

module attributes {stable_mosaic.version = 11 : i64} {
  func.func @_mm_bn_kernel(%arg0: i32, %arg1: memref<32x256xf32, #tpu.memory_space<vmem>>, %arg2: memref<256x64xbf16, #tpu.memory_space<vmem>>, %arg3: memref<1x64xf32, #tpu.memory_space<vmem>>, %arg4: memref<32x64xf32, #tpu.memory_space<vmem>>) attributes {dimension_semantics = [#tpu.dimension_semantics<parallel>], iteration_bounds = array<i64: 1>, scalar_prefetch = 0 : i64, scratch_operands = 0 : i64, tpu.core_type = #tpu.core_type<tc>, window_params = [{transform_indices = @transform_0, window_bounds = array<i64: 32, 256>}, {pipeline_mode = #tpu.pipeline_mode<synchronous>, transform_indices = @transform_1, window_bounds = array<i64: 256, 64>}, {pipeline_mode = #tpu.pipeline_mode<synchronous>, transform_indices = @transform_2, window_bounds = array<i64: 1, 64>}, {transform_indices = @transform_3, window_bounds = array<i64: 32, 64>}]} {
    %c0 = arith.constant 0 : index
    %c0_0 = arith.constant 0 : index
    %0 = vector.load %arg1[%c0, %c0_0] : memref<32x256xf32, #tpu.memory_space<vmem>>, vector<32x256xf32>
    %1 = arith.truncf %0 : vector<32x256xf32> to vector<32x256xbf16>
    %c0_1 = arith.constant 0 : index
    %c0_2 = arith.constant 0 : index
    %2 = vector.load %arg2[%c0_1, %c0_2] : memref<256x64xbf16, #tpu.memory_space<vmem>>, vector<256x64xbf16>
    %cst = arith.constant dense<0.000000e+00> : vector<32x64xf32>
    %3 = tpu.matmul %1, %2, %cst {dimension_numbers = #tpu.dot_dimension_numbers<[1], [0], [0], [1], [0, 0, 1, 1], [], []>} : vector<32x256xbf16>, vector<256x64xbf16>, vector<32x64xf32> -> vector<32x64xf32>
    %c0_3 = arith.constant 0 : index
    %c0_4 = arith.constant 0 : index
    %4 = vector.load %arg3[%c0_3, %c0_4] : memref<1x64xf32, #tpu.memory_space<vmem>>, vector<1x64xf32>
    %5 = vector.broadcast %4 : vector<1x64xf32> to vector<32x64xf32>
    %6 = arith.addf %3, %5 : vector<32x64xf32>
    %cst_5 = arith.constant 0.000000e+00 : f32
    %7 = vector.broadcast %cst_5 : f32 to vector<32x64xf32>
    %8 = arith.maximumf %6, %7 : vector<32x64xf32>
    %c0_6 = arith.constant 0 : index
    %c0_7 = arith.constant 0 : index
    %9 = vector.load %arg4[%c0_6, %c0_7] : memref<32x64xf32, #tpu.memory_space<vmem>>, vector<32x64xf32>
    tpu.vector_store %arg4[%c0_6, %c0_7], %8 {strides = array<i32>} : memref<32x64xf32, #tpu.memory_space<vmem>>, vector<32x64xf32>,
    return
  }
  func.func @transform_0(%arg0: i32) -> (i32, i32) {
    %c0_i32 = arith.constant 0 : i32
    %c0_i32_0 = arith.constant 0 : i32
    return %arg0, %c0_i32 : i32, i32
  }
  func.func @transform_1(%arg0: i32) -> (i32, i32) {
    %c0_i32 = arith.constant 0 : i32
    %c0_i32_0 = arith.constant 0 : i32
    %c0_i32_1 = arith.constant 0 : i32
    return %c0_i32, %c0_i32_0 : i32, i32
  }
  func.func @transform_2(%arg0: i32) -> (i32, i32) {
    %c0_i32 = arith.constant 0 : i32
    %c0_i32_0 = arith.constant 0 : i32
    %c0_i32_1 = arith.constant 0 : i32
    return %c0_i32, %c0_i32_0 : i32, i32
  }
  func.func @transform_3(%arg0: i32) -> (i32, i32) {
    %c0_i32 = arith.constant 0 : i32
    %c0_i32_0 = arith.constant 0 : i32
    return %arg0, %c0_i32 : i32, i32
  }
}

module attributes {stable_mosaic.version = 11 : i64} {
  func.func @_mm_bn_kernel(%arg0: i32, %arg1: memref<8x1152xbf16, #tpu.memory_space<vmem>>, %arg2: memref<1152x128xbf16, #tpu.memory_space<vmem>>, %arg3: memref<1x128xf32, #tpu.memory_space<vmem>>, %arg4: memref<8x128xf32, #tpu.memory_space<vmem>>) attributes {dimension_semantics = [#tpu.dimension_semantics<parallel>], iteration_bounds = array<i64: 1>, scalar_prefetch = 0 : i64, scratch_operands = 0 : i64, tpu.core_type = #tpu.core_type<tc>, window_params = [{transform_indices = @transform_0, window_bounds = array<i64: 8, 1152>}, {pipeline_mode = #tpu.pipeline_mode<synchronous>, transform_indices = @transform_1, window_bounds = array<i64: 1152, 128>}, {pipeline_mode = #tpu.pipeline_mode<synchronous>, transform_indices = @transform_2, window_bounds = array<i64: 1, 128>}, {transform_indices = @transform_3, window_bounds = array<i64: 8, 128>}]} {
    %c0 = arith.constant 0 : index
    %c0_0 = arith.constant 0 : index
    %0 = vector.load %arg1[%c0, %c0_0] : memref<8x1152xbf16, #tpu.memory_space<vmem>>, vector<8x1152xbf16>
    %c0_1 = arith.constant 0 : index
    %c0_2 = arith.constant 0 : index
    %1 = vector.load %arg2[%c0_1, %c0_2] : memref<1152x128xbf16, #tpu.memory_space<vmem>>, vector<1152x128xbf16>
    %cst = arith.constant dense<0.000000e+00> : vector<8x128xf32>
    %2 = tpu.matmul %0, %1, %cst {dimension_numbers = #tpu.dot_dimension_numbers<[1], [0], [0], [1], [0, 0, 1, 1], [], []>} : vector<8x1152xbf16>, vector<1152x128xbf16>, vector<8x128xf32> -> vector<8x128xf32>
    %c0_3 = arith.constant 0 : index
    %c0_4 = arith.constant 0 : index
    %3 = vector.load %arg3[%c0_3, %c0_4] : memref<1x128xf32, #tpu.memory_space<vmem>>, vector<1x128xf32>
    %4 = vector.broadcast %3 : vector<1x128xf32> to vector<8x128xf32>
    %5 = arith.addf %2, %4 : vector<8x128xf32>
    %cst_5 = arith.constant 0.000000e+00 : f32
    %6 = vector.broadcast %cst_5 : f32 to vector<8x128xf32>
    %7 = arith.maximumf %5, %6 : vector<8x128xf32>
    %c0_6 = arith.constant 0 : index
    %c0_7 = arith.constant 0 : index
    %8 = vector.load %arg4[%c0_6, %c0_7] : memref<8x128xf32, #tpu.memory_space<vmem>>, vector<8x128xf32>
    tpu.vector_store %arg4[%c0_6, %c0_7], %7 {strides = array<i32>} : memref<8x128xf32, #tpu.memory_space<vmem>>, vector<8x128xf32>,
    return
  }
  func.func @transform_0(%arg0: i32) -> (i32, i32) {
    %c0_i32 = arith.constant 0 : i32
    %c0_i32_0 = arith.constant 0 : i32
    return %arg0, %c0_i32 : i32, i32
  }
  func.func @transform_1(%arg0: i32) -> (i32, i32) {
    %c0_i32 = arith.constant 0 : i32
    %c0_i32_0 = arith.constant 0 : i32
    %c0_i32_1 = arith.constant 0 : i32
    return %c0_i32, %c0_i32_0 : i32, i32
  }
  func.func @transform_2(%arg0: i32) -> (i32, i32) {
    %c0_i32 = arith.constant 0 : i32
    %c0_i32_0 = arith.constant 0 : i32
    %c0_i32_1 = arith.constant 0 : i32
    return %c0_i32, %c0_i32_0 : i32, i32
  }
  func.func @transform_3(%arg0: i32) -> (i32, i32) {
    %c0_i32 = arith.constant 0 : i32
    %c0_i32_0 = arith.constant 0 : i32
    return %arg0, %c0_i32 : i32, i32
  }
}

module attributes {stable_mosaic.version = 11 : i64} {
  func.func @_mm_bn_kernel(%arg0: i32, %arg1: memref<8x256xf32, #tpu.memory_space<vmem>>, %arg2: memref<256x512xbf16, #tpu.memory_space<vmem>>, %arg3: memref<1x512xf32, #tpu.memory_space<vmem>>, %arg4: memref<8x512xf32, #tpu.memory_space<vmem>>) attributes {dimension_semantics = [#tpu.dimension_semantics<parallel>], iteration_bounds = array<i64: 1>, scalar_prefetch = 0 : i64, scratch_operands = 0 : i64, tpu.core_type = #tpu.core_type<tc>, window_params = [{transform_indices = @transform_0, window_bounds = array<i64: 8, 256>}, {pipeline_mode = #tpu.pipeline_mode<synchronous>, transform_indices = @transform_1, window_bounds = array<i64: 256, 512>}, {pipeline_mode = #tpu.pipeline_mode<synchronous>, transform_indices = @transform_2, window_bounds = array<i64: 1, 512>}, {transform_indices = @transform_3, window_bounds = array<i64: 8, 512>}]} {
    %c0 = arith.constant 0 : index
    %c0_0 = arith.constant 0 : index
    %0 = vector.load %arg1[%c0, %c0_0] : memref<8x256xf32, #tpu.memory_space<vmem>>, vector<8x256xf32>
    %1 = arith.truncf %0 : vector<8x256xf32> to vector<8x256xbf16>
    %c0_1 = arith.constant 0 : index
    %c0_2 = arith.constant 0 : index
    %2 = vector.load %arg2[%c0_1, %c0_2] : memref<256x512xbf16, #tpu.memory_space<vmem>>, vector<256x512xbf16>
    %cst = arith.constant dense<0.000000e+00> : vector<8x512xf32>
    %3 = tpu.matmul %1, %2, %cst {dimension_numbers = #tpu.dot_dimension_numbers<[1], [0], [0], [1], [0, 0, 1, 1], [], []>} : vector<8x256xbf16>, vector<256x512xbf16>, vector<8x512xf32> -> vector<8x512xf32>
    %c0_3 = arith.constant 0 : index
    %c0_4 = arith.constant 0 : index
    %4 = vector.load %arg3[%c0_3, %c0_4] : memref<1x512xf32, #tpu.memory_space<vmem>>, vector<1x512xf32>
    %5 = vector.broadcast %4 : vector<1x512xf32> to vector<8x512xf32>
    %6 = arith.addf %3, %5 : vector<8x512xf32>
    %c0_5 = arith.constant 0 : index
    %c0_6 = arith.constant 0 : index
    %7 = vector.load %arg4[%c0_5, %c0_6] : memref<8x512xf32, #tpu.memory_space<vmem>>, vector<8x512xf32>
    tpu.vector_store %arg4[%c0_5, %c0_6], %6 {strides = array<i32>} : memref<8x512xf32, #tpu.memory_space<vmem>>, vector<8x512xf32>,
    return
  }
  func.func @transform_0(%arg0: i32) -> (i32, i32) {
    %c0_i32 = arith.constant 0 : i32
    %c0_i32_0 = arith.constant 0 : i32
    return %arg0, %c0_i32 : i32, i32
  }
  func.func @transform_1(%arg0: i32) -> (i32, i32) {
    %c0_i32 = arith.constant 0 : i32
    %c0_i32_0 = arith.constant 0 : i32
    %c0_i32_1 = arith.constant 0 : i32
    return %c0_i32, %c0_i32_0 : i32, i32
  }
  func.func @transform_2(%arg0: i32) -> (i32, i32) {
    %c0_i32 = arith.constant 0 : i32
    %c0_i32_0 = arith.constant 0 : i32
    %c0_i32_1 = arith.constant 0 : i32
    return %c0_i32, %c0_i32_0 : i32, i32
  }
  func.func @transform_3(%arg0: i32) -> (i32, i32) {
    %c0_i32 = arith.constant 0 : i32
    %c0_i32_0 = arith.constant 0 : i32
    return %arg0, %c0_i32 : i32, i32
  }
}

module attributes {stable_mosaic.version = 11 : i64} {
  func.func @_mm_bn_res_kernel(%arg0: i32, %arg1: memref<8x128xf32, #tpu.memory_space<vmem>>, %arg2: memref<128x512xbf16, #tpu.memory_space<vmem>>, %arg3: memref<1x512xf32, #tpu.memory_space<vmem>>, %arg4: memref<8x512xf32, #tpu.memory_space<vmem>>, %arg5: memref<8x512xf32, #tpu.memory_space<vmem>>) attributes {dimension_semantics = [#tpu.dimension_semantics<parallel>], iteration_bounds = array<i64: 1>, scalar_prefetch = 0 : i64, scratch_operands = 0 : i64, tpu.core_type = #tpu.core_type<tc>, window_params = [{transform_indices = @transform_0, window_bounds = array<i64: 8, 128>}, {pipeline_mode = #tpu.pipeline_mode<synchronous>, transform_indices = @transform_1, window_bounds = array<i64: 128, 512>}, {pipeline_mode = #tpu.pipeline_mode<synchronous>, transform_indices = @transform_2, window_bounds = array<i64: 1, 512>}, {transform_indices = @transform_3, window_bounds = array<i64: 8, 512>}, {transform_indices = @transform_4, window_bounds = array<i64: 8, 512>}]} {
    %c0 = arith.constant 0 : index
    %c0_0 = arith.constant 0 : index
    %0 = vector.load %arg1[%c0, %c0_0] : memref<8x128xf32, #tpu.memory_space<vmem>>, vector<8x128xf32>
    %1 = arith.truncf %0 : vector<8x128xf32> to vector<8x128xbf16>
    %c0_1 = arith.constant 0 : index
    %c0_2 = arith.constant 0 : index
    %2 = vector.load %arg2[%c0_1, %c0_2] : memref<128x512xbf16, #tpu.memory_space<vmem>>, vector<128x512xbf16>
    %cst = arith.constant dense<0.000000e+00> : vector<8x512xf32>
    %3 = tpu.matmul %1, %2, %cst {dimension_numbers = #tpu.dot_dimension_numbers<[1], [0], [0], [1], [0, 0, 1, 1], [], []>} : vector<8x128xbf16>, vector<128x512xbf16>, vector<8x512xf32> -> vector<8x512xf32>
    %c0_3 = arith.constant 0 : index
    %c0_4 = arith.constant 0 : index
    %4 = vector.load %arg3[%c0_3, %c0_4] : memref<1x512xf32, #tpu.memory_space<vmem>>, vector<1x512xf32>
    %5 = vector.broadcast %4 : vector<1x512xf32> to vector<8x512xf32>
    %6 = arith.addf %3, %5 : vector<8x512xf32>
    %c0_5 = arith.constant 0 : index
    %c0_6 = arith.constant 0 : index
    %7 = vector.load %arg4[%c0_5, %c0_6] : memref<8x512xf32, #tpu.memory_space<vmem>>, vector<8x512xf32>
    %8 = arith.addf %6, %7 : vector<8x512xf32>
    %cst_7 = arith.constant 0.000000e+00 : f32
    %9 = vector.broadcast %cst_7 : f32 to vector<8x512xf32>
    %10 = arith.maximumf %8, %9 : vector<8x512xf32>
    %c0_8 = arith.constant 0 : index
    %c0_9 = arith.constant 0 : index
    %11 = vector.load %arg5[%c0_8, %c0_9] : memref<8x512xf32, #tpu.memory_space<vmem>>, vector<8x512xf32>
    tpu.vector_store %arg5[%c0_8, %c0_9], %10 {strides = array<i32>} : memref<8x512xf32, #tpu.memory_space<vmem>>, vector<8x512xf32>,
    return
  }
  func.func @transform_0(%arg0: i32) -> (i32, i32) {
    %c0_i32 = arith.constant 0 : i32
    %c0_i32_0 = arith.constant 0 : i32
    return %arg0, %c0_i32 : i32, i32
  }
  func.func @transform_1(%arg0: i32) -> (i32, i32) {
    %c0_i32 = arith.constant 0 : i32
    %c0_i32_0 = arith.constant 0 : i32
    %c0_i32_1 = arith.constant 0 : i32
    return %c0_i32, %c0_i32_0 : i32, i32
  }
  func.func @transform_2(%arg0: i32) -> (i32, i32) {
    %c0_i32 = arith.constant 0 : i32
    %c0_i32_0 = arith.constant 0 : i32
    %c0_i32_1 = arith.constant 0 : i32
    return %c0_i32, %c0_i32_0 : i32, i32
  }
  func.func @transform_3(%arg0: i32) -> (i32, i32) {
    %c0_i32 = arith.constant 0 : i32
    %c0_i32_0 = arith.constant 0 : i32
    return %arg0, %c0_i32 : i32, i32
  }
  func.func @transform_4(%arg0: i32) -> (i32, i32) {
    %c0_i32 = arith.constant 0 : i32
    %c0_i32_0 = arith.constant 0 : i32
    return %arg0, %c0_i32 : i32, i32
  }
}

module attributes {stable_mosaic.version = 11 : i64} {
  func.func @_mm_bn_kernel(%arg0: i32, %arg1: memref<8x512xf32, #tpu.memory_space<vmem>>, %arg2: memref<512x128xbf16, #tpu.memory_space<vmem>>, %arg3: memref<1x128xf32, #tpu.memory_space<vmem>>, %arg4: memref<8x128xf32, #tpu.memory_space<vmem>>) attributes {dimension_semantics = [#tpu.dimension_semantics<parallel>], iteration_bounds = array<i64: 1>, scalar_prefetch = 0 : i64, scratch_operands = 0 : i64, tpu.core_type = #tpu.core_type<tc>, window_params = [{transform_indices = @transform_0, window_bounds = array<i64: 8, 512>}, {pipeline_mode = #tpu.pipeline_mode<synchronous>, transform_indices = @transform_1, window_bounds = array<i64: 512, 128>}, {pipeline_mode = #tpu.pipeline_mode<synchronous>, transform_indices = @transform_2, window_bounds = array<i64: 1, 128>}, {transform_indices = @transform_3, window_bounds = array<i64: 8, 128>}]} {
    %c0 = arith.constant 0 : index
    %c0_0 = arith.constant 0 : index
    %0 = vector.load %arg1[%c0, %c0_0] : memref<8x512xf32, #tpu.memory_space<vmem>>, vector<8x512xf32>
    %1 = arith.truncf %0 : vector<8x512xf32> to vector<8x512xbf16>
    %c0_1 = arith.constant 0 : index
    %c0_2 = arith.constant 0 : index
    %2 = vector.load %arg2[%c0_1, %c0_2] : memref<512x128xbf16, #tpu.memory_space<vmem>>, vector<512x128xbf16>
    %cst = arith.constant dense<0.000000e+00> : vector<8x128xf32>
    %3 = tpu.matmul %1, %2, %cst {dimension_numbers = #tpu.dot_dimension_numbers<[1], [0], [0], [1], [0, 0, 1, 1], [], []>} : vector<8x512xbf16>, vector<512x128xbf16>, vector<8x128xf32> -> vector<8x128xf32>
    %c0_3 = arith.constant 0 : index
    %c0_4 = arith.constant 0 : index
    %4 = vector.load %arg3[%c0_3, %c0_4] : memref<1x128xf32, #tpu.memory_space<vmem>>, vector<1x128xf32>
    %5 = vector.broadcast %4 : vector<1x128xf32> to vector<8x128xf32>
    %6 = arith.addf %3, %5 : vector<8x128xf32>
    %cst_5 = arith.constant 0.000000e+00 : f32
    %7 = vector.broadcast %cst_5 : f32 to vector<8x128xf32>
    %8 = arith.maximumf %6, %7 : vector<8x128xf32>
    %c0_6 = arith.constant 0 : index
    %c0_7 = arith.constant 0 : index
    %9 = vector.load %arg4[%c0_6, %c0_7] : memref<8x128xf32, #tpu.memory_space<vmem>>, vector<8x128xf32>
    tpu.vector_store %arg4[%c0_6, %c0_7], %8 {strides = array<i32>} : memref<8x128xf32, #tpu.memory_space<vmem>>, vector<8x128xf32>,
    return
  }
  func.func @transform_0(%arg0: i32) -> (i32, i32) {
    %c0_i32 = arith.constant 0 : i32
    %c0_i32_0 = arith.constant 0 : i32
    return %arg0, %c0_i32 : i32, i32
  }
  func.func @transform_1(%arg0: i32) -> (i32, i32) {
    %c0_i32 = arith.constant 0 : i32
    %c0_i32_0 = arith.constant 0 : i32
    %c0_i32_1 = arith.constant 0 : i32
    return %c0_i32, %c0_i32_0 : i32, i32
  }
  func.func @transform_2(%arg0: i32) -> (i32, i32) {
    %c0_i32 = arith.constant 0 : i32
    %c0_i32_0 = arith.constant 0 : i32
    %c0_i32_1 = arith.constant 0 : i32
    return %c0_i32, %c0_i32_0 : i32, i32
  }
  func.func @transform_3(%arg0: i32) -> (i32, i32) {
    %c0_i32 = arith.constant 0 : i32
    %c0_i32_0 = arith.constant 0 : i32
    return %arg0, %c0_i32 : i32, i32
  }
}

module attributes {stable_mosaic.version = 11 : i64} {
  func.func @_gram_head_kernel(%arg0: i32, %arg1: memref<1x4x512xf32, #tpu.memory_space<vmem>>, %arg2: memref<512x10xf32, #tpu.memory_space<vmem>>, %arg3: memref<1x10xf32, #tpu.memory_space<vmem>>, %arg4: memref<1x4x4xf32, #tpu.memory_space<vmem>>, %arg5: memref<1x1x10xf32, #tpu.memory_space<vmem>>) attributes {dimension_semantics = [#tpu.dimension_semantics<parallel>], iteration_bounds = array<i64: 2>, scalar_prefetch = 0 : i64, scratch_operands = 0 : i64, tpu.core_type = #tpu.core_type<tc>, window_params = [{transform_indices = @transform_0, window_bounds = array<i64: 1, 4, 512>}, {pipeline_mode = #tpu.pipeline_mode<synchronous>, transform_indices = @transform_1, window_bounds = array<i64: 512, 10>}, {pipeline_mode = #tpu.pipeline_mode<synchronous>, transform_indices = @transform_2, window_bounds = array<i64: 1, 10>}, {transform_indices = @transform_3, window_bounds = array<i64: 1, 4, 4>}, {transform_indices = @transform_4, window_bounds = array<i64: 1, 1, 10>}]} {
    %c0 = arith.constant 0 : index
    %c0_0 = arith.constant 0 : index
    %c0_1 = arith.constant 0 : index
    %0 = vector.load %arg1[%c0, %c0_0, %c0_1] : memref<1x4x512xf32, #tpu.memory_space<vmem>>, vector<1x4x512xf32>
    %1 = vector.shape_cast %0 : vector<1x4x512xf32> to vector<4x512xf32>
    %2 = arith.mulf %1, %1 : vector<4x512xf32>
    %cst = arith.constant dense<0.000000e+00> : vector<512xf32>
    %3 = vector.multi_reduction <add>, %2, %cst [0] : vector<4x512xf32> to vector<512xf32>
    %4 = vector.shape_cast %3 : vector<512xf32> to vector<1x512xf32>
    %5 = math.sqrt %4 : vector<1x512xf32>
    %cst_2 = arith.constant 9.99999993E-9 : f32
    %6 = vector.broadcast %cst_2 : f32 to vector<1x512xf32>
    %7 = arith.maximumf %5, %6 : vector<1x512xf32>
    %8 = vector.broadcast %7 : vector<1x512xf32> to vector<4x512xf32>
    %9 = arith.divf %1, %8 : vector<4x512xf32>
    %cst_3 = arith.constant dense<0.000000e+00> : vector<4x4xf32>
    %10 = tpu.matmul %9, %9, %cst_3 {dimension_numbers = #tpu.dot_dimension_numbers<[1], [1], [0], [0], [0, 0, 1, 0], [], []>} : vector<4x512xf32>, vector<4x512xf32>, vector<4x4xf32> -> vector<4x4xf32>
    %c0_4 = arith.constant 0 : index
    %c0_5 = arith.constant 0 : index
    %c0_6 = arith.constant 0 : index
    %11 = vector.load %arg4[%c0_4, %c0_5, %c0_6] : memref<1x4x4xf32, #tpu.memory_space<vmem>>, vector<1x4x4xf32>
    %12 = vector.shape_cast %11 : vector<1x4x4xf32> to vector<4x4xf32>
    %13 = vector.shape_cast %10 : vector<4x4xf32> to vector<1x4x4xf32>
    tpu.vector_store %arg4[%c0_4, %c0_5, %c0_6], %13 {strides = array<i32>} : memref<1x4x4xf32, #tpu.memory_space<vmem>>, vector<1x4x4xf32>,
    %cst_7 = arith.constant dense<0.000000e+00> : vector<512xf32>
    %14 = vector.multi_reduction <add>, %1, %cst_7 [0] : vector<4x512xf32> to vector<512xf32>
    %15 = vector.shape_cast %14 : vector<512xf32> to vector<1x512xf32>
    %cst_8 = arith.constant 4.000000e+00 : f32
    %16 = vector.broadcast %cst_8 : f32 to vector<1x512xf32>
    %17 = arith.divf %15, %16 : vector<1x512xf32>
    %c0_9 = arith.constant 0 : index
    %c0_10 = arith.constant 0 : index
    %18 = vector.load %arg2[%c0_9, %c0_10] : memref<512x10xf32, #tpu.memory_space<vmem>>, vector<512x10xf32>
    %cst_11 = arith.constant dense<0.000000e+00> : vector<1x10xf32>
    %19 = tpu.matmul %17, %18, %cst_11 {dimension_numbers = #tpu.dot_dimension_numbers<[1], [0], [0], [1], [0, 0, 1, 1], [], []>} : vector<1x512xf32>, vector<512x10xf32>, vector<1x10xf32> -> vector<1x10xf32>
    %c0_12 = arith.constant 0 : index
    %c0_13 = arith.constant 0 : index
    %20 = vector.load %arg3[%c0_12, %c0_13] : memref<1x10xf32, #tpu.memory_space<vmem>>, vector<1x10xf32>
    %21 = arith.addf %19, %20 : vector<1x10xf32>
    %c0_14 = arith.constant 0 : index
    %c0_15 = arith.constant 0 : index
    %c0_16 = arith.constant 0 : index
    %22 = vector.load %arg5[%c0_14, %c0_15, %c0_16] : memref<1x1x10xf32, #tpu.memory_space<vmem>>, vector<1x1x10xf32>
    %23 = vector.shape_cast %22 : vector<1x1x10xf32> to vector<1x10xf32>
    %24 = vector.shape_cast %21 : vector<1x10xf32> to vector<1x1x10xf32>
    tpu.vector_store %arg5[%c0_14, %c0_15, %c0_16], %24 {strides = array<i32>} : memref<1x1x10xf32, #tpu.memory_space<vmem>>, vector<1x1x10xf32>,
    return
  }
  func.func @transform_0(%arg0: i32) -> (i32, i32, i32) {
    %c0_i32 = arith.constant 0 : i32
    %c0_i32_0 = arith.constant 0 : i32
    %c0_i32_1 = arith.constant 0 : i32
    return %arg0, %c0_i32, %c0_i32_0 : i32, i32, i32
  }
  func.func @transform_1(%arg0: i32) -> (i32, i32) {
    %c0_i32 = arith.constant 0 : i32
    %c0_i32_0 = arith.constant 0 : i32
    %c0_i32_1 = arith.constant 0 : i32
    return %c0_i32, %c0_i32_0 : i32, i32
  }
  func.func @transform_2(%arg0: i32) -> (i32, i32) {
    %c0_i32 = arith.constant 0 : i32
    %c0_i32_0 = arith.constant 0 : i32
    %c0_i32_1 = arith.constant 0 : i32
    return %c0_i32, %c0_i32_0 : i32, i32
  }
  func.func @transform_3(%arg0: i32) -> (i32, i32, i32) {
    %c0_i32 = arith.constant 0 : i32
    %c0_i32_0 = arith.constant 0 : i32
    %c0_i32_1 = arith.constant 0 : i32
    return %arg0, %c0_i32, %c0_i32_0 : i32, i32, i32
  }
  func.func @transform_4(%arg0: i32) -> (i32, i32, i32) {
    %c0_i32 = arith.constant 0 : i32
    %c0_i32_0 = arith.constant 0 : i32
    %c0_i32_1 = arith.constant 0 : i32
    return %arg0, %c0_i32, %c0_i32_0 : i32, i32, i32
  }
}

</mosaic_0001>

<llo_original>
// kernel: forward.55
$region0: #{forward.55}
  #allocation0 [shape = 'u32[]', space=smem, size = 0x4, offset = 0x4, fixed_abs, tag = 'smem constant byte address 0x4 - core index']
  #allocation1 [shape = 'u32[144,128]{1,0:T(1,128)}', space=vmem, size = 0x12000, scoped, tag = 'internal scratch']
  %s0 = inlined_call_operand.vmem [shape: bf16[2048,152], index: 0, kind: input, shape index: {}]
  %s1 = inlined_call_operand.vmem [shape: bf16[152,16], index: 1, kind: input, shape index: {}]
  %s2 = inlined_call_operand.vmem [shape: f32[1,16], index: 2, kind: input, shape index: {}]
  %s3 = inlined_call_operand.vmem [shape: f32[2048,16], index: 3, kind: output, shape index: {}]
  %s4 = sld [smem:[#allocation0]]
  $region45: #{forward.55} parent=0
    _
  %s6 = ssub.s32 1, %s4
  %s7 = scalar_select 0, %s6, %s4
  loop: start=0, step=1, limit=6
  $region2: #{forward.55} parent=0 // loop_pre_header
    _
  $region3: #{forward.55} parent=0 // loop_header
    %s9 = sphi 0, %s13
    %p10 = scmp.ge.s32.totalorder %s9, 6
    %s19 = sphi 0, %s21
    %s22 = sphi 0, %s19
    %s23 = sphi 0, %s22
    %s39 = sphi 0, %s23
    %s43 = sphi 0, %s43
    %s45 = sphi 0, %s43
    %s46 = sphi 0, %s45
    %s60 = sphi 0, %s46
    %s64 = sphi 0, %s64
    %s66 = sphi 0, %s64
    %s67 = sphi 0, %s66
    %s81 = sphi 0, %s67
    %s87 = sphi 0, %s89
    %s90 = sphi 0, %s87
    %s91 = sphi 0, %s90
    %s107 = sphi 0, %s91
  $region4: #{forward.55} parent=0 // loop_header_branch
    %12 = sbr.rel (%p10) target = $region8
  $region5: #{forward.55} parent=0 // loop_body
    %s14 = ssub.s32 %s9, 1
    %s15 = ssub.s32 %s9, 2
    %s16 = sadd.s32 %s9, 1
    %s17 = ssub.s32 %s9, %s16
    %p18 = scmp.eq.s32.totalorder %s17, 0
    %s20 = sadd.s32 %s19, 1
    %s21 = scalar_select %p18, %s19, %s20
    %p24 = pneg %p18
    %p25 = scmp.eq.s32.totalorder %s9, 3
    %p26 = por %p24, %p25
    %p27 = scmp.ne.s32.totalorder %s19, %s22
    %p28 = scmp.eq.s32.totalorder %s9, 0
    %p29 = por %p27, %p28
    %p30 = scmp.ne.s32.totalorder %s19, %s22
    %p31 = scmp.eq.s32.totalorder %s14, 3
    %p32 = por %p30, %p31
    %p33 = scmp.ne.s32.totalorder %s22, %s23
    %p34 = scmp.eq.s32.totalorder %s14, 0
    %p35 = por %p33, %p34
    %p36 = scmp.ne.s32.totalorder %s22, %s23
    %p37 = scmp.eq.s32.totalorder %s15, 3
    %p38 = por %p36, %p37
    %p40 = scmp.ne.s32.totalorder %s23, %s39
    %p41 = scmp.eq.s32.totalorder %s15, 0
    %p42 = por %p40, %p41
    %s44 = sadd.s32 %s43, 1
    %p47 = scmp.eq.s32.totalorder %s9, 3
    %p48 = scmp.ne.s32.totalorder %s43, %s45
    %p49 = scmp.eq.s32.totalorder %s9, 0
    %p50 = por %p48, %p49
    %p51 = scmp.ne.s32.totalorder %s43, %s45
    %p52 = scmp.eq.s32.totalorder %s14, 3
    %p53 = por %p51, %p52
    %p54 = scmp.ne.s32.totalorder %s45, %s46
    %p55 = scmp.eq.s32.totalorder %s14, 0
    %p56 = por %p54, %p55
    %p57 = scmp.ne.s32.totalorder %s45, %s46
    %p58 = scmp.eq.s32.totalorder %s15, 3
    %p59 = por %p57, %p58
    %p61 = scmp.ne.s32.totalorder %s46, %s60
    %p62 = scmp.eq.s32.totalorder %s15, 0
    %p63 = por %p61, %p62
    %s65 = sadd.s32 %s64, 1
    %p68 = scmp.eq.s32.totalorder %s9, 3
    %p69 = scmp.ne.s32.totalorder %s64, %s66
    %p70 = scmp.eq.s32.totalorder %s9, 0
    %p71 = por %p69, %p70
    %p72 = scmp.ne.s32.totalorder %s64, %s66
    %p73 = scmp.eq.s32.totalorder %s14, 3
    %p74 = por %p72, %p73
    %p75 = scmp.ne.s32.totalorder %s66, %s67
    %p76 = scmp.eq.s32.totalorder %s14, 0
    %p77 = por %p75, %p76
    %p78 = scmp.ne.s32.totalorder %s66, %s67
    %p79 = scmp.eq.s32.totalorder %s15, 3
    %p80 = por %p78, %p79
    %p82 = scmp.ne.s32.totalorder %s67, %s81
    %p83 = scmp.eq.s32.totalorder %s15, 0
    %p84 = por %p82, %p83
    %s85 = ssub.s32 %s9, %s16
    %p86 = scmp.eq.s32.totalorder %s85, 0
    %s88 = sadd.s32 %s87, 1
    %s89 = scalar_select %p86, %s87, %s88
    %p92 = pneg %p86
    %p93 = scmp.eq.s32.totalorder %s9, 3
    %p94 = por %p92, %p93
    %p95 = scmp.ne.s32.totalorder %s87, %s90
    %p96 = scmp.eq.s32.totalorder %s9, 0
    %p97 = por %p95, %p96
    %p98 = scmp.ne.s32.totalorder %s87, %s90
    %p99 = scmp.eq.s32.totalorder %s14, 3
    %p100 = por %p98, %p99
    %p101 = scmp.ne.s32.totalorder %s90, %s91
    %p102 = scmp.eq.s32.totalorder %s14, 0
    %p103 = por %p101, %p102
    %p104 = scmp.ne.s32.totalorder %s90, %s91
    %p105 = scmp.eq.s32.totalorder %s15, 3
    %p106 = por %p104, %p105
    %p108 = scmp.ne.s32.totalorder %s91, %s107
    %p109 = scmp.eq.s32.totalorder %s15, 0
    %p110 = por %p108, %p109
    %p111 = scmp.le.s32.totalorder 1, %s9
    %p112 = scmp.lt.s32.totalorder %s9, 5
    %p113 = pnand %p111, %p112
    %p114 = pneg %p113
    // Predicated region
    $region9: #{forward.55} parent=5 // pred_check
      _
    $region10: #{forward.55} parent=5 // pred_check_branch
      %116 = sbr.rel (%p113) target = $region12
    $region11: #{forward.55} parent=5 // pred_region
      %s117 = ssub.s32 %s9, 1
      // Predicated region
      $region13: #{forward.55} parent=11 // pred_check
        %p118 = pneg %p56
      $region14: #{forward.55} parent=11 // pred_check_branch
        %120 = sbr.rel (%p118) target = $region16
      $region15: #{forward.55} parent=11 // pred_region
        _
      $region16: #{forward.55} parent=11 // pred_fallthru
        _
      // Predicated region
      $region17: #{forward.55} parent=11 // pred_check
        %p121 = pneg %p77
      $region18: #{forward.55} parent=11 // pred_check_branch
        %123 = sbr.rel (%p121) target = $region20
      $region19: #{forward.55} parent=11 // pred_region
        _
      $region20: #{forward.55} parent=11 // pred_fallthru
        _
    $region12: #{forward.55} parent=5 // pred_fallthru
      _
    %p124 = scmp.lt.s32.totalorder %s9, 4
    // Predicated region
    $region21: #{forward.55} parent=5 // pred_check
      %p125 = pneg %p124
    $region22: #{forward.55} parent=5 // pred_check_branch
      %127 = sbr.rel (%p125) target = $region24
    $region23: #{forward.55} parent=5 // pred_region
      // Predicated region
      $region25: #{forward.55} parent=23 // pred_check
        %p128 = pneg %p29
      $region26: #{forward.55} parent=23 // pred_check_branch
        %130 = sbr.rel (%p128) target = $region28
      $region27: #{forward.55} parent=23 // pred_region
        %s131 = smul.u32 64, %s9
        %p132 = scmp.lt.s32.totalorder %s131, 255
        %s133 = scalar_select %p132, %s131, 255
        %s134 = smul.addr %s133, 2
        %s135 = smul.addr %s134, 4
        %s136 = scalar_lea.vmem %s0, %s135
        %s137 = smul.u32 64, %s9
      $region28: #{forward.55} parent=23 // pred_fallthru
        _
    $region24: #{forward.55} parent=5 // pred_fallthru
      _
    %p138 = scmp.le.s32.totalorder 1, %s9
    %p139 = scmp.lt.s32.totalorder %s9, 5
    %p140 = pnand %p138, %p139
    %p141 = pneg %p140
    // Predicated region
    $region29: #{forward.55} parent=5 // pred_check
      _
    $region30: #{forward.55} parent=5 // pred_check_branch
      %143 = sbr.rel (%p140) target = $region32
    $region31: #{forward.55} parent=5 // pred_region
      %s144 = ssub.s32 %s9, 1
      %s145 = smul.u32 64, %s14
      %p146 = scmp.lt.s32.totalorder %s145, 255
      %s147 = scalar_select %p146, %s145, 255
      %s148 = smul.addr %s147, 2
      %s149 = smul.addr %s148, 4
      %s150 = scalar_lea.vmem %s0, %s149
      %p151 = pneg %p35
      %p152 = pneg %p32
      %p153 = pneg %p56
      %p154 = pneg %p53
      %p155 = pneg %p77
      %p156 = pneg %p74
      %p157 = pneg %p103
      %p158 = pneg %p100
      %s159 = smul.u32 64, %s14
      %p160 = scmp.lt.s32.totalorder %s159, 255
      %s161 = scalar_select %p160, %s159, 255
      %s162 = smul.addr %s161, 8
      %s163 = scalar_lea.vmem %s3, %s162
      %s164 = smul.u32 64, %s14
      %p165 = scmp.lt.s32.totalorder %s164, 255
      %s166 = scalar_select %p165, %s164, 255
      %s167 = smul.addr %s166, 2
      %s168 = smul.addr %s167, 4
      %s169 = scalar_lea.vmem %s0, %s168
      %s170 = smul.u32 64, %s14
      %s171 = smul.u32 64, %s14
      %p172 = scmp.lt.s32.totalorder %s171, 255
      %s173 = scalar_select %p172, %s171, 255
      %s174 = smul.addr %s173, 8
      %s175 = scalar_lea.vmem %s3, %s174
      %s176 = smul.u32 64, %s14
      %v178 = vld [vmem:[%s169] sm:$0xff]
      %v179 = vld [vmem:[%s169 + $0x8] sm:$0xff]
      %v180 = vld [vmem:[%s169 + $0x10] sm:$0xff]
      %v181 = vld [vmem:[%s169 + $0x18] sm:$0xff]
      %v182 = vld [vmem:[%s169 + $0x20] sm:$0xff]
      %v183 = vld [vmem:[%s169 + $0x28] sm:$0xff]
      %v184 = vld [vmem:[%s169 + $0x30] sm:$0xff]
      %v185 = vld [vmem:[%s169 + $0x38] sm:$0xff]
      %v186 = vld [vmem:[%s169 + $0x40] sm:$0xff]
      %v187 = vld [vmem:[%s169 + $0x48] sm:$0xff]
      %v188 = vld [vmem:[%s169 + $0x50] sm:$0xff]
      %v189 = vld [vmem:[%s169 + $0x58] sm:$0xff]
      %v190 = vld [vmem:[%s169 + $0x60] sm:$0xff]
      %v191 = vld [vmem:[%s169 + $0x68] sm:$0xff]
      %v192 = vld [vmem:[%s169 + $0x70] sm:$0xff]
      %v193 = vld [vmem:[%s169 + $0x78] sm:$0xff]
      %v194 = vld [vmem:[%s169 + $0x80] sm:$0xff]
      %v195 = vld [vmem:[%s169 + $0x88] sm:$0xff]
      %v196 = vld [vmem:[%s169 + $0x90] sm:$0xff]
      %v197 = vld [vmem:[%s169 + $0x98] sm:$0xff]
      %v198 = vld [vmem:[%s169 + $0xa0] sm:$0xff]
      %v199 = vld [vmem:[%s169 + $0xa8] sm:$0xff]
      %v200 = vld [vmem:[%s169 + $0xb0] sm:$0xff]
      %v201 = vld [vmem:[%s169 + $0xb8] sm:$0xff]
      %v202 = vld [vmem:[%s169 + $0xc0] sm:$0xff]
      %v203 = vld [vmem:[%s169 + $0xc8] sm:$0xff]
      %v204 = vld [vmem:[%s169 + $0xd0] sm:$0xff]
      %v205 = vld [vmem:[%s169 + $0xd8] sm:$0xff]
      %v206 = vld [vmem:[%s169 + $0xe0] sm:$0xff]
      %v207 = vld [vmem:[%s169 + $0xe8] sm:$0xff]
      %v208 = vld [vmem:[%s169 + $0xf0] sm:$0xff]
      %v209 = vld [vmem:[%s169 + $0xf8] sm:$0xff]
      %v210 = vld [vmem:[%s169 + $0x100] sm:$0xff]
      %v211 = vld [vmem:[%s169 + $0x108] sm:$0xff]
      %v212 = vld [vmem:[%s169 + $0x110] sm:$0xff]
      %v213 = vld [vmem:[%s169 + $0x118] sm:$0xff]
      %v214 = vld [vmem:[%s169 + $0x120] sm:$0xff]
      %v215 = vld [vmem:[%s169 + $0x128] sm:$0xff]
      %v216 = vld [vmem:[%s169 + $0x130] sm:$0xff]
      %v217 = vld [vmem:[%s169 + $0x138] sm:$0xff]
      %v218 = vld [vmem:[%s169 + $0x140] sm:$0xff]
      %v219 = vld [vmem:[%s169 + $0x148] sm:$0xff]
      %v220 = vld [vmem:[%s169 + $0x150] sm:$0xff]
      %v221 = vld [vmem:[%s169 + $0x158] sm:$0xff]
      %v222 = vld [vmem:[%s169 + $0x160] sm:$0xff]
      %v223 = vld [vmem:[%s169 + $0x168] sm:$0xff]
      %v224 = vld [vmem:[%s169 + $0x170] sm:$0xff]
      %v225 = vld [vmem:[%s169 + $0x178] sm:$0xff]
      %v226 = vld [vmem:[%s169 + $0x180] sm:$0xff]
      %v227 = vld [vmem:[%s169 + $0x188] sm:$0xff]
      %v228 = vld [vmem:[%s169 + $0x190] sm:$0xff]
      %v229 = vld [vmem:[%s169 + $0x198] sm:$0xff]
      %v230 = vld [vmem:[%s169 + $0x1a0] sm:$0xff]
      %v231 = vld [vmem:[%s169 + $0x1a8] sm:$0xff]
      %v232 = vld [vmem:[%s169 + $0x1b0] sm:$0xff]
      %v233 = vld [vmem:[%s169 + $0x1b8] sm:$0xff]
      %v234 = vld [vmem:[%s169 + $0x1c0] sm:$0xff]
      %v235 = vld [vmem:[%s169 + $0x1c8] sm:$0xff]
      %v236 = vld [vmem:[%s169 + $0x1d0] sm:$0xff]
      %v237 = vld [vmem:[%s169 + $0x1d8] sm:$0xff]
      %v238 = vld [vmem:[%s169 + $0x1e0] sm:$0xff]
      %v239 = vld [vmem:[%s169 + $0x1e8] sm:$0xff]
      %v240 = vld [vmem:[%s169 + $0x1f0] sm:$0xff]
      %v241 = vld [vmem:[%s169 + $0x1f8] sm:$0xff]
      %v242 = vld [vmem:[%s1] sm:$0xf]
      %v243 = vld [vmem:[%s1 + $0x4] sm:$0xf]
      %v244 = vld [vmem:[%s1 + $0x8] sm:$0xf]
      %v245 = vld [vmem:[%s1 + $0xc] sm:$0xf]
      %v246 = vld [vmem:[%s1 + $0x10] sm:$0xf]
      %v247 = vld [vmem:[%s1 + $0x14] sm:$0xf]
      %v248 = vld [vmem:[%s1 + $0x18] sm:$0xf]
      %v249 = vld [vmem:[%s1 + $0x1c] sm:$0xf]
      %v250 = vld [vmem:[%s1 + $0x20] sm:$0xf]
      %v251 = vld [vmem:[%s1 + $0x24] sm:$0xf]
      %v252 = vld [vmem:[%s1 + $0x28] sm:$0xf]
      %v253 = vld [vmem:[%s1 + $0x2c] sm:$0xf]
      %v254 = vld [vmem:[%s1 + $0x30] sm:$0xf]
      %v255 = vld [vmem:[%s1 + $0x34] sm:$0xf]
      %v256 = vld [vmem:[%s1 + $0x38] sm:$0xf]
      %v257 = vld [vmem:[%s1 + $0x3c] sm:$0xf]
      %v258 = vld [vmem:[%s1 + $0x40] sm:$0xf]
      %v259 = vld [vmem:[%s1 + $0x44] sm:$0xf]
      %v260 = vld [vmem:[%s1 + $0x48] sm:$0xf]
      %v261 = vld [vmem:[%s2] sm:$0x1]
      %v263 = vlaneseq
      %v264 = vshrl.u32 %v263, 7
      %v265 = vsub.s32 0, %v264
      %v266 = vrot.slane %v261, %v265
      %v332 = vunpack.c.l.b16 %v178
      %v333 = vunpack.c.h.b16 %v178
      %v334 = vunpack.c.l.b16 %v179
      %v335 = vunpack.c.h.b16 %v179
      %v336 = vunpack.c.l.b16 %v180
      %v337 = vunpack.c.h.b16 %v180
      %v338 = vunpack.c.l.b16 %v181
      %v339 = vunpack.c.h.b16 %v181
      %v340 = vunpack.c.l.b16 %v182
      %v341 = vunpack.c.h.b16 %v182
      %v342 = vunpack.c.l.b16 %v183
      %v343 = vunpack.c.h.b16 %v183
      %v344 = vunpack.c.l.b16 %v184
      %v345 = vunpack.c.h.b16 %v184
      %v346 = vunpack.c.l.b16 %v185
      %v347 = vunpack.c.h.b16 %v185
      %v348 = vunpack.c.l.b16 %v186
      %v349 = vunpack.c.h.b16 %v186
      %v350 = vunpack.c.l.b16 %v187
      %v351 = vunpack.c.h.b16 %v187
      %v352 = vunpack.c.l.b16 %v188
      %v353 = vunpack.c.h.b16 %v188
      %v354 = vunpack.c.l.b16 %v189
      %v355 = vunpack.c.h.b16 %v189
      %v356 = vunpack.c.l.b16 %v190
      %v357 = vunpack.c.h.b16 %v190
      %v358 = vunpack.c.l.b16 %v191
      %v359 = vunpack.c.h.b16 %v191
      %v360 = vunpack.c.l.b16 %v192
      %v361 = vunpack.c.h.b16 %v192
      %v362 = vunpack.c.l.b16 %v193
      %v363 = vunpack.c.h.b16 %v193
      %v364 = vunpack.c.l.b16 %v194
      %v365 = vunpack.c.h.b16 %v194
      %v366 = vunpack.c.l.b16 %v195
      %v367 = vunpack.c.h.b16 %v195
      %v368 = vunpack.c.l.b16 %v196
      %v369 = vunpack.c.h.b16 %v196
      %v370 = vunpack.c.l.b16 %v197
      %v371 = vunpack.c.h.b16 %v197
      %v372 = vunpack.c.l.b16 %v198
      %v373 = vunpack.c.h.b16 %v198
      %v374 = vunpack.c.l.b16 %v199
      %v375 = vunpack.c.h.b16 %v199
      %v376 = vunpack.c.l.b16 %v200
      %v377 = vunpack.c.h.b16 %v200
      %v378 = vunpack.c.l.b16 %v201
      %v379 = vunpack.c.h.b16 %v201
      %v380 = vunpack.c.l.b16 %v202
      %v381 = vunpack.c.h.b16 %v202
      %v382 = vunpack.c.l.b16 %v203
      %v383 = vunpack.c.h.b16 %v203
      %v384 = vunpack.c.l.b16 %v204
      %v385 = vunpack.c.h.b16 %v204
      %v386 = vunpack.c.l.b16 %v205
      %v387 = vunpack.c.h.b16 %v205
      %v388 = vunpack.c.l.b16 %v206
      %v389 = vunpack.c.h.b16 %v206
      %v390 = vunpack.c.l.b16 %v207
      %v391 = vunpack.c.h.b16 %v207
      %v392 = vunpack.c.l.b16 %v208
      %v393 = vunpack.c.h.b16 %v208
      %v394 = vunpack.c.l.b16 %v209
      %v395 = vunpack.c.h.b16 %v209
      %v396 = vunpack.c.l.b16 %v210
      %v397 = vunpack.c.h.b16 %v210
      %v398 = vunpack.c.l.b16 %v211
      %v399 = vunpack.c.h.b16 %v211
      %v400 = vunpack.c.l.b16 %v212
      %v401 = vunpack.c.h.b16 %v212
      %v402 = vunpack.c.l.b16 %v213
      %v403 = vunpack.c.h.b16 %v213
      %v404 = vunpack.c.l.b16 %v214
      %v405 = vunpack.c.h.b16 %v214
      %v406 = vunpack.c.l.b16 %v215
      %v407 = vunpack.c.h.b16 %v215
      %v408 = vunpack.c.l.b16 %v216
      %v409 = vunpack.c.h.b16 %v216
      %v410 = vunpack.c.l.b16 %v217
      %v411 = vunpack.c.h.b16 %v217
      %v412 = vunpack.c.l.b16 %v218
      %v413 = vunpack.c.h.b16 %v218
      %v414 = vunpack.c.l.b16 %v219
      %v415 = vunpack.c.h.b16 %v219
      %v416 = vunpack.c.l.b16 %v220
      %v417 = vunpack.c.h.b16 %v220
      %v418 = vunpack.c.l.b16 %v221
      %v419 = vunpack.c.h.b16 %v221
      %v420 = vunpack.c.l.b16 %v222
      %v421 = vunpack.c.h.b16 %v222
      %v422 = vunpack.c.l.b16 %v223
      %v423 = vunpack.c.h.b16 %v223
      %v424 = vunpack.c.l.b16 %v224
      %v425 = vunpack.c.h.b16 %v224
      %v426 = vunpack.c.l.b16 %v225
      %v427 = vunpack.c.h.b16 %v225
      %v428 = vunpack.c.l.b16 %v226
      %v429 = vunpack.c.h.b16 %v226
      %v430 = vunpack.c.l.b16 %v227
      %v431 = vunpack.c.h.b16 %v227
      %v432 = vunpack.c.l.b16 %v228
      %v433 = vunpack.c.h.b16 %v228
      %v434 = vunpack.c.l.b16 %v229
      %v435 = vunpack.c.h.b16 %v229
      %v436 = vunpack.c.l.b16 %v230
      %v437 = vunpack.c.h.b16 %v230
      %v438 = vunpack.c.l.b16 %v231
      %v439 = vunpack.c.h.b16 %v231
      %v440 = vunpack.c.l.b16 %v232
      %v441 = vunpack.c.h.b16 %v232
      %v442 = vunpack.c.l.b16 %v233
      %v443 = vunpack.c.h.b16 %v233
      %v444 = vunpack.c.l.b16 %v234
      %v445 = vunpack.c.h.b16 %v234
      %v446 = vunpack.c.l.b16 %v235
      %v447 = vunpack.c.h.b16 %v235
      %v448 = vunpack.c.l.b16 %v236
      %v449 = vunpack.c.h.b16 %v236
      %v450 = vunpack.c.l.b16 %v237
      %v451 = vunpack.c.h.b16 %v237
      %v452 = vunpack.c.l.b16 %v238
      %v453 = vunpack.c.h.b16 %v238
      %v454 = vunpack.c.l.b16 %v239
      %v455 = vunpack.c.h.b16 %v239
      %v456 = vunpack.c.l.b16 %v240
      %v457 = vunpack.c.h.b16 %v240
      %v458 = vunpack.c.l.b16 %v241
      %v459 = vunpack.c.h.b16 %v241
      %v460 = vpack.c.b16 %v334, %v332
      %v461 = vpack.c.b16 %v335, %v333
      %v462 = vpack.c.b16 %v338, %v336
      %v463 = vpack.c.b16 %v339, %v337
      %v464 = vpack.c.b16 %v342, %v340
      %v465 = vpack.c.b16 %v343, %v341
      %v466 = vpack.c.b16 %v346, %v344
      %v467 = vpack.c.b16 %v347, %v345
      %v468 = vpack.c.b16 %v350, %v348
      %v469 = vpack.c.b16 %v351, %v349
      %v470 = vpack.c.b16 %v354, %v352
      %v471 = vpack.c.b16 %v355, %v353
      %v472 = vpack.c.b16 %v358, %v356
      %v473 = vpack.c.b16 %v359, %v357
      %v474 = vpack.c.b16 %v362, %v360
      %v475 = vpack.c.b16 %v363, %v361
      %v476 = vpack.c.b16 %v366, %v364
      %v477 = vpack.c.b16 %v367, %v365
      %v478 = vpack.c.b16 %v370, %v368
      %v479 = vpack.c.b16 %v371, %v369
      %v480 = vpack.c.b16 %v374, %v372
      %v481 = vpack.c.b16 %v375, %v373
      %v482 = vpack.c.b16 %v378, %v376
      %v483 = vpack.c.b16 %v379, %v377
      %v484 = vpack.c.b16 %v382, %v380
      %v485 = vpack.c.b16 %v383, %v381
      %v486 = vpack.c.b16 %v386, %v384
      %v487 = vpack.c.b16 %v387, %v385
      %v488 = vpack.c.b16 %v390, %v388
      %v489 = vpack.c.b16 %v391, %v389
      %v490 = vpack.c.b16 %v394, %v392
      %v491 = vpack.c.b16 %v395, %v393
      %v492 = vpack.c.b16 %v398, %v396
      %v493 = vpack.c.b16 %v399, %v397
      %v494 = vpack.c.b16 %v402, %v400
      %v495 = vpack.c.b16 %v403, %v401
      %v496 = vpack.c.b16 %v406, %v404
      %v497 = vpack.c.b16 %v407, %v405
      %v498 = vpack.c.b16 %v410, %v408
      %v499 = vpack.c.b16 %v411, %v409
      %v500 = vpack.c.b16 %v414, %v412
      %v501 = vpack.c.b16 %v415, %v413
      %v502 = vpack.c.b16 %v418, %v416
      %v503 = vpack.c.b16 %v419, %v417
      %v504 = vpack.c.b16 %v422, %v420
      %v505 = vpack.c.b16 %v423, %v421
      %v506 = vpack.c.b16 %v426, %v424
      %v507 = vpack.c.b16 %v427, %v425
      %v508 = vpack.c.b16 %v430, %v428
      %v509 = vpack.c.b16 %v431, %v429
      %v510 = vpack.c.b16 %v434, %v432
      %v511 = vpack.c.b16 %v435, %v433
      %v512 = vpack.c.b16 %v438, %v436
      %v513 = vpack.c.b16 %v439, %v437
      %v514 = vpack.c.b16 %v442, %v440
      %v515 = vpack.c.b16 %v443, %v441
      %v516 = vpack.c.b16 %v446, %v444
      %v517 = vpack.c.b16 %v447, %v445
      %v518 = vpack.c.b16 %v450, %v448
      %v519 = vpack.c.b16 %v451, %v449
      %v520 = vpack.c.b16 %v454, %v452
      %v521 = vpack.c.b16 %v455, %v453
      %v522 = vpack.c.b16 %v458, %v456
      %v523 = vpack.c.b16 %v459, %v457
      %v575 = vunpack.c.l.b16 %v242
      %v576 = vunpack.c.l.b16 %v243
      %v577 = vunpack.c.l.b16 %v244
      %v578 = vunpack.c.l.b16 %v245
      %v579 = vunpack.c.l.b16 %v246
      %v580 = vunpack.c.l.b16 %v247
      %v581 = vunpack.c.l.b16 %v248
      %v582 = vunpack.c.l.b16 %v249
      %v583 = vunpack.c.l.b16 %v250
      %v584 = vunpack.c.l.b16 %v251
      %v585 = vunpack.c.l.b16 %v252
      %v586 = vunpack.c.l.b16 %v253
      %v587 = vunpack.c.l.b16 %v254
      %v588 = vunpack.c.l.b16 %v255
      %v589 = vunpack.c.l.b16 %v256
      %v590 = vunpack.c.l.b16 %v257
      %v591 = vunpack.c.l.b16 %v258
      %v592 = vunpack.c.l.b16 %v259
      %v593 = vunpack.c.l.b16 %v260
      %v594 = vpack.c.b16 %v576, %v575
      %v595 = vpack.c.b16 %v578, %v577
      %v596 = vpack.c.b16 %v580, %v579
      %v597 = vpack.c.b16 %v582, %v581
      %v598 = vpack.c.b16 %v584, %v583
      %v599 = vpack.c.b16 %v586, %v585
      %v600 = vpack.c.b16 %v588, %v587
      %v601 = vpack.c.b16 %v590, %v589
      %v602 = vpack.c.b16 %v592, %v591
      %v603 = vpack.c.b16 %v593, %v593
      %vm613 = vcmask 195584
      %v615 = vsel %vm613, %v461, 0
      %v618 = vsel %vm613, %v463, 0
      %v621 = vsel %vm613, %v465, 0
      %v624 = vsel %vm613, %v467, 0
      %v627 = vsel %vm613, %v469, 0
      %v630 = vsel %vm613, %v471, 0
      %v633 = vsel %vm613, %v473, 0
      %v636 = vsel %vm613, %v475, 0
      %v639 = vsel %vm613, %v477, 0
      %v642 = vsel %vm613, %v479, 0
      %v645 = vsel %vm613, %v481, 0
      %v648 = vsel %vm613, %v483, 0
      %v651 = vsel %vm613, %v485, 0
      %v654 = vsel %vm613, %v487, 0
      %v657 = vsel %vm613, %v489, 0
      %v660 = vsel %vm613, %v491, 0
      %v663 = vsel %vm613, %v493, 0
      %v666 = vsel %vm613, %v495, 0
      %v669 = vsel %vm613, %v497, 0
      %v672 = vsel %vm613, %v499, 0
      %v675 = vsel %vm613, %v501, 0
      %v678 = vsel %vm613, %v503, 0
      %v681 = vsel %vm613, %v505, 0
      %v684 = vsel %vm613, %v507, 0
      %v687 = vsel %vm613, %v509, 0
      %v690 = vsel %vm613, %v511, 0
      %v693 = vsel %vm613, %v513, 0
      %v696 = vsel %vm613, %v515, 0
      %v699 = vsel %vm613, %v517, 0
      %v702 = vsel %vm613, %v519, 0
      %v705 = vsel %vm613, %v521, 0
      %v708 = vsel %vm613, %v523, 0
      %vm710 = vcmask 1043456
      %v712 = vsel %vm710, %v603, 0
      %714 = vmatprep.subr.bf16.mxu0 0
      %715 = vmatpush1.bf16.msra.mxu0 %v601
      %716 = vmatprep.subr.bf16.mxu0 0
      %717 = vmatpush1.bf16.msra.mxu0 %v600
      %718 = vmatprep.subr.bf16.mxu0 0
      %719 = vmatpush1.bf16.msra.mxu0 %v599
      %720 = vmatprep.subr.bf16.mxu0 0
      %721 = vmatpush1.bf16.msra.mxu0 %v598
      %722 = vmatprep.subr.bf16.mxu0 0
      %723 = vmatpush1.bf16.msra.mxu0 %v597
      %724 = vmatprep.subr.bf16.mxu0 0
      %725 = vmatpush1.bf16.msra.mxu0 %v596
      %726 = vmatprep.subr.bf16.mxu0 0
      %727 = vmatpush1.bf16.msra.mxu0 %v595
      %728 = vmatprep.subr.bf16.mxu0 0
      %729 = vmatpush1.bf16.msra.mxu0 %v594
      %730 = vmatprep.subr.bf16.mxu0 0
      %731 = vmatpush2.bf16.msra.mxu0 0
      %732 = vmatprep.subr.bf16.mxu0 0
      %733 = vmatpush2.bf16.msra.mxu0 0
      %734 = vmatprep.subr.bf16.mxu0 0
      %735 = vmatpush2.bf16.msra.mxu0 0
      %736 = vmatprep.subr.bf16.mxu0 0
      %737 = vmatpush2.bf16.msra.mxu0 0
      %738 = vmatprep.subr.bf16.mxu0 0
      %739 = vmatpush2.bf16.msra.mxu0 0
      %740 = vmatprep.subr.bf16.mxu0 0
      %741 = vmatpush2.bf16.msra.mxu0 0
      %742 = vmatprep.subr.bf16.mxu0 0
      %743 = vmatpush2.bf16.msra.mxu0 %v712
      %744 = vmatprep.subr.bf16.mxu0 0
      %745 = vmatpush2.bf16.msra.mxu0 %v602
      %746 = vmatprep.mubr.bf16.mxu0 %v615
      %747 = vmatmul.mubr.bf16.gmra.mxu0 %v460
      %v748 = vpop.f32.mrf.mxu0
      %v749 = vadd.f32 %v266, %v748
      %v750 = vpop.f32.mrf.mxu0
      %v751 = vpop.f32.mrf.mxu0
      %v752 = vadd.f32 %v266, %v751
      %v753 = vpop.f32.mrf.mxu0
      %754 = vmatprep.mubr.bf16.mxu0 %v618
      %755 = vmatmul.mubr.bf16.gmra.mxu0 %v462
      %v756 = vpop.f32.mrf.mxu0
      %v757 = vadd.f32 %v266, %v756
      %v758 = vpop.f32.mrf.mxu0
      %v759 = vpop.f32.mrf.mxu0
      %v760 = vadd.f32 %v266, %v759
      %v761 = vpop.f32.mrf.mxu0
      %762 = vmatprep.mubr.bf16.mxu0 %v621
      %763 = vmatmul.mubr.bf16.gmra.mxu0 %v464
      %v764 = vpop.f32.mrf.mxu0
      %v765 = vadd.f32 %v266, %v764
      %v766 = vpop.f32.mrf.mxu0
      %v767 = vpop.f32.mrf.mxu0
      %v768 = vadd.f32 %v266, %v767
      %v769 = vpop.f32.mrf.mxu0
      %770 = vmatprep.mubr.bf16.mxu0 %v624
      %771 = vmatmul.mubr.bf16.gmra.mxu0 %v466
      %v772 = vpop.f32.mrf.mxu0
      %v773 = vadd.f32 %v266, %v772
      %v774 = vpop.f32.mrf.mxu0
      %v775 = vpop.f32.mrf.mxu0
      %v776 = vadd.f32 %v266, %v775
      %v777 = vpop.f32.mrf.mxu0
      %778 = vmatprep.mubr.bf16.mxu0 %v627
      %779 = vmatmul.mubr.bf16.gmra.mxu0 %v468
      %v780 = vpop.f32.mrf.mxu0
      %v781 = vadd.f32 %v266, %v780
      %v782 = vpop.f32.mrf.mxu0
      %v783 = vpop.f32.mrf.mxu0
      %v784 = vadd.f32 %v266, %v783
      %v785 = vpop.f32.mrf.mxu0
      %786 = vmatprep.mubr.bf16.mxu0 %v630
      %787 = vmatmul.mubr.bf16.gmra.mxu0 %v470
      %v788 = vpop.f32.mrf.mxu0
      %v789 = vadd.f32 %v266, %v788
      %v790 = vpop.f32.mrf.mxu0
      %v791 = vpop.f32.mrf.mxu0
      %v792 = vadd.f32 %v266, %v791
      %v793 = vpop.f32.mrf.mxu0
      %794 = vmatprep.mubr.bf16.mxu0 %v633
      %795 = vmatmul.mubr.bf16.gmra.mxu0 %v472
      %v796 = vpop.f32.mrf.mxu0
      %v797 = vadd.f32 %v266, %v796
      %v798 = vpop.f32.mrf.mxu0
      %v799 = vpop.f32.mrf.mxu0
      %v800 = vadd.f32 %v266, %v799
      %v801 = vpop.f32.mrf.mxu0
      %802 = vmatprep.mubr.bf16.mxu0 %v636
      %803 = vmatmul.mubr.bf16.gmra.mxu0 %v474
      %v804 = vpop.f32.mrf.mxu0
      %v805 = vadd.f32 %v266, %v804
      %v806 = vpop.f32.mrf.mxu0
      %v807 = vpop.f32.mrf.mxu0
      %v808 = vadd.f32 %v266, %v807
      %v809 = vpop.f32.mrf.mxu0
      %810 = vmatprep.mubr.bf16.mxu0 %v639
      %811 = vmatmul.mubr.bf16.gmra.mxu0 %v476
      %v812 = vpop.f32.mrf.mxu0
      %v813 = vadd.f32 %v266, %v812
      %v814 = vpop.f32.mrf.mxu0
      %v815 = vpop.f32.mrf.mxu0
      %v816 = vadd.f32 %v266, %v815
      %v817 = vpop.f32.mrf.mxu0
      %818 = vmatprep.mubr.bf16.mxu0 %v642
      %819 = vmatmul.mubr.bf16.gmra.mxu0 %v478
      %v820 = vpop.f32.mrf.mxu0
      %v821 = vadd.f32 %v266, %v820
      %v822 = vpop.f32.mrf.mxu0
      %v823 = vpop.f32.mrf.mxu0
      %v824 = vadd.f32 %v266, %v823
      %v825 = vpop.f32.mrf.mxu0
      %826 = vmatprep.mubr.bf16.mxu0 %v645
      %827 = vmatmul.mubr.bf16.gmra.mxu0 %v480
      %v828 = vpop.f32.mrf.mxu0
      %v829 = vadd.f32 %v266, %v828
      %v830 = vpop.f32.mrf.mxu0
      %v831 = vpop.f32.mrf.mxu0
      %v832 = vadd.f32 %v266, %v831
      %v833 = vpop.f32.mrf.mxu0
      %834 = vmatprep.mubr.bf16.mxu0 %v648
      %835 = vmatmul.mubr.bf16.gmra.mxu0 %v482
      %v836 = vpop.f32.mrf.mxu0
      %v837 = vadd.f32 %v266, %v836
      %v838 = vpop.f32.mrf.mxu0
      %v839 = vpop.f32.mrf.mxu0
      %v840 = vadd.f32 %v266, %v839
      %v841 = vpop.f32.mrf.mxu0
      %842 = vmatprep.mubr.bf16.mxu0 %v651
      %843 = vmatmul.mubr.bf16.gmra.mxu0 %v484
      %v844 = vpop.f32.mrf.mxu0
      %v845 = vadd.f32 %v266, %v844
      %v846 = vpop.f32.mrf.mxu0
      %v847 = vpop.f32.mrf.mxu0
      %v848 = vadd.f32 %v266, %v847
      %v849 = vpop.f32.mrf.mxu0
      %850 = vmatprep.mubr.bf16.mxu0 %v654
      %851 = vmatmul.mubr.bf16.gmra.mxu0 %v486
      %v852 = vpop.f32.mrf.mxu0
      %v853 = vadd.f32 %v266, %v852
      %v854 = vpop.f32.mrf.mxu0
      %v855 = vpop.f32.mrf.mxu0
      %v856 = vadd.f32 %v266, %v855
      %v857 = vpop.f32.mrf.mxu0
      %858 = vmatprep.mubr.bf16.mxu0 %v657
      %859 = vmatmul.mubr.bf16.gmra.mxu0 %v488
      %v860 = vpop.f32.mrf.mxu0
      %v861 = vadd.f32 %v266, %v860
      %v862 = vpop.f32.mrf.mxu0
      %v863 = vpop.f32.mrf.mxu0
      %v864 = vadd.f32 %v266, %v863
      %v865 = vpop.f32.mrf.mxu0
      %866 = vmatprep.mubr.bf16.mxu0 %v660
      %867 = vmatmul.mubr.bf16.gmra.mxu0 %v490
      %v868 = vpop.f32.mrf.mxu0
      %v869 = vadd.f32 %v266, %v868
      %v870 = vpop.f32.mrf.mxu0
      %v871 = vpop.f32.mrf.mxu0
      %v872 = vadd.f32 %v266, %v871
      %v873 = vpop.f32.mrf.mxu0
      %874 = vmatprep.mubr.bf16.mxu0 %v663
      %875 = vmatmul.mubr.bf16.gmra.mxu0 %v492
      %v876 = vpop.f32.mrf.mxu0
      %v877 = vadd.f32 %v266, %v876
      %v878 = vpop.f32.mrf.mxu0
      %v879 = vpop.f32.mrf.mxu0
      %v880 = vadd.f32 %v266, %v879
      %v881 = vpop.f32.mrf.mxu0
      %882 = vmatprep.mubr.bf16.mxu0 %v666
      %883 = vmatmul.mubr.bf16.gmra.mxu0 %v494
      %v884 = vpop.f32.mrf.mxu0
      %v885 = vadd.f32 %v266, %v884
      %v886 = vpop.f32.mrf.mxu0
      %v887 = vpop.f32.mrf.mxu0
      %v888 = vadd.f32 %v266, %v887
      %v889 = vpop.f32.mrf.mxu0
      %890 = vmatprep.mubr.bf16.mxu0 %v669
      %891 = vmatmul.mubr.bf16.gmra.mxu0 %v496
      %v892 = vpop.f32.mrf.mxu0
      %v893 = vadd.f32 %v266, %v892
      %v894 = vpop.f32.mrf.mxu0
      %v895 = vpop.f32.mrf.mxu0
      %v896 = vadd.f32 %v266, %v895
      %v897 = vpop.f32.mrf.mxu0
      %898 = vmatprep.mubr.bf16.mxu0 %v672
      %899 = vmatmul.mubr.bf16.gmra.mxu0 %v498
      %v900 = vpop.f32.mrf.mxu0
      %v901 = vadd.f32 %v266, %v900
      %v902 = vpop.f32.mrf.mxu0
      %v903 = vpop.f32.mrf.mxu0
      %v904 = vadd.f32 %v266, %v903
      %v905 = vpop.f32.mrf.mxu0
      %906 = vmatprep.mubr.bf16.mxu0 %v675
      %907 = vmatmul.mubr.bf16.gmra.mxu0 %v500
      %v908 = vpop.f32.mrf.mxu0
      %v909 = vadd.f32 %v266, %v908
      %v910 = vpop.f32.mrf.mxu0
      %v911 = vpop.f32.mrf.mxu0
      %v912 = vadd.f32 %v266, %v911
      %v913 = vpop.f32.mrf.mxu0
      %914 = vmatprep.mubr.bf16.mxu0 %v678
      %915 = vmatmul.mubr.bf16.gmra.mxu0 %v502
      %v916 = vpop.f32.mrf.mxu0
      %v917 = vadd.f32 %v266, %v916
      %v918 = vpop.f32.mrf.mxu0
      %v919 = vpop.f32.mrf.mxu0
      %v920 = vadd.f32 %v266, %v919
      %v921 = vpop.f32.mrf.mxu0
      %922 = vmatprep.mubr.bf16.mxu0 %v681
      %923 = vmatmul.mubr.bf16.gmra.mxu0 %v504
      %v924 = vpop.f32.mrf.mxu0
      %v925 = vadd.f32 %v266, %v924
      %v926 = vpop.f32.mrf.mxu0
      %v927 = vpop.f32.mrf.mxu0
      %v928 = vadd.f32 %v266, %v927
      %v929 = vpop.f32.mrf.mxu0
      %930 = vmatprep.mubr.bf16.mxu0 %v684
      %931 = vmatmul.mubr.bf16.gmra.mxu0 %v506
      %v932 = vpop.f32.mrf.mxu0
      %v933 = vadd.f32 %v266, %v932
      %v934 = vpop.f32.mrf.mxu0
      %v935 = vpop.f32.mrf.mxu0
      %v936 = vadd.f32 %v266, %v935
      %v937 = vpop.f32.mrf.mxu0
      %938 = vmatprep.mubr.bf16.mxu0 %v687
      %939 = vmatmul.mubr.bf16.gmra.mxu0 %v508
      %v940 = vpop.f32.mrf.mxu0
      %v941 = vadd.f32 %v266, %v940
      %v942 = vpop.f32.mrf.mxu0
      %v943 = vpop.f32.mrf.mxu0
      %v944 = vadd.f32 %v266, %v943
      %v945 = vpop.f32.mrf.mxu0
      %946 = vmatprep.mubr.bf16.mxu0 %v690
      %947 = vmatmul.mubr.bf16.gmra.mxu0 %v510
      %v948 = vpop.f32.mrf.mxu0
      %v949 = vadd.f32 %v266, %v948
      %v950 = vpop.f32.mrf.mxu0
      %v951 = vpop.f32.mrf.mxu0
      %v952 = vadd.f32 %v266, %v951
      %v953 = vpop.f32.mrf.mxu0
      %954 = vmatprep.mubr.bf16.mxu0 %v693
      %955 = vmatmul.mubr.bf16.gmra.mxu0 %v512
      %v956 = vpop.f32.mrf.mxu0
      %v957 = vadd.f32 %v266, %v956
      %v958 = vpop.f32.mrf.mxu0
      %v959 = vpop.f32.mrf.mxu0
      %v960 = vadd.f32 %v266, %v959
      %v961 = vpop.f32.mrf.mxu0
      %962 = vmatprep.mubr.bf16.mxu0 %v696
      %963 = vmatmul.mubr.bf16.gmra.mxu0 %v514
      %v964 = vpop.f32.mrf.mxu0
      %v965 = vadd.f32 %v266, %v964
      %v966 = vpop.f32.mrf.mxu0
      %v967 = vpop.f32.mrf.mxu0
      %v968 = vadd.f32 %v266, %v967
      %v969 = vpop.f32.mrf.mxu0
      %970 = vmatprep.mubr.bf16.mxu0 %v699
      %971 = vmatmul.mubr.bf16.gmra.mxu0 %v516
      %v972 = vpop.f32.mrf.mxu0
      %v973 = vadd.f32 %v266, %v972
      %v974 = vpop.f32.mrf.mxu0
      %v975 = vpop.f32.mrf.mxu0
      %v976 = vadd.f32 %v266, %v975
      %v977 = vpop.f32.mrf.mxu0
      %978 = vmatprep.mubr.bf16.mxu0 %v702
      %979 = vmatmul.mubr.bf16.gmra.mxu0 %v518
      %v980 = vpop.f32.mrf.mxu0
      %v981 = vadd.f32 %v266, %v980
      %v982 = vpop.f32.mrf.mxu0
      %v983 = vpop.f32.mrf.mxu0
      %v984 = vadd.f32 %v266, %v983
      %v985 = vpop.f32.mrf.mxu0
      %986 = vmatprep.mubr.bf16.mxu0 %v705
      %987 = vmatmul.mubr.bf16.gmra.mxu0 %v520
      %v988 = vpop.f32.mrf.mxu0
      %v989 = vadd.f32 %v266, %v988
      %v990 = vpop.f32.mrf.mxu0
      %v991 = vpop.f32.mrf.mxu0
      %v992 = vadd.f32 %v266, %v991
      %v993 = vpop.f32.mrf.mxu0
      %994 = vmatprep.mubr.bf16.mxu0 %v708
      %995 = vmatmul.mubr.bf16.gmra.mxu0 %v522
      %v996 = vpop.f32.mrf.mxu0
      %v997 = vadd.f32 %v266, %v996
      %v998 = vpop.f32.mrf.mxu0
      %v999 = vpop.f32.mrf.mxu0
      %v1000 = vadd.f32 %v266, %v999
      %v1001 = vpop.f32.mrf.mxu0
      %1002 = vdwg.mxu0
      %v1003 = vmax.f32 %v749, 0.0
      %v1004 = vmax.f32 %v752, 0.0
      %v1005 = vmax.f32 %v757, 0.0
      %v1006 = vmax.f32 %v760, 0.0
      %v1007 = vmax.f32 %v765, 0.0
      %v1008 = vmax.f32 %v768, 0.0
      %v1009 = vmax.f32 %v773, 0.0
      %v1010 = vmax.f32 %v776, 0.0
      %v1011 = vmax.f32 %v781, 0.0
      %v1012 = vmax.f32 %v784, 0.0
      %v1013 = vmax.f32 %v789, 0.0
      %v1014 = vmax.f32 %v792, 0.0
      %v1015 = vmax.f32 %v797, 0.0
      %v1016 = vmax.f32 %v800, 0.0
      %v1017 = vmax.f32 %v805, 0.0
      %v1018 = vmax.f32 %v808, 0.0
      %v1019 = vmax.f32 %v813, 0.0
      %v1020 = vmax.f32 %v816, 0.0
      %v1021 = vmax.f32 %v821, 0.0
      %v1022 = vmax.f32 %v824, 0.0
      %v1023 = vmax.f32 %v829, 0.0
      %v1024 = vmax.f32 %v832, 0.0
      %v1025 = vmax.f32 %v837, 0.0
      %v1026 = vmax.f32 %v840, 0.0
      %v1027 = vmax.f32 %v845, 0.0
      %v1028 = vmax.f32 %v848, 0.0
      %v1029 = vmax.f32 %v853, 0.0
      %v1030 = vmax.f32 %v856, 0.0
      %v1031 = vmax.f32 %v861, 0.0
      %v1032 = vmax.f32 %v864, 0.0
      %v1033 = vmax.f32 %v869, 0.0
      %v1034 = vmax.f32 %v872, 0.0
      %v1035 = vmax.f32 %v877, 0.0
      %v1036 = vmax.f32 %v880, 0.0
      %v1037 = vmax.f32 %v885, 0.0
      %v1038 = vmax.f32 %v888, 0.0
      %v1039 = vmax.f32 %v893, 0.0
      %v1040 = vmax.f32 %v896, 0.0
      %v1041 = vmax.f32 %v901, 0.0
      %v1042 = vmax.f32 %v904, 0.0
      %v1043 = vmax.f32 %v909, 0.0
      %v1044 = vmax.f32 %v912, 0.0
      %v1045 = vmax.f32 %v917, 0.0
      %v1046 = vmax.f32 %v920, 0.0
      %v1047 = vmax.f32 %v925, 0.0
      %v1048 = vmax.f32 %v928, 0.0
      %v1049 = vmax.f32 %v933, 0.0
      %v1050 = vmax.f32 %v936, 0.0
      %v1051 = vmax.f32 %v941, 0.0
      %v1052 = vmax.f32 %v944, 0.0
      %v1053 = vmax.f32 %v949, 0.0
      %v1054 = vmax.f32 %v952, 0.0
      %v1055 = vmax.f32 %v957, 0.0
      %v1056 = vmax.f32 %v960, 0.0
      %v1057 = vmax.f32 %v965, 0.0
      %v1058 = vmax.f32 %v968, 0.0
      %v1059 = vmax.f32 %v973, 0.0
      %v1060 = vmax.f32 %v976, 0.0
      %v1061 = vmax.f32 %v981, 0.0
      %v1062 = vmax.f32 %v984, 0.0
      %v1063 = vmax.f32 %v989, 0.0
      %v1064 = vmax.f32 %v992, 0.0
      %v1065 = vmax.f32 %v997, 0.0
      %v1066 = vmax.f32 %v1000, 0.0
      %vm1067 = vcmask 130048
      %1068 = vst.msk [vmem:[%s175] sm:$0xff] %vm1067, %v1003
      %1069 = vst.msk [vmem:[%s175 + $0x8] sm:$0xff] %vm1067, %v1004
      %1070 = vst.msk [vmem:[%s175 + $0x10] sm:$0xff] %vm1067, %v1005
      %1071 = vst.msk [vmem:[%s175 + $0x18] sm:$0xff] %vm1067, %v1006
      %1072 = vst.msk [vmem:[%s175 + $0x20] sm:$0xff] %vm1067, %v1007
      %1073 = vst.msk [vmem:[%s175 + $0x28] sm:$0xff] %vm1067, %v1008
      %1074 = vst.msk [vmem:[%s175 + $0x30] sm:$0xff] %vm1067, %v1009
      %1075 = vst.msk [vmem:[%s175 + $0x38] sm:$0xff] %vm1067, %v1010
      %1076 = vst.msk [vmem:[%s175 + $0x40] sm:$0xff] %vm1067, %v1011
      %1077 = vst.msk [vmem:[%s175 + $0x48] sm:$0xff] %vm1067, %v1012
      %1078 = vst.msk [vmem:[%s175 + $0x50] sm:$0xff] %vm1067, %v1013
      %1079 = vst.msk [vmem:[%s175 + $0x58] sm:$0xff] %vm1067, %v1014
      %1080 = vst.msk [vmem:[%s175 + $0x60] sm:$0xff] %vm1067, %v1015
      %1081 = vst.msk [vmem:[%s175 + $0x68] sm:$0xff] %vm1067, %v1016
      %1082 = vst.msk [vmem:[%s175 + $0x70] sm:$0xff] %vm1067, %v1017
      %1083 = vst.msk [vmem:[%s175 + $0x78] sm:$0xff] %vm1067, %v1018
      %1084 = vst.msk [vmem:[%s175 + $0x80] sm:$0xff] %vm1067, %v1019
      %1085 = vst.msk [vmem:[%s175 + $0x88] sm:$0xff] %vm1067, %v1020
      %1086 = vst.msk [vmem:[%s175 + $0x90] sm:$0xff] %vm1067, %v1021
      %1087 = vst.msk [vmem:[%s175 + $0x98] sm:$0xff] %vm1067, %v1022
      %1088 = vst.msk [vmem:[%s175 + $0xa0] sm:$0xff] %vm1067, %v1023
      %1089 = vst.msk [vmem:[%s175 + $0xa8] sm:$0xff] %vm1067, %v1024
      %1090 = vst.msk [vmem:[%s175 + $0xb0] sm:$0xff] %vm1067, %v1025
      %1091 = vst.msk [vmem:[%s175 + $0xb8] sm:$0xff] %vm1067, %v1026
      %1092 = vst.msk [vmem:[%s175 + $0xc0] sm:$0xff] %vm1067, %v1027
      %1093 = vst.msk [vmem:[%s175 + $0xc8] sm:$0xff] %vm1067, %v1028
      %1094 = vst.msk [vmem:[%s175 + $0xd0] sm:$0xff] %vm1067, %v1029
      %1095 = vst.msk [vmem:[%s175 + $0xd8] sm:$0xff] %vm1067, %v1030
      %1096 = vst.msk [vmem:[%s175 + $0xe0] sm:$0xff] %vm1067, %v1031
      %1097 = vst.msk [vmem:[%s175 + $0xe8] sm:$0xff] %vm1067, %v1032
      %1098 = vst.msk [vmem:[%s175 + $0xf0] sm:$0xff] %vm1067, %v1033
      %1099 = vst.msk [vmem:[%s175 + $0xf8] sm:$0xff] %vm1067, %v1034
      %1100 = vst.msk [vmem:[%s175 + $0x100] sm:$0xff] %vm1067, %v1035
      %1101 = vst.msk [vmem:[%s175 + $0x108] sm:$0xff] %vm1067, %v1036
      %1102 = vst.msk [vmem:[%s175 + $0x110] sm:$0xff] %vm1067, %v1037
      %1103 = vst.msk [vmem:[%s175 + $0x118] sm:$0xff] %vm1067, %v1038
      %1104 = vst.msk [vmem:[%s175 + $0x120] sm:$0xff] %vm1067, %v1039
      %1105 = vst.msk [vmem:[%s175 + $0x128] sm:$0xff] %vm1067, %v1040
      %1106 = vst.msk [vmem:[%s175 + $0x130] sm:$0xff] %vm1067, %v1041
      %1107 = vst.msk [vmem:[%s175 + $0x138] sm:$0xff] %vm1067, %v1042
      %1108 = vst.msk [vmem:[%s175 + $0x140] sm:$0xff] %vm1067, %v1043
      %1109 = vst.msk [vmem:[%s175 + $0x148] sm:$0xff] %vm1067, %v1044
      %1110 = vst.msk [vmem:[%s175 + $0x150] sm:$0xff] %vm1067, %v1045
      %1111 = vst.msk [vmem:[%s175 + $0x158] sm:$0xff] %vm1067, %v1046
      %1112 = vst.msk [vmem:[%s175 + $0x160] sm:$0xff] %vm1067, %v1047
      %1113 = vst.msk [vmem:[%s175 + $0x168] sm:$0xff] %vm1067, %v1048
      %1114 = vst.msk [vmem:[%s175 + $0x170] sm:$0xff] %vm1067, %v1049
      %1115 = vst.msk [vmem:[%s175 + $0x178] sm:$0xff] %vm1067, %v1050
      %1116 = vst.msk [vmem:[%s175 + $0x180] sm:$0xff] %vm1067, %v1051
      %1117 = vst.msk [vmem:[%s175 + $0x188] sm:$0xff] %vm1067, %v1052
      %1118 = vst.msk [vmem:[%s175 + $0x190] sm:$0xff] %vm1067, %v1053
      %1119 = vst.msk [vmem:[%s175 + $0x198] sm:$0xff] %vm1067, %v1054
      %1120 = vst.msk [vmem:[%s175 + $0x1a0] sm:$0xff] %vm1067, %v1055
      %1121 = vst.msk [vmem:[%s175 + $0x1a8] sm:$0xff] %vm1067, %v1056
      %1122 = vst.msk [vmem:[%s175 + $0x1b0] sm:$0xff] %vm1067, %v1057
      %1123 = vst.msk [vmem:[%s175 + $0x1b8] sm:$0xff] %vm1067, %v1058
      %1124 = vst.msk [vmem:[%s175 + $0x1c0] sm:$0xff] %vm1067, %v1059
      %1125 = vst.msk [vmem:[%s175 + $0x1c8] sm:$0xff] %vm1067, %v1060
      %1126 = vst.msk [vmem:[%s175 + $0x1d0] sm:$0xff] %vm1067, %v1061
      %1127 = vst.msk [vmem:[%s175 + $0x1d8] sm:$0xff] %vm1067, %v1062
      %1128 = vst.msk [vmem:[%s175 + $0x1e0] sm:$0xff] %vm1067, %v1063
      %1129 = vst.msk [vmem:[%s175 + $0x1e8] sm:$0xff] %vm1067, %v1064
      %1130 = vst.msk [vmem:[%s175 + $0x1f0] sm:$0xff] %vm1067, %v1065
      %1131 = vst.msk [vmem:[%s175 + $0x1f8] sm:$0xff] %vm1067, %v1066
      %s1132 = smul.u32 64, %s14
      %p1133 = scmp.lt.s32.totalorder %s1132, 255
      %s1134 = scalar_select %p1133, %s1132, 255
      %s1135 = smul.addr %s1134, 8
      %s1136 = scalar_lea.vmem %s3, %s1135
      // Predicated region
      $region33: #{forward.55} parent=31 // pred_check
        %p1137 = pneg %p100
      $region34: #{forward.55} parent=31 // pred_check_branch
        %1139 = sbr.rel (%p1137) target = $region36
      $region35: #{forward.55} parent=31 // pred_region
        %s1140 = smul.u32 64, %s14
      $region36: #{forward.55} parent=31 // pred_fallthru
        _
    $region32: #{forward.55} parent=5 // pred_fallthru
      _
    %p1141 = scmp.le.s32.totalorder 2, %s9
    // Predicated region
    $region37: #{forward.55} parent=5 // pred_check
      %p1142 = pneg %p1141
    $region38: #{forward.55} parent=5 // pred_check_branch
      %1144 = sbr.rel (%p1142) target = $region40
    $region39: #{forward.55} parent=5 // pred_region
      %s1145 = ssub.s32 %s9, 2
      // Predicated region
      $region41: #{forward.55} parent=39 // pred_check
        %p1146 = pneg %p106
      $region42: #{forward.55} parent=39 // pred_check_branch
        %1148 = sbr.rel (%p1146) target = $region44
      $region43: #{forward.55} parent=39 // pred_region
        %s1149 = smul.u32 64, %s15
        %p1150 = scmp.lt.s32.totalorder %s1149, 255
        %s1151 = scalar_select %p1150, %s1149, 255
        %s1152 = smul.addr %s1151, 8
        %s1153 = scalar_lea.vmem %s3, %s1152
      $region44: #{forward.55} parent=39 // pred_fallthru
        _
    $region40: #{forward.55} parent=5 // pred_fallthru
      _
  $region6: #{forward.55} parent=0 // loop_footer
    %s13 = sadd.s32 1, %s9
  $region7: #{forward.55} parent=0 // loop_footer_branch
    %8 = sbr.rel target = $region3
  $region8: #{forward.55} parent=0 // loop_exit
    _

// kernel: forward.56
$region0: #{forward.56}
  #allocation0 [shape = 'u32[]', space=smem, size = 0x4, offset = 0x4, fixed_abs, tag = 'smem constant byte address 0x4 - core index']
  #allocation1 [shape = 'u32[144,128]{1,0:T(1,128)}', space=vmem, size = 0x12000, scoped, tag = 'internal scratch']
  %s0 = inlined_call_operand.vmem [shape: f32[9,64,128], index: 0, kind: input, shape index: {}]
  %s1 = inlined_call_operand.vmem [shape: f32[64,128], index: 1, kind: output, shape index: {}]
  %s2 = sld [smem:[#allocation0]]
  $region14: #{forward.56} parent=0
    _
  %s4 = ssub.s32 1, %s2
  %s5 = scalar_select 0, %s4, %s2
  // Predicated region
  $region2: #{forward.56} parent=0 // pred_check
    _
  $region3: #{forward.56} parent=0 // pred_check_branch
    %7 = sbr.rel (0) target = $region5
  $region4: #{forward.56} parent=0 // pred_region
    _
  $region5: #{forward.56} parent=0 // pred_fallthru
    _
  %v8 = vld [vmem:[%s0] sm:$0xff]
  %v9 = vld [vmem:[%s0 + $0x8] sm:$0xff]
  %v10 = vld [vmem:[%s0 + $0x10] sm:$0xff]
  %v11 = vld [vmem:[%s0 + $0x18] sm:$0xff]
  %v12 = vld [vmem:[%s0 + $0x20] sm:$0xff]
  %v13 = vld [vmem:[%s0 + $0x28] sm:$0xff]
  %v14 = vld [vmem:[%s0 + $0x30] sm:$0xff]
  %v15 = vld [vmem:[%s0 + $0x38] sm:$0xff]
  %v16 = vld [vmem:[%s0 + $0x40] sm:$0xff]
  %v17 = vld [vmem:[%s0 + $0x48] sm:$0xff]
  %v18 = vld [vmem:[%s0 + $0x50] sm:$0xff]
  %v19 = vld [vmem:[%s0 + $0x58] sm:$0xff]
  %v20 = vld [vmem:[%s0 + $0x60] sm:$0xff]
  %v21 = vld [vmem:[%s0 + $0x68] sm:$0xff]
  %v22 = vld [vmem:[%s0 + $0x70] sm:$0xff]
  %v23 = vld [vmem:[%s0 + $0x78] sm:$0xff]
  %v24 = vld [vmem:[%s0 + $0x80] sm:$0xff]
  %v25 = vld [vmem:[%s0 + $0x88] sm:$0xff]
  %v26 = vld [vmem:[%s0 + $0x90] sm:$0xff]
  %v27 = vld [vmem:[%s0 + $0x98] sm:$0xff]
  %v28 = vld [vmem:[%s0 + $0xa0] sm:$0xff]
  %v29 = vld [vmem:[%s0 + $0xa8] sm:$0xff]
  %v30 = vld [vmem:[%s0 + $0xb0] sm:$0xff]
  %v31 = vld [vmem:[%s0 + $0xb8] sm:$0xff]
  %v32 = vld [vmem:[%s0 + $0xc0] sm:$0xff]
  %v33 = vld [vmem:[%s0 + $0xc8] sm:$0xff]
  %v34 = vld [vmem:[%s0 + $0xd0] sm:$0xff]
  %v35 = vld [vmem:[%s0 + $0xd8] sm:$0xff]
  %v36 = vld [vmem:[%s0 + $0xe0] sm:$0xff]
  %v37 = vld [vmem:[%s0 + $0xe8] sm:$0xff]
  %v38 = vld [vmem:[%s0 + $0xf0] sm:$0xff]
  %v39 = vld [vmem:[%s0 + $0xf8] sm:$0xff]
  %v40 = vld [vmem:[%s0 + $0x100] sm:$0xff]
  %v41 = vld [vmem:[%s0 + $0x108] sm:$0xff]
  %v42 = vld [vmem:[%s0 + $0x110] sm:$0xff]
  %v43 = vld [vmem:[%s0 + $0x118] sm:$0xff]
  %v44 = vld [vmem:[%s0 + $0x120] sm:$0xff]
  %v45 = vld [vmem:[%s0 + $0x128] sm:$0xff]
  %v46 = vld [vmem:[%s0 + $0x130] sm:$0xff]
  %v47 = vld [vmem:[%s0 + $0x138] sm:$0xff]
  %v48 = vld [vmem:[%s0 + $0x140] sm:$0xff]
  %v49 = vld [vmem:[%s0 + $0x148] sm:$0xff]
  %v50 = vld [vmem:[%s0 + $0x150] sm:$0xff]
  %v51 = vld [vmem:[%s0 + $0x158] sm:$0xff]
  %v52 = vld [vmem:[%s0 + $0x160] sm:$0xff]
  %v53 = vld [vmem:[%s0 + $0x168] sm:$0xff]
  %v54 = vld [vmem:[%s0 + $0x170] sm:$0xff]
  %v55 = vld [vmem:[%s0 + $0x178] sm:$0xff]
  %v56 = vld [vmem:[%s0 + $0x180] sm:$0xff]
  %v57 = vld [vmem:[%s0 + $0x188] sm:$0xff]
  %v58 = vld [vmem:[%s0 + $0x190] sm:$0xff]
  %v59 = vld [vmem:[%s0 + $0x198] sm:$0xff]
  %v60 = vld [vmem:[%s0 + $0x1a0] sm:$0xff]
  %v61 = vld [vmem:[%s0 + $0x1a8] sm:$0xff]
  %v62 = vld [vmem:[%s0 + $0x1b0] sm:$0xff]
  %v63 = vld [vmem:[%s0 + $0x1b8] sm:$0xff]
  %v64 = vld [vmem:[%s0 + $0x1c0] sm:$0xff]
  %v65 = vld [vmem:[%s0 + $0x1c8] sm:$0xff]
  %v66 = vld [vmem:[%s0 + $0x1d0] sm:$0xff]
  %v67 = vld [vmem:[%s0 + $0x1d8] sm:$0xff]
  %v68 = vld [vmem:[%s0 + $0x1e0] sm:$0xff]
  %v69 = vld [vmem:[%s0 + $0x1e8] sm:$0xff]
  %v70 = vld [vmem:[%s0 + $0x1f0] sm:$0xff]
  %v71 = vld [vmem:[%s0 + $0x1f8] sm:$0xff]
  %v72 = vld [vmem:[%s0 + $0x200] sm:$0xff]
  %v73 = vld [vmem:[%s0 + $0x208] sm:$0xff]
  %v74 = vld [vmem:[%s0 + $0x210] sm:$0xff]
  %v75 = vld [vmem:[%s0 + $0x218] sm:$0xff]
  %v76 = vld [vmem:[%s0 + $0x220] sm:$0xff]
  %v77 = vld [vmem:[%s0 + $0x228] sm:$0xff]
  %v78 = vld [vmem:[%s0 + $0x230] sm:$0xff]
  %v79 = vld [vmem:[%s0 + $0x238] sm:$0xff]
  %v80 = vmax.f32 %v8, %v16
  %v81 = vmax.f32 %v80, %v24
  %v82 = vmax.f32 %v81, %v32
  %v83 = vmax.f32 %v82, %v40
  %v84 = vmax.f32 %v83, %v48
  %v85 = vmax.f32 %v84, %v56
  %v86 = vmax.f32 %v85, %v64
  %v87 = vmax.f32 %v86, %v72
  %v88 = vmax.f32 %v9, %v17
  %v89 = vmax.f32 %v88, %v25
  %v90 = vmax.f32 %v89, %v33
  %v91 = vmax.f32 %v90, %v41
  %v92 = vmax.f32 %v91, %v49
  %v93 = vmax.f32 %v92, %v57
  %v94 = vmax.f32 %v93, %v65
  %v95 = vmax.f32 %v94, %v73
  %v96 = vmax.f32 %v10, %v18
  %v97 = vmax.f32 %v96, %v26
  %v98 = vmax.f32 %v97, %v34
  %v99 = vmax.f32 %v98, %v42
  %v100 = vmax.f32 %v99, %v50
  %v101 = vmax.f32 %v100, %v58
  %v102 = vmax.f32 %v101, %v66
  %v103 = vmax.f32 %v102, %v74
  %v104 = vmax.f32 %v11, %v19
  %v105 = vmax.f32 %v104, %v27
  %v106 = vmax.f32 %v105, %v35
  %v107 = vmax.f32 %v106, %v43
  %v108 = vmax.f32 %v107, %v51
  %v109 = vmax.f32 %v108, %v59
  %v110 = vmax.f32 %v109, %v67
  %v111 = vmax.f32 %v110, %v75
  %v112 = vmax.f32 %v12, %v20
  %v113 = vmax.f32 %v112, %v28
  %v114 = vmax.f32 %v113, %v36
  %v115 = vmax.f32 %v114, %v44
  %v116 = vmax.f32 %v115, %v52
  %v117 = vmax.f32 %v116, %v60
  %v118 = vmax.f32 %v117, %v68
  %v119 = vmax.f32 %v118, %v76
  %v120 = vmax.f32 %v13, %v21
  %v121 = vmax.f32 %v120, %v29
  %v122 = vmax.f32 %v121, %v37
  %v123 = vmax.f32 %v122, %v45
  %v124 = vmax.f32 %v123, %v53
  %v125 = vmax.f32 %v124, %v61
  %v126 = vmax.f32 %v125, %v69
  %v127 = vmax.f32 %v126, %v77
  %v128 = vmax.f32 %v14, %v22
  %v129 = vmax.f32 %v128, %v30
  %v130 = vmax.f32 %v129, %v38
  %v131 = vmax.f32 %v130, %v46
  %v132 = vmax.f32 %v131, %v54
  %v133 = vmax.f32 %v132, %v62
  %v134 = vmax.f32 %v133, %v70
  %v135 = vmax.f32 %v134, %v78
  %v136 = vmax.f32 %v15, %v23
  %v137 = vmax.f32 %v136, %v31
  %v138 = vmax.f32 %v137, %v39
  %v139 = vmax.f32 %v138, %v47
  %v140 = vmax.f32 %v139, %v55
  %v141 = vmax.f32 %v140, %v63
  %v142 = vmax.f32 %v141, %v71
  %v143 = vmax.f32 %v142, %v79
  %144 = vst [vmem:[%s1] sm:$0xff] %v87
  %145 = vst [vmem:[%s1 + $0x8] sm:$0xff] %v95
  %146 = vst [vmem:[%s1 + $0x10] sm:$0xff] %v103
  %147 = vst [vmem:[%s1 + $0x18] sm:$0xff] %v111
  %148 = vst [vmem:[%s1 + $0x20] sm:$0xff] %v119
  %149 = vst [vmem:[%s1 + $0x28] sm:$0xff] %v127
  %150 = vst [vmem:[%s1 + $0x30] sm:$0xff] %v135
  %151 = vst [vmem:[%s1 + $0x38] sm:$0xff] %v143
  // Predicated region
  $region6: #{forward.56} parent=0 // pred_check
    _
  $region7: #{forward.56} parent=0 // pred_check_branch
    %153 = sbr.rel (0) target = $region9
  $region8: #{forward.56} parent=0 // pred_region
    _
  $region9: #{forward.56} parent=0 // pred_fallthru
    _
  // Predicated region
  $region10: #{forward.56} parent=0 // pred_check
    _
  $region11: #{forward.56} parent=0 // pred_check_branch
    %155 = sbr.rel (0) target = $region13
  $region12: #{forward.56} parent=0 // pred_region
    _
  $region13: #{forward.56} parent=0 // pred_fallthru
    _

// kernel: forward.58
$region0: #{forward.58}
  #allocation0 [shape = 'u32[]', space=smem, size = 0x4, offset = 0x4, fixed_abs, tag = 'smem constant byte address 0x4 - core index']
  #allocation1 [shape = 'u32[144,128]{1,0:T(1,128)}', space=vmem, size = 0x12000, scoped, tag = 'internal scratch']
  %s0 = inlined_call_operand.vmem [shape: f32[512,16], index: 0, kind: input, shape index: {}]
  %s1 = inlined_call_operand.vmem [shape: bf16[16,16], index: 1, kind: input, shape index: {}]
  %s2 = inlined_call_operand.vmem [shape: f32[1,16], index: 2, kind: input, shape index: {}]
  %s3 = inlined_call_operand.vmem [shape: f32[512,16], index: 3, kind: output, shape index: {}]
  %s4 = sld [smem:[#allocation0]]
  $region22: #{forward.58} parent=0
    _
  %s6 = ssub.s32 1, %s4
  %s7 = scalar_select 0, %s6, %s4
  // Predicated region
  $region2: #{forward.58} parent=0 // pred_check
    _
  $region3: #{forward.58} parent=0 // pred_check_branch
    %9 = sbr.rel (0) target = $region5
  $region4: #{forward.58} parent=0 // pred_region
    _
  $region5: #{forward.58} parent=0 // pred_fallthru
    _
  // Predicated region
  $region6: #{forward.58} parent=0 // pred_check
    _
  $region7: #{forward.58} parent=0 // pred_check_branch
    %11 = sbr.rel (0) target = $region9
  $region8: #{forward.58} parent=0 // pred_region
    _
  $region9: #{forward.58} parent=0 // pred_fallthru
    _
  // Predicated region
  $region10: #{forward.58} parent=0 // pred_check
    _
  $region11: #{forward.58} parent=0 // pred_check_branch
    %13 = sbr.rel (0) target = $region13
  $region12: #{forward.58} parent=0 // pred_region
    _
  $region13: #{forward.58} parent=0 // pred_fallthru
    _
  %v15 = vld [vmem:[%s0] sm:$0xff]
  %v16 = vld [vmem:[%s0 + $0x8] sm:$0xff]
  %v17 = vld [vmem:[%s0 + $0x10] sm:$0xff]
  %v18 = vld [vmem:[%s0 + $0x18] sm:$0xff]
  %v19 = vld [vmem:[%s0 + $0x20] sm:$0xff]
  %v20 = vld [vmem:[%s0 + $0x28] sm:$0xff]
  %v21 = vld [vmem:[%s0 + $0x30] sm:$0xff]
  %v22 = vld [vmem:[%s0 + $0x38] sm:$0xff]
  %v23 = vld [vmem:[%s0 + $0x40] sm:$0xff]
  %v24 = vld [vmem:[%s0 + $0x48] sm:$0xff]
  %v25 = vld [vmem:[%s0 + $0x50] sm:$0xff]
  %v26 = vld [vmem:[%s0 + $0x58] sm:$0xff]
  %v27 = vld [vmem:[%s0 + $0x60] sm:$0xff]
  %v28 = vld [vmem:[%s0 + $0x68] sm:$0xff]
  %v29 = vld [vmem:[%s0 + $0x70] sm:$0xff]
  %v30 = vld [vmem:[%s0 + $0x78] sm:$0xff]
  %v31 = vld [vmem:[%s0 + $0x80] sm:$0xff]
  %v32 = vld [vmem:[%s0 + $0x88] sm:$0xff]
  %v33 = vld [vmem:[%s0 + $0x90] sm:$0xff]
  %v34 = vld [vmem:[%s0 + $0x98] sm:$0xff]
  %v35 = vld [vmem:[%s0 + $0xa0] sm:$0xff]
  %v36 = vld [vmem:[%s0 + $0xa8] sm:$0xff]
  %v37 = vld [vmem:[%s0 + $0xb0] sm:$0xff]
  %v38 = vld [vmem:[%s0 + $0xb8] sm:$0xff]
  %v39 = vld [vmem:[%s0 + $0xc0] sm:$0xff]
  %v40 = vld [vmem:[%s0 + $0xc8] sm:$0xff]
  %v41 = vld [vmem:[%s0 + $0xd0] sm:$0xff]
  %v42 = vld [vmem:[%s0 + $0xd8] sm:$0xff]
  %v43 = vld [vmem:[%s0 + $0xe0] sm:$0xff]
  %v44 = vld [vmem:[%s0 + $0xe8] sm:$0xff]
  %v45 = vld [vmem:[%s0 + $0xf0] sm:$0xff]
  %v46 = vld [vmem:[%s0 + $0xf8] sm:$0xff]
  %v47 = vld [vmem:[%s0 + $0x100] sm:$0xff]
  %v48 = vld [vmem:[%s0 + $0x108] sm:$0xff]
  %v49 = vld [vmem:[%s0 + $0x110] sm:$0xff]
  %v50 = vld [vmem:[%s0 + $0x118] sm:$0xff]
  %v51 = vld [vmem:[%s0 + $0x120] sm:$0xff]
  %v52 = vld [vmem:[%s0 + $0x128] sm:$0xff]
  %v53 = vld [vmem:[%s0 + $0x130] sm:$0xff]
  %v54 = vld [vmem:[%s0 + $0x138] sm:$0xff]
  %v55 = vld [vmem:[%s0 + $0x140] sm:$0xff]
  %v56 = vld [vmem:[%s0 + $0x148] sm:$0xff]
  %v57 = vld [vmem:[%s0 + $0x150] sm:$0xff]
  %v58 = vld [vmem:[%s0 + $0x158] sm:$0xff]
  %v59 = vld [vmem:[%s0 + $0x160] sm:$0xff]
  %v60 = vld [vmem:[%s0 + $0x168] sm:$0xff]
  %v61 = vld [vmem:[%s0 + $0x170] sm:$0xff]
  %v62 = vld [vmem:[%s0 + $0x178] sm:$0xff]
  %v63 = vld [vmem:[%s0 + $0x180] sm:$0xff]
  %v64 = vld [vmem:[%s0 + $0x188] sm:$0xff]
  %v65 = vld [vmem:[%s0 + $0x190] sm:$0xff]
  %v66 = vld [vmem:[%s0 + $0x198] sm:$0xff]
  %v67 = vld [vmem:[%s0 + $0x1a0] sm:$0xff]
  %v68 = vld [vmem:[%s0 + $0x1a8] sm:$0xff]
  %v69 = vld [vmem:[%s0 + $0x1b0] sm:$0xff]
  %v70 = vld [vmem:[%s0 + $0x1b8] sm:$0xff]
  %v71 = vld [vmem:[%s0 + $0x1c0] sm:$0xff]
  %v72 = vld [vmem:[%s0 + $0x1c8] sm:$0xff]
  %v73 = vld [vmem:[%s0 + $0x1d0] sm:$0xff]
  %v74 = vld [vmem:[%s0 + $0x1d8] sm:$0xff]
  %v75 = vld [vmem:[%s0 + $0x1e0] sm:$0xff]
  %v76 = vld [vmem:[%s0 + $0x1e8] sm:$0xff]
  %v77 = vld [vmem:[%s0 + $0x1f0] sm:$0xff]
  %v78 = vld [vmem:[%s0 + $0x1f8] sm:$0xff]
  %v79 = vpack.c.bf16 %v16, %v15
  %v80 = vpack.c.bf16 %v18, %v17
  %v81 = vpack.c.bf16 %v20, %v19
  %v82 = vpack.c.bf16 %v22, %v21
  %v83 = vpack.c.bf16 %v24, %v23
  %v84 = vpack.c.bf16 %v26, %v25
  %v85 = vpack.c.bf16 %v28, %v27
  %v86 = vpack.c.bf16 %v30, %v29
  %v87 = vpack.c.bf16 %v32, %v31
  %v88 = vpack.c.bf16 %v34, %v33
  %v89 = vpack.c.bf16 %v36, %v35
  %v90 = vpack.c.bf16 %v38, %v37
  %v91 = vpack.c.bf16 %v40, %v39
  %v92 = vpack.c.bf16 %v42, %v41
  %v93 = vpack.c.bf16 %v44, %v43
  %v94 = vpack.c.bf16 %v46, %v45
  %v95 = vpack.c.bf16 %v48, %v47
  %v96 = vpack.c.bf16 %v50, %v49
  %v97 = vpack.c.bf16 %v52, %v51
  %v98 = vpack.c.bf16 %v54, %v53
  %v99 = vpack.c.bf16 %v56, %v55
  %v100 = vpack.c.bf16 %v58, %v57
  %v101 = vpack.c.bf16 %v60, %v59
  %v102 = vpack.c.bf16 %v62, %v61
  %v103 = vpack.c.bf16 %v64, %v63
  %v104 = vpack.c.bf16 %v66, %v65
  %v105 = vpack.c.bf16 %v68, %v67
  %v106 = vpack.c.bf16 %v70, %v69
  %v107 = vpack.c.bf16 %v72, %v71
  %v108 = vpack.c.bf16 %v74, %v73
  %v109 = vpack.c.bf16 %v76, %v75
  %v110 = vpack.c.bf16 %v78, %v77
  %v111 = vld [vmem:[%s1] sm:$0xf]
  %v112 = vld [vmem:[%s1 + $0x4] sm:$0xf]
  %v113 = vld [vmem:[%s2] sm:$0x1]
  %v115 = vlaneseq
  %v116 = vshrl.u32 %v115, 7
  %v117 = vsub.s32 0, %v116
  %v118 = vrot.slane %v113, %v117
  %v122 = vunpack.c.l.b16 %v111
  %v123 = vunpack.c.l.b16 %v112
  %v124 = vpack.c.b16 %v123, %v122
  %vm126 = vcmask 130048
  %v128 = vsel %vm126, %v79, 0
  %v131 = vsel %vm126, %v80, 0
  %v134 = vsel %vm126, %v81, 0
  %v137 = vsel %vm126, %v82, 0
  %v140 = vsel %vm126, %v83, 0
  %v143 = vsel %vm126, %v84, 0
  %v146 = vsel %vm126, %v85, 0
  %v149 = vsel %vm126, %v86, 0
  %v152 = vsel %vm126, %v87, 0
  %v155 = vsel %vm126, %v88, 0
  %v158 = vsel %vm126, %v89, 0
  %v161 = vsel %vm126, %v90, 0
  %v164 = vsel %vm126, %v91, 0
  %v167 = vsel %vm126, %v92, 0
  %v170 = vsel %vm126, %v93, 0
  %v173 = vsel %vm126, %v94, 0
  %v176 = vsel %vm126, %v95, 0
  %v179 = vsel %vm126, %v96, 0
  %v182 = vsel %vm126, %v97, 0
  %v185 = vsel %vm126, %v98, 0
  %v188 = vsel %vm126, %v99, 0
  %v191 = vsel %vm126, %v100, 0
  %v194 = vsel %vm126, %v101, 0
  %v197 = vsel %vm126, %v102, 0
  %v200 = vsel %vm126, %v103, 0
  %v203 = vsel %vm126, %v104, 0
  %v206 = vsel %vm126, %v105, 0
  %v209 = vsel %vm126, %v106, 0
  %v212 = vsel %vm126, %v107, 0
  %v215 = vsel %vm126, %v108, 0
  %v218 = vsel %vm126, %v109, 0
  %v221 = vsel %vm126, %v110, 0
  %223 = vmatprep.subr.bf16.mxu0 0
  %224 = vmatpush1.bf16.msra.mxu0 0
  %225 = vmatprep.subr.bf16.mxu0 0
  %226 = vmatpush1.bf16.msra.mxu0 0
  %227 = vmatprep.subr.bf16.mxu0 0
  %228 = vmatpush1.bf16.msra.mxu0 0
  %229 = vmatprep.subr.bf16.mxu0 0
  %230 = vmatpush1.bf16.msra.mxu0 0
  %231 = vmatprep.subr.bf16.mxu0 0
  %232 = vmatpush1.bf16.msra.mxu0 0
  %233 = vmatprep.subr.bf16.mxu0 0
  %234 = vmatpush1.bf16.msra.mxu0 0
  %235 = vmatprep.subr.bf16.mxu0 0
  %236 = vmatpush1.bf16.msra.mxu0 0
  %237 = vmatprep.subr.bf16.mxu0 0
  %238 = vmatpush1.bf16.msra.mxu0 %v124
  %239 = vmatprep.subr.bf16.mxu0 0
  %240 = vmatpush2.bf16.msra.mxu0 0
  %241 = vmatprep.subr.bf16.mxu0 0
  %242 = vmatpush2.bf16.msra.mxu0 0
  %243 = vmatprep.subr.bf16.mxu0 0
  %244 = vmatpush2.bf16.msra.mxu0 0
  %245 = vmatprep.subr.bf16.mxu0 0
  %246 = vmatpush2.bf16.msra.mxu0 0
  %247 = vmatprep.subr.bf16.mxu0 0
  %248 = vmatpush2.bf16.msra.mxu0 0
  %249 = vmatprep.subr.bf16.mxu0 0
  %250 = vmatpush2.bf16.msra.mxu0 0
  %251 = vmatprep.subr.bf16.mxu0 0
  %252 = vmatpush2.bf16.msra.mxu0 0
  %253 = vmatprep.subr.bf16.mxu0 0
  %254 = vmatpush2.bf16.msra.mxu0 0
  %255 = vmatprep.mubr.bf16.mxu0 0
  %256 = vmatmul.mubr.bf16.gmra.mxu0 %v128
  %v257 = vpop.f32.mrf.mxu0
  %v258 = vadd.f32 %v118, %v257
  %v259 = vpop.f32.mrf.mxu0
  %v260 = vpop.f32.mrf.mxu0
  %v261 = vadd.f32 %v118, %v260
  %v262 = vpop.f32.mrf.mxu0
  %263 = vmatprep.mubr.bf16.mxu0 0
  %264 = vmatmul.mubr.bf16.gmra.mxu0 %v131
  %v265 = vpop.f32.mrf.mxu0
  %v266 = vadd.f32 %v118, %v265
  %v267 = vpop.f32.mrf.mxu0
  %v268 = vpop.f32.mrf.mxu0
  %v269 = vadd.f32 %v118, %v268
  %v270 = vpop.f32.mrf.mxu0
  %271 = vmatprep.mubr.bf16.mxu0 0
  %272 = vmatmul.mubr.bf16.gmra.mxu0 %v134
  %v273 = vpop.f32.mrf.mxu0
  %v274 = vadd.f32 %v118, %v273
  %v275 = vpop.f32.mrf.mxu0
  %v276 = vpop.f32.mrf.mxu0
  %v277 = vadd.f32 %v118, %v276
  %v278 = vpop.f32.mrf.mxu0
  %279 = vmatprep.mubr.bf16.mxu0 0
  %280 = vmatmul.mubr.bf16.gmra.mxu0 %v137
  %v281 = vpop.f32.mrf.mxu0
  %v282 = vadd.f32 %v118, %v281
  %v283 = vpop.f32.mrf.mxu0
  %v284 = vpop.f32.mrf.mxu0
  %v285 = vadd.f32 %v118, %v284
  %v286 = vpop.f32.mrf.mxu0
  %287 = vmatprep.mubr.bf16.mxu0 0
  %288 = vmatmul.mubr.bf16.gmra.mxu0 %v140
  %v289 = vpop.f32.mrf.mxu0
  %v290 = vadd.f32 %v118, %v289
  %v291 = vpop.f32.mrf.mxu0
  %v292 = vpop.f32.mrf.mxu0
  %v293 = vadd.f32 %v118, %v292
  %v294 = vpop.f32.mrf.mxu0
  %295 = vmatprep.mubr.bf16.mxu0 0
  %296 = vmatmul.mubr.bf16.gmra.mxu0 %v143
  %v297 = vpop.f32.mrf.mxu0
  %v298 = vadd.f32 %v118, %v297
  %v299 = vpop.f32.mrf.mxu0
  %v300 = vpop.f32.mrf.mxu0
  %v301 = vadd.f32 %v118, %v300
  %v302 = vpop.f32.mrf.mxu0
  %303 = vmatprep.mubr.bf16.mxu0 0
  %304 = vmatmul.mubr.bf16.gmra.mxu0 %v146
  %v305 = vpop.f32.mrf.mxu0
  %v306 = vadd.f32 %v118, %v305
  %v307 = vpop.f32.mrf.mxu0
  %v308 = vpop.f32.mrf.mxu0
  %v309 = vadd.f32 %v118, %v308
  %v310 = vpop.f32.mrf.mxu0
  %311 = vmatprep.mubr.bf16.mxu0 0
  %312 = vmatmul.mubr.bf16.gmra.mxu0 %v149
  %v313 = vpop.f32.mrf.mxu0
  %v314 = vadd.f32 %v118, %v313
  %v315 = vpop.f32.mrf.mxu0
  %v316 = vpop.f32.mrf.mxu0
  %v317 = vadd.f32 %v118, %v316
  %v318 = vpop.f32.mrf.mxu0
  %319 = vmatprep.mubr.bf16.mxu0 0
  %320 = vmatmul.mubr.bf16.gmra.mxu0 %v152
  %v321 = vpop.f32.mrf.mxu0
  %v322 = vadd.f32 %v118, %v321
  %v323 = vpop.f32.mrf.mxu0
  %v324 = vpop.f32.mrf.mxu0
  %v325 = vadd.f32 %v118, %v324
  %v326 = vpop.f32.mrf.mxu0
  %327 = vmatprep.mubr.bf16.mxu0 0
  %328 = vmatmul.mubr.bf16.gmra.mxu0 %v155
  %v329 = vpop.f32.mrf.mxu0
  %v330 = vadd.f32 %v118, %v329
  %v331 = vpop.f32.mrf.mxu0
  %v332 = vpop.f32.mrf.mxu0
  %v333 = vadd.f32 %v118, %v332
  %v334 = vpop.f32.mrf.mxu0
  %335 = vmatprep.mubr.bf16.mxu0 0
  %336 = vmatmul.mubr.bf16.gmra.mxu0 %v158
  %v337 = vpop.f32.mrf.mxu0
  %v338 = vadd.f32 %v118, %v337
  %v339 = vpop.f32.mrf.mxu0
  %v340 = vpop.f32.mrf.mxu0
  %v341 = vadd.f32 %v118, %v340
  %v342 = vpop.f32.mrf.mxu0
  %343 = vmatprep.mubr.bf16.mxu0 0
  %344 = vmatmul.mubr.bf16.gmra.mxu0 %v161
  %v345 = vpop.f32.mrf.mxu0
  %v346 = vadd.f32 %v118, %v345
  %v347 = vpop.f32.mrf.mxu0
  %v348 = vpop.f32.mrf.mxu0
  %v349 = vadd.f32 %v118, %v348
  %v350 = vpop.f32.mrf.mxu0
  %351 = vmatprep.mubr.bf16.mxu0 0
  %352 = vmatmul.mubr.bf16.gmra.mxu0 %v164
  %v353 = vpop.f32.mrf.mxu0
  %v354 = vadd.f32 %v118, %v353
  %v355 = vpop.f32.mrf.mxu0
  %v356 = vpop.f32.mrf.mxu0
  %v357 = vadd.f32 %v118, %v356
  %v358 = vpop.f32.mrf.mxu0
  %359 = vmatprep.mubr.bf16.mxu0 0
  %360 = vmatmul.mubr.bf16.gmra.mxu0 %v167
  %v361 = vpop.f32.mrf.mxu0
  %v362 = vadd.f32 %v118, %v361
  %v363 = vpop.f32.mrf.mxu0
  %v364 = vpop.f32.mrf.mxu0
  %v365 = vadd.f32 %v118, %v364
  %v366 = vpop.f32.mrf.mxu0
  %367 = vmatprep.mubr.bf16.mxu0 0
  %368 = vmatmul.mubr.bf16.gmra.mxu0 %v170
  %v369 = vpop.f32.mrf.mxu0
  %v370 = vadd.f32 %v118, %v369
  %v371 = vpop.f32.mrf.mxu0
  %v372 = vpop.f32.mrf.mxu0
  %v373 = vadd.f32 %v118, %v372
  %v374 = vpop.f32.mrf.mxu0
  %375 = vmatprep.mubr.bf16.mxu0 0
  %376 = vmatmul.mubr.bf16.gmra.mxu0 %v173
  %v377 = vpop.f32.mrf.mxu0
  %v378 = vadd.f32 %v118, %v377
  %v379 = vpop.f32.mrf.mxu0
  %v380 = vpop.f32.mrf.mxu0
  %v381 = vadd.f32 %v118, %v380
  %v382 = vpop.f32.mrf.mxu0
  %383 = vmatprep.mubr.bf16.mxu0 0
  %384 = vmatmul.mubr.bf16.gmra.mxu0 %v176
  %v385 = vpop.f32.mrf.mxu0
  %v386 = vadd.f32 %v118, %v385
  %v387 = vpop.f32.mrf.mxu0
  %v388 = vpop.f32.mrf.mxu0
  %v389 = vadd.f32 %v118, %v388
  %v390 = vpop.f32.mrf.mxu0
  %391 = vmatprep.mubr.bf16.mxu0 0
  %392 = vmatmul.mubr.bf16.gmra.mxu0 %v179
  %v393 = vpop.f32.mrf.mxu0
  %v394 = vadd.f32 %v118, %v393
  %v395 = vpop.f32.mrf.mxu0
  %v396 = vpop.f32.mrf.mxu0
  %v397 = vadd.f32 %v118, %v396
  %v398 = vpop.f32.mrf.mxu0
  %399 = vmatprep.mubr.bf16.mxu0 0
  %400 = vmatmul.mubr.bf16.gmra.mxu0 %v182
  %v401 = vpop.f32.mrf.mxu0
  %v402 = vadd.f32 %v118, %v401
  %v403 = vpop.f32.mrf.mxu0
  %v404 = vpop.f32.mrf.mxu0
  %v405 = vadd.f32 %v118, %v404
  %v406 = vpop.f32.mrf.mxu0
  %407 = vmatprep.mubr.bf16.mxu0 0
  %408 = vmatmul.mubr.bf16.gmra.mxu0 %v185
  %v409 = vpop.f32.mrf.mxu0
  %v410 = vadd.f32 %v118, %v409
  %v411 = vpop.f32.mrf.mxu0
  %v412 = vpop.f32.mrf.mxu0
  %v413 = vadd.f32 %v118, %v412
  %v414 = vpop.f32.mrf.mxu0
  %415 = vmatprep.mubr.bf16.mxu0 0
  %416 = vmatmul.mubr.bf16.gmra.mxu0 %v188
  %v417 = vpop.f32.mrf.mxu0
  %v418 = vadd.f32 %v118, %v417
  %v419 = vpop.f32.mrf.mxu0
  %v420 = vpop.f32.mrf.mxu0
  %v421 = vadd.f32 %v118, %v420
  %v422 = vpop.f32.mrf.mxu0
  %423 = vmatprep.mubr.bf16.mxu0 0
  %424 = vmatmul.mubr.bf16.gmra.mxu0 %v191
  %v425 = vpop.f32.mrf.mxu0
  %v426 = vadd.f32 %v118, %v425
  %v427 = vpop.f32.mrf.mxu0
  %v428 = vpop.f32.mrf.mxu0
  %v429 = vadd.f32 %v118, %v428
  %v430 = vpop.f32.mrf.mxu0
  %431 = vmatprep.mubr.bf16.mxu0 0
  %432 = vmatmul.mubr.bf16.gmra.mxu0 %v194
  %v433 = vpop.f32.mrf.mxu0
  %v434 = vadd.f32 %v118, %v433
  %v435 = vpop.f32.mrf.mxu0
  %v436 = vpop.f32.mrf.mxu0
  %v437 = vadd.f32 %v118, %v436
  %v438 = vpop.f32.mrf.mxu0
  %439 = vmatprep.mubr.bf16.mxu0 0
  %440 = vmatmul.mubr.bf16.gmra.mxu0 %v197
  %v441 = vpop.f32.mrf.mxu0
  %v442 = vadd.f32 %v118, %v441
  %v443 = vpop.f32.mrf.mxu0
  %v444 = vpop.f32.mrf.mxu0
  %v445 = vadd.f32 %v118, %v444
  %v446 = vpop.f32.mrf.mxu0
  %447 = vmatprep.mubr.bf16.mxu0 0
  %448 = vmatmul.mubr.bf16.gmra.mxu0 %v200
  %v449 = vpop.f32.mrf.mxu0
  %v450 = vadd.f32 %v118, %v449
  %v451 = vpop.f32.mrf.mxu0
  %v452 = vpop.f32.mrf.mxu0
  %v453 = vadd.f32 %v118, %v452
  %v454 = vpop.f32.mrf.mxu0
  %455 = vmatprep.mubr.bf16.mxu0 0
  %456 = vmatmul.mubr.bf16.gmra.mxu0 %v203
  %v457 = vpop.f32.mrf.mxu0
  %v458 = vadd.f32 %v118, %v457
  %v459 = vpop.f32.mrf.mxu0
  %v460 = vpop.f32.mrf.mxu0
  %v461 = vadd.f32 %v118, %v460
  %v462 = vpop.f32.mrf.mxu0
  %463 = vmatprep.mubr.bf16.mxu0 0
  %464 = vmatmul.mubr.bf16.gmra.mxu0 %v206
  %v465 = vpop.f32.mrf.mxu0
  %v466 = vadd.f32 %v118, %v465
  %v467 = vpop.f32.mrf.mxu0
  %v468 = vpop.f32.mrf.mxu0
  %v469 = vadd.f32 %v118, %v468
  %v470 = vpop.f32.mrf.mxu0
  %471 = vmatprep.mubr.bf16.mxu0 0
  %472 = vmatmul.mubr.bf16.gmra.mxu0 %v209
  %v473 = vpop.f32.mrf.mxu0
  %v474 = vadd.f32 %v118, %v473
  %v475 = vpop.f32.mrf.mxu0
  %v476 = vpop.f32.mrf.mxu0
  %v477 = vadd.f32 %v118, %v476
  %v478 = vpop.f32.mrf.mxu0
  %479 = vmatprep.mubr.bf16.mxu0 0
  %480 = vmatmul.mubr.bf16.gmra.mxu0 %v212
  %v481 = vpop.f32.mrf.mxu0
  %v482 = vadd.f32 %v118, %v481
  %v483 = vpop.f32.mrf.mxu0
  %v484 = vpop.f32.mrf.mxu0
  %v485 = vadd.f32 %v118, %v484
  %v486 = vpop.f32.mrf.mxu0
  %487 = vmatprep.mubr.bf16.mxu0 0
  %488 = vmatmul.mubr.bf16.gmra.mxu0 %v215
  %v489 = vpop.f32.mrf.mxu0
  %v490 = vadd.f32 %v118, %v489
  %v491 = vpop.f32.mrf.mxu0
  %v492 = vpop.f32.mrf.mxu0
  %v493 = vadd.f32 %v118, %v492
  %v494 = vpop.f32.mrf.mxu0
  %495 = vmatprep.mubr.bf16.mxu0 0
  %496 = vmatmul.mubr.bf16.gmra.mxu0 %v218
  %v497 = vpop.f32.mrf.mxu0
  %v498 = vadd.f32 %v118, %v497
  %v499 = vpop.f32.mrf.mxu0
  %v500 = vpop.f32.mrf.mxu0
  %v501 = vadd.f32 %v118, %v500
  %v502 = vpop.f32.mrf.mxu0
  %503 = vmatprep.mubr.bf16.mxu0 0
  %504 = vmatmul.mubr.bf16.gmra.mxu0 %v221
  %v505 = vpop.f32.mrf.mxu0
  %v506 = vadd.f32 %v118, %v505
  %v507 = vpop.f32.mrf.mxu0
  %v508 = vpop.f32.mrf.mxu0
  %v509 = vadd.f32 %v118, %v508
  %v510 = vpop.f32.mrf.mxu0
  %511 = vdwg.mxu0
  %v512 = vmax.f32 %v258, 0.0
  %v513 = vmax.f32 %v261, 0.0
  %v514 = vmax.f32 %v266, 0.0
  %v515 = vmax.f32 %v269, 0.0
  %v516 = vmax.f32 %v274, 0.0
  %v517 = vmax.f32 %v277, 0.0
  %v518 = vmax.f32 %v282, 0.0
  %v519 = vmax.f32 %v285, 0.0
  %v520 = vmax.f32 %v290, 0.0
  %v521 = vmax.f32 %v293, 0.0
  %v522 = vmax.f32 %v298, 0.0
  %v523 = vmax.f32 %v301, 0.0
  %v524 = vmax.f32 %v306, 0.0
  %v525 = vmax.f32 %v309, 0.0
  %v526 = vmax.f32 %v314, 0.0
  %v527 = vmax.f32 %v317, 0.0
  %v528 = vmax.f32 %v322, 0.0
  %v529 = vmax.f32 %v325, 0.0
  %v530 = vmax.f32 %v330, 0.0
  %v531 = vmax.f32 %v333, 0.0
  %v532 = vmax.f32 %v338, 0.0
  %v533 = vmax.f32 %v341, 0.0
  %v534 = vmax.f32 %v346, 0.0
  %v535 = vmax.f32 %v349, 0.0
  %v536 = vmax.f32 %v354, 0.0
  %v537 = vmax.f32 %v357, 0.0
  %v538 = vmax.f32 %v362, 0.0
  %v539 = vmax.f32 %v365, 0.0
  %v540 = vmax.f32 %v370, 0.0
  %v541 = vmax.f32 %v373, 0.0
  %v542 = vmax.f32 %v378, 0.0
  %v543 = vmax.f32 %v381, 0.0
  %v544 = vmax.f32 %v386, 0.0
  %v545 = vmax.f32 %v389, 0.0
  %v546 = vmax.f32 %v394, 0.0
  %v547 = vmax.f32 %v397, 0.0
  %v548 = vmax.f32 %v402, 0.0
  %v549 = vmax.f32 %v405, 0.0
  %v550 = vmax.f32 %v410, 0.0
  %v551 = vmax.f32 %v413, 0.0
  %v552 = vmax.f32 %v418, 0.0
  %v553 = vmax.f32 %v421, 0.0
  %v554 = vmax.f32 %v426, 0.0
  %v555 = vmax.f32 %v429, 0.0
  %v556 = vmax.f32 %v434, 0.0
  %v557 = vmax.f32 %v437, 0.0
  %v558 = vmax.f32 %v442, 0.0
  %v559 = vmax.f32 %v445, 0.0
  %v560 = vmax.f32 %v450, 0.0
  %v561 = vmax.f32 %v453, 0.0
  %v562 = vmax.f32 %v458, 0.0
  %v563 = vmax.f32 %v461, 0.0
  %v564 = vmax.f32 %v466, 0.0
  %v565 = vmax.f32 %v469, 0.0
  %v566 = vmax.f32 %v474, 0.0
  %v567 = vmax.f32 %v477, 0.0
  %v568 = vmax.f32 %v482, 0.0
  %v569 = vmax.f32 %v485, 0.0
  %v570 = vmax.f32 %v490, 0.0
  %v571 = vmax.f32 %v493, 0.0
  %v572 = vmax.f32 %v498, 0.0
  %v573 = vmax.f32 %v501, 0.0
  %v574 = vmax.f32 %v506, 0.0
  %v575 = vmax.f32 %v509, 0.0
  %576 = vst.msk [vmem:[%s3] sm:$0xff] %vm126, %v512
  %577 = vst.msk [vmem:[%s3 + $0x8] sm:$0xff] %vm126, %v513
  %578 = vst.msk [vmem:[%s3 + $0x10] sm:$0xff] %vm126, %v514
  %579 = vst.msk [vmem:[%s3 + $0x18] sm:$0xff] %vm126, %v515
  %580 = vst.msk [vmem:[%s3 + $0x20] sm:$0xff] %vm126, %v516
  %581 = vst.msk [vmem:[%s3 + $0x28] sm:$0xff] %vm126, %v517
  %582 = vst.msk [vmem:[%s3 + $0x30] sm:$0xff] %vm126, %v518
  %583 = vst.msk [vmem:[%s3 + $0x38] sm:$0xff] %vm126, %v519
  %584 = vst.msk [vmem:[%s3 + $0x40] sm:$0xff] %vm126, %v520
  %585 = vst.msk [vmem:[%s3 + $0x48] sm:$0xff] %vm126, %v521
  %586 = vst.msk [vmem:[%s3 + $0x50] sm:$0xff] %vm126, %v522
  %587 = vst.msk [vmem:[%s3 + $0x58] sm:$0xff] %vm126, %v523
  %588 = vst.msk [vmem:[%s3 + $0x60] sm:$0xff] %vm126, %v524
  %589 = vst.msk [vmem:[%s3 + $0x68] sm:$0xff] %vm126, %v525
  %590 = vst.msk [vmem:[%s3 + $0x70] sm:$0xff] %vm126, %v526
  %591 = vst.msk [vmem:[%s3 + $0x78] sm:$0xff] %vm126, %v527
  %592 = vst.msk [vmem:[%s3 + $0x80] sm:$0xff] %vm126, %v528
  %593 = vst.msk [vmem:[%s3 + $0x88] sm:$0xff] %vm126, %v529
  %594 = vst.msk [vmem:[%s3 + $0x90] sm:$0xff] %vm126, %v530
  %595 = vst.msk [vmem:[%s3 + $0x98] sm:$0xff] %vm126, %v531
  %596 = vst.msk [vmem:[%s3 + $0xa0] sm:$0xff] %vm126, %v532
  %597 = vst.msk [vmem:[%s3 + $0xa8] sm:$0xff] %vm126, %v533
  %598 = vst.msk [vmem:[%s3 + $0xb0] sm:$0xff] %vm126, %v534
  %599 = vst.msk [vmem:[%s3 + $0xb8] sm:$0xff] %vm126, %v535
  %600 = vst.msk [vmem:[%s3 + $0xc0] sm:$0xff] %vm126, %v536
  %601 = vst.msk [vmem:[%s3 + $0xc8] sm:$0xff] %vm126, %v537
  %602 = vst.msk [vmem:[%s3 + $0xd0] sm:$0xff] %vm126, %v538
  %603 = vst.msk [vmem:[%s3 + $0xd8] sm:$0xff] %vm126, %v539
  %604 = vst.msk [vmem:[%s3 + $0xe0] sm:$0xff] %vm126, %v540
  %605 = vst.msk [vmem:[%s3 + $0xe8] sm:$0xff] %vm126, %v541
  %606 = vst.msk [vmem:[%s3 + $0xf0] sm:$0xff] %vm126, %v542
  %607 = vst.msk [vmem:[%s3 + $0xf8] sm:$0xff] %vm126, %v543
  %608 = vst.msk [vmem:[%s3 + $0x100] sm:$0xff] %vm126, %v544
  %609 = vst.msk [vmem:[%s3 + $0x108] sm:$0xff] %vm126, %v545
  %610 = vst.msk [vmem:[%s3 + $0x110] sm:$0xff] %vm126, %v546
  %611 = vst.msk [vmem:[%s3 + $0x118] sm:$0xff] %vm126, %v547
  %612 = vst.msk [vmem:[%s3 + $0x120] sm:$0xff] %vm126, %v548
  %613 = vst.msk [vmem:[%s3 + $0x128] sm:$0xff] %vm126, %v549
  %614 = vst.msk [vmem:[%s3 + $0x130] sm:$0xff] %vm126, %v550
  %615 = vst.msk [vmem:[%s3 + $0x138] sm:$0xff] %vm126, %v551
  %616 = vst.msk [vmem:[%s3 + $0x140] sm:$0xff] %vm126, %v552
  %617 = vst.msk [vmem:[%s3 + $0x148] sm:$0xff] %vm126, %v553
  %618 = vst.msk [vmem:[%s3 + $0x150] sm:$0xff] %vm126, %v554
  %619 = vst.msk [vmem:[%s3 + $0x158] sm:$0xff] %vm126, %v555
  %620 = vst.msk [vmem:[%s3 + $0x160] sm:$0xff] %vm126, %v556
  %621 = vst.msk [vmem:[%s3 + $0x168] sm:$0xff] %vm126, %v557
  %622 = vst.msk [vmem:[%s3 + $0x170] sm:$0xff] %vm126, %v558
  %623 = vst.msk [vmem:[%s3 + $0x178] sm:$0xff] %vm126, %v559
  %624 = vst.msk [vmem:[%s3 + $0x180] sm:$0xff] %vm126, %v560
  %625 = vst.msk [vmem:[%s3 + $0x188] sm:$0xff] %vm126, %v561
  %626 = vst.msk [vmem:[%s3 + $0x190] sm:$0xff] %vm126, %v562
  %627 = vst.msk [vmem:[%s3 + $0x198] sm:$0xff] %vm126, %v563
  %628 = vst.msk [vmem:[%s3 + $0x1a0] sm:$0xff] %vm126, %v564
  %629 = vst.msk [vmem:[%s3 + $0x1a8] sm:$0xff] %vm126, %v565
  %630 = vst.msk [vmem:[%s3 + $0x1b0] sm:$0xff] %vm126, %v566
  %631 = vst.msk [vmem:[%s3 + $0x1b8] sm:$0xff] %vm126, %v567
  %632 = vst.msk [vmem:[%s3 + $0x1c0] sm:$0xff] %vm126, %v568
  %633 = vst.msk [vmem:[%s3 + $0x1c8] sm:$0xff] %vm126, %v569
  %634 = vst.msk [vmem:[%s3 + $0x1d0] sm:$0xff] %vm126, %v570
  %635 = vst.msk [vmem:[%s3 + $0x1d8] sm:$0xff] %vm126, %v571
  %636 = vst.msk [vmem:[%s3 + $0x1e0] sm:$0xff] %vm126, %v572
  %637 = vst.msk [vmem:[%s3 + $0x1e8] sm:$0xff] %vm126, %v573
  %638 = vst.msk [vmem:[%s3 + $0x1f0] sm:$0xff] %vm126, %v574
  %639 = vst.msk [vmem:[%s3 + $0x1f8] sm:$0xff] %vm126, %v575
  // Predicated region
  $region14: #{forward.58} parent=0 // pred_check
    _
  $region15: #{forward.58} parent=0 // pred_check_branch
    %641 = sbr.rel (0) target = $region17
  $region16: #{forward.58} parent=0 // pred_region
    _
  $region17: #{forward.58} parent=0 // pred_fallthru
    _
  // Predicated region
  $region18: #{forward.58} parent=0 // pred_check
    _
  $region19: #{forward.58} parent=0 // pred_check_branch
    %643 = sbr.rel (0) target = $region21
  $region20: #{forward.58} parent=0 // pred_region
    _
  $region21: #{forward.58} parent=0 // pred_fallthru
    _

// kernel: forward.59
$region0: #{forward.59}
  #allocation0 [shape = 'u32[]', space=smem, size = 0x4, offset = 0x4, fixed_abs, tag = 'smem constant byte address 0x4 - core index']
  #allocation1 [shape = 'u32[144,128]{1,0:T(1,128)}', space=vmem, size = 0x12000, scoped, tag = 'internal scratch']
  %s0 = inlined_call_operand.vmem [shape: bf16[512,144], index: 0, kind: input, shape index: {}]
  %s1 = inlined_call_operand.vmem [shape: bf16[144,16], index: 1, kind: input, shape index: {}]
  %s2 = inlined_call_operand.vmem [shape: f32[1,16], index: 2, kind: input, shape index: {}]
  %s3 = inlined_call_operand.vmem [shape: f32[512,16], index: 3, kind: output, shape index: {}]
  %s4 = sld [smem:[#allocation0]]
  $region22: #{forward.59} parent=0
    _
  %s6 = ssub.s32 1, %s4
  %s7 = scalar_select 0, %s6, %s4
  // Predicated region
  $region2: #{forward.59} parent=0 // pred_check
    _
  $region3: #{forward.59} parent=0 // pred_check_branch
    %9 = sbr.rel (0) target = $region5
  $region4: #{forward.59} parent=0 // pred_region
    _
  $region5: #{forward.59} parent=0 // pred_fallthru
    _
  // Predicated region
  $region6: #{forward.59} parent=0 // pred_check
    _
  $region7: #{forward.59} parent=0 // pred_check_branch
    %11 = sbr.rel (0) target = $region9
  $region8: #{forward.59} parent=0 // pred_region
    _
  $region9: #{forward.59} parent=0 // pred_fallthru
    _
  // Predicated region
  $region10: #{forward.59} parent=0 // pred_check
    _
  $region11: #{forward.59} parent=0 // pred_check_branch
    %13 = sbr.rel (0) target = $region13
  $region12: #{forward.59} parent=0 // pred_region
    _
  $region13: #{forward.59} parent=0 // pred_fallthru
    _
  %v15 = vld [vmem:[%s0] sm:$0xff]
  %v16 = vld [vmem:[%s0 + $0x8] sm:$0xff]
  %v17 = vld [vmem:[%s0 + $0x10] sm:$0xff]
  %v18 = vld [vmem:[%s0 + $0x18] sm:$0xff]
  %v19 = vld [vmem:[%s0 + $0x20] sm:$0xff]
  %v20 = vld [vmem:[%s0 + $0x28] sm:$0xff]
  %v21 = vld [vmem:[%s0 + $0x30] sm:$0xff]
  %v22 = vld [vmem:[%s0 + $0x38] sm:$0xff]
  %v23 = vld [vmem:[%s0 + $0x40] sm:$0xff]
  %v24 = vld [vmem:[%s0 + $0x48] sm:$0xff]
  %v25 = vld [vmem:[%s0 + $0x50] sm:$0xff]
  %v26 = vld [vmem:[%s0 + $0x58] sm:$0xff]
  %v27 = vld [vmem:[%s0 + $0x60] sm:$0xff]
  %v28 = vld [vmem:[%s0 + $0x68] sm:$0xff]
  %v29 = vld [vmem:[%s0 + $0x70] sm:$0xff]
  %v30 = vld [vmem:[%s0 + $0x78] sm:$0xff]
  %v31 = vld [vmem:[%s0 + $0x80] sm:$0xff]
  %v32 = vld [vmem:[%s0 + $0x88] sm:$0xff]
  %v33 = vld [vmem:[%s0 + $0x90] sm:$0xff]
  %v34 = vld [vmem:[%s0 + $0x98] sm:$0xff]
  %v35 = vld [vmem:[%s0 + $0xa0] sm:$0xff]
  %v36 = vld [vmem:[%s0 + $0xa8] sm:$0xff]
  %v37 = vld [vmem:[%s0 + $0xb0] sm:$0xff]
  %v38 = vld [vmem:[%s0 + $0xb8] sm:$0xff]
  %v39 = vld [vmem:[%s0 + $0xc0] sm:$0xff]
  %v40 = vld [vmem:[%s0 + $0xc8] sm:$0xff]
  %v41 = vld [vmem:[%s0 + $0xd0] sm:$0xff]
  %v42 = vld [vmem:[%s0 + $0xd8] sm:$0xff]
  %v43 = vld [vmem:[%s0 + $0xe0] sm:$0xff]
  %v44 = vld [vmem:[%s0 + $0xe8] sm:$0xff]
  %v45 = vld [vmem:[%s0 + $0xf0] sm:$0xff]
  %v46 = vld [vmem:[%s0 + $0xf8] sm:$0xff]
  %v47 = vld [vmem:[%s0 + $0x100] sm:$0xff]
  %v48 = vld [vmem:[%s0 + $0x108] sm:$0xff]
  %v49 = vld [vmem:[%s0 + $0x110] sm:$0xff]
  %v50 = vld [vmem:[%s0 + $0x118] sm:$0xff]
  %v51 = vld [vmem:[%s0 + $0x120] sm:$0xff]
  %v52 = vld [vmem:[%s0 + $0x128] sm:$0xff]
  %v53 = vld [vmem:[%s0 + $0x130] sm:$0xff]
  %v54 = vld [vmem:[%s0 + $0x138] sm:$0xff]
  %v55 = vld [vmem:[%s0 + $0x140] sm:$0xff]
  %v56 = vld [vmem:[%s0 + $0x148] sm:$0xff]
  %v57 = vld [vmem:[%s0 + $0x150] sm:$0xff]
  %v58 = vld [vmem:[%s0 + $0x158] sm:$0xff]
  %v59 = vld [vmem:[%s0 + $0x160] sm:$0xff]
  %v60 = vld [vmem:[%s0 + $0x168] sm:$0xff]
  %v61 = vld [vmem:[%s0 + $0x170] sm:$0xff]
  %v62 = vld [vmem:[%s0 + $0x178] sm:$0xff]
  %v63 = vld [vmem:[%s0 + $0x180] sm:$0xff]
  %v64 = vld [vmem:[%s0 + $0x188] sm:$0xff]
  %v65 = vld [vmem:[%s0 + $0x190] sm:$0xff]
  %v66 = vld [vmem:[%s0 + $0x198] sm:$0xff]
  %v67 = vld [vmem:[%s0 + $0x1a0] sm:$0xff]
  %v68 = vld [vmem:[%s0 + $0x1a8] sm:$0xff]
  %v69 = vld [vmem:[%s0 + $0x1b0] sm:$0xff]
  %v70 = vld [vmem:[%s0 + $0x1b8] sm:$0xff]
  %v71 = vld [vmem:[%s0 + $0x1c0] sm:$0xff]
  %v72 = vld [vmem:[%s0 + $0x1c8] sm:$0xff]
  %v73 = vld [vmem:[%s0 + $0x1d0] sm:$0xff]
  %v74 = vld [vmem:[%s0 + $0x1d8] sm:$0xff]
  %v75 = vld [vmem:[%s0 + $0x1e0] sm:$0xff]
  %v76 = vld [vmem:[%s0 + $0x1e8] sm:$0xff]
  %v77 = vld [vmem:[%s0 + $0x1f0] sm:$0xff]
  %v78 = vld [vmem:[%s0 + $0x1f8] sm:$0xff]
  %v79 = vld [vmem:[%s1] sm:$0xf]
  %v80 = vld [vmem:[%s1 + $0x4] sm:$0xf]
  %v81 = vld [vmem:[%s1 + $0x8] sm:$0xf]
  %v82 = vld [vmem:[%s1 + $0xc] sm:$0xf]
  %v83 = vld [vmem:[%s1 + $0x10] sm:$0xf]
  %v84 = vld [vmem:[%s1 + $0x14] sm:$0xf]
  %v85 = vld [vmem:[%s1 + $0x18] sm:$0xf]
  %v86 = vld [vmem:[%s1 + $0x1c] sm:$0xf]
  %v87 = vld [vmem:[%s1 + $0x20] sm:$0xf]
  %v88 = vld [vmem:[%s1 + $0x24] sm:$0xf]
  %v89 = vld [vmem:[%s1 + $0x28] sm:$0xf]
  %v90 = vld [vmem:[%s1 + $0x2c] sm:$0xf]
  %v91 = vld [vmem:[%s1 + $0x30] sm:$0xf]
  %v92 = vld [vmem:[%s1 + $0x34] sm:$0xf]
  %v93 = vld [vmem:[%s1 + $0x38] sm:$0xf]
  %v94 = vld [vmem:[%s1 + $0x3c] sm:$0xf]
  %v95 = vld [vmem:[%s1 + $0x40] sm:$0xf]
  %v96 = vld [vmem:[%s1 + $0x44] sm:$0xf]
  %v97 = vld [vmem:[%s2] sm:$0x1]
  %v99 = vlaneseq
  %v100 = vshrl.u32 %v99, 7
  %v101 = vsub.s32 0, %v100
  %v102 = vrot.slane %v97, %v101
  %v168 = vunpack.c.l.b16 %v15
  %v169 = vunpack.c.h.b16 %v15
  %v170 = vunpack.c.l.b16 %v16
  %v171 = vunpack.c.h.b16 %v16
  %v172 = vunpack.c.l.b16 %v17
  %v173 = vunpack.c.h.b16 %v17
  %v174 = vunpack.c.l.b16 %v18
  %v175 = vunpack.c.h.b16 %v18
  %v176 = vunpack.c.l.b16 %v19
  %v177 = vunpack.c.h.b16 %v19
  %v178 = vunpack.c.l.b16 %v20
  %v179 = vunpack.c.h.b16 %v20
  %v180 = vunpack.c.l.b16 %v21
  %v181 = vunpack.c.h.b16 %v21
  %v182 = vunpack.c.l.b16 %v22
  %v183 = vunpack.c.h.b16 %v22
  %v184 = vunpack.c.l.b16 %v23
  %v185 = vunpack.c.h.b16 %v23
  %v186 = vunpack.c.l.b16 %v24
  %v187 = vunpack.c.h.b16 %v24
  %v188 = vunpack.c.l.b16 %v25
  %v189 = vunpack.c.h.b16 %v25
  %v190 = vunpack.c.l.b16 %v26
  %v191 = vunpack.c.h.b16 %v26
  %v192 = vunpack.c.l.b16 %v27
  %v193 = vunpack.c.h.b16 %v27
  %v194 = vunpack.c.l.b16 %v28
  %v195 = vunpack.c.h.b16 %v28
  %v196 = vunpack.c.l.b16 %v29
  %v197 = vunpack.c.h.b16 %v29
  %v198 = vunpack.c.l.b16 %v30
  %v199 = vunpack.c.h.b16 %v30
  %v200 = vunpack.c.l.b16 %v31
  %v201 = vunpack.c.h.b16 %v31
  %v202 = vunpack.c.l.b16 %v32
  %v203 = vunpack.c.h.b16 %v32
  %v204 = vunpack.c.l.b16 %v33
  %v205 = vunpack.c.h.b16 %v33
  %v206 = vunpack.c.l.b16 %v34
  %v207 = vunpack.c.h.b16 %v34
  %v208 = vunpack.c.l.b16 %v35
  %v209 = vunpack.c.h.b16 %v35
  %v210 = vunpack.c.l.b16 %v36
  %v211 = vunpack.c.h.b16 %v36
  %v212 = vunpack.c.l.b16 %v37
  %v213 = vunpack.c.h.b16 %v37
  %v214 = vunpack.c.l.b16 %v38
  %v215 = vunpack.c.h.b16 %v38
  %v216 = vunpack.c.l.b16 %v39
  %v217 = vunpack.c.h.b16 %v39
  %v218 = vunpack.c.l.b16 %v40
  %v219 = vunpack.c.h.b16 %v40
  %v220 = vunpack.c.l.b16 %v41
  %v221 = vunpack.c.h.b16 %v41
  %v222 = vunpack.c.l.b16 %v42
  %v223 = vunpack.c.h.b16 %v42
  %v224 = vunpack.c.l.b16 %v43
  %v225 = vunpack.c.h.b16 %v43
  %v226 = vunpack.c.l.b16 %v44
  %v227 = vunpack.c.h.b16 %v44
  %v228 = vunpack.c.l.b16 %v45
  %v229 = vunpack.c.h.b16 %v45
  %v230 = vunpack.c.l.b16 %v46
  %v231 = vunpack.c.h.b16 %v46
  %v232 = vunpack.c.l.b16 %v47
  %v233 = vunpack.c.h.b16 %v47
  %v234 = vunpack.c.l.b16 %v48
  %v235 = vunpack.c.h.b16 %v48
  %v236 = vunpack.c.l.b16 %v49
  %v237 = vunpack.c.h.b16 %v49
  %v238 = vunpack.c.l.b16 %v50
  %v239 = vunpack.c.h.b16 %v50
  %v240 = vunpack.c.l.b16 %v51
  %v241 = vunpack.c.h.b16 %v51
  %v242 = vunpack.c.l.b16 %v52
  %v243 = vunpack.c.h.b16 %v52
  %v244 = vunpack.c.l.b16 %v53
  %v245 = vunpack.c.h.b16 %v53
  %v246 = vunpack.c.l.b16 %v54
  %v247 = vunpack.c.h.b16 %v54
  %v248 = vunpack.c.l.b16 %v55
  %v249 = vunpack.c.h.b16 %v55
  %v250 = vunpack.c.l.b16 %v56
  %v251 = vunpack.c.h.b16 %v56
  %v252 = vunpack.c.l.b16 %v57
  %v253 = vunpack.c.h.b16 %v57
  %v254 = vunpack.c.l.b16 %v58
  %v255 = vunpack.c.h.b16 %v58
  %v256 = vunpack.c.l.b16 %v59
  %v257 = vunpack.c.h.b16 %v59
  %v258 = vunpack.c.l.b16 %v60
  %v259 = vunpack.c.h.b16 %v60
  %v260 = vunpack.c.l.b16 %v61
  %v261 = vunpack.c.h.b16 %v61
  %v262 = vunpack.c.l.b16 %v62
  %v263 = vunpack.c.h.b16 %v62
  %v264 = vunpack.c.l.b16 %v63
  %v265 = vunpack.c.h.b16 %v63
  %v266 = vunpack.c.l.b16 %v64
  %v267 = vunpack.c.h.b16 %v64
  %v268 = vunpack.c.l.b16 %v65
  %v269 = vunpack.c.h.b16 %v65
  %v270 = vunpack.c.l.b16 %v66
  %v271 = vunpack.c.h.b16 %v66
  %v272 = vunpack.c.l.b16 %v67
  %v273 = vunpack.c.h.b16 %v67
  %v274 = vunpack.c.l.b16 %v68
  %v275 = vunpack.c.h.b16 %v68
  %v276 = vunpack.c.l.b16 %v69
  %v277 = vunpack.c.h.b16 %v69
  %v278 = vunpack.c.l.b16 %v70
  %v279 = vunpack.c.h.b16 %v70
  %v280 = vunpack.c.l.b16 %v71
  %v281 = vunpack.c.h.b16 %v71
  %v282 = vunpack.c.l.b16 %v72
  %v283 = vunpack.c.h.b16 %v72
  %v284 = vunpack.c.l.b16 %v73
  %v285 = vunpack.c.h.b16 %v73
  %v286 = vunpack.c.l.b16 %v74
  %v287 = vunpack.c.h.b16 %v74
  %v288 = vunpack.c.l.b16 %v75
  %v289 = vunpack.c.h.b16 %v75
  %v290 = vunpack.c.l.b16 %v76
  %v291 = vunpack.c.h.b16 %v76
  %v292 = vunpack.c.l.b16 %v77
  %v293 = vunpack.c.h.b16 %v77
  %v294 = vunpack.c.l.b16 %v78
  %v295 = vunpack.c.h.b16 %v78
  %v296 = vpack.c.b16 %v170, %v168
  %v297 = vpack.c.b16 %v171, %v169
  %v298 = vpack.c.b16 %v174, %v172
  %v299 = vpack.c.b16 %v175, %v173
  %v300 = vpack.c.b16 %v178, %v176
  %v301 = vpack.c.b16 %v179, %v177
  %v302 = vpack.c.b16 %v182, %v180
  %v303 = vpack.c.b16 %v183, %v181
  %v304 = vpack.c.b16 %v186, %v184
  %v305 = vpack.c.b16 %v187, %v185
  %v306 = vpack.c.b16 %v190, %v188
  %v307 = vpack.c.b16 %v191, %v189
  %v308 = vpack.c.b16 %v194, %v192
  %v309 = vpack.c.b16 %v195, %v193
  %v310 = vpack.c.b16 %v198, %v196
  %v311 = vpack.c.b16 %v199, %v197
  %v312 = vpack.c.b16 %v202, %v200
  %v313 = vpack.c.b16 %v203, %v201
  %v314 = vpack.c.b16 %v206, %v204
  %v315 = vpack.c.b16 %v207, %v205
  %v316 = vpack.c.b16 %v210, %v208
  %v317 = vpack.c.b16 %v211, %v209
  %v318 = vpack.c.b16 %v214, %v212
  %v319 = vpack.c.b16 %v215, %v213
  %v320 = vpack.c.b16 %v218, %v216
  %v321 = vpack.c.b16 %v219, %v217
  %v322 = vpack.c.b16 %v222, %v220
  %v323 = vpack.c.b16 %v223, %v221
  %v324 = vpack.c.b16 %v226, %v224
  %v325 = vpack.c.b16 %v227, %v225
  %v326 = vpack.c.b16 %v230, %v228
  %v327 = vpack.c.b16 %v231, %v229
  %v328 = vpack.c.b16 %v234, %v232
  %v329 = vpack.c.b16 %v235, %v233
  %v330 = vpack.c.b16 %v238, %v236
  %v331 = vpack.c.b16 %v239, %v237
  %v332 = vpack.c.b16 %v242, %v240
  %v333 = vpack.c.b16 %v243, %v241
  %v334 = vpack.c.b16 %v246, %v244
  %v335 = vpack.c.b16 %v247, %v245
  %v336 = vpack.c.b16 %v250, %v248
  %v337 = vpack.c.b16 %v251, %v249
  %v338 = vpack.c.b16 %v254, %v252
  %v339 = vpack.c.b16 %v255, %v253
  %v340 = vpack.c.b16 %v258, %v256
  %v341 = vpack.c.b16 %v259, %v257
  %v342 = vpack.c.b16 %v262, %v260
  %v343 = vpack.c.b16 %v263, %v261
  %v344 = vpack.c.b16 %v266, %v264
  %v345 = vpack.c.b16 %v267, %v265
  %v346 = vpack.c.b16 %v270, %v268
  %v347 = vpack.c.b16 %v271, %v269
  %v348 = vpack.c.b16 %v274, %v272
  %v349 = vpack.c.b16 %v275, %v273
  %v350 = vpack.c.b16 %v278, %v276
  %v351 = vpack.c.b16 %v279, %v277
  %v352 = vpack.c.b16 %v282, %v280
  %v353 = vpack.c.b16 %v283, %v281
  %v354 = vpack.c.b16 %v286, %v284
  %v355 = vpack.c.b16 %v287, %v285
  %v356 = vpack.c.b16 %v290, %v288
  %v357 = vpack.c.b16 %v291, %v289
  %v358 = vpack.c.b16 %v294, %v292
  %v359 = vpack.c.b16 %v295, %v293
  %v410 = vunpack.c.l.b16 %v79
  %v411 = vunpack.c.l.b16 %v80
  %v412 = vunpack.c.l.b16 %v81
  %v413 = vunpack.c.l.b16 %v82
  %v414 = vunpack.c.l.b16 %v83
  %v415 = vunpack.c.l.b16 %v84
  %v416 = vunpack.c.l.b16 %v85
  %v417 = vunpack.c.l.b16 %v86
  %v418 = vunpack.c.l.b16 %v87
  %v419 = vunpack.c.l.b16 %v88
  %v420 = vunpack.c.l.b16 %v89
  %v421 = vunpack.c.l.b16 %v90
  %v422 = vunpack.c.l.b16 %v91
  %v423 = vunpack.c.l.b16 %v92
  %v424 = vunpack.c.l.b16 %v93
  %v425 = vunpack.c.l.b16 %v94
  %v426 = vunpack.c.l.b16 %v95
  %v427 = vunpack.c.l.b16 %v96
  %v428 = vpack.c.b16 %v411, %v410
  %v429 = vpack.c.b16 %v413, %v412
  %v430 = vpack.c.b16 %v415, %v414
  %v431 = vpack.c.b16 %v417, %v416
  %v432 = vpack.c.b16 %v419, %v418
  %v433 = vpack.c.b16 %v421, %v420
  %v434 = vpack.c.b16 %v423, %v422
  %v435 = vpack.c.b16 %v425, %v424
  %v436 = vpack.c.b16 %v427, %v426
  %vm446 = vcmask 130048
  %v448 = vsel %vm446, %v297, 0
  %v451 = vsel %vm446, %v299, 0
  %v454 = vsel %vm446, %v301, 0
  %v457 = vsel %vm446, %v303, 0
  %v460 = vsel %vm446, %v305, 0
  %v463 = vsel %vm446, %v307, 0
  %v466 = vsel %vm446, %v309, 0
  %v469 = vsel %vm446, %v311, 0
  %v472 = vsel %vm446, %v313, 0
  %v475 = vsel %vm446, %v315, 0
  %v478 = vsel %vm446, %v317, 0
  %v481 = vsel %vm446, %v319, 0
  %v484 = vsel %vm446, %v321, 0
  %v487 = vsel %vm446, %v323, 0
  %v490 = vsel %vm446, %v325, 0
  %v493 = vsel %vm446, %v327, 0
  %v496 = vsel %vm446, %v329, 0
  %v499 = vsel %vm446, %v331, 0
  %v502 = vsel %vm446, %v333, 0
  %v505 = vsel %vm446, %v335, 0
  %v508 = vsel %vm446, %v337, 0
  %v511 = vsel %vm446, %v339, 0
  %v514 = vsel %vm446, %v341, 0
  %v517 = vsel %vm446, %v343, 0
  %v520 = vsel %vm446, %v345, 0
  %v523 = vsel %vm446, %v347, 0
  %v526 = vsel %vm446, %v349, 0
  %v529 = vsel %vm446, %v351, 0
  %v532 = vsel %vm446, %v353, 0
  %v535 = vsel %vm446, %v355, 0
  %v538 = vsel %vm446, %v357, 0
  %v541 = vsel %vm446, %v359, 0
  %543 = vmatprep.subr.bf16.mxu0 0
  %544 = vmatpush1.bf16.msra.mxu0 %v435
  %545 = vmatprep.subr.bf16.mxu0 0
  %546 = vmatpush1.bf16.msra.mxu0 %v434
  %547 = vmatprep.subr.bf16.mxu0 0
  %548 = vmatpush1.bf16.msra.mxu0 %v433
  %549 = vmatprep.subr.bf16.mxu0 0
  %550 = vmatpush1.bf16.msra.mxu0 %v432
  %551 = vmatprep.subr.bf16.mxu0 0
  %552 = vmatpush1.bf16.msra.mxu0 %v431
  %553 = vmatprep.subr.bf16.mxu0 0
  %554 = vmatpush1.bf16.msra.mxu0 %v430
  %555 = vmatprep.subr.bf16.mxu0 0
  %556 = vmatpush1.bf16.msra.mxu0 %v429
  %557 = vmatprep.subr.bf16.mxu0 0
  %558 = vmatpush1.bf16.msra.mxu0 %v428
  %559 = vmatprep.subr.bf16.mxu0 0
  %560 = vmatpush2.bf16.msra.mxu0 0
  %561 = vmatprep.subr.bf16.mxu0 0
  %562 = vmatpush2.bf16.msra.mxu0 0
  %563 = vmatprep.subr.bf16.mxu0 0
  %564 = vmatpush2.bf16.msra.mxu0 0
  %565 = vmatprep.subr.bf16.mxu0 0
  %566 = vmatpush2.bf16.msra.mxu0 0
  %567 = vmatprep.subr.bf16.mxu0 0
  %568 = vmatpush2.bf16.msra.mxu0 0
  %569 = vmatprep.subr.bf16.mxu0 0
  %570 = vmatpush2.bf16.msra.mxu0 0
  %571 = vmatprep.subr.bf16.mxu0 0
  %572 = vmatpush2.bf16.msra.mxu0 0
  %573 = vmatprep.subr.bf16.mxu0 0
  %574 = vmatpush2.bf16.msra.mxu0 %v436
  %575 = vmatprep.mubr.bf16.mxu0 %v448
  %576 = vmatmul.mubr.bf16.gmra.mxu0 %v296
  %v577 = vpop.f32.mrf.mxu0
  %v578 = vadd.f32 %v102, %v577
  %v579 = vpop.f32.mrf.mxu0
  %v580 = vpop.f32.mrf.mxu0
  %v581 = vadd.f32 %v102, %v580
  %v582 = vpop.f32.mrf.mxu0
  %583 = vmatprep.mubr.bf16.mxu0 %v451
  %584 = vmatmul.mubr.bf16.gmra.mxu0 %v298
  %v585 = vpop.f32.mrf.mxu0
  %v586 = vadd.f32 %v102, %v585
  %v587 = vpop.f32.mrf.mxu0
  %v588 = vpop.f32.mrf.mxu0
  %v589 = vadd.f32 %v102, %v588
  %v590 = vpop.f32.mrf.mxu0
  %591 = vmatprep.mubr.bf16.mxu0 %v454
  %592 = vmatmul.mubr.bf16.gmra.mxu0 %v300
  %v593 = vpop.f32.mrf.mxu0
  %v594 = vadd.f32 %v102, %v593
  %v595 = vpop.f32.mrf.mxu0
  %v596 = vpop.f32.mrf.mxu0
  %v597 = vadd.f32 %v102, %v596
  %v598 = vpop.f32.mrf.mxu0
  %599 = vmatprep.mubr.bf16.mxu0 %v457
  %600 = vmatmul.mubr.bf16.gmra.mxu0 %v302
  %v601 = vpop.f32.mrf.mxu0
  %v602 = vadd.f32 %v102, %v601
  %v603 = vpop.f32.mrf.mxu0
  %v604 = vpop.f32.mrf.mxu0
  %v605 = vadd.f32 %v102, %v604
  %v606 = vpop.f32.mrf.mxu0
  %607 = vmatprep.mubr.bf16.mxu0 %v460
  %608 = vmatmul.mubr.bf16.gmra.mxu0 %v304
  %v609 = vpop.f32.mrf.mxu0
  %v610 = vadd.f32 %v102, %v609
  %v611 = vpop.f32.mrf.mxu0
  %v612 = vpop.f32.mrf.mxu0
  %v613 = vadd.f32 %v102, %v612
  %v614 = vpop.f32.mrf.mxu0
  %615 = vmatprep.mubr.bf16.mxu0 %v463
  %616 = vmatmul.mubr.bf16.gmra.mxu0 %v306
  %v617 = vpop.f32.mrf.mxu0
  %v618 = vadd.f32 %v102, %v617
  %v619 = vpop.f32.mrf.mxu0
  %v620 = vpop.f32.mrf.mxu0
  %v621 = vadd.f32 %v102, %v620
  %v622 = vpop.f32.mrf.mxu0
  %623 = vmatprep.mubr.bf16.mxu0 %v466
  %624 = vmatmul.mubr.bf16.gmra.mxu0 %v308
  %v625 = vpop.f32.mrf.mxu0
  %v626 = vadd.f32 %v102, %v625
  %v627 = vpop.f32.mrf.mxu0
  %v628 = vpop.f32.mrf.mxu0
  %v629 = vadd.f32 %v102, %v628
  %v630 = vpop.f32.mrf.mxu0
  %631 = vmatprep.mubr.bf16.mxu0 %v469
  %632 = vmatmul.mubr.bf16.gmra.mxu0 %v310
  %v633 = vpop.f32.mrf.mxu0
  %v634 = vadd.f32 %v102, %v633
  %v635 = vpop.f32.mrf.mxu0
  %v636 = vpop.f32.mrf.mxu0
  %v637 = vadd.f32 %v102, %v636
  %v638 = vpop.f32.mrf.mxu0
  %639 = vmatprep.mubr.bf16.mxu0 %v472
  %640 = vmatmul.mubr.bf16.gmra.mxu0 %v312
  %v641 = vpop.f32.mrf.mxu0
  %v642 = vadd.f32 %v102, %v641
  %v643 = vpop.f32.mrf.mxu0
  %v644 = vpop.f32.mrf.mxu0
  %v645 = vadd.f32 %v102, %v644
  %v646 = vpop.f32.mrf.mxu0
  %647 = vmatprep.mubr.bf16.mxu0 %v475
  %648 = vmatmul.mubr.bf16.gmra.mxu0 %v314
  %v649 = vpop.f32.mrf.mxu0
  %v650 = vadd.f32 %v102, %v649
  %v651 = vpop.f32.mrf.mxu0
  %v652 = vpop.f32.mrf.mxu0
  %v653 = vadd.f32 %v102, %v652
  %v654 = vpop.f32.mrf.mxu0
  %655 = vmatprep.mubr.bf16.mxu0 %v478
  %656 = vmatmul.mubr.bf16.gmra.mxu0 %v316
  %v657 = vpop.f32.mrf.mxu0
  %v658 = vadd.f32 %v102, %v657
  %v659 = vpop.f32.mrf.mxu0
  %v660 = vpop.f32.mrf.mxu0
  %v661 = vadd.f32 %v102, %v660
  %v662 = vpop.f32.mrf.mxu0
  %663 = vmatprep.mubr.bf16.mxu0 %v481
  %664 = vmatmul.mubr.bf16.gmra.mxu0 %v318
  %v665 = vpop.f32.mrf.mxu0
  %v666 = vadd.f32 %v102, %v665
  %v667 = vpop.f32.mrf.mxu0
  %v668 = vpop.f32.mrf.mxu0
  %v669 = vadd.f32 %v102, %v668
  %v670 = vpop.f32.mrf.mxu0
  %671 = vmatprep.mubr.bf16.mxu0 %v484
  %672 = vmatmul.mubr.bf16.gmra.mxu0 %v320
  %v673 = vpop.f32.mrf.mxu0
  %v674 = vadd.f32 %v102, %v673
  %v675 = vpop.f32.mrf.mxu0
  %v676 = vpop.f32.mrf.mxu0
  %v677 = vadd.f32 %v102, %v676
  %v678 = vpop.f32.mrf.mxu0
  %679 = vmatprep.mubr.bf16.mxu0 %v487
  %680 = vmatmul.mubr.bf16.gmra.mxu0 %v322
  %v681 = vpop.f32.mrf.mxu0
  %v682 = vadd.f32 %v102, %v681
  %v683 = vpop.f32.mrf.mxu0
  %v684 = vpop.f32.mrf.mxu0
  %v685 = vadd.f32 %v102, %v684
  %v686 = vpop.f32.mrf.mxu0
  %687 = vmatprep.mubr.bf16.mxu0 %v490
  %688 = vmatmul.mubr.bf16.gmra.mxu0 %v324
  %v689 = vpop.f32.mrf.mxu0
  %v690 = vadd.f32 %v102, %v689
  %v691 = vpop.f32.mrf.mxu0
  %v692 = vpop.f32.mrf.mxu0
  %v693 = vadd.f32 %v102, %v692
  %v694 = vpop.f32.mrf.mxu0
  %695 = vmatprep.mubr.bf16.mxu0 %v493
  %696 = vmatmul.mubr.bf16.gmra.mxu0 %v326
  %v697 = vpop.f32.mrf.mxu0
  %v698 = vadd.f32 %v102, %v697
  %v699 = vpop.f32.mrf.mxu0
  %v700 = vpop.f32.mrf.mxu0
  %v701 = vadd.f32 %v102, %v700
  %v702 = vpop.f32.mrf.mxu0
  %703 = vmatprep.mubr.bf16.mxu0 %v496
  %704 = vmatmul.mubr.bf16.gmra.mxu0 %v328
  %v705 = vpop.f32.mrf.mxu0
  %v706 = vadd.f32 %v102, %v705
  %v707 = vpop.f32.mrf.mxu0
  %v708 = vpop.f32.mrf.mxu0
  %v709 = vadd.f32 %v102, %v708
  %v710 = vpop.f32.mrf.mxu0
  %711 = vmatprep.mubr.bf16.mxu0 %v499
  %712 = vmatmul.mubr.bf16.gmra.mxu0 %v330
  %v713 = vpop.f32.mrf.mxu0
  %v714 = vadd.f32 %v102, %v713
  %v715 = vpop.f32.mrf.mxu0
  %v716 = vpop.f32.mrf.mxu0
  %v717 = vadd.f32 %v102, %v716
  %v718 = vpop.f32.mrf.mxu0
  %719 = vmatprep.mubr.bf16.mxu0 %v502
  %720 = vmatmul.mubr.bf16.gmra.mxu0 %v332
  %v721 = vpop.f32.mrf.mxu0
  %v722 = vadd.f32 %v102, %v721
  %v723 = vpop.f32.mrf.mxu0
  %v724 = vpop.f32.mrf.mxu0
  %v725 = vadd.f32 %v102, %v724
  %v726 = vpop.f32.mrf.mxu0
  %727 = vmatprep.mubr.bf16.mxu0 %v505
  %728 = vmatmul.mubr.bf16.gmra.mxu0 %v334
  %v729 = vpop.f32.mrf.mxu0
  %v730 = vadd.f32 %v102, %v729
  %v731 = vpop.f32.mrf.mxu0
  %v732 = vpop.f32.mrf.mxu0
  %v733 = vadd.f32 %v102, %v732
  %v734 = vpop.f32.mrf.mxu0
  %735 = vmatprep.mubr.bf16.mxu0 %v508
  %736 = vmatmul.mubr.bf16.gmra.mxu0 %v336
  %v737 = vpop.f32.mrf.mxu0
  %v738 = vadd.f32 %v102, %v737
  %v739 = vpop.f32.mrf.mxu0
  %v740 = vpop.f32.mrf.mxu0
  %v741 = vadd.f32 %v102, %v740
  %v742 = vpop.f32.mrf.mxu0
  %743 = vmatprep.mubr.bf16.mxu0 %v511
  %744 = vmatmul.mubr.bf16.gmra.mxu0 %v338
  %v745 = vpop.f32.mrf.mxu0
  %v746 = vadd.f32 %v102, %v745
  %v747 = vpop.f32.mrf.mxu0
  %v748 = vpop.f32.mrf.mxu0
  %v749 = vadd.f32 %v102, %v748
  %v750 = vpop.f32.mrf.mxu0
  %751 = vmatprep.mubr.bf16.mxu0 %v514
  %752 = vmatmul.mubr.bf16.gmra.mxu0 %v340
  %v753 = vpop.f32.mrf.mxu0
  %v754 = vadd.f32 %v102, %v753
  %v755 = vpop.f32.mrf.mxu0
  %v756 = vpop.f32.mrf.mxu0
  %v757 = vadd.f32 %v102, %v756
  %v758 = vpop.f32.mrf.mxu0
  %759 = vmatprep.mubr.bf16.mxu0 %v517
  %760 = vmatmul.mubr.bf16.gmra.mxu0 %v342
  %v761 = vpop.f32.mrf.mxu0
  %v762 = vadd.f32 %v102, %v761
  %v763 = vpop.f32.mrf.mxu0
  %v764 = vpop.f32.mrf.mxu0
  %v765 = vadd.f32 %v102, %v764
  %v766 = vpop.f32.mrf.mxu0
  %767 = vmatprep.mubr.bf16.mxu0 %v520
  %768 = vmatmul.mubr.bf16.gmra.mxu0 %v344
  %v769 = vpop.f32.mrf.mxu0
  %v770 = vadd.f32 %v102, %v769
  %v771 = vpop.f32.mrf.mxu0
  %v772 = vpop.f32.mrf.mxu0
  %v773 = vadd.f32 %v102, %v772
  %v774 = vpop.f32.mrf.mxu0
  %775 = vmatprep.mubr.bf16.mxu0 %v523
  %776 = vmatmul.mubr.bf16.gmra.mxu0 %v346
  %v777 = vpop.f32.mrf.mxu0
  %v778 = vadd.f32 %v102, %v777
  %v779 = vpop.f32.mrf.mxu0
  %v780 = vpop.f32.mrf.mxu0
  %v781 = vadd.f32 %v102, %v780
  %v782 = vpop.f32.mrf.mxu0
  %783 = vmatprep.mubr.bf16.mxu0 %v526
  %784 = vmatmul.mubr.bf16.gmra.mxu0 %v348
  %v785 = vpop.f32.mrf.mxu0
  %v786 = vadd.f32 %v102, %v785
  %v787 = vpop.f32.mrf.mxu0
  %v788 = vpop.f32.mrf.mxu0
  %v789 = vadd.f32 %v102, %v788
  %v790 = vpop.f32.mrf.mxu0
  %791 = vmatprep.mubr.bf16.mxu0 %v529
  %792 = vmatmul.mubr.bf16.gmra.mxu0 %v350
  %v793 = vpop.f32.mrf.mxu0
  %v794 = vadd.f32 %v102, %v793
  %v795 = vpop.f32.mrf.mxu0
  %v796 = vpop.f32.mrf.mxu0
  %v797 = vadd.f32 %v102, %v796
  %v798 = vpop.f32.mrf.mxu0
  %799 = vmatprep.mubr.bf16.mxu0 %v532
  %800 = vmatmul.mubr.bf16.gmra.mxu0 %v352
  %v801 = vpop.f32.mrf.mxu0
  %v802 = vadd.f32 %v102, %v801
  %v803 = vpop.f32.mrf.mxu0
  %v804 = vpop.f32.mrf.mxu0
  %v805 = vadd.f32 %v102, %v804
  %v806 = vpop.f32.mrf.mxu0
  %807 = vmatprep.mubr.bf16.mxu0 %v535
  %808 = vmatmul.mubr.bf16.gmra.mxu0 %v354
  %v809 = vpop.f32.mrf.mxu0
  %v810 = vadd.f32 %v102, %v809
  %v811 = vpop.f32.mrf.mxu0
  %v812 = vpop.f32.mrf.mxu0
  %v813 = vadd.f32 %v102, %v812
  %v814 = vpop.f32.mrf.mxu0
  %815 = vmatprep.mubr.bf16.mxu0 %v538
  %816 = vmatmul.mubr.bf16.gmra.mxu0 %v356
  %v817 = vpop.f32.mrf.mxu0
  %v818 = vadd.f32 %v102, %v817
  %v819 = vpop.f32.mrf.mxu0
  %v820 = vpop.f32.mrf.mxu0
  %v821 = vadd.f32 %v102, %v820
  %v822 = vpop.f32.mrf.mxu0
  %823 = vmatprep.mubr.bf16.mxu0 %v541
  %824 = vmatmul.mubr.bf16.gmra.mxu0 %v358
  %v825 = vpop.f32.mrf.mxu0
  %v826 = vadd.f32 %v102, %v825
  %v827 = vpop.f32.mrf.mxu0
  %v828 = vpop.f32.mrf.mxu0
  %v829 = vadd.f32 %v102, %v828
  %v830 = vpop.f32.mrf.mxu0
  %831 = vdwg.mxu0
  %v832 = vmax.f32 %v578, 0.0
  %v833 = vmax.f32 %v581, 0.0
  %v834 = vmax.f32 %v586, 0.0
  %v835 = vmax.f32 %v589, 0.0
  %v836 = vmax.f32 %v594, 0.0
  %v837 = vmax.f32 %v597, 0.0
  %v838 = vmax.f32 %v602, 0.0
  %v839 = vmax.f32 %v605, 0.0
  %v840 = vmax.f32 %v610, 0.0
  %v841 = vmax.f32 %v613, 0.0
  %v842 = vmax.f32 %v618, 0.0
  %v843 = vmax.f32 %v621, 0.0
  %v844 = vmax.f32 %v626, 0.0
  %v845 = vmax.f32 %v629, 0.0
  %v846 = vmax.f32 %v634, 0.0
  %v847 = vmax.f32 %v637, 0.0
  %v848 = vmax.f32 %v642, 0.0
  %v849 = vmax.f32 %v645, 0.0
  %v850 = vmax.f32 %v650, 0.0
  %v851 = vmax.f32 %v653, 0.0
  %v852 = vmax.f32 %v658, 0.0
  %v853 = vmax.f32 %v661, 0.0
  %v854 = vmax.f32 %v666, 0.0
  %v855 = vmax.f32 %v669, 0.0
  %v856 = vmax.f32 %v674, 0.0
  %v857 = vmax.f32 %v677, 0.0
  %v858 = vmax.f32 %v682, 0.0
  %v859 = vmax.f32 %v685, 0.0
  %v860 = vmax.f32 %v690, 0.0
  %v861 = vmax.f32 %v693, 0.0
  %v862 = vmax.f32 %v698, 0.0
  %v863 = vmax.f32 %v701, 0.0
  %v864 = vmax.f32 %v706, 0.0
  %v865 = vmax.f32 %v709, 0.0
  %v866 = vmax.f32 %v714, 0.0
  %v867 = vmax.f32 %v717, 0.0
  %v868 = vmax.f32 %v722, 0.0
  %v869 = vmax.f32 %v725, 0.0
  %v870 = vmax.f32 %v730, 0.0
  %v871 = vmax.f32 %v733, 0.0
  %v872 = vmax.f32 %v738, 0.0
  %v873 = vmax.f32 %v741, 0.0
  %v874 = vmax.f32 %v746, 0.0
  %v875 = vmax.f32 %v749, 0.0
  %v876 = vmax.f32 %v754, 0.0
  %v877 = vmax.f32 %v757, 0.0
  %v878 = vmax.f32 %v762, 0.0
  %v879 = vmax.f32 %v765, 0.0
  %v880 = vmax.f32 %v770, 0.0
  %v881 = vmax.f32 %v773, 0.0
  %v882 = vmax.f32 %v778, 0.0
  %v883 = vmax.f32 %v781, 0.0
  %v884 = vmax.f32 %v786, 0.0
  %v885 = vmax.f32 %v789, 0.0
  %v886 = vmax.f32 %v794, 0.0
  %v887 = vmax.f32 %v797, 0.0
  %v888 = vmax.f32 %v802, 0.0
  %v889 = vmax.f32 %v805, 0.0
  %v890 = vmax.f32 %v810, 0.0
  %v891 = vmax.f32 %v813, 0.0
  %v892 = vmax.f32 %v818, 0.0
  %v893 = vmax.f32 %v821, 0.0
  %v894 = vmax.f32 %v826, 0.0
  %v895 = vmax.f32 %v829, 0.0
  %896 = vst.msk [vmem:[%s3] sm:$0xff] %vm446, %v832
  %897 = vst.msk [vmem:[%s3 + $0x8] sm:$0xff] %vm446, %v833
  %898 = vst.msk [vmem:[%s3 + $0x10] sm:$0xff] %vm446, %v834
  %899 = vst.msk [vmem:[%s3 + $0x18] sm:$0xff] %vm446, %v835
  %900 = vst.msk [vmem:[%s3 + $0x20] sm:$0xff] %vm446, %v836
  %901 = vst.msk [vmem:[%s3 + $0x28] sm:$0xff] %vm446, %v837
  %902 = vst.msk [vmem:[%s3 + $0x30] sm:$0xff] %vm446, %v838
  %903 = vst.msk [vmem:[%s3 + $0x38] sm:$0xff] %vm446, %v839
  %904 = vst.msk [vmem:[%s3 + $0x40] sm:$0xff] %vm446, %v840
  %905 = vst.msk [vmem:[%s3 + $0x48] sm:$0xff] %vm446, %v841
  %906 = vst.msk [vmem:[%s3 + $0x50] sm:$0xff] %vm446, %v842
  %907 = vst.msk [vmem:[%s3 + $0x58] sm:$0xff] %vm446, %v843
  %908 = vst.msk [vmem:[%s3 + $0x60] sm:$0xff] %vm446, %v844
  %909 = vst.msk [vmem:[%s3 + $0x68] sm:$0xff] %vm446, %v845
  %910 = vst.msk [vmem:[%s3 + $0x70] sm:$0xff] %vm446, %v846
  %911 = vst.msk [vmem:[%s3 + $0x78] sm:$0xff] %vm446, %v847
  %912 = vst.msk [vmem:[%s3 + $0x80] sm:$0xff] %vm446, %v848
  %913 = vst.msk [vmem:[%s3 + $0x88] sm:$0xff] %vm446, %v849
  %914 = vst.msk [vmem:[%s3 + $0x90] sm:$0xff] %vm446, %v850
  %915 = vst.msk [vmem:[%s3 + $0x98] sm:$0xff] %vm446, %v851
  %916 = vst.msk [vmem:[%s3 + $0xa0] sm:$0xff] %vm446, %v852
  %917 = vst.msk [vmem:[%s3 + $0xa8] sm:$0xff] %vm446, %v853
  %918 = vst.msk [vmem:[%s3 + $0xb0] sm:$0xff] %vm446, %v854
  %919 = vst.msk [vmem:[%s3 + $0xb8] sm:$0xff] %vm446, %v855
  %920 = vst.msk [vmem:[%s3 + $0xc0] sm:$0xff] %vm446, %v856
  %921 = vst.msk [vmem:[%s3 + $0xc8] sm:$0xff] %vm446, %v857
  %922 = vst.msk [vmem:[%s3 + $0xd0] sm:$0xff] %vm446, %v858
  %923 = vst.msk [vmem:[%s3 + $0xd8] sm:$0xff] %vm446, %v859
  %924 = vst.msk [vmem:[%s3 + $0xe0] sm:$0xff] %vm446, %v860
  %925 = vst.msk [vmem:[%s3 + $0xe8] sm:$0xff] %vm446, %v861
  %926 = vst.msk [vmem:[%s3 + $0xf0] sm:$0xff] %vm446, %v862
  %927 = vst.msk [vmem:[%s3 + $0xf8] sm:$0xff] %vm446, %v863
  %928 = vst.msk [vmem:[%s3 + $0x100] sm:$0xff] %vm446, %v864
  %929 = vst.msk [vmem:[%s3 + $0x108] sm:$0xff] %vm446, %v865
  %930 = vst.msk [vmem:[%s3 + $0x110] sm:$0xff] %vm446, %v866
  %931 = vst.msk [vmem:[%s3 + $0x118] sm:$0xff] %vm446, %v867
  %932 = vst.msk [vmem:[%s3 + $0x120] sm:$0xff] %vm446, %v868
  %933 = vst.msk [vmem:[%s3 + $0x128] sm:$0xff] %vm446, %v869
  %934 = vst.msk [vmem:[%s3 + $0x130] sm:$0xff] %vm446, %v870
  %935 = vst.msk [vmem:[%s3 + $0x138] sm:$0xff] %vm446, %v871
  %936 = vst.msk [vmem:[%s3 + $0x140] sm:$0xff] %vm446, %v872
  %937 = vst.msk [vmem:[%s3 + $0x148] sm:$0xff] %vm446, %v873
  %938 = vst.msk [vmem:[%s3 + $0x150] sm:$0xff] %vm446, %v874
  %939 = vst.msk [vmem:[%s3 + $0x158] sm:$0xff] %vm446, %v875
  %940 = vst.msk [vmem:[%s3 + $0x160] sm:$0xff] %vm446, %v876
  %941 = vst.msk [vmem:[%s3 + $0x168] sm:$0xff] %vm446, %v877
  %942 = vst.msk [vmem:[%s3 + $0x170] sm:$0xff] %vm446, %v878
  %943 = vst.msk [vmem:[%s3 + $0x178] sm:$0xff] %vm446, %v879
  %944 = vst.msk [vmem:[%s3 + $0x180] sm:$0xff] %vm446, %v880
  %945 = vst.msk [vmem:[%s3 + $0x188] sm:$0xff] %vm446, %v881
  %946 = vst.msk [vmem:[%s3 + $0x190] sm:$0xff] %vm446, %v882
  %947 = vst.msk [vmem:[%s3 + $0x198] sm:$0xff] %vm446, %v883
  %948 = vst.msk [vmem:[%s3 + $0x1a0] sm:$0xff] %vm446, %v884
  %949 = vst.msk [vmem:[%s3 + $0x1a8] sm:$0xff] %vm446, %v885
  %950 = vst.msk [vmem:[%s3 + $0x1b0] sm:$0xff] %vm446, %v886
  %951 = vst.msk [vmem:[%s3 + $0x1b8] sm:$0xff] %vm446, %v887
  %952 = vst.msk [vmem:[%s3 + $0x1c0] sm:$0xff] %vm446, %v888
  %953 = vst.msk [vmem:[%s3 + $0x1c8] sm:$0xff] %vm446, %v889
  %954 = vst.msk [vmem:[%s3 + $0x1d0] sm:$0xff] %vm446, %v890
  %955 = vst.msk [vmem:[%s3 + $0x1d8] sm:$0xff] %vm446, %v891
  %956 = vst.msk [vmem:[%s3 + $0x1e0] sm:$0xff] %vm446, %v892
  %957 = vst.msk [vmem:[%s3 + $0x1e8] sm:$0xff] %vm446, %v893
  %958 = vst.msk [vmem:[%s3 + $0x1f0] sm:$0xff] %vm446, %v894
  %959 = vst.msk [vmem:[%s3 + $0x1f8] sm:$0xff] %vm446, %v895
  // Predicated region
  $region14: #{forward.59} parent=0 // pred_check
    _
  $region15: #{forward.59} parent=0 // pred_check_branch
    %961 = sbr.rel (0) target = $region17
  $region16: #{forward.59} parent=0 // pred_region
    _
  $region17: #{forward.59} parent=0 // pred_fallthru
    _
  // Predicated region
  $region18: #{forward.59} parent=0 // pred_check
    _
  $region19: #{forward.59} parent=0 // pred_check_branch
    %963 = sbr.rel (0) target = $region21
  $region20: #{forward.59} parent=0 // pred_region
    _
  $region21: #{forward.59} parent=0 // pred_fallthru
    _

// kernel: forward.57
$region0: #{forward.57}
  #allocation0 [shape = 'u32[]', space=smem, size = 0x4, offset = 0x4, fixed_abs, tag = 'smem constant byte address 0x4 - core index']
  #allocation1 [shape = 'u32[144,128]{1,0:T(1,128)}', space=vmem, size = 0x12000, scoped, tag = 'internal scratch']
  %s0 = inlined_call_operand.vmem [shape: f32[512,16], index: 0, kind: input, shape index: {}]
  %s1 = inlined_call_operand.vmem [shape: bf16[16,64], index: 1, kind: input, shape index: {}]
  %s2 = inlined_call_operand.vmem [shape: f32[1,64], index: 2, kind: input, shape index: {}]
  %s3 = inlined_call_operand.vmem [shape: f32[512,64], index: 3, kind: output, shape index: {}]
  %s4 = sld [smem:[#allocation0]]
  $region22: #{forward.57} parent=0
    _
  %s6 = ssub.s32 1, %s4
  %s7 = scalar_select 0, %s6, %s4
  // Predicated region
  $region2: #{forward.57} parent=0 // pred_check
    _
  $region3: #{forward.57} parent=0 // pred_check_branch
    %9 = sbr.rel (0) target = $region5
  $region4: #{forward.57} parent=0 // pred_region
    _
  $region5: #{forward.57} parent=0 // pred_fallthru
    _
  // Predicated region
  $region6: #{forward.57} parent=0 // pred_check
    _
  $region7: #{forward.57} parent=0 // pred_check_branch
    %11 = sbr.rel (0) target = $region9
  $region8: #{forward.57} parent=0 // pred_region
    _
  $region9: #{forward.57} parent=0 // pred_fallthru
    _
  // Predicated region
  $region10: #{forward.57} parent=0 // pred_check
    _
  $region11: #{forward.57} parent=0 // pred_check_branch
    %13 = sbr.rel (0) target = $region13
  $region12: #{forward.57} parent=0 // pred_region
    _
  $region13: #{forward.57} parent=0 // pred_fallthru
    _
  %v15 = vld [vmem:[%s0] sm:$0xff]
  %v16 = vld [vmem:[%s0 + $0x8] sm:$0xff]
  %v17 = vld [vmem:[%s0 + $0x10] sm:$0xff]
  %v18 = vld [vmem:[%s0 + $0x18] sm:$0xff]
  %v19 = vld [vmem:[%s0 + $0x20] sm:$0xff]
  %v20 = vld [vmem:[%s0 + $0x28] sm:$0xff]
  %v21 = vld [vmem:[%s0 + $0x30] sm:$0xff]
  %v22 = vld [vmem:[%s0 + $0x38] sm:$0xff]
  %v23 = vld [vmem:[%s0 + $0x40] sm:$0xff]
  %v24 = vld [vmem:[%s0 + $0x48] sm:$0xff]
  %v25 = vld [vmem:[%s0 + $0x50] sm:$0xff]
  %v26 = vld [vmem:[%s0 + $0x58] sm:$0xff]
  %v27 = vld [vmem:[%s0 + $0x60] sm:$0xff]
  %v28 = vld [vmem:[%s0 + $0x68] sm:$0xff]
  %v29 = vld [vmem:[%s0 + $0x70] sm:$0xff]
  %v30 = vld [vmem:[%s0 + $0x78] sm:$0xff]
  %v31 = vld [vmem:[%s0 + $0x80] sm:$0xff]
  %v32 = vld [vmem:[%s0 + $0x88] sm:$0xff]
  %v33 = vld [vmem:[%s0 + $0x90] sm:$0xff]
  %v34 = vld [vmem:[%s0 + $0x98] sm:$0xff]
  %v35 = vld [vmem:[%s0 + $0xa0] sm:$0xff]
  %v36 = vld [vmem:[%s0 + $0xa8] sm:$0xff]
  %v37 = vld [vmem:[%s0 + $0xb0] sm:$0xff]
  %v38 = vld [vmem:[%s0 + $0xb8] sm:$0xff]
  %v39 = vld [vmem:[%s0 + $0xc0] sm:$0xff]
  %v40 = vld [vmem:[%s0 + $0xc8] sm:$0xff]
  %v41 = vld [vmem:[%s0 + $0xd0] sm:$0xff]
  %v42 = vld [vmem:[%s0 + $0xd8] sm:$0xff]
  %v43 = vld [vmem:[%s0 + $0xe0] sm:$0xff]
  %v44 = vld [vmem:[%s0 + $0xe8] sm:$0xff]
  %v45 = vld [vmem:[%s0 + $0xf0] sm:$0xff]
  %v46 = vld [vmem:[%s0 + $0xf8] sm:$0xff]
  %v47 = vld [vmem:[%s0 + $0x100] sm:$0xff]
  %v48 = vld [vmem:[%s0 + $0x108] sm:$0xff]
  %v49 = vld [vmem:[%s0 + $0x110] sm:$0xff]
  %v50 = vld [vmem:[%s0 + $0x118] sm:$0xff]
  %v51 = vld [vmem:[%s0 + $0x120] sm:$0xff]
  %v52 = vld [vmem:[%s0 + $0x128] sm:$0xff]
  %v53 = vld [vmem:[%s0 + $0x130] sm:$0xff]
  %v54 = vld [vmem:[%s0 + $0x138] sm:$0xff]
  %v55 = vld [vmem:[%s0 + $0x140] sm:$0xff]
  %v56 = vld [vmem:[%s0 + $0x148] sm:$0xff]
  %v57 = vld [vmem:[%s0 + $0x150] sm:$0xff]
  %v58 = vld [vmem:[%s0 + $0x158] sm:$0xff]
  %v59 = vld [vmem:[%s0 + $0x160] sm:$0xff]
  %v60 = vld [vmem:[%s0 + $0x168] sm:$0xff]
  %v61 = vld [vmem:[%s0 + $0x170] sm:$0xff]
  %v62 = vld [vmem:[%s0 + $0x178] sm:$0xff]
  %v63 = vld [vmem:[%s0 + $0x180] sm:$0xff]
  %v64 = vld [vmem:[%s0 + $0x188] sm:$0xff]
  %v65 = vld [vmem:[%s0 + $0x190] sm:$0xff]
  %v66 = vld [vmem:[%s0 + $0x198] sm:$0xff]
  %v67 = vld [vmem:[%s0 + $0x1a0] sm:$0xff]
  %v68 = vld [vmem:[%s0 + $0x1a8] sm:$0xff]
  %v69 = vld [vmem:[%s0 + $0x1b0] sm:$0xff]
  %v70 = vld [vmem:[%s0 + $0x1b8] sm:$0xff]
  %v71 = vld [vmem:[%s0 + $0x1c0] sm:$0xff]
  %v72 = vld [vmem:[%s0 + $0x1c8] sm:$0xff]
  %v73 = vld [vmem:[%s0 + $0x1d0] sm:$0xff]
  %v74 = vld [vmem:[%s0 + $0x1d8] sm:$0xff]
  %v75 = vld [vmem:[%s0 + $0x1e0] sm:$0xff]
  %v76 = vld [vmem:[%s0 + $0x1e8] sm:$0xff]
  %v77 = vld [vmem:[%s0 + $0x1f0] sm:$0xff]
  %v78 = vld [vmem:[%s0 + $0x1f8] sm:$0xff]
  %v79 = vpack.c.bf16 %v16, %v15
  %v80 = vpack.c.bf16 %v18, %v17
  %v81 = vpack.c.bf16 %v20, %v19
  %v82 = vpack.c.bf16 %v22, %v21
  %v83 = vpack.c.bf16 %v24, %v23
  %v84 = vpack.c.bf16 %v26, %v25
  %v85 = vpack.c.bf16 %v28, %v27
  %v86 = vpack.c.bf16 %v30, %v29
  %v87 = vpack.c.bf16 %v32, %v31
  %v88 = vpack.c.bf16 %v34, %v33
  %v89 = vpack.c.bf16 %v36, %v35
  %v90 = vpack.c.bf16 %v38, %v37
  %v91 = vpack.c.bf16 %v40, %v39
  %v92 = vpack.c.bf16 %v42, %v41
  %v93 = vpack.c.bf16 %v44, %v43
  %v94 = vpack.c.bf16 %v46, %v45
  %v95 = vpack.c.bf16 %v48, %v47
  %v96 = vpack.c.bf16 %v50, %v49
  %v97 = vpack.c.bf16 %v52, %v51
  %v98 = vpack.c.bf16 %v54, %v53
  %v99 = vpack.c.bf16 %v56, %v55
  %v100 = vpack.c.bf16 %v58, %v57
  %v101 = vpack.c.bf16 %v60, %v59
  %v102 = vpack.c.bf16 %v62, %v61
  %v103 = vpack.c.bf16 %v64, %v63
  %v104 = vpack.c.bf16 %v66, %v65
  %v105 = vpack.c.bf16 %v68, %v67
  %v106 = vpack.c.bf16 %v70, %v69
  %v107 = vpack.c.bf16 %v72, %v71
  %v108 = vpack.c.bf16 %v74, %v73
  %v109 = vpack.c.bf16 %v76, %v75
  %v110 = vpack.c.bf16 %v78, %v77
  %v111 = vld [vmem:[%s1] sm:$0xf]
  %v112 = vld [vmem:[%s1 + $0x4] sm:$0xf]
  %v113 = vld [vmem:[%s2] sm:$0x1]
  %v115 = vlaneseq
  %v116 = vshrl.u32 %v115, 7
  %v117 = vsub.s32 0, %v116
  %v118 = vrot.slane %v113, %v117
  %v122 = vunpack.c.l.b16 %v111
  %v123 = vunpack.c.l.b16 %v112
  %v124 = vpack.c.b16 %v123, %v122
  %vm126 = vcmask 130048
  %v128 = vsel %vm126, %v79, 0
  %v131 = vsel %vm126, %v80, 0
  %v134 = vsel %vm126, %v81, 0
  %v137 = vsel %vm126, %v82, 0
  %v140 = vsel %vm126, %v83, 0
  %v143 = vsel %vm126, %v84, 0
  %v146 = vsel %vm126, %v85, 0
  %v149 = vsel %vm126, %v86, 0
  %v152 = vsel %vm126, %v87, 0
  %v155 = vsel %vm126, %v88, 0
  %v158 = vsel %vm126, %v89, 0
  %v161 = vsel %vm126, %v90, 0
  %v164 = vsel %vm126, %v91, 0
  %v167 = vsel %vm126, %v92, 0
  %v170 = vsel %vm126, %v93, 0
  %v173 = vsel %vm126, %v94, 0
  %v176 = vsel %vm126, %v95, 0
  %v179 = vsel %vm126, %v96, 0
  %v182 = vsel %vm126, %v97, 0
  %v185 = vsel %vm126, %v98, 0
  %v188 = vsel %vm126, %v99, 0
  %v191 = vsel %vm126, %v100, 0
  %v194 = vsel %vm126, %v101, 0
  %v197 = vsel %vm126, %v102, 0
  %v200 = vsel %vm126, %v103, 0
  %v203 = vsel %vm126, %v104, 0
  %v206 = vsel %vm126, %v105, 0
  %v209 = vsel %vm126, %v106, 0
  %v212 = vsel %vm126, %v107, 0
  %v215 = vsel %vm126, %v108, 0
  %v218 = vsel %vm126, %v109, 0
  %v221 = vsel %vm126, %v110, 0
  %223 = vmatprep.subr.bf16.mxu0 0
  %224 = vmatpush1.bf16.msra.mxu0 0
  %225 = vmatprep.subr.bf16.mxu0 0
  %226 = vmatpush1.bf16.msra.mxu0 0
  %227 = vmatprep.subr.bf16.mxu0 0
  %228 = vmatpush1.bf16.msra.mxu0 0
  %229 = vmatprep.subr.bf16.mxu0 0
  %230 = vmatpush1.bf16.msra.mxu0 0
  %231 = vmatprep.subr.bf16.mxu0 0
  %232 = vmatpush1.bf16.msra.mxu0 0
  %233 = vmatprep.subr.bf16.mxu0 0
  %234 = vmatpush1.bf16.msra.mxu0 0
  %235 = vmatprep.subr.bf16.mxu0 0
  %236 = vmatpush1.bf16.msra.mxu0 0
  %237 = vmatprep.subr.bf16.mxu0 0
  %238 = vmatpush1.bf16.msra.mxu0 %v124
  %239 = vmatprep.subr.bf16.mxu0 0
  %240 = vmatpush2.bf16.msra.mxu0 0
  %241 = vmatprep.subr.bf16.mxu0 0
  %242 = vmatpush2.bf16.msra.mxu0 0
  %243 = vmatprep.subr.bf16.mxu0 0
  %244 = vmatpush2.bf16.msra.mxu0 0
  %245 = vmatprep.subr.bf16.mxu0 0
  %246 = vmatpush2.bf16.msra.mxu0 0
  %247 = vmatprep.subr.bf16.mxu0 0
  %248 = vmatpush2.bf16.msra.mxu0 0
  %249 = vmatprep.subr.bf16.mxu0 0
  %250 = vmatpush2.bf16.msra.mxu0 0
  %251 = vmatprep.subr.bf16.mxu0 0
  %252 = vmatpush2.bf16.msra.mxu0 0
  %253 = vmatprep.subr.bf16.mxu0 0
  %254 = vmatpush2.bf16.msra.mxu0 0
  %255 = vmatprep.mubr.bf16.mxu0 0
  %256 = vmatmul.mubr.bf16.gmra.mxu0 %v128
  %v257 = vpop.f32.mrf.mxu0
  %v258 = vadd.f32 %v118, %v257
  %v259 = vpop.f32.mrf.mxu0
  %v260 = vpop.f32.mrf.mxu0
  %v261 = vadd.f32 %v118, %v260
  %v262 = vpop.f32.mrf.mxu0
  %263 = vmatprep.mubr.bf16.mxu0 0
  %264 = vmatmul.mubr.bf16.gmra.mxu0 %v131
  %v265 = vpop.f32.mrf.mxu0
  %v266 = vadd.f32 %v118, %v265
  %v267 = vpop.f32.mrf.mxu0
  %v268 = vpop.f32.mrf.mxu0
  %v269 = vadd.f32 %v118, %v268
  %v270 = vpop.f32.mrf.mxu0
  %271 = vmatprep.mubr.bf16.mxu0 0
  %272 = vmatmul.mubr.bf16.gmra.mxu0 %v134
  %v273 = vpop.f32.mrf.mxu0
  %v274 = vadd.f32 %v118, %v273
  %v275 = vpop.f32.mrf.mxu0
  %v276 = vpop.f32.mrf.mxu0
  %v277 = vadd.f32 %v118, %v276
  %v278 = vpop.f32.mrf.mxu0
  %279 = vmatprep.mubr.bf16.mxu0 0
  %280 = vmatmul.mubr.bf16.gmra.mxu0 %v137
  %v281 = vpop.f32.mrf.mxu0
  %v282 = vadd.f32 %v118, %v281
  %v283 = vpop.f32.mrf.mxu0
  %v284 = vpop.f32.mrf.mxu0
  %v285 = vadd.f32 %v118, %v284
  %v286 = vpop.f32.mrf.mxu0
  %287 = vmatprep.mubr.bf16.mxu0 0
  %288 = vmatmul.mubr.bf16.gmra.mxu0 %v140
  %v289 = vpop.f32.mrf.mxu0
  %v290 = vadd.f32 %v118, %v289
  %v291 = vpop.f32.mrf.mxu0
  %v292 = vpop.f32.mrf.mxu0
  %v293 = vadd.f32 %v118, %v292
  %v294 = vpop.f32.mrf.mxu0
  %295 = vmatprep.mubr.bf16.mxu0 0
  %296 = vmatmul.mubr.bf16.gmra.mxu0 %v143
  %v297 = vpop.f32.mrf.mxu0
  %v298 = vadd.f32 %v118, %v297
  %v299 = vpop.f32.mrf.mxu0
  %v300 = vpop.f32.mrf.mxu0
  %v301 = vadd.f32 %v118, %v300
  %v302 = vpop.f32.mrf.mxu0
  %303 = vmatprep.mubr.bf16.mxu0 0
  %304 = vmatmul.mubr.bf16.gmra.mxu0 %v146
  %v305 = vpop.f32.mrf.mxu0
  %v306 = vadd.f32 %v118, %v305
  %v307 = vpop.f32.mrf.mxu0
  %v308 = vpop.f32.mrf.mxu0
  %v309 = vadd.f32 %v118, %v308
  %v310 = vpop.f32.mrf.mxu0
  %311 = vmatprep.mubr.bf16.mxu0 0
  %312 = vmatmul.mubr.bf16.gmra.mxu0 %v149
  %v313 = vpop.f32.mrf.mxu0
  %v314 = vadd.f32 %v118, %v313
  %v315 = vpop.f32.mrf.mxu0
  %v316 = vpop.f32.mrf.mxu0
  %v317 = vadd.f32 %v118, %v316
  %v318 = vpop.f32.mrf.mxu0
  %319 = vmatprep.mubr.bf16.mxu0 0
  %320 = vmatmul.mubr.bf16.gmra.mxu0 %v152
  %v321 = vpop.f32.mrf.mxu0
  %v322 = vadd.f32 %v118, %v321
  %v323 = vpop.f32.mrf.mxu0
  %v324 = vpop.f32.mrf.mxu0
  %v325 = vadd.f32 %v118, %v324
  %v326 = vpop.f32.mrf.mxu0
  %327 = vmatprep.mubr.bf16.mxu0 0
  %328 = vmatmul.mubr.bf16.gmra.mxu0 %v155
  %v329 = vpop.f32.mrf.mxu0
  %v330 = vadd.f32 %v118, %v329
  %v331 = vpop.f32.mrf.mxu0
  %v332 = vpop.f32.mrf.mxu0
  %v333 = vadd.f32 %v118, %v332
  %v334 = vpop.f32.mrf.mxu0
  %335 = vmatprep.mubr.bf16.mxu0 0
  %336 = vmatmul.mubr.bf16.gmra.mxu0 %v158
  %v337 = vpop.f32.mrf.mxu0
  %v338 = vadd.f32 %v118, %v337
  %v339 = vpop.f32.mrf.mxu0
  %v340 = vpop.f32.mrf.mxu0
  %v341 = vadd.f32 %v118, %v340
  %v342 = vpop.f32.mrf.mxu0
  %343 = vmatprep.mubr.bf16.mxu0 0
  %344 = vmatmul.mubr.bf16.gmra.mxu0 %v161
  %v345 = vpop.f32.mrf.mxu0
  %v346 = vadd.f32 %v118, %v345
  %v347 = vpop.f32.mrf.mxu0
  %v348 = vpop.f32.mrf.mxu0
  %v349 = vadd.f32 %v118, %v348
  %v350 = vpop.f32.mrf.mxu0
  %351 = vmatprep.mubr.bf16.mxu0 0
  %352 = vmatmul.mubr.bf16.gmra.mxu0 %v164
  %v353 = vpop.f32.mrf.mxu0
  %v354 = vadd.f32 %v118, %v353
  %v355 = vpop.f32.mrf.mxu0
  %v356 = vpop.f32.mrf.mxu0
  %v357 = vadd.f32 %v118, %v356
  %v358 = vpop.f32.mrf.mxu0
  %359 = vmatprep.mubr.bf16.mxu0 0
  %360 = vmatmul.mubr.bf16.gmra.mxu0 %v167
  %v361 = vpop.f32.mrf.mxu0
  %v362 = vadd.f32 %v118, %v361
  %v363 = vpop.f32.mrf.mxu0
  %v364 = vpop.f32.mrf.mxu0
  %v365 = vadd.f32 %v118, %v364
  %v366 = vpop.f32.mrf.mxu0
  %367 = vmatprep.mubr.bf16.mxu0 0
  %368 = vmatmul.mubr.bf16.gmra.mxu0 %v170
  %v369 = vpop.f32.mrf.mxu0
  %v370 = vadd.f32 %v118, %v369
  %v371 = vpop.f32.mrf.mxu0
  %v372 = vpop.f32.mrf.mxu0
  %v373 = vadd.f32 %v118, %v372
  %v374 = vpop.f32.mrf.mxu0
  %375 = vmatprep.mubr.bf16.mxu0 0
  %376 = vmatmul.mubr.bf16.gmra.mxu0 %v173
  %v377 = vpop.f32.mrf.mxu0
  %v378 = vadd.f32 %v118, %v377
  %v379 = vpop.f32.mrf.mxu0
  %v380 = vpop.f32.mrf.mxu0
  %v381 = vadd.f32 %v118, %v380
  %v382 = vpop.f32.mrf.mxu0
  %383 = vmatprep.mubr.bf16.mxu0 0
  %384 = vmatmul.mubr.bf16.gmra.mxu0 %v176
  %v385 = vpop.f32.mrf.mxu0
  %v386 = vadd.f32 %v118, %v385
  %v387 = vpop.f32.mrf.mxu0
  %v388 = vpop.f32.mrf.mxu0
  %v389 = vadd.f32 %v118, %v388
  %v390 = vpop.f32.mrf.mxu0
  %391 = vmatprep.mubr.bf16.mxu0 0
  %392 = vmatmul.mubr.bf16.gmra.mxu0 %v179
  %v393 = vpop.f32.mrf.mxu0
  %v394 = vadd.f32 %v118, %v393
  %v395 = vpop.f32.mrf.mxu0
  %v396 = vpop.f32.mrf.mxu0
  %v397 = vadd.f32 %v118, %v396
  %v398 = vpop.f32.mrf.mxu0
  %399 = vmatprep.mubr.bf16.mxu0 0
  %400 = vmatmul.mubr.bf16.gmra.mxu0 %v182
  %v401 = vpop.f32.mrf.mxu0
  %v402 = vadd.f32 %v118, %v401
  %v403 = vpop.f32.mrf.mxu0
  %v404 = vpop.f32.mrf.mxu0
  %v405 = vadd.f32 %v118, %v404
  %v406 = vpop.f32.mrf.mxu0
  %407 = vmatprep.mubr.bf16.mxu0 0
  %408 = vmatmul.mubr.bf16.gmra.mxu0 %v185
  %v409 = vpop.f32.mrf.mxu0
  %v410 = vadd.f32 %v118, %v409
  %v411 = vpop.f32.mrf.mxu0
  %v412 = vpop.f32.mrf.mxu0
  %v413 = vadd.f32 %v118, %v412
  %v414 = vpop.f32.mrf.mxu0
  %415 = vmatprep.mubr.bf16.mxu0 0
  %416 = vmatmul.mubr.bf16.gmra.mxu0 %v188
  %v417 = vpop.f32.mrf.mxu0
  %v418 = vadd.f32 %v118, %v417
  %v419 = vpop.f32.mrf.mxu0
  %v420 = vpop.f32.mrf.mxu0
  %v421 = vadd.f32 %v118, %v420
  %v422 = vpop.f32.mrf.mxu0
  %423 = vmatprep.mubr.bf16.mxu0 0
  %424 = vmatmul.mubr.bf16.gmra.mxu0 %v191
  %v425 = vpop.f32.mrf.mxu0
  %v426 = vadd.f32 %v118, %v425
  %v427 = vpop.f32.mrf.mxu0
  %v428 = vpop.f32.mrf.mxu0
  %v429 = vadd.f32 %v118, %v428
  %v430 = vpop.f32.mrf.mxu0
  %431 = vmatprep.mubr.bf16.mxu0 0
  %432 = vmatmul.mubr.bf16.gmra.mxu0 %v194
  %v433 = vpop.f32.mrf.mxu0
  %v434 = vadd.f32 %v118, %v433
  %v435 = vpop.f32.mrf.mxu0
  %v436 = vpop.f32.mrf.mxu0
  %v437 = vadd.f32 %v118, %v436
  %v438 = vpop.f32.mrf.mxu0
  %439 = vmatprep.mubr.bf16.mxu0 0
  %440 = vmatmul.mubr.bf16.gmra.mxu0 %v197
  %v441 = vpop.f32.mrf.mxu0
  %v442 = vadd.f32 %v118, %v441
  %v443 = vpop.f32.mrf.mxu0
  %v444 = vpop.f32.mrf.mxu0
  %v445 = vadd.f32 %v118, %v444
  %v446 = vpop.f32.mrf.mxu0
  %447 = vmatprep.mubr.bf16.mxu0 0
  %448 = vmatmul.mubr.bf16.gmra.mxu0 %v200
  %v449 = vpop.f32.mrf.mxu0
  %v450 = vadd.f32 %v118, %v449
  %v451 = vpop.f32.mrf.mxu0
  %v452 = vpop.f32.mrf.mxu0
  %v453 = vadd.f32 %v118, %v452
  %v454 = vpop.f32.mrf.mxu0
  %455 = vmatprep.mubr.bf16.mxu0 0
  %456 = vmatmul.mubr.bf16.gmra.mxu0 %v203
  %v457 = vpop.f32.mrf.mxu0
  %v458 = vadd.f32 %v118, %v457
  %v459 = vpop.f32.mrf.mxu0
  %v460 = vpop.f32.mrf.mxu0
  %v461 = vadd.f32 %v118, %v460
  %v462 = vpop.f32.mrf.mxu0
  %463 = vmatprep.mubr.bf16.mxu0 0
  %464 = vmatmul.mubr.bf16.gmra.mxu0 %v206
  %v465 = vpop.f32.mrf.mxu0
  %v466 = vadd.f32 %v118, %v465
  %v467 = vpop.f32.mrf.mxu0
  %v468 = vpop.f32.mrf.mxu0
  %v469 = vadd.f32 %v118, %v468
  %v470 = vpop.f32.mrf.mxu0
  %471 = vmatprep.mubr.bf16.mxu0 0
  %472 = vmatmul.mubr.bf16.gmra.mxu0 %v209
  %v473 = vpop.f32.mrf.mxu0
  %v474 = vadd.f32 %v118, %v473
  %v475 = vpop.f32.mrf.mxu0
  %v476 = vpop.f32.mrf.mxu0
  %v477 = vadd.f32 %v118, %v476
  %v478 = vpop.f32.mrf.mxu0
  %479 = vmatprep.mubr.bf16.mxu0 0
  %480 = vmatmul.mubr.bf16.gmra.mxu0 %v212
  %v481 = vpop.f32.mrf.mxu0
  %v482 = vadd.f32 %v118, %v481
  %v483 = vpop.f32.mrf.mxu0
  %v484 = vpop.f32.mrf.mxu0
  %v485 = vadd.f32 %v118, %v484
  %v486 = vpop.f32.mrf.mxu0
  %487 = vmatprep.mubr.bf16.mxu0 0
  %488 = vmatmul.mubr.bf16.gmra.mxu0 %v215
  %v489 = vpop.f32.mrf.mxu0
  %v490 = vadd.f32 %v118, %v489
  %v491 = vpop.f32.mrf.mxu0
  %v492 = vpop.f32.mrf.mxu0
  %v493 = vadd.f32 %v118, %v492
  %v494 = vpop.f32.mrf.mxu0
  %495 = vmatprep.mubr.bf16.mxu0 0
  %496 = vmatmul.mubr.bf16.gmra.mxu0 %v218
  %v497 = vpop.f32.mrf.mxu0
  %v498 = vadd.f32 %v118, %v497
  %v499 = vpop.f32.mrf.mxu0
  %v500 = vpop.f32.mrf.mxu0
  %v501 = vadd.f32 %v118, %v500
  %v502 = vpop.f32.mrf.mxu0
  %503 = vmatprep.mubr.bf16.mxu0 0
  %504 = vmatmul.mubr.bf16.gmra.mxu0 %v221
  %v505 = vpop.f32.mrf.mxu0
  %v506 = vadd.f32 %v118, %v505
  %v507 = vpop.f32.mrf.mxu0
  %v508 = vpop.f32.mrf.mxu0
  %v509 = vadd.f32 %v118, %v508
  %v510 = vpop.f32.mrf.mxu0
  %511 = vdwg.mxu0
  %vm512 = vcmask 523264
  %513 = vst.msk [vmem:[%s3] sm:$0xff] %vm512, %v258
  %514 = vst.msk [vmem:[%s3 + $0x8] sm:$0xff] %vm512, %v261
  %515 = vst.msk [vmem:[%s3 + $0x10] sm:$0xff] %vm512, %v266
  %516 = vst.msk [vmem:[%s3 + $0x18] sm:$0xff] %vm512, %v269
  %517 = vst.msk [vmem:[%s3 + $0x20] sm:$0xff] %vm512, %v274
  %518 = vst.msk [vmem:[%s3 + $0x28] sm:$0xff] %vm512, %v277
  %519 = vst.msk [vmem:[%s3 + $0x30] sm:$0xff] %vm512, %v282
  %520 = vst.msk [vmem:[%s3 + $0x38] sm:$0xff] %vm512, %v285
  %521 = vst.msk [vmem:[%s3 + $0x40] sm:$0xff] %vm512, %v290
  %522 = vst.msk [vmem:[%s3 + $0x48] sm:$0xff] %vm512, %v293
  %523 = vst.msk [vmem:[%s3 + $0x50] sm:$0xff] %vm512, %v298
  %524 = vst.msk [vmem:[%s3 + $0x58] sm:$0xff] %vm512, %v301
  %525 = vst.msk [vmem:[%s3 + $0x60] sm:$0xff] %vm512, %v306
  %526 = vst.msk [vmem:[%s3 + $0x68] sm:$0xff] %vm512, %v309
  %527 = vst.msk [vmem:[%s3 + $0x70] sm:$0xff] %vm512, %v314
  %528 = vst.msk [vmem:[%s3 + $0x78] sm:$0xff] %vm512, %v317
  %529 = vst.msk [vmem:[%s3 + $0x80] sm:$0xff] %vm512, %v322
  %530 = vst.msk [vmem:[%s3 + $0x88] sm:$0xff] %vm512, %v325
  %531 = vst.msk [vmem:[%s3 + $0x90] sm:$0xff] %vm512, %v330
  %532 = vst.msk [vmem:[%s3 + $0x98] sm:$0xff] %vm512, %v333
  %533 = vst.msk [vmem:[%s3 + $0xa0] sm:$0xff] %vm512, %v338
  %534 = vst.msk [vmem:[%s3 + $0xa8] sm:$0xff] %vm512, %v341
  %535 = vst.msk [vmem:[%s3 + $0xb0] sm:$0xff] %vm512, %v346
  %536 = vst.msk [vmem:[%s3 + $0xb8] sm:$0xff] %vm512, %v349
  %537 = vst.msk [vmem:[%s3 + $0xc0] sm:$0xff] %vm512, %v354
  %538 = vst.msk [vmem:[%s3 + $0xc8] sm:$0xff] %vm512, %v357
  %539 = vst.msk [vmem:[%s3 + $0xd0] sm:$0xff] %vm512, %v362
  %540 = vst.msk [vmem:[%s3 + $0xd8] sm:$0xff] %vm512, %v365
  %541 = vst.msk [vmem:[%s3 + $0xe0] sm:$0xff] %vm512, %v370
  %542 = vst.msk [vmem:[%s3 + $0xe8] sm:$0xff] %vm512, %v373
  %543 = vst.msk [vmem:[%s3 + $0xf0] sm:$0xff] %vm512, %v378
  %544 = vst.msk [vmem:[%s3 + $0xf8] sm:$0xff] %vm512, %v381
  %545 = vst.msk [vmem:[%s3 + $0x100] sm:$0xff] %vm512, %v386
  %546 = vst.msk [vmem:[%s3 + $0x108] sm:$0xff] %vm512, %v389
  %547 = vst.msk [vmem:[%s3 + $0x110] sm:$0xff] %vm512, %v394
  %548 = vst.msk [vmem:[%s3 + $0x118] sm:$0xff] %vm512, %v397
  %549 = vst.msk [vmem:[%s3 + $0x120] sm:$0xff] %vm512, %v402
  %550 = vst.msk [vmem:[%s3 + $0x128] sm:$0xff] %vm512, %v405
  %551 = vst.msk [vmem:[%s3 + $0x130] sm:$0xff] %vm512, %v410
  %552 = vst.msk [vmem:[%s3 + $0x138] sm:$0xff] %vm512, %v413
  %553 = vst.msk [vmem:[%s3 + $0x140] sm:$0xff] %vm512, %v418
  %554 = vst.msk [vmem:[%s3 + $0x148] sm:$0xff] %vm512, %v421
  %555 = vst.msk [vmem:[%s3 + $0x150] sm:$0xff] %vm512, %v426
  %556 = vst.msk [vmem:[%s3 + $0x158] sm:$0xff] %vm512, %v429
  %557 = vst.msk [vmem:[%s3 + $0x160] sm:$0xff] %vm512, %v434
  %558 = vst.msk [vmem:[%s3 + $0x168] sm:$0xff] %vm512, %v437
  %559 = vst.msk [vmem:[%s3 + $0x170] sm:$0xff] %vm512, %v442
  %560 = vst.msk [vmem:[%s3 + $0x178] sm:$0xff] %vm512, %v445
  %561 = vst.msk [vmem:[%s3 + $0x180] sm:$0xff] %vm512, %v450
  %562 = vst.msk [vmem:[%s3 + $0x188] sm:$0xff] %vm512, %v453
  %563 = vst.msk [vmem:[%s3 + $0x190] sm:$0xff] %vm512, %v458
  %564 = vst.msk [vmem:[%s3 + $0x198] sm:$0xff] %vm512, %v461
  %565 = vst.msk [vmem:[%s3 + $0x1a0] sm:$0xff] %vm512, %v466
  %566 = vst.msk [vmem:[%s3 + $0x1a8] sm:$0xff] %vm512, %v469
  %567 = vst.msk [vmem:[%s3 + $0x1b0] sm:$0xff] %vm512, %v474
  %568 = vst.msk [vmem:[%s3 + $0x1b8] sm:$0xff] %vm512, %v477
  %569 = vst.msk [vmem:[%s3 + $0x1c0] sm:$0xff] %vm512, %v482
  %570 = vst.msk [vmem:[%s3 + $0x1c8] sm:$0xff] %vm512, %v485
  %571 = vst.msk [vmem:[%s3 + $0x1d0] sm:$0xff] %vm512, %v490
  %572 = vst.msk [vmem:[%s3 + $0x1d8] sm:$0xff] %vm512, %v493
  %573 = vst.msk [vmem:[%s3 + $0x1e0] sm:$0xff] %vm512, %v498
  %574 = vst.msk [vmem:[%s3 + $0x1e8] sm:$0xff] %vm512, %v501
  %575 = vst.msk [vmem:[%s3 + $0x1f0] sm:$0xff] %vm512, %v506
  %576 = vst.msk [vmem:[%s3 + $0x1f8] sm:$0xff] %vm512, %v509
  // Predicated region
  $region14: #{forward.57} parent=0 // pred_check
    _
  $region15: #{forward.57} parent=0 // pred_check_branch
    %578 = sbr.rel (0) target = $region17
  $region16: #{forward.57} parent=0 // pred_region
    _
  $region17: #{forward.57} parent=0 // pred_fallthru
    _
  // Predicated region
  $region18: #{forward.57} parent=0 // pred_check
    _
  $region19: #{forward.57} parent=0 // pred_check_branch
    %580 = sbr.rel (0) target = $region21
  $region20: #{forward.57} parent=0 // pred_region
    _
  $region21: #{forward.57} parent=0 // pred_fallthru
    _

// kernel: forward.60
$region0: #{forward.60}
  #allocation0 [shape = 'u32[]', space=smem, size = 0x4, offset = 0x4, fixed_abs, tag = 'smem constant byte address 0x4 - core index']
  #allocation1 [shape = 'u32[144,128]{1,0:T(1,128)}', space=vmem, size = 0x12000, scoped, tag = 'internal scratch']
  %s0 = inlined_call_operand.vmem [shape: f32[512,16], index: 0, kind: input, shape index: {}]
  %s1 = inlined_call_operand.vmem [shape: bf16[16,64], index: 1, kind: input, shape index: {}]
  %s2 = inlined_call_operand.vmem [shape: f32[1,64], index: 2, kind: input, shape index: {}]
  %s3 = inlined_call_operand.vmem [shape: f32[512,64], index: 3, kind: input, shape index: {}]
  %s4 = inlined_call_operand.vmem [shape: f32[512,64], index: 4, kind: output, shape index: {}]
  %s5 = sld [smem:[#allocation0]]
  $region26: #{forward.60} parent=0
    _
  %s7 = ssub.s32 1, %s5
  %s8 = scalar_select 0, %s7, %s5
  // Predicated region
  $region2: #{forward.60} parent=0 // pred_check
    _
  $region3: #{forward.60} parent=0 // pred_check_branch
    %10 = sbr.rel (0) target = $region5
  $region4: #{forward.60} parent=0 // pred_region
    _
  $region5: #{forward.60} parent=0 // pred_fallthru
    _
  // Predicated region
  $region6: #{forward.60} parent=0 // pred_check
    _
  $region7: #{forward.60} parent=0 // pred_check_branch
    %12 = sbr.rel (0) target = $region9
  $region8: #{forward.60} parent=0 // pred_region
    _
  $region9: #{forward.60} parent=0 // pred_fallthru
    _
  // Predicated region
  $region10: #{forward.60} parent=0 // pred_check
    _
  $region11: #{forward.60} parent=0 // pred_check_branch
    %14 = sbr.rel (0) target = $region13
  $region12: #{forward.60} parent=0 // pred_region
    _
  $region13: #{forward.60} parent=0 // pred_fallthru
    _
  // Predicated region
  $region14: #{forward.60} parent=0 // pred_check
    _
  $region15: #{forward.60} parent=0 // pred_check_branch
    %16 = sbr.rel (0) target = $region17
  $region16: #{forward.60} parent=0 // pred_region
    _
  $region17: #{forward.60} parent=0 // pred_fallthru
    _
  %v18 = vld [vmem:[%s0] sm:$0xff]
  %v19 = vld [vmem:[%s0 + $0x8] sm:$0xff]
  %v20 = vld [vmem:[%s0 + $0x10] sm:$0xff]
  %v21 = vld [vmem:[%s0 + $0x18] sm:$0xff]
  %v22 = vld [vmem:[%s0 + $0x20] sm:$0xff]
  %v23 = vld [vmem:[%s0 + $0x28] sm:$0xff]
  %v24 = vld [vmem:[%s0 + $0x30] sm:$0xff]
  %v25 = vld [vmem:[%s0 + $0x38] sm:$0xff]
  %v26 = vld [vmem:[%s0 + $0x40] sm:$0xff]
  %v27 = vld [vmem:[%s0 + $0x48] sm:$0xff]
  %v28 = vld [vmem:[%s0 + $0x50] sm:$0xff]
  %v29 = vld [vmem:[%s0 + $0x58] sm:$0xff]
  %v30 = vld [vmem:[%s0 + $0x60] sm:$0xff]
  %v31 = vld [vmem:[%s0 + $0x68] sm:$0xff]
  %v32 = vld [vmem:[%s0 + $0x70] sm:$0xff]
  %v33 = vld [vmem:[%s0 + $0x78] sm:$0xff]
  %v34 = vld [vmem:[%s0 + $0x80] sm:$0xff]
  %v35 = vld [vmem:[%s0 + $0x88] sm:$0xff]
  %v36 = vld [vmem:[%s0 + $0x90] sm:$0xff]
  %v37 = vld [vmem:[%s0 + $0x98] sm:$0xff]
  %v38 = vld [vmem:[%s0 + $0xa0] sm:$0xff]
  %v39 = vld [vmem:[%s0 + $0xa8] sm:$0xff]
  %v40 = vld [vmem:[%s0 + $0xb0] sm:$0xff]
  %v41 = vld [vmem:[%s0 + $0xb8] sm:$0xff]
  %v42 = vld [vmem:[%s0 + $0xc0] sm:$0xff]
  %v43 = vld [vmem:[%s0 + $0xc8] sm:$0xff]
  %v44 = vld [vmem:[%s0 + $0xd0] sm:$0xff]
  %v45 = vld [vmem:[%s0 + $0xd8] sm:$0xff]
  %v46 = vld [vmem:[%s0 + $0xe0] sm:$0xff]
  %v47 = vld [vmem:[%s0 + $0xe8] sm:$0xff]
  %v48 = vld [vmem:[%s0 + $0xf0] sm:$0xff]
  %v49 = vld [vmem:[%s0 + $0xf8] sm:$0xff]
  %v50 = vld [vmem:[%s0 + $0x100] sm:$0xff]
  %v51 = vld [vmem:[%s0 + $0x108] sm:$0xff]
  %v52 = vld [vmem:[%s0 + $0x110] sm:$0xff]
  %v53 = vld [vmem:[%s0 + $0x118] sm:$0xff]
  %v54 = vld [vmem:[%s0 + $0x120] sm:$0xff]
  %v55 = vld [vmem:[%s0 + $0x128] sm:$0xff]
  %v56 = vld [vmem:[%s0 + $0x130] sm:$0xff]
  %v57 = vld [vmem:[%s0 + $0x138] sm:$0xff]
  %v58 = vld [vmem:[%s0 + $0x140] sm:$0xff]
  %v59 = vld [vmem:[%s0 + $0x148] sm:$0xff]
  %v60 = vld [vmem:[%s0 + $0x150] sm:$0xff]
  %v61 = vld [vmem:[%s0 + $0x158] sm:$0xff]
  %v62 = vld [vmem:[%s0 + $0x160] sm:$0xff]
  %v63 = vld [vmem:[%s0 + $0x168] sm:$0xff]
  %v64 = vld [vmem:[%s0 + $0x170] sm:$0xff]
  %v65 = vld [vmem:[%s0 + $0x178] sm:$0xff]
  %v66 = vld [vmem:[%s0 + $0x180] sm:$0xff]
  %v67 = vld [vmem:[%s0 + $0x188] sm:$0xff]
  %v68 = vld [vmem:[%s0 + $0x190] sm:$0xff]
  %v69 = vld [vmem:[%s0 + $0x198] sm:$0xff]
  %v70 = vld [vmem:[%s0 + $0x1a0] sm:$0xff]
  %v71 = vld [vmem:[%s0 + $0x1a8] sm:$0xff]
  %v72 = vld [vmem:[%s0 + $0x1b0] sm:$0xff]
  %v73 = vld [vmem:[%s0 + $0x1b8] sm:$0xff]
  %v74 = vld [vmem:[%s0 + $0x1c0] sm:$0xff]
  %v75 = vld [vmem:[%s0 + $0x1c8] sm:$0xff]
  %v76 = vld [vmem:[%s0 + $0x1d0] sm:$0xff]
  %v77 = vld [vmem:[%s0 + $0x1d8] sm:$0xff]
  %v78 = vld [vmem:[%s0 + $0x1e0] sm:$0xff]
  %v79 = vld [vmem:[%s0 + $0x1e8] sm:$0xff]
  %v80 = vld [vmem:[%s0 + $0x1f0] sm:$0xff]
  %v81 = vld [vmem:[%s0 + $0x1f8] sm:$0xff]
  %v82 = vpack.c.bf16 %v19, %v18
  %v83 = vpack.c.bf16 %v21, %v20
  %v84 = vpack.c.bf16 %v23, %v22
  %v85 = vpack.c.bf16 %v25, %v24
  %v86 = vpack.c.bf16 %v27, %v26
  %v87 = vpack.c.bf16 %v29, %v28
  %v88 = vpack.c.bf16 %v31, %v30
  %v89 = vpack.c.bf16 %v33, %v32
  %v90 = vpack.c.bf16 %v35, %v34
  %v91 = vpack.c.bf16 %v37, %v36
  %v92 = vpack.c.bf16 %v39, %v38
  %v93 = vpack.c.bf16 %v41, %v40
  %v94 = vpack.c.bf16 %v43, %v42
  %v95 = vpack.c.bf16 %v45, %v44
  %v96 = vpack.c.bf16 %v47, %v46
  %v97 = vpack.c.bf16 %v49, %v48
  %v98 = vpack.c.bf16 %v51, %v50
  %v99 = vpack.c.bf16 %v53, %v52
  %v100 = vpack.c.bf16 %v55, %v54
  %v101 = vpack.c.bf16 %v57, %v56
  %v102 = vpack.c.bf16 %v59, %v58
  %v103 = vpack.c.bf16 %v61, %v60
  %v104 = vpack.c.bf16 %v63, %v62
  %v105 = vpack.c.bf16 %v65, %v64
  %v106 = vpack.c.bf16 %v67, %v66
  %v107 = vpack.c.bf16 %v69, %v68
  %v108 = vpack.c.bf16 %v71, %v70
  %v109 = vpack.c.bf16 %v73, %v72
  %v110 = vpack.c.bf16 %v75, %v74
  %v111 = vpack.c.bf16 %v77, %v76
  %v112 = vpack.c.bf16 %v79, %v78
  %v113 = vpack.c.bf16 %v81, %v80
  %v114 = vld [vmem:[%s1] sm:$0xf]
  %v115 = vld [vmem:[%s1 + $0x4] sm:$0xf]
  %v116 = vld [vmem:[%s2] sm:$0x1]
  %v118 = vlaneseq
  %v119 = vshrl.u32 %v118, 7
  %v120 = vsub.s32 0, %v119
  %v121 = vrot.slane %v116, %v120
  %v125 = vunpack.c.l.b16 %v114
  %v126 = vunpack.c.l.b16 %v115
  %v127 = vpack.c.b16 %v126, %v125
  %vm129 = vcmask 130048
  %v131 = vsel %vm129, %v82, 0
  %v134 = vsel %vm129, %v83, 0
  %v137 = vsel %vm129, %v84, 0
  %v140 = vsel %vm129, %v85, 0
  %v143 = vsel %vm129, %v86, 0
  %v146 = vsel %vm129, %v87, 0
  %v149 = vsel %vm129, %v88, 0
  %v152 = vsel %vm129, %v89, 0
  %v155 = vsel %vm129, %v90, 0
  %v158 = vsel %vm129, %v91, 0
  %v161 = vsel %vm129, %v92, 0
  %v164 = vsel %vm129, %v93, 0
  %v167 = vsel %vm129, %v94, 0
  %v170 = vsel %vm129, %v95, 0
  %v173 = vsel %vm129, %v96, 0
  %v176 = vsel %vm129, %v97, 0
  %v179 = vsel %vm129, %v98, 0
  %v182 = vsel %vm129, %v99, 0
  %v185 = vsel %vm129, %v100, 0
  %v188 = vsel %vm129, %v101, 0
  %v191 = vsel %vm129, %v102, 0
  %v194 = vsel %vm129, %v103, 0
  %v197 = vsel %vm129, %v104, 0
  %v200 = vsel %vm129, %v105, 0
  %v203 = vsel %vm129, %v106, 0
  %v206 = vsel %vm129, %v107, 0
  %v209 = vsel %vm129, %v108, 0
  %v212 = vsel %vm129, %v109, 0
  %v215 = vsel %vm129, %v110, 0
  %v218 = vsel %vm129, %v111, 0
  %v221 = vsel %vm129, %v112, 0
  %v224 = vsel %vm129, %v113, 0
  %226 = vmatprep.subr.bf16.mxu0 0
  %227 = vmatpush1.bf16.msra.mxu0 0
  %228 = vmatprep.subr.bf16.mxu0 0
  %229 = vmatpush1.bf16.msra.mxu0 0
  %230 = vmatprep.subr.bf16.mxu0 0
  %231 = vmatpush1.bf16.msra.mxu0 0
  %232 = vmatprep.subr.bf16.mxu0 0
  %233 = vmatpush1.bf16.msra.mxu0 0
  %234 = vmatprep.subr.bf16.mxu0 0
  %235 = vmatpush1.bf16.msra.mxu0 0
  %236 = vmatprep.subr.bf16.mxu0 0
  %237 = vmatpush1.bf16.msra.mxu0 0
  %238 = vmatprep.subr.bf16.mxu0 0
  %239 = vmatpush1.bf16.msra.mxu0 0
  %240 = vmatprep.subr.bf16.mxu0 0
  %241 = vmatpush1.bf16.msra.mxu0 %v127
  %242 = vmatprep.subr.bf16.mxu0 0
  %243 = vmatpush2.bf16.msra.mxu0 0
  %244 = vmatprep.subr.bf16.mxu0 0
  %245 = vmatpush2.bf16.msra.mxu0 0
  %246 = vmatprep.subr.bf16.mxu0 0
  %247 = vmatpush2.bf16.msra.mxu0 0
  %248 = vmatprep.subr.bf16.mxu0 0
  %249 = vmatpush2.bf16.msra.mxu0 0
  %250 = vmatprep.subr.bf16.mxu0 0
  %251 = vmatpush2.bf16.msra.mxu0 0
  %252 = vmatprep.subr.bf16.mxu0 0
  %253 = vmatpush2.bf16.msra.mxu0 0
  %254 = vmatprep.subr.bf16.mxu0 0
  %255 = vmatpush2.bf16.msra.mxu0 0
  %256 = vmatprep.subr.bf16.mxu0 0
  %257 = vmatpush2.bf16.msra.mxu0 0
  %258 = vmatprep.mubr.bf16.mxu0 0
  %259 = vmatmul.mubr.bf16.gmra.mxu0 %v131
  %v260 = vpop.f32.mrf.mxu0
  %v261 = vadd.f32 %v121, %v260
  %v262 = vpop.f32.mrf.mxu0
  %v263 = vpop.f32.mrf.mxu0
  %v264 = vadd.f32 %v121, %v263
  %v265 = vpop.f32.mrf.mxu0
  %266 = vmatprep.mubr.bf16.mxu0 0
  %267 = vmatmul.mubr.bf16.gmra.mxu0 %v134
  %v268 = vpop.f32.mrf.mxu0
  %v269 = vadd.f32 %v121, %v268
  %v270 = vpop.f32.mrf.mxu0
  %v271 = vpop.f32.mrf.mxu0
  %v272 = vadd.f32 %v121, %v271
  %v273 = vpop.f32.mrf.mxu0
  %274 = vmatprep.mubr.bf16.mxu0 0
  %275 = vmatmul.mubr.bf16.gmra.mxu0 %v137
  %v276 = vpop.f32.mrf.mxu0
  %v277 = vadd.f32 %v121, %v276
  %v278 = vpop.f32.mrf.mxu0
  %v279 = vpop.f32.mrf.mxu0
  %v280 = vadd.f32 %v121, %v279
  %v281 = vpop.f32.mrf.mxu0
  %282 = vmatprep.mubr.bf16.mxu0 0
  %283 = vmatmul.mubr.bf16.gmra.mxu0 %v140
  %v284 = vpop.f32.mrf.mxu0
  %v285 = vadd.f32 %v121, %v284
  %v286 = vpop.f32.mrf.mxu0
  %v287 = vpop.f32.mrf.mxu0
  %v288 = vadd.f32 %v121, %v287
  %v289 = vpop.f32.mrf.mxu0
  %290 = vmatprep.mubr.bf16.mxu0 0
  %291 = vmatmul.mubr.bf16.gmra.mxu0 %v143
  %v292 = vpop.f32.mrf.mxu0
  %v293 = vadd.f32 %v121, %v292
  %v294 = vpop.f32.mrf.mxu0
  %v295 = vpop.f32.mrf.mxu0
  %v296 = vadd.f32 %v121, %v295
  %v297 = vpop.f32.mrf.mxu0
  %298 = vmatprep.mubr.bf16.mxu0 0
  %299 = vmatmul.mubr.bf16.gmra.mxu0 %v146
  %v300 = vpop.f32.mrf.mxu0
  %v301 = vadd.f32 %v121, %v300
  %v302 = vpop.f32.mrf.mxu0
  %v303 = vpop.f32.mrf.mxu0
  %v304 = vadd.f32 %v121, %v303
  %v305 = vpop.f32.mrf.mxu0
  %306 = vmatprep.mubr.bf16.mxu0 0
  %307 = vmatmul.mubr.bf16.gmra.mxu0 %v149
  %v308 = vpop.f32.mrf.mxu0
  %v309 = vadd.f32 %v121, %v308
  %v310 = vpop.f32.mrf.mxu0
  %v311 = vpop.f32.mrf.mxu0
  %v312 = vadd.f32 %v121, %v311
  %v313 = vpop.f32.mrf.mxu0
  %314 = vmatprep.mubr.bf16.mxu0 0
  %315 = vmatmul.mubr.bf16.gmra.mxu0 %v152
  %v316 = vpop.f32.mrf.mxu0
  %v317 = vadd.f32 %v121, %v316
  %v318 = vpop.f32.mrf.mxu0
  %v319 = vpop.f32.mrf.mxu0
  %v320 = vadd.f32 %v121, %v319
  %v321 = vpop.f32.mrf.mxu0
  %322 = vmatprep.mubr.bf16.mxu0 0
  %323 = vmatmul.mubr.bf16.gmra.mxu0 %v155
  %v324 = vpop.f32.mrf.mxu0
  %v325 = vadd.f32 %v121, %v324
  %v326 = vpop.f32.mrf.mxu0
  %v327 = vpop.f32.mrf.mxu0
  %v328 = vadd.f32 %v121, %v327
  %v329 = vpop.f32.mrf.mxu0
  %330 = vmatprep.mubr.bf16.mxu0 0
  %331 = vmatmul.mubr.bf16.gmra.mxu0 %v158
  %v332 = vpop.f32.mrf.mxu0
  %v333 = vadd.f32 %v121, %v332
  %v334 = vpop.f32.mrf.mxu0
  %v335 = vpop.f32.mrf.mxu0
  %v336 = vadd.f32 %v121, %v335
  %v337 = vpop.f32.mrf.mxu0
  %338 = vmatprep.mubr.bf16.mxu0 0
  %339 = vmatmul.mubr.bf16.gmra.mxu0 %v161
  %v340 = vpop.f32.mrf.mxu0
  %v341 = vadd.f32 %v121, %v340
  %v342 = vpop.f32.mrf.mxu0
  %v343 = vpop.f32.mrf.mxu0
  %v344 = vadd.f32 %v121, %v343
  %v345 = vpop.f32.mrf.mxu0
  %346 = vmatprep.mubr.bf16.mxu0 0
  %347 = vmatmul.mubr.bf16.gmra.mxu0 %v164
  %v348 = vpop.f32.mrf.mxu0
  %v349 = vadd.f32 %v121, %v348
  %v350 = vpop.f32.mrf.mxu0
  %v351 = vpop.f32.mrf.mxu0
  %v352 = vadd.f32 %v121, %v351
  %v353 = vpop.f32.mrf.mxu0
  %354 = vmatprep.mubr.bf16.mxu0 0
  %355 = vmatmul.mubr.bf16.gmra.mxu0 %v167
  %v356 = vpop.f32.mrf.mxu0
  %v357 = vadd.f32 %v121, %v356
  %v358 = vpop.f32.mrf.mxu0
  %v359 = vpop.f32.mrf.mxu0
  %v360 = vadd.f32 %v121, %v359
  %v361 = vpop.f32.mrf.mxu0
  %362 = vmatprep.mubr.bf16.mxu0 0
  %363 = vmatmul.mubr.bf16.gmra.mxu0 %v170
  %v364 = vpop.f32.mrf.mxu0
  %v365 = vadd.f32 %v121, %v364
  %v366 = vpop.f32.mrf.mxu0
  %v367 = vpop.f32.mrf.mxu0
  %v368 = vadd.f32 %v121, %v367
  %v369 = vpop.f32.mrf.mxu0
  %370 = vmatprep.mubr.bf16.mxu0 0
  %371 = vmatmul.mubr.bf16.gmra.mxu0 %v173
  %v372 = vpop.f32.mrf.mxu0
  %v373 = vadd.f32 %v121, %v372
  %v374 = vpop.f32.mrf.mxu0
  %v375 = vpop.f32.mrf.mxu0
  %v376 = vadd.f32 %v121, %v375
  %v377 = vpop.f32.mrf.mxu0
  %378 = vmatprep.mubr.bf16.mxu0 0
  %379 = vmatmul.mubr.bf16.gmra.mxu0 %v176
  %v380 = vpop.f32.mrf.mxu0
  %v381 = vadd.f32 %v121, %v380
  %v382 = vpop.f32.mrf.mxu0
  %v383 = vpop.f32.mrf.mxu0
  %v384 = vadd.f32 %v121, %v383
  %v385 = vpop.f32.mrf.mxu0
  %386 = vmatprep.mubr.bf16.mxu0 0
  %387 = vmatmul.mubr.bf16.gmra.mxu0 %v179
  %v388 = vpop.f32.mrf.mxu0
  %v389 = vadd.f32 %v121, %v388
  %v390 = vpop.f32.mrf.mxu0
  %v391 = vpop.f32.mrf.mxu0
  %v392 = vadd.f32 %v121, %v391
  %v393 = vpop.f32.mrf.mxu0
  %394 = vmatprep.mubr.bf16.mxu0 0
  %395 = vmatmul.mubr.bf16.gmra.mxu0 %v182
  %v396 = vpop.f32.mrf.mxu0
  %v397 = vadd.f32 %v121, %v396
  %v398 = vpop.f32.mrf.mxu0
  %v399 = vpop.f32.mrf.mxu0
  %v400 = vadd.f32 %v121, %v399
  %v401 = vpop.f32.mrf.mxu0
  %402 = vmatprep.mubr.bf16.mxu0 0
  %403 = vmatmul.mubr.bf16.gmra.mxu0 %v185
  %v404 = vpop.f32.mrf.mxu0
  %v405 = vadd.f32 %v121, %v404
  %v406 = vpop.f32.mrf.mxu0
  %v407 = vpop.f32.mrf.mxu0
  %v408 = vadd.f32 %v121, %v407
  %v409 = vpop.f32.mrf.mxu0
  %410 = vmatprep.mubr.bf16.mxu0 0
  %411 = vmatmul.mubr.bf16.gmra.mxu0 %v188
  %v412 = vpop.f32.mrf.mxu0
  %v413 = vadd.f32 %v121, %v412
  %v414 = vpop.f32.mrf.mxu0
  %v415 = vpop.f32.mrf.mxu0
  %v416 = vadd.f32 %v121, %v415
  %v417 = vpop.f32.mrf.mxu0
  %418 = vmatprep.mubr.bf16.mxu0 0
  %419 = vmatmul.mubr.bf16.gmra.mxu0 %v191
  %v420 = vpop.f32.mrf.mxu0
  %v421 = vadd.f32 %v121, %v420
  %v422 = vpop.f32.mrf.mxu0
  %v423 = vpop.f32.mrf.mxu0
  %v424 = vadd.f32 %v121, %v423
  %v425 = vpop.f32.mrf.mxu0
  %426 = vmatprep.mubr.bf16.mxu0 0
  %427 = vmatmul.mubr.bf16.gmra.mxu0 %v194
  %v428 = vpop.f32.mrf.mxu0
  %v429 = vadd.f32 %v121, %v428
  %v430 = vpop.f32.mrf.mxu0
  %v431 = vpop.f32.mrf.mxu0
  %v432 = vadd.f32 %v121, %v431
  %v433 = vpop.f32.mrf.mxu0
  %434 = vmatprep.mubr.bf16.mxu0 0
  %435 = vmatmul.mubr.bf16.gmra.mxu0 %v197
  %v436 = vpop.f32.mrf.mxu0
  %v437 = vadd.f32 %v121, %v436
  %v438 = vpop.f32.mrf.mxu0
  %v439 = vpop.f32.mrf.mxu0
  %v440 = vadd.f32 %v121, %v439
  %v441 = vpop.f32.mrf.mxu0
  %442 = vmatprep.mubr.bf16.mxu0 0
  %443 = vmatmul.mubr.bf16.gmra.mxu0 %v200
  %v444 = vpop.f32.mrf.mxu0
  %v445 = vadd.f32 %v121, %v444
  %v446 = vpop.f32.mrf.mxu0
  %v447 = vpop.f32.mrf.mxu0
  %v448 = vadd.f32 %v121, %v447
  %v449 = vpop.f32.mrf.mxu0
  %450 = vmatprep.mubr.bf16.mxu0 0
  %451 = vmatmul.mubr.bf16.gmra.mxu0 %v203
  %v452 = vpop.f32.mrf.mxu0
  %v453 = vadd.f32 %v121, %v452
  %v454 = vpop.f32.mrf.mxu0
  %v455 = vpop.f32.mrf.mxu0
  %v456 = vadd.f32 %v121, %v455
  %v457 = vpop.f32.mrf.mxu0
  %458 = vmatprep.mubr.bf16.mxu0 0
  %459 = vmatmul.mubr.bf16.gmra.mxu0 %v206
  %v460 = vpop.f32.mrf.mxu0
  %v461 = vadd.f32 %v121, %v460
  %v462 = vpop.f32.mrf.mxu0
  %v463 = vpop.f32.mrf.mxu0
  %v464 = vadd.f32 %v121, %v463
  %v465 = vpop.f32.mrf.mxu0
  %466 = vmatprep.mubr.bf16.mxu0 0
  %467 = vmatmul.mubr.bf16.gmra.mxu0 %v209
  %v468 = vpop.f32.mrf.mxu0
  %v469 = vadd.f32 %v121, %v468
  %v470 = vpop.f32.mrf.mxu0
  %v471 = vpop.f32.mrf.mxu0
  %v472 = vadd.f32 %v121, %v471
  %v473 = vpop.f32.mrf.mxu0
  %474 = vmatprep.mubr.bf16.mxu0 0
  %475 = vmatmul.mubr.bf16.gmra.mxu0 %v212
  %v476 = vpop.f32.mrf.mxu0
  %v477 = vadd.f32 %v121, %v476
  %v478 = vpop.f32.mrf.mxu0
  %v479 = vpop.f32.mrf.mxu0
  %v480 = vadd.f32 %v121, %v479
  %v481 = vpop.f32.mrf.mxu0
  %482 = vmatprep.mubr.bf16.mxu0 0
  %483 = vmatmul.mubr.bf16.gmra.mxu0 %v215
  %v484 = vpop.f32.mrf.mxu0
  %v485 = vadd.f32 %v121, %v484
  %v486 = vpop.f32.mrf.mxu0
  %v487 = vpop.f32.mrf.mxu0
  %v488 = vadd.f32 %v121, %v487
  %v489 = vpop.f32.mrf.mxu0
  %490 = vmatprep.mubr.bf16.mxu0 0
  %491 = vmatmul.mubr.bf16.gmra.mxu0 %v218
  %v492 = vpop.f32.mrf.mxu0
  %v493 = vadd.f32 %v121, %v492
  %v494 = vpop.f32.mrf.mxu0
  %v495 = vpop.f32.mrf.mxu0
  %v496 = vadd.f32 %v121, %v495
  %v497 = vpop.f32.mrf.mxu0
  %498 = vmatprep.mubr.bf16.mxu0 0
  %499 = vmatmul.mubr.bf16.gmra.mxu0 %v221
  %v500 = vpop.f32.mrf.mxu0
  %v501 = vadd.f32 %v121, %v500
  %v502 = vpop.f32.mrf.mxu0
  %v503 = vpop.f32.mrf.mxu0
  %v504 = vadd.f32 %v121, %v503
  %v505 = vpop.f32.mrf.mxu0
  %506 = vmatprep.mubr.bf16.mxu0 0
  %507 = vmatmul.mubr.bf16.gmra.mxu0 %v224
  %v508 = vpop.f32.mrf.mxu0
  %v509 = vadd.f32 %v121, %v508
  %v510 = vpop.f32.mrf.mxu0
  %v511 = vpop.f32.mrf.mxu0
  %v512 = vadd.f32 %v121, %v511
  %v513 = vpop.f32.mrf.mxu0
  %514 = vdwg.mxu0
  %v515 = vld [vmem:[%s3] sm:$0xff]
  %v516 = vld [vmem:[%s3 + $0x8] sm:$0xff]
  %v517 = vld [vmem:[%s3 + $0x10] sm:$0xff]
  %v518 = vld [vmem:[%s3 + $0x18] sm:$0xff]
  %v519 = vld [vmem:[%s3 + $0x20] sm:$0xff]
  %v520 = vld [vmem:[%s3 + $0x28] sm:$0xff]
  %v521 = vld [vmem:[%s3 + $0x30] sm:$0xff]
  %v522 = vld [vmem:[%s3 + $0x38] sm:$0xff]
  %v523 = vld [vmem:[%s3 + $0x40] sm:$0xff]
  %v524 = vld [vmem:[%s3 + $0x48] sm:$0xff]
  %v525 = vld [vmem:[%s3 + $0x50] sm:$0xff]
  %v526 = vld [vmem:[%s3 + $0x58] sm:$0xff]
  %v527 = vld [vmem:[%s3 + $0x60] sm:$0xff]
  %v528 = vld [vmem:[%s3 + $0x68] sm:$0xff]
  %v529 = vld [vmem:[%s3 + $0x70] sm:$0xff]
  %v530 = vld [vmem:[%s3 + $0x78] sm:$0xff]
  %v531 = vld [vmem:[%s3 + $0x80] sm:$0xff]
  %v532 = vld [vmem:[%s3 + $0x88] sm:$0xff]
  %v533 = vld [vmem:[%s3 + $0x90] sm:$0xff]
  %v534 = vld [vmem:[%s3 + $0x98] sm:$0xff]
  %v535 = vld [vmem:[%s3 + $0xa0] sm:$0xff]
  %v536 = vld [vmem:[%s3 + $0xa8] sm:$0xff]
  %v537 = vld [vmem:[%s3 + $0xb0] sm:$0xff]
  %v538 = vld [vmem:[%s3 + $0xb8] sm:$0xff]
  %v539 = vld [vmem:[%s3 + $0xc0] sm:$0xff]
  %v540 = vld [vmem:[%s3 + $0xc8] sm:$0xff]
  %v541 = vld [vmem:[%s3 + $0xd0] sm:$0xff]
  %v542 = vld [vmem:[%s3 + $0xd8] sm:$0xff]
  %v543 = vld [vmem:[%s3 + $0xe0] sm:$0xff]
  %v544 = vld [vmem:[%s3 + $0xe8] sm:$0xff]
  %v545 = vld [vmem:[%s3 + $0xf0] sm:$0xff]
  %v546 = vld [vmem:[%s3 + $0xf8] sm:$0xff]
  %v547 = vld [vmem:[%s3 + $0x100] sm:$0xff]
  %v548 = vld [vmem:[%s3 + $0x108] sm:$0xff]
  %v549 = vld [vmem:[%s3 + $0x110] sm:$0xff]
  %v550 = vld [vmem:[%s3 + $0x118] sm:$0xff]
  %v551 = vld [vmem:[%s3 + $0x120] sm:$0xff]
  %v552 = vld [vmem:[%s3 + $0x128] sm:$0xff]
  %v553 = vld [vmem:[%s3 + $0x130] sm:$0xff]
  %v554 = vld [vmem:[%s3 + $0x138] sm:$0xff]
  %v555 = vld [vmem:[%s3 + $0x140] sm:$0xff]
  %v556 = vld [vmem:[%s3 + $0x148] sm:$0xff]
  %v557 = vld [vmem:[%s3 + $0x150] sm:$0xff]
  %v558 = vld [vmem:[%s3 + $0x158] sm:$0xff]
  %v559 = vld [vmem:[%s3 + $0x160] sm:$0xff]
  %v560 = vld [vmem:[%s3 + $0x168] sm:$0xff]
  %v561 = vld [vmem:[%s3 + $0x170] sm:$0xff]
  %v562 = vld [vmem:[%s3 + $0x178] sm:$0xff]
  %v563 = vld [vmem:[%s3 + $0x180] sm:$0xff]
  %v564 = vld [vmem:[%s3 + $0x188] sm:$0xff]
  %v565 = vld [vmem:[%s3 + $0x190] sm:$0xff]
  %v566 = vld [vmem:[%s3 + $0x198] sm:$0xff]
  %v567 = vld [vmem:[%s3 + $0x1a0] sm:$0xff]
  %v568 = vld [vmem:[%s3 + $0x1a8] sm:$0xff]
  %v569 = vld [vmem:[%s3 + $0x1b0] sm:$0xff]
  %v570 = vld [vmem:[%s3 + $0x1b8] sm:$0xff]
  %v571 = vld [vmem:[%s3 + $0x1c0] sm:$0xff]
  %v572 = vld [vmem:[%s3 + $0x1c8] sm:$0xff]
  %v573 = vld [vmem:[%s3 + $0x1d0] sm:$0xff]
  %v574 = vld [vmem:[%s3 + $0x1d8] sm:$0xff]
  %v575 = vld [vmem:[%s3 + $0x1e0] sm:$0xff]
  %v576 = vld [vmem:[%s3 + $0x1e8] sm:$0xff]
  %v577 = vld [vmem:[%s3 + $0x1f0] sm:$0xff]
  %v578 = vld [vmem:[%s3 + $0x1f8] sm:$0xff]
  %v579 = vadd.f32 %v261, %v515
  %v580 = vadd.f32 %v264, %v516
  %v581 = vadd.f32 %v269, %v517
  %v582 = vadd.f32 %v272, %v518
  %v583 = vadd.f32 %v277, %v519
  %v584 = vadd.f32 %v280, %v520
  %v585 = vadd.f32 %v285, %v521
  %v586 = vadd.f32 %v288, %v522
  %v587 = vadd.f32 %v293, %v523
  %v588 = vadd.f32 %v296, %v524
  %v589 = vadd.f32 %v301, %v525
  %v590 = vadd.f32 %v304, %v526
  %v591 = vadd.f32 %v309, %v527
  %v592 = vadd.f32 %v312, %v528
  %v593 = vadd.f32 %v317, %v529
  %v594 = vadd.f32 %v320, %v530
  %v595 = vadd.f32 %v325, %v531
  %v596 = vadd.f32 %v328, %v532
  %v597 = vadd.f32 %v333, %v533
  %v598 = vadd.f32 %v336, %v534
  %v599 = vadd.f32 %v341, %v535
  %v600 = vadd.f32 %v344, %v536
  %v601 = vadd.f32 %v349, %v537
  %v602 = vadd.f32 %v352, %v538
  %v603 = vadd.f32 %v357, %v539
  %v604 = vadd.f32 %v360, %v540
  %v605 = vadd.f32 %v365, %v541
  %v606 = vadd.f32 %v368, %v542
  %v607 = vadd.f32 %v373, %v543
  %v608 = vadd.f32 %v376, %v544
  %v609 = vadd.f32 %v381, %v545
  %v610 = vadd.f32 %v384, %v546
  %v611 = vadd.f32 %v389, %v547
  %v612 = vadd.f32 %v392, %v548
  %v613 = vadd.f32 %v397, %v549
  %v614 = vadd.f32 %v400, %v550
  %v615 = vadd.f32 %v405, %v551
  %v616 = vadd.f32 %v408, %v552
  %v617 = vadd.f32 %v413, %v553
  %v618 = vadd.f32 %v416, %v554
  %v619 = vadd.f32 %v421, %v555
  %v620 = vadd.f32 %v424, %v556
  %v621 = vadd.f32 %v429, %v557
  %v622 = vadd.f32 %v432, %v558
  %v623 = vadd.f32 %v437, %v559
  %v624 = vadd.f32 %v440, %v560
  %v625 = vadd.f32 %v445, %v561
  %v626 = vadd.f32 %v448, %v562
  %v627 = vadd.f32 %v453, %v563
  %v628 = vadd.f32 %v456, %v564
  %v629 = vadd.f32 %v461, %v565
  %v630 = vadd.f32 %v464, %v566
  %v631 = vadd.f32 %v469, %v567
  %v632 = vadd.f32 %v472, %v568
  %v633 = vadd.f32 %v477, %v569
  %v634 = vadd.f32 %v480, %v570
  %v635 = vadd.f32 %v485, %v571
  %v636 = vadd.f32 %v488, %v572
  %v637 = vadd.f32 %v493, %v573
  %v638 = vadd.f32 %v496, %v574
  %v639 = vadd.f32 %v501, %v575
  %v640 = vadd.f32 %v504, %v576
  %v641 = vadd.f32 %v509, %v577
  %v642 = vadd.f32 %v512, %v578
  %v643 = vmax.f32 %v579, 0.0
  %v644 = vmax.f32 %v580, 0.0
  %v645 = vmax.f32 %v581, 0.0
  %v646 = vmax.f32 %v582, 0.0
  %v647 = vmax.f32 %v583, 0.0
  %v648 = vmax.f32 %v584, 0.0
  %v649 = vmax.f32 %v585, 0.0
  %v650 = vmax.f32 %v586, 0.0
  %v651 = vmax.f32 %v587, 0.0
  %v652 = vmax.f32 %v588, 0.0
  %v653 = vmax.f32 %v589, 0.0
  %v654 = vmax.f32 %v590, 0.0
  %v655 = vmax.f32 %v591, 0.0
  %v656 = vmax.f32 %v592, 0.0
  %v657 = vmax.f32 %v593, 0.0
  %v658 = vmax.f32 %v594, 0.0
  %v659 = vmax.f32 %v595, 0.0
  %v660 = vmax.f32 %v596, 0.0
  %v661 = vmax.f32 %v597, 0.0
  %v662 = vmax.f32 %v598, 0.0
  %v663 = vmax.f32 %v599, 0.0
  %v664 = vmax.f32 %v600, 0.0
  %v665 = vmax.f32 %v601, 0.0
  %v666 = vmax.f32 %v602, 0.0
  %v667 = vmax.f32 %v603, 0.0
  %v668 = vmax.f32 %v604, 0.0
  %v669 = vmax.f32 %v605, 0.0
  %v670 = vmax.f32 %v606, 0.0
  %v671 = vmax.f32 %v607, 0.0
  %v672 = vmax.f32 %v608, 0.0
  %v673 = vmax.f32 %v609, 0.0
  %v674 = vmax.f32 %v610, 0.0
  %v675 = vmax.f32 %v611, 0.0
  %v676 = vmax.f32 %v612, 0.0
  %v677 = vmax.f32 %v613, 0.0
  %v678 = vmax.f32 %v614, 0.0
  %v679 = vmax.f32 %v615, 0.0
  %v680 = vmax.f32 %v616, 0.0
  %v681 = vmax.f32 %v617, 0.0
  %v682 = vmax.f32 %v618, 0.0
  %v683 = vmax.f32 %v619, 0.0
  %v684 = vmax.f32 %v620, 0.0
  %v685 = vmax.f32 %v621, 0.0
  %v686 = vmax.f32 %v622, 0.0
  %v687 = vmax.f32 %v623, 0.0
  %v688 = vmax.f32 %v624, 0.0
  %v689 = vmax.f32 %v625, 0.0
  %v690 = vmax.f32 %v626, 0.0
  %v691 = vmax.f32 %v627, 0.0
  %v692 = vmax.f32 %v628, 0.0
  %v693 = vmax.f32 %v629, 0.0
  %v694 = vmax.f32 %v630, 0.0
  %v695 = vmax.f32 %v631, 0.0
  %v696 = vmax.f32 %v632, 0.0
  %v697 = vmax.f32 %v633, 0.0
  %v698 = vmax.f32 %v634, 0.0
  %v699 = vmax.f32 %v635, 0.0
  %v700 = vmax.f32 %v636, 0.0
  %v701 = vmax.f32 %v637, 0.0
  %v702 = vmax.f32 %v638, 0.0
  %v703 = vmax.f32 %v639, 0.0
  %v704 = vmax.f32 %v640, 0.0
  %v705 = vmax.f32 %v641, 0.0
  %v706 = vmax.f32 %v642, 0.0
  %vm707 = vcmask 523264
  %708 = vst.msk [vmem:[%s4] sm:$0xff] %vm707, %v643
  %709 = vst.msk [vmem:[%s4 + $0x8] sm:$0xff] %vm707, %v644
  %710 = vst.msk [vmem:[%s4 + $0x10] sm:$0xff] %vm707, %v645
  %711 = vst.msk [vmem:[%s4 + $0x18] sm:$0xff] %vm707, %v646
  %712 = vst.msk [vmem:[%s4 + $0x20] sm:$0xff] %vm707, %v647
  %713 = vst.msk [vmem:[%s4 + $0x28] sm:$0xff] %vm707, %v648
  %714 = vst.msk [vmem:[%s4 + $0x30] sm:$0xff] %vm707, %v649
  %715 = vst.msk [vmem:[%s4 + $0x38] sm:$0xff] %vm707, %v650
  %716 = vst.msk [vmem:[%s4 + $0x40] sm:$0xff] %vm707, %v651
  %717 = vst.msk [vmem:[%s4 + $0x48] sm:$0xff] %vm707, %v652
  %718 = vst.msk [vmem:[%s4 + $0x50] sm:$0xff] %vm707, %v653
  %719 = vst.msk [vmem:[%s4 + $0x58] sm:$0xff] %vm707, %v654
  %720 = vst.msk [vmem:[%s4 + $0x60] sm:$0xff] %vm707, %v655
  %721 = vst.msk [vmem:[%s4 + $0x68] sm:$0xff] %vm707, %v656
  %722 = vst.msk [vmem:[%s4 + $0x70] sm:$0xff] %vm707, %v657
  %723 = vst.msk [vmem:[%s4 + $0x78] sm:$0xff] %vm707, %v658
  %724 = vst.msk [vmem:[%s4 + $0x80] sm:$0xff] %vm707, %v659
  %725 = vst.msk [vmem:[%s4 + $0x88] sm:$0xff] %vm707, %v660
  %726 = vst.msk [vmem:[%s4 + $0x90] sm:$0xff] %vm707, %v661
  %727 = vst.msk [vmem:[%s4 + $0x98] sm:$0xff] %vm707, %v662
  %728 = vst.msk [vmem:[%s4 + $0xa0] sm:$0xff] %vm707, %v663
  %729 = vst.msk [vmem:[%s4 + $0xa8] sm:$0xff] %vm707, %v664
  %730 = vst.msk [vmem:[%s4 + $0xb0] sm:$0xff] %vm707, %v665
  %731 = vst.msk [vmem:[%s4 + $0xb8] sm:$0xff] %vm707, %v666
  %732 = vst.msk [vmem:[%s4 + $0xc0] sm:$0xff] %vm707, %v667
  %733 = vst.msk [vmem:[%s4 + $0xc8] sm:$0xff] %vm707, %v668
  %734 = vst.msk [vmem:[%s4 + $0xd0] sm:$0xff] %vm707, %v669
  %735 = vst.msk [vmem:[%s4 + $0xd8] sm:$0xff] %vm707, %v670
  %736 = vst.msk [vmem:[%s4 + $0xe0] sm:$0xff] %vm707, %v671
  %737 = vst.msk [vmem:[%s4 + $0xe8] sm:$0xff] %vm707, %v672
  %738 = vst.msk [vmem:[%s4 + $0xf0] sm:$0xff] %vm707, %v673
  %739 = vst.msk [vmem:[%s4 + $0xf8] sm:$0xff] %vm707, %v674
  %740 = vst.msk [vmem:[%s4 + $0x100] sm:$0xff] %vm707, %v675
  %741 = vst.msk [vmem:[%s4 + $0x108] sm:$0xff] %vm707, %v676
  %742 = vst.msk [vmem:[%s4 + $0x110] sm:$0xff] %vm707, %v677
  %743 = vst.msk [vmem:[%s4 + $0x118] sm:$0xff] %vm707, %v678
  %744 = vst.msk [vmem:[%s4 + $0x120] sm:$0xff] %vm707, %v679
  %745 = vst.msk [vmem:[%s4 + $0x128] sm:$0xff] %vm707, %v680
  %746 = vst.msk [vmem:[%s4 + $0x130] sm:$0xff] %vm707, %v681
  %747 = vst.msk [vmem:[%s4 + $0x138] sm:$0xff] %vm707, %v682
  %748 = vst.msk [vmem:[%s4 + $0x140] sm:$0xff] %vm707, %v683
  %749 = vst.msk [vmem:[%s4 + $0x148] sm:$0xff] %vm707, %v684
  %750 = vst.msk [vmem:[%s4 + $0x150] sm:$0xff] %vm707, %v685
  %751 = vst.msk [vmem:[%s4 + $0x158] sm:$0xff] %vm707, %v686
  %752 = vst.msk [vmem:[%s4 + $0x160] sm:$0xff] %vm707, %v687
  %753 = vst.msk [vmem:[%s4 + $0x168] sm:$0xff] %vm707, %v688
  %754 = vst.msk [vmem:[%s4 + $0x170] sm:$0xff] %vm707, %v689
  %755 = vst.msk [vmem:[%s4 + $0x178] sm:$0xff] %vm707, %v690
  %756 = vst.msk [vmem:[%s4 + $0x180] sm:$0xff] %vm707, %v691
  %757 = vst.msk [vmem:[%s4 + $0x188] sm:$0xff] %vm707, %v692
  %758 = vst.msk [vmem:[%s4 + $0x190] sm:$0xff] %vm707, %v693
  %759 = vst.msk [vmem:[%s4 + $0x198] sm:$0xff] %vm707, %v694
  %760 = vst.msk [vmem:[%s4 + $0x1a0] sm:$0xff] %vm707, %v695
  %761 = vst.msk [vmem:[%s4 + $0x1a8] sm:$0xff] %vm707, %v696
  %762 = vst.msk [vmem:[%s4 + $0x1b0] sm:$0xff] %vm707, %v697
  %763 = vst.msk [vmem:[%s4 + $0x1b8] sm:$0xff] %vm707, %v698
  %764 = vst.msk [vmem:[%s4 + $0x1c0] sm:$0xff] %vm707, %v699
  %765 = vst.msk [vmem:[%s4 + $0x1c8] sm:$0xff] %vm707, %v700
  %766 = vst.msk [vmem:[%s4 + $0x1d0] sm:$0xff] %vm707, %v701
  %767 = vst.msk [vmem:[%s4 + $0x1d8] sm:$0xff] %vm707, %v702
  %768 = vst.msk [vmem:[%s4 + $0x1e0] sm:$0xff] %vm707, %v703
  %769 = vst.msk [vmem:[%s4 + $0x1e8] sm:$0xff] %vm707, %v704
  %770 = vst.msk [vmem:[%s4 + $0x1f0] sm:$0xff] %vm707, %v705
  %771 = vst.msk [vmem:[%s4 + $0x1f8] sm:$0xff] %vm707, %v706
  // Predicated region
  $region18: #{forward.60} parent=0 // pred_check
    _
  $region19: #{forward.60} parent=0 // pred_check_branch
    %773 = sbr.rel (0) target = $region21
  $region20: #{forward.60} parent=0 // pred_region
    _
  $region21: #{forward.60} parent=0 // pred_fallthru
    _
  // Predicated region
  $region22: #{forward.60} parent=0 // pred_check
    _
  $region23: #{forward.60} parent=0 // pred_check_branch
    %775 = sbr.rel (0) target = $region25
  $region24: #{forward.60} parent=0 // pred_region
    _
  $region25: #{forward.60} parent=0 // pred_fallthru
    _

// kernel: forward.61
$region0: #{forward.61}
  #allocation0 [shape = 'u32[]', space=smem, size = 0x4, offset = 0x4, fixed_abs, tag = 'smem constant byte address 0x4 - core index']
  #allocation1 [shape = 'u32[144,128]{1,0:T(1,128)}', space=vmem, size = 0x12000, scoped, tag = 'internal scratch']
  %s0 = inlined_call_operand.vmem [shape: f32[512,64], index: 0, kind: input, shape index: {}]
  %s1 = inlined_call_operand.vmem [shape: bf16[64,16], index: 1, kind: input, shape index: {}]
  %s2 = inlined_call_operand.vmem [shape: f32[1,16], index: 2, kind: input, shape index: {}]
  %s3 = inlined_call_operand.vmem [shape: f32[512,16], index: 3, kind: output, shape index: {}]
  %s4 = sld [smem:[#allocation0]]
  $region22: #{forward.61} parent=0
    _
  %s6 = ssub.s32 1, %s4
  %s7 = scalar_select 0, %s6, %s4
  // Predicated region
  $region2: #{forward.61} parent=0 // pred_check
    _
  $region3: #{forward.61} parent=0 // pred_check_branch
    %9 = sbr.rel (0) target = $region5
  $region4: #{forward.61} parent=0 // pred_region
    _
  $region5: #{forward.61} parent=0 // pred_fallthru
    _
  // Predicated region
  $region6: #{forward.61} parent=0 // pred_check
    _
  $region7: #{forward.61} parent=0 // pred_check_branch
    %11 = sbr.rel (0) target = $region9
  $region8: #{forward.61} parent=0 // pred_region
    _
  $region9: #{forward.61} parent=0 // pred_fallthru
    _
  // Predicated region
  $region10: #{forward.61} parent=0 // pred_check
    _
  $region11: #{forward.61} parent=0 // pred_check_branch
    %13 = sbr.rel (0) target = $region13
  $region12: #{forward.61} parent=0 // pred_region
    _
  $region13: #{forward.61} parent=0 // pred_fallthru
    _
  %v15 = vld [vmem:[%s0] sm:$0xff]
  %v16 = vld [vmem:[%s0 + $0x8] sm:$0xff]
  %v17 = vld [vmem:[%s0 + $0x10] sm:$0xff]
  %v18 = vld [vmem:[%s0 + $0x18] sm:$0xff]
  %v19 = vld [vmem:[%s0 + $0x20] sm:$0xff]
  %v20 = vld [vmem:[%s0 + $0x28] sm:$0xff]
  %v21 = vld [vmem:[%s0 + $0x30] sm:$0xff]
  %v22 = vld [vmem:[%s0 + $0x38] sm:$0xff]
  %v23 = vld [vmem:[%s0 + $0x40] sm:$0xff]
  %v24 = vld [vmem:[%s0 + $0x48] sm:$0xff]
  %v25 = vld [vmem:[%s0 + $0x50] sm:$0xff]
  %v26 = vld [vmem:[%s0 + $0x58] sm:$0xff]
  %v27 = vld [vmem:[%s0 + $0x60] sm:$0xff]
  %v28 = vld [vmem:[%s0 + $0x68] sm:$0xff]
  %v29 = vld [vmem:[%s0 + $0x70] sm:$0xff]
  %v30 = vld [vmem:[%s0 + $0x78] sm:$0xff]
  %v31 = vld [vmem:[%s0 + $0x80] sm:$0xff]
  %v32 = vld [vmem:[%s0 + $0x88] sm:$0xff]
  %v33 = vld [vmem:[%s0 + $0x90] sm:$0xff]
  %v34 = vld [vmem:[%s0 + $0x98] sm:$0xff]
  %v35 = vld [vmem:[%s0 + $0xa0] sm:$0xff]
  %v36 = vld [vmem:[%s0 + $0xa8] sm:$0xff]
  %v37 = vld [vmem:[%s0 + $0xb0] sm:$0xff]
  %v38 = vld [vmem:[%s0 + $0xb8] sm:$0xff]
  %v39 = vld [vmem:[%s0 + $0xc0] sm:$0xff]
  %v40 = vld [vmem:[%s0 + $0xc8] sm:$0xff]
  %v41 = vld [vmem:[%s0 + $0xd0] sm:$0xff]
  %v42 = vld [vmem:[%s0 + $0xd8] sm:$0xff]
  %v43 = vld [vmem:[%s0 + $0xe0] sm:$0xff]
  %v44 = vld [vmem:[%s0 + $0xe8] sm:$0xff]
  %v45 = vld [vmem:[%s0 + $0xf0] sm:$0xff]
  %v46 = vld [vmem:[%s0 + $0xf8] sm:$0xff]
  %v47 = vld [vmem:[%s0 + $0x100] sm:$0xff]
  %v48 = vld [vmem:[%s0 + $0x108] sm:$0xff]
  %v49 = vld [vmem:[%s0 + $0x110] sm:$0xff]
  %v50 = vld [vmem:[%s0 + $0x118] sm:$0xff]
  %v51 = vld [vmem:[%s0 + $0x120] sm:$0xff]
  %v52 = vld [vmem:[%s0 + $0x128] sm:$0xff]
  %v53 = vld [vmem:[%s0 + $0x130] sm:$0xff]
  %v54 = vld [vmem:[%s0 + $0x138] sm:$0xff]
  %v55 = vld [vmem:[%s0 + $0x140] sm:$0xff]
  %v56 = vld [vmem:[%s0 + $0x148] sm:$0xff]
  %v57 = vld [vmem:[%s0 + $0x150] sm:$0xff]
  %v58 = vld [vmem:[%s0 + $0x158] sm:$0xff]
  %v59 = vld [vmem:[%s0 + $0x160] sm:$0xff]
  %v60 = vld [vmem:[%s0 + $0x168] sm:$0xff]
  %v61 = vld [vmem:[%s0 + $0x170] sm:$0xff]
  %v62 = vld [vmem:[%s0 + $0x178] sm:$0xff]
  %v63 = vld [vmem:[%s0 + $0x180] sm:$0xff]
  %v64 = vld [vmem:[%s0 + $0x188] sm:$0xff]
  %v65 = vld [vmem:[%s0 + $0x190] sm:$0xff]
  %v66 = vld [vmem:[%s0 + $0x198] sm:$0xff]
  %v67 = vld [vmem:[%s0 + $0x1a0] sm:$0xff]
  %v68 = vld [vmem:[%s0 + $0x1a8] sm:$0xff]
  %v69 = vld [vmem:[%s0 + $0x1b0] sm:$0xff]
  %v70 = vld [vmem:[%s0 + $0x1b8] sm:$0xff]
  %v71 = vld [vmem:[%s0 + $0x1c0] sm:$0xff]
  %v72 = vld [vmem:[%s0 + $0x1c8] sm:$0xff]
  %v73 = vld [vmem:[%s0 + $0x1d0] sm:$0xff]
  %v74 = vld [vmem:[%s0 + $0x1d8] sm:$0xff]
  %v75 = vld [vmem:[%s0 + $0x1e0] sm:$0xff]
  %v76 = vld [vmem:[%s0 + $0x1e8] sm:$0xff]
  %v77 = vld [vmem:[%s0 + $0x1f0] sm:$0xff]
  %v78 = vld [vmem:[%s0 + $0x1f8] sm:$0xff]
  %v79 = vpack.c.bf16 %v16, %v15
  %v80 = vpack.c.bf16 %v18, %v17
  %v81 = vpack.c.bf16 %v20, %v19
  %v82 = vpack.c.bf16 %v22, %v21
  %v83 = vpack.c.bf16 %v24, %v23
  %v84 = vpack.c.bf16 %v26, %v25
  %v85 = vpack.c.bf16 %v28, %v27
  %v86 = vpack.c.bf16 %v30, %v29
  %v87 = vpack.c.bf16 %v32, %v31
  %v88 = vpack.c.bf16 %v34, %v33
  %v89 = vpack.c.bf16 %v36, %v35
  %v90 = vpack.c.bf16 %v38, %v37
  %v91 = vpack.c.bf16 %v40, %v39
  %v92 = vpack.c.bf16 %v42, %v41
  %v93 = vpack.c.bf16 %v44, %v43
  %v94 = vpack.c.bf16 %v46, %v45
  %v95 = vpack.c.bf16 %v48, %v47
  %v96 = vpack.c.bf16 %v50, %v49
  %v97 = vpack.c.bf16 %v52, %v51
  %v98 = vpack.c.bf16 %v54, %v53
  %v99 = vpack.c.bf16 %v56, %v55
  %v100 = vpack.c.bf16 %v58, %v57
  %v101 = vpack.c.bf16 %v60, %v59
  %v102 = vpack.c.bf16 %v62, %v61
  %v103 = vpack.c.bf16 %v64, %v63
  %v104 = vpack.c.bf16 %v66, %v65
  %v105 = vpack.c.bf16 %v68, %v67
  %v106 = vpack.c.bf16 %v70, %v69
  %v107 = vpack.c.bf16 %v72, %v71
  %v108 = vpack.c.bf16 %v74, %v73
  %v109 = vpack.c.bf16 %v76, %v75
  %v110 = vpack.c.bf16 %v78, %v77
  %v111 = vld [vmem:[%s1] sm:$0xf]
  %v112 = vld [vmem:[%s1 + $0x4] sm:$0xf]
  %v113 = vld [vmem:[%s1 + $0x8] sm:$0xf]
  %v114 = vld [vmem:[%s1 + $0xc] sm:$0xf]
  %v115 = vld [vmem:[%s1 + $0x10] sm:$0xf]
  %v116 = vld [vmem:[%s1 + $0x14] sm:$0xf]
  %v117 = vld [vmem:[%s1 + $0x18] sm:$0xf]
  %v118 = vld [vmem:[%s1 + $0x1c] sm:$0xf]
  %v119 = vld [vmem:[%s2] sm:$0x1]
  %v121 = vlaneseq
  %v122 = vshrl.u32 %v121, 7
  %v123 = vsub.s32 0, %v122
  %v124 = vrot.slane %v119, %v123
  %v134 = vunpack.c.l.b16 %v111
  %v135 = vunpack.c.l.b16 %v112
  %v136 = vunpack.c.l.b16 %v113
  %v137 = vunpack.c.l.b16 %v114
  %v138 = vunpack.c.l.b16 %v115
  %v139 = vunpack.c.l.b16 %v116
  %v140 = vunpack.c.l.b16 %v117
  %v141 = vunpack.c.l.b16 %v118
  %v142 = vpack.c.b16 %v135, %v134
  %v143 = vpack.c.b16 %v137, %v136
  %v144 = vpack.c.b16 %v139, %v138
  %v145 = vpack.c.b16 %v141, %v140
  %vm150 = vcmask 523264
  %v152 = vsel %vm150, %v79, 0
  %v155 = vsel %vm150, %v80, 0
  %v158 = vsel %vm150, %v81, 0
  %v161 = vsel %vm150, %v82, 0
  %v164 = vsel %vm150, %v83, 0
  %v167 = vsel %vm150, %v84, 0
  %v170 = vsel %vm150, %v85, 0
  %v173 = vsel %vm150, %v86, 0
  %v176 = vsel %vm150, %v87, 0
  %v179 = vsel %vm150, %v88, 0
  %v182 = vsel %vm150, %v89, 0
  %v185 = vsel %vm150, %v90, 0
  %v188 = vsel %vm150, %v91, 0
  %v191 = vsel %vm150, %v92, 0
  %v194 = vsel %vm150, %v93, 0
  %v197 = vsel %vm150, %v94, 0
  %v200 = vsel %vm150, %v95, 0
  %v203 = vsel %vm150, %v96, 0
  %v206 = vsel %vm150, %v97, 0
  %v209 = vsel %vm150, %v98, 0
  %v212 = vsel %vm150, %v99, 0
  %v215 = vsel %vm150, %v100, 0
  %v218 = vsel %vm150, %v101, 0
  %v221 = vsel %vm150, %v102, 0
  %v224 = vsel %vm150, %v103, 0
  %v227 = vsel %vm150, %v104, 0
  %v230 = vsel %vm150, %v105, 0
  %v233 = vsel %vm150, %v106, 0
  %v236 = vsel %vm150, %v107, 0
  %v239 = vsel %vm150, %v108, 0
  %v242 = vsel %vm150, %v109, 0
  %v245 = vsel %vm150, %v110, 0
  %247 = vmatprep.subr.bf16.mxu0 0
  %248 = vmatpush1.bf16.msra.mxu0 0
  %249 = vmatprep.subr.bf16.mxu0 0
  %250 = vmatpush1.bf16.msra.mxu0 0
  %251 = vmatprep.subr.bf16.mxu0 0
  %252 = vmatpush1.bf16.msra.mxu0 0
  %253 = vmatprep.subr.bf16.mxu0 0
  %254 = vmatpush1.bf16.msra.mxu0 0
  %255 = vmatprep.subr.bf16.mxu0 0
  %256 = vmatpush1.bf16.msra.mxu0 %v145
  %257 = vmatprep.subr.bf16.mxu0 0
  %258 = vmatpush1.bf16.msra.mxu0 %v144
  %259 = vmatprep.subr.bf16.mxu0 0
  %260 = vmatpush1.bf16.msra.mxu0 %v143
  %261 = vmatprep.subr.bf16.mxu0 0
  %262 = vmatpush1.bf16.msra.mxu0 %v142
  %263 = vmatprep.subr.bf16.mxu0 0
  %264 = vmatpush2.bf16.msra.mxu0 0
  %265 = vmatprep.subr.bf16.mxu0 0
  %266 = vmatpush2.bf16.msra.mxu0 0
  %267 = vmatprep.subr.bf16.mxu0 0
  %268 = vmatpush2.bf16.msra.mxu0 0
  %269 = vmatprep.subr.bf16.mxu0 0
  %270 = vmatpush2.bf16.msra.mxu0 0
  %271 = vmatprep.subr.bf16.mxu0 0
  %272 = vmatpush2.bf16.msra.mxu0 0
  %273 = vmatprep.subr.bf16.mxu0 0
  %274 = vmatpush2.bf16.msra.mxu0 0
  %275 = vmatprep.subr.bf16.mxu0 0
  %276 = vmatpush2.bf16.msra.mxu0 0
  %277 = vmatprep.subr.bf16.mxu0 0
  %278 = vmatpush2.bf16.msra.mxu0 0
  %279 = vmatprep.mubr.bf16.mxu0 0
  %280 = vmatmul.mubr.bf16.gmra.mxu0 %v152
  %v281 = vpop.f32.mrf.mxu0
  %v282 = vadd.f32 %v124, %v281
  %v283 = vpop.f32.mrf.mxu0
  %v284 = vpop.f32.mrf.mxu0
  %v285 = vadd.f32 %v124, %v284
  %v286 = vpop.f32.mrf.mxu0
  %287 = vmatprep.mubr.bf16.mxu0 0
  %288 = vmatmul.mubr.bf16.gmra.mxu0 %v155
  %v289 = vpop.f32.mrf.mxu0
  %v290 = vadd.f32 %v124, %v289
  %v291 = vpop.f32.mrf.mxu0
  %v292 = vpop.f32.mrf.mxu0
  %v293 = vadd.f32 %v124, %v292
  %v294 = vpop.f32.mrf.mxu0
  %295 = vmatprep.mubr.bf16.mxu0 0
  %296 = vmatmul.mubr.bf16.gmra.mxu0 %v158
  %v297 = vpop.f32.mrf.mxu0
  %v298 = vadd.f32 %v124, %v297
  %v299 = vpop.f32.mrf.mxu0
  %v300 = vpop.f32.mrf.mxu0
  %v301 = vadd.f32 %v124, %v300
  %v302 = vpop.f32.mrf.mxu0
  %303 = vmatprep.mubr.bf16.mxu0 0
  %304 = vmatmul.mubr.bf16.gmra.mxu0 %v161
  %v305 = vpop.f32.mrf.mxu0
  %v306 = vadd.f32 %v124, %v305
  %v307 = vpop.f32.mrf.mxu0
  %v308 = vpop.f32.mrf.mxu0
  %v309 = vadd.f32 %v124, %v308
  %v310 = vpop.f32.mrf.mxu0
  %311 = vmatprep.mubr.bf16.mxu0 0
  %312 = vmatmul.mubr.bf16.gmra.mxu0 %v164
  %v313 = vpop.f32.mrf.mxu0
  %v314 = vadd.f32 %v124, %v313
  %v315 = vpop.f32.mrf.mxu0
  %v316 = vpop.f32.mrf.mxu0
  %v317 = vadd.f32 %v124, %v316
  %v318 = vpop.f32.mrf.mxu0
  %319 = vmatprep.mubr.bf16.mxu0 0
  %320 = vmatmul.mubr.bf16.gmra.mxu0 %v167
  %v321 = vpop.f32.mrf.mxu0
  %v322 = vadd.f32 %v124, %v321
  %v323 = vpop.f32.mrf.mxu0
  %v324 = vpop.f32.mrf.mxu0
  %v325 = vadd.f32 %v124, %v324
  %v326 = vpop.f32.mrf.mxu0
  %327 = vmatprep.mubr.bf16.mxu0 0
  %328 = vmatmul.mubr.bf16.gmra.mxu0 %v170
  %v329 = vpop.f32.mrf.mxu0
  %v330 = vadd.f32 %v124, %v329
  %v331 = vpop.f32.mrf.mxu0
  %v332 = vpop.f32.mrf.mxu0
  %v333 = vadd.f32 %v124, %v332
  %v334 = vpop.f32.mrf.mxu0
  %335 = vmatprep.mubr.bf16.mxu0 0
  %336 = vmatmul.mubr.bf16.gmra.mxu0 %v173
  %v337 = vpop.f32.mrf.mxu0
  %v338 = vadd.f32 %v124, %v337
  %v339 = vpop.f32.mrf.mxu0
  %v340 = vpop.f32.mrf.mxu0
  %v341 = vadd.f32 %v124, %v340
  %v342 = vpop.f32.mrf.mxu0
  %343 = vmatprep.mubr.bf16.mxu0 0
  %344 = vmatmul.mubr.bf16.gmra.mxu0 %v176
  %v345 = vpop.f32.mrf.mxu0
  %v346 = vadd.f32 %v124, %v345
  %v347 = vpop.f32.mrf.mxu0
  %v348 = vpop.f32.mrf.mxu0
  %v349 = vadd.f32 %v124, %v348
  %v350 = vpop.f32.mrf.mxu0
  %351 = vmatprep.mubr.bf16.mxu0 0
  %352 = vmatmul.mubr.bf16.gmra.mxu0 %v179
  %v353 = vpop.f32.mrf.mxu0
  %v354 = vadd.f32 %v124, %v353
  %v355 = vpop.f32.mrf.mxu0
  %v356 = vpop.f32.mrf.mxu0
  %v357 = vadd.f32 %v124, %v356
  %v358 = vpop.f32.mrf.mxu0
  %359 = vmatprep.mubr.bf16.mxu0 0
  %360 = vmatmul.mubr.bf16.gmra.mxu0 %v182
  %v361 = vpop.f32.mrf.mxu0
  %v362 = vadd.f32 %v124, %v361
  %v363 = vpop.f32.mrf.mxu0
  %v364 = vpop.f32.mrf.mxu0
  %v365 = vadd.f32 %v124, %v364
  %v366 = vpop.f32.mrf.mxu0
  %367 = vmatprep.mubr.bf16.mxu0 0
  %368 = vmatmul.mubr.bf16.gmra.mxu0 %v185
  %v369 = vpop.f32.mrf.mxu0
  %v370 = vadd.f32 %v124, %v369
  %v371 = vpop.f32.mrf.mxu0
  %v372 = vpop.f32.mrf.mxu0
  %v373 = vadd.f32 %v124, %v372
  %v374 = vpop.f32.mrf.mxu0
  %375 = vmatprep.mubr.bf16.mxu0 0
  %376 = vmatmul.mubr.bf16.gmra.mxu0 %v188
  %v377 = vpop.f32.mrf.mxu0
  %v378 = vadd.f32 %v124, %v377
  %v379 = vpop.f32.mrf.mxu0
  %v380 = vpop.f32.mrf.mxu0
  %v381 = vadd.f32 %v124, %v380
  %v382 = vpop.f32.mrf.mxu0
  %383 = vmatprep.mubr.bf16.mxu0 0
  %384 = vmatmul.mubr.bf16.gmra.mxu0 %v191
  %v385 = vpop.f32.mrf.mxu0
  %v386 = vadd.f32 %v124, %v385
  %v387 = vpop.f32.mrf.mxu0
  %v388 = vpop.f32.mrf.mxu0
  %v389 = vadd.f32 %v124, %v388
  %v390 = vpop.f32.mrf.mxu0
  %391 = vmatprep.mubr.bf16.mxu0 0
  %392 = vmatmul.mubr.bf16.gmra.mxu0 %v194
  %v393 = vpop.f32.mrf.mxu0
  %v394 = vadd.f32 %v124, %v393
  %v395 = vpop.f32.mrf.mxu0
  %v396 = vpop.f32.mrf.mxu0
  %v397 = vadd.f32 %v124, %v396
  %v398 = vpop.f32.mrf.mxu0
  %399 = vmatprep.mubr.bf16.mxu0 0
  %400 = vmatmul.mubr.bf16.gmra.mxu0 %v197
  %v401 = vpop.f32.mrf.mxu0
  %v402 = vadd.f32 %v124, %v401
  %v403 = vpop.f32.mrf.mxu0
  %v404 = vpop.f32.mrf.mxu0
  %v405 = vadd.f32 %v124, %v404
  %v406 = vpop.f32.mrf.mxu0
  %407 = vmatprep.mubr.bf16.mxu0 0
  %408 = vmatmul.mubr.bf16.gmra.mxu0 %v200
  %v409 = vpop.f32.mrf.mxu0
  %v410 = vadd.f32 %v124, %v409
  %v411 = vpop.f32.mrf.mxu0
  %v412 = vpop.f32.mrf.mxu0
  %v413 = vadd.f32 %v124, %v412
  %v414 = vpop.f32.mrf.mxu0
  %415 = vmatprep.mubr.bf16.mxu0 0
  %416 = vmatmul.mubr.bf16.gmra.mxu0 %v203
  %v417 = vpop.f32.mrf.mxu0
  %v418 = vadd.f32 %v124, %v417
  %v419 = vpop.f32.mrf.mxu0
  %v420 = vpop.f32.mrf.mxu0
  %v421 = vadd.f32 %v124, %v420
  %v422 = vpop.f32.mrf.mxu0
  %423 = vmatprep.mubr.bf16.mxu0 0
  %424 = vmatmul.mubr.bf16.gmra.mxu0 %v206
  %v425 = vpop.f32.mrf.mxu0
  %v426 = vadd.f32 %v124, %v425
  %v427 = vpop.f32.mrf.mxu0
  %v428 = vpop.f32.mrf.mxu0
  %v429 = vadd.f32 %v124, %v428
  %v430 = vpop.f32.mrf.mxu0
  %431 = vmatprep.mubr.bf16.mxu0 0
  %432 = vmatmul.mubr.bf16.gmra.mxu0 %v209
  %v433 = vpop.f32.mrf.mxu0
  %v434 = vadd.f32 %v124, %v433
  %v435 = vpop.f32.mrf.mxu0
  %v436 = vpop.f32.mrf.mxu0
  %v437 = vadd.f32 %v124, %v436
  %v438 = vpop.f32.mrf.mxu0
  %439 = vmatprep.mubr.bf16.mxu0 0
  %440 = vmatmul.mubr.bf16.gmra.mxu0 %v212
  %v441 = vpop.f32.mrf.mxu0
  %v442 = vadd.f32 %v124, %v441
  %v443 = vpop.f32.mrf.mxu0
  %v444 = vpop.f32.mrf.mxu0
  %v445 = vadd.f32 %v124, %v444
  %v446 = vpop.f32.mrf.mxu0
  %447 = vmatprep.mubr.bf16.mxu0 0
  %448 = vmatmul.mubr.bf16.gmra.mxu0 %v215
  %v449 = vpop.f32.mrf.mxu0
  %v450 = vadd.f32 %v124, %v449
  %v451 = vpop.f32.mrf.mxu0
  %v452 = vpop.f32.mrf.mxu0
  %v453 = vadd.f32 %v124, %v452
  %v454 = vpop.f32.mrf.mxu0
  %455 = vmatprep.mubr.bf16.mxu0 0
  %456 = vmatmul.mubr.bf16.gmra.mxu0 %v218
  %v457 = vpop.f32.mrf.mxu0
  %v458 = vadd.f32 %v124, %v457
  %v459 = vpop.f32.mrf.mxu0
  %v460 = vpop.f32.mrf.mxu0
  %v461 = vadd.f32 %v124, %v460
  %v462 = vpop.f32.mrf.mxu0
  %463 = vmatprep.mubr.bf16.mxu0 0
  %464 = vmatmul.mubr.bf16.gmra.mxu0 %v221
  %v465 = vpop.f32.mrf.mxu0
  %v466 = vadd.f32 %v124, %v465
  %v467 = vpop.f32.mrf.mxu0
  %v468 = vpop.f32.mrf.mxu0
  %v469 = vadd.f32 %v124, %v468
  %v470 = vpop.f32.mrf.mxu0
  %471 = vmatprep.mubr.bf16.mxu0 0
  %472 = vmatmul.mubr.bf16.gmra.mxu0 %v224
  %v473 = vpop.f32.mrf.mxu0
  %v474 = vadd.f32 %v124, %v473
  %v475 = vpop.f32.mrf.mxu0
  %v476 = vpop.f32.mrf.mxu0
  %v477 = vadd.f32 %v124, %v476
  %v478 = vpop.f32.mrf.mxu0
  %479 = vmatprep.mubr.bf16.mxu0 0
  %480 = vmatmul.mubr.bf16.gmra.mxu0 %v227
  %v481 = vpop.f32.mrf.mxu0
  %v482 = vadd.f32 %v124, %v481
  %v483 = vpop.f32.mrf.mxu0
  %v484 = vpop.f32.mrf.mxu0
  %v485 = vadd.f32 %v124, %v484
  %v486 = vpop.f32.mrf.mxu0
  %487 = vmatprep.mubr.bf16.mxu0 0
  %488 = vmatmul.mubr.bf16.gmra.mxu0 %v230
  %v489 = vpop.f32.mrf.mxu0
  %v490 = vadd.f32 %v124, %v489
  %v491 = vpop.f32.mrf.mxu0
  %v492 = vpop.f32.mrf.mxu0
  %v493 = vadd.f32 %v124, %v492
  %v494 = vpop.f32.mrf.mxu0
  %495 = vmatprep.mubr.bf16.mxu0 0
  %496 = vmatmul.mubr.bf16.gmra.mxu0 %v233
  %v497 = vpop.f32.mrf.mxu0
  %v498 = vadd.f32 %v124, %v497
  %v499 = vpop.f32.mrf.mxu0
  %v500 = vpop.f32.mrf.mxu0
  %v501 = vadd.f32 %v124, %v500
  %v502 = vpop.f32.mrf.mxu0
  %503 = vmatprep.mubr.bf16.mxu0 0
  %504 = vmatmul.mubr.bf16.gmra.mxu0 %v236
  %v505 = vpop.f32.mrf.mxu0
  %v506 = vadd.f32 %v124, %v505
  %v507 = vpop.f32.mrf.mxu0
  %v508 = vpop.f32.mrf.mxu0
  %v509 = vadd.f32 %v124, %v508
  %v510 = vpop.f32.mrf.mxu0
  %511 = vmatprep.mubr.bf16.mxu0 0
  %512 = vmatmul.mubr.bf16.gmra.mxu0 %v239
  %v513 = vpop.f32.mrf.mxu0
  %v514 = vadd.f32 %v124, %v513
  %v515 = vpop.f32.mrf.mxu0
  %v516 = vpop.f32.mrf.mxu0
  %v517 = vadd.f32 %v124, %v516
  %v518 = vpop.f32.mrf.mxu0
  %519 = vmatprep.mubr.bf16.mxu0 0
  %520 = vmatmul.mubr.bf16.gmra.mxu0 %v242
  %v521 = vpop.f32.mrf.mxu0
  %v522 = vadd.f32 %v124, %v521
  %v523 = vpop.f32.mrf.mxu0
  %v524 = vpop.f32.mrf.mxu0
  %v525 = vadd.f32 %v124, %v524
  %v526 = vpop.f32.mrf.mxu0
  %527 = vmatprep.mubr.bf16.mxu0 0
  %528 = vmatmul.mubr.bf16.gmra.mxu0 %v245
  %v529 = vpop.f32.mrf.mxu0
  %v530 = vadd.f32 %v124, %v529
  %v531 = vpop.f32.mrf.mxu0
  %v532 = vpop.f32.mrf.mxu0
  %v533 = vadd.f32 %v124, %v532
  %v534 = vpop.f32.mrf.mxu0
  %535 = vdwg.mxu0
  %v536 = vmax.f32 %v282, 0.0
  %v537 = vmax.f32 %v285, 0.0
  %v538 = vmax.f32 %v290, 0.0
  %v539 = vmax.f32 %v293, 0.0
  %v540 = vmax.f32 %v298, 0.0
  %v541 = vmax.f32 %v301, 0.0
  %v542 = vmax.f32 %v306, 0.0
  %v543 = vmax.f32 %v309, 0.0
  %v544 = vmax.f32 %v314, 0.0
  %v545 = vmax.f32 %v317, 0.0
  %v546 = vmax.f32 %v322, 0.0
  %v547 = vmax.f32 %v325, 0.0
  %v548 = vmax.f32 %v330, 0.0
  %v549 = vmax.f32 %v333, 0.0
  %v550 = vmax.f32 %v338, 0.0
  %v551 = vmax.f32 %v341, 0.0
  %v552 = vmax.f32 %v346, 0.0
  %v553 = vmax.f32 %v349, 0.0
  %v554 = vmax.f32 %v354, 0.0
  %v555 = vmax.f32 %v357, 0.0
  %v556 = vmax.f32 %v362, 0.0
  %v557 = vmax.f32 %v365, 0.0
  %v558 = vmax.f32 %v370, 0.0
  %v559 = vmax.f32 %v373, 0.0
  %v560 = vmax.f32 %v378, 0.0
  %v561 = vmax.f32 %v381, 0.0
  %v562 = vmax.f32 %v386, 0.0
  %v563 = vmax.f32 %v389, 0.0
  %v564 = vmax.f32 %v394, 0.0
  %v565 = vmax.f32 %v397, 0.0
  %v566 = vmax.f32 %v402, 0.0
  %v567 = vmax.f32 %v405, 0.0
  %v568 = vmax.f32 %v410, 0.0
  %v569 = vmax.f32 %v413, 0.0
  %v570 = vmax.f32 %v418, 0.0
  %v571 = vmax.f32 %v421, 0.0
  %v572 = vmax.f32 %v426, 0.0
  %v573 = vmax.f32 %v429, 0.0
  %v574 = vmax.f32 %v434, 0.0
  %v575 = vmax.f32 %v437, 0.0
  %v576 = vmax.f32 %v442, 0.0
  %v577 = vmax.f32 %v445, 0.0
  %v578 = vmax.f32 %v450, 0.0
  %v579 = vmax.f32 %v453, 0.0
  %v580 = vmax.f32 %v458, 0.0
  %v581 = vmax.f32 %v461, 0.0
  %v582 = vmax.f32 %v466, 0.0
  %v583 = vmax.f32 %v469, 0.0
  %v584 = vmax.f32 %v474, 0.0
  %v585 = vmax.f32 %v477, 0.0
  %v586 = vmax.f32 %v482, 0.0
  %v587 = vmax.f32 %v485, 0.0
  %v588 = vmax.f32 %v490, 0.0
  %v589 = vmax.f32 %v493, 0.0
  %v590 = vmax.f32 %v498, 0.0
  %v591 = vmax.f32 %v501, 0.0
  %v592 = vmax.f32 %v506, 0.0
  %v593 = vmax.f32 %v509, 0.0
  %v594 = vmax.f32 %v514, 0.0
  %v595 = vmax.f32 %v517, 0.0
  %v596 = vmax.f32 %v522, 0.0
  %v597 = vmax.f32 %v525, 0.0
  %v598 = vmax.f32 %v530, 0.0
  %v599 = vmax.f32 %v533, 0.0
  %vm600 = vcmask 130048
  %601 = vst.msk [vmem:[%s3] sm:$0xff] %vm600, %v536
  %602 = vst.msk [vmem:[%s3 + $0x8] sm:$0xff] %vm600, %v537
  %603 = vst.msk [vmem:[%s3 + $0x10] sm:$0xff] %vm600, %v538
  %604 = vst.msk [vmem:[%s3 + $0x18] sm:$0xff] %vm600, %v539
  %605 = vst.msk [vmem:[%s3 + $0x20] sm:$0xff] %vm600, %v540
  %606 = vst.msk [vmem:[%s3 + $0x28] sm:$0xff] %vm600, %v541
  %607 = vst.msk [vmem:[%s3 + $0x30] sm:$0xff] %vm600, %v542
  %608 = vst.msk [vmem:[%s3 + $0x38] sm:$0xff] %vm600, %v543
  %609 = vst.msk [vmem:[%s3 + $0x40] sm:$0xff] %vm600, %v544
  %610 = vst.msk [vmem:[%s3 + $0x48] sm:$0xff] %vm600, %v545
  %611 = vst.msk [vmem:[%s3 + $0x50] sm:$0xff] %vm600, %v546
  %612 = vst.msk [vmem:[%s3 + $0x58] sm:$0xff] %vm600, %v547
  %613 = vst.msk [vmem:[%s3 + $0x60] sm:$0xff] %vm600, %v548
  %614 = vst.msk [vmem:[%s3 + $0x68] sm:$0xff] %vm600, %v549
  %615 = vst.msk [vmem:[%s3 + $0x70] sm:$0xff] %vm600, %v550
  %616 = vst.msk [vmem:[%s3 + $0x78] sm:$0xff] %vm600, %v551
  %617 = vst.msk [vmem:[%s3 + $0x80] sm:$0xff] %vm600, %v552
  %618 = vst.msk [vmem:[%s3 + $0x88] sm:$0xff] %vm600, %v553
  %619 = vst.msk [vmem:[%s3 + $0x90] sm:$0xff] %vm600, %v554
  %620 = vst.msk [vmem:[%s3 + $0x98] sm:$0xff] %vm600, %v555
  %621 = vst.msk [vmem:[%s3 + $0xa0] sm:$0xff] %vm600, %v556
  %622 = vst.msk [vmem:[%s3 + $0xa8] sm:$0xff] %vm600, %v557
  %623 = vst.msk [vmem:[%s3 + $0xb0] sm:$0xff] %vm600, %v558
  %624 = vst.msk [vmem:[%s3 + $0xb8] sm:$0xff] %vm600, %v559
  %625 = vst.msk [vmem:[%s3 + $0xc0] sm:$0xff] %vm600, %v560
  %626 = vst.msk [vmem:[%s3 + $0xc8] sm:$0xff] %vm600, %v561
  %627 = vst.msk [vmem:[%s3 + $0xd0] sm:$0xff] %vm600, %v562
  %628 = vst.msk [vmem:[%s3 + $0xd8] sm:$0xff] %vm600, %v563
  %629 = vst.msk [vmem:[%s3 + $0xe0] sm:$0xff] %vm600, %v564
  %630 = vst.msk [vmem:[%s3 + $0xe8] sm:$0xff] %vm600, %v565
  %631 = vst.msk [vmem:[%s3 + $0xf0] sm:$0xff] %vm600, %v566
  %632 = vst.msk [vmem:[%s3 + $0xf8] sm:$0xff] %vm600, %v567
  %633 = vst.msk [vmem:[%s3 + $0x100] sm:$0xff] %vm600, %v568
  %634 = vst.msk [vmem:[%s3 + $0x108] sm:$0xff] %vm600, %v569
  %635 = vst.msk [vmem:[%s3 + $0x110] sm:$0xff] %vm600, %v570
  %636 = vst.msk [vmem:[%s3 + $0x118] sm:$0xff] %vm600, %v571
  %637 = vst.msk [vmem:[%s3 + $0x120] sm:$0xff] %vm600, %v572
  %638 = vst.msk [vmem:[%s3 + $0x128] sm:$0xff] %vm600, %v573
  %639 = vst.msk [vmem:[%s3 + $0x130] sm:$0xff] %vm600, %v574
  %640 = vst.msk [vmem:[%s3 + $0x138] sm:$0xff] %vm600, %v575
  %641 = vst.msk [vmem:[%s3 + $0x140] sm:$0xff] %vm600, %v576
  %642 = vst.msk [vmem:[%s3 + $0x148] sm:$0xff] %vm600, %v577
  %643 = vst.msk [vmem:[%s3 + $0x150] sm:$0xff] %vm600, %v578
  %644 = vst.msk [vmem:[%s3 + $0x158] sm:$0xff] %vm600, %v579
  %645 = vst.msk [vmem:[%s3 + $0x160] sm:$0xff] %vm600, %v580
  %646 = vst.msk [vmem:[%s3 + $0x168] sm:$0xff] %vm600, %v581
  %647 = vst.msk [vmem:[%s3 + $0x170] sm:$0xff] %vm600, %v582
  %648 = vst.msk [vmem:[%s3 + $0x178] sm:$0xff] %vm600, %v583
  %649 = vst.msk [vmem:[%s3 + $0x180] sm:$0xff] %vm600, %v584
  %650 = vst.msk [vmem:[%s3 + $0x188] sm:$0xff] %vm600, %v585
  %651 = vst.msk [vmem:[%s3 + $0x190] sm:$0xff] %vm600, %v586
  %652 = vst.msk [vmem:[%s3 + $0x198] sm:$0xff] %vm600, %v587
  %653 = vst.msk [vmem:[%s3 + $0x1a0] sm:$0xff] %vm600, %v588
  %654 = vst.msk [vmem:[%s3 + $0x1a8] sm:$0xff] %vm600, %v589
  %655 = vst.msk [vmem:[%s3 + $0x1b0] sm:$0xff] %vm600, %v590
  %656 = vst.msk [vmem:[%s3 + $0x1b8] sm:$0xff] %vm600, %v591
  %657 = vst.msk [vmem:[%s3 + $0x1c0] sm:$0xff] %vm600, %v592
  %658 = vst.msk [vmem:[%s3 + $0x1c8] sm:$0xff] %vm600, %v593
  %659 = vst.msk [vmem:[%s3 + $0x1d0] sm:$0xff] %vm600, %v594
  %660 = vst.msk [vmem:[%s3 + $0x1d8] sm:$0xff] %vm600, %v595
  %661 = vst.msk [vmem:[%s3 + $0x1e0] sm:$0xff] %vm600, %v596
  %662 = vst.msk [vmem:[%s3 + $0x1e8] sm:$0xff] %vm600, %v597
  %663 = vst.msk [vmem:[%s3 + $0x1f0] sm:$0xff] %vm600, %v598
  %664 = vst.msk [vmem:[%s3 + $0x1f8] sm:$0xff] %vm600, %v599
  // Predicated region
  $region14: #{forward.61} parent=0 // pred_check
    _
  $region15: #{forward.61} parent=0 // pred_check_branch
    %666 = sbr.rel (0) target = $region17
  $region16: #{forward.61} parent=0 // pred_region
    _
  $region17: #{forward.61} parent=0 // pred_fallthru
    _
  // Predicated region
  $region18: #{forward.61} parent=0 // pred_check
    _
  $region19: #{forward.61} parent=0 // pred_check_branch
    %668 = sbr.rel (0) target = $region21
  $region20: #{forward.61} parent=0 // pred_region
    _
  $region21: #{forward.61} parent=0 // pred_fallthru
    _

// kernel: forward.68
$region0: #{forward.68}
  #allocation0 [shape = 'u32[]', space=smem, size = 0x4, offset = 0x4, fixed_abs, tag = 'smem constant byte address 0x4 - core index']
  #allocation1 [shape = 'u32[144,128]{1,0:T(1,128)}', space=vmem, size = 0x12000, scoped, tag = 'internal scratch']
  %s0 = inlined_call_operand.vmem [shape: f32[512,64], index: 0, kind: input, shape index: {}]
  %s1 = inlined_call_operand.vmem [shape: bf16[64,32], index: 1, kind: input, shape index: {}]
  %s2 = inlined_call_operand.vmem [shape: f32[1,32], index: 2, kind: input, shape index: {}]
  %s3 = inlined_call_operand.vmem [shape: f32[512,32], index: 3, kind: output, shape index: {}]
  %s4 = sld [smem:[#allocation0]]
  $region22: #{forward.68} parent=0
    _
  %s6 = ssub.s32 1, %s4
  %s7 = scalar_select 0, %s6, %s4
  // Predicated region
  $region2: #{forward.68} parent=0 // pred_check
    _
  $region3: #{forward.68} parent=0 // pred_check_branch
    %9 = sbr.rel (0) target = $region5
  $region4: #{forward.68} parent=0 // pred_region
    _
  $region5: #{forward.68} parent=0 // pred_fallthru
    _
  // Predicated region
  $region6: #{forward.68} parent=0 // pred_check
    _
  $region7: #{forward.68} parent=0 // pred_check_branch
    %11 = sbr.rel (0) target = $region9
  $region8: #{forward.68} parent=0 // pred_region
    _
  $region9: #{forward.68} parent=0 // pred_fallthru
    _
  // Predicated region
  $region10: #{forward.68} parent=0 // pred_check
    _
  $region11: #{forward.68} parent=0 // pred_check_branch
    %13 = sbr.rel (0) target = $region13
  $region12: #{forward.68} parent=0 // pred_region
    _
  $region13: #{forward.68} parent=0 // pred_fallthru
    _
  %v15 = vld [vmem:[%s0] sm:$0xff]
  %v16 = vld [vmem:[%s0 + $0x8] sm:$0xff]
  %v17 = vld [vmem:[%s0 + $0x10] sm:$0xff]
  %v18 = vld [vmem:[%s0 + $0x18] sm:$0xff]
  %v19 = vld [vmem:[%s0 + $0x20] sm:$0xff]
  %v20 = vld [vmem:[%s0 + $0x28] sm:$0xff]
  %v21 = vld [vmem:[%s0 + $0x30] sm:$0xff]
  %v22 = vld [vmem:[%s0 + $0x38] sm:$0xff]
  %v23 = vld [vmem:[%s0 + $0x40] sm:$0xff]
  %v24 = vld [vmem:[%s0 + $0x48] sm:$0xff]
  %v25 = vld [vmem:[%s0 + $0x50] sm:$0xff]
  %v26 = vld [vmem:[%s0 + $0x58] sm:$0xff]
  %v27 = vld [vmem:[%s0 + $0x60] sm:$0xff]
  %v28 = vld [vmem:[%s0 + $0x68] sm:$0xff]
  %v29 = vld [vmem:[%s0 + $0x70] sm:$0xff]
  %v30 = vld [vmem:[%s0 + $0x78] sm:$0xff]
  %v31 = vld [vmem:[%s0 + $0x80] sm:$0xff]
  %v32 = vld [vmem:[%s0 + $0x88] sm:$0xff]
  %v33 = vld [vmem:[%s0 + $0x90] sm:$0xff]
  %v34 = vld [vmem:[%s0 + $0x98] sm:$0xff]
  %v35 = vld [vmem:[%s0 + $0xa0] sm:$0xff]
  %v36 = vld [vmem:[%s0 + $0xa8] sm:$0xff]
  %v37 = vld [vmem:[%s0 + $0xb0] sm:$0xff]
  %v38 = vld [vmem:[%s0 + $0xb8] sm:$0xff]
  %v39 = vld [vmem:[%s0 + $0xc0] sm:$0xff]
  %v40 = vld [vmem:[%s0 + $0xc8] sm:$0xff]
  %v41 = vld [vmem:[%s0 + $0xd0] sm:$0xff]
  %v42 = vld [vmem:[%s0 + $0xd8] sm:$0xff]
  %v43 = vld [vmem:[%s0 + $0xe0] sm:$0xff]
  %v44 = vld [vmem:[%s0 + $0xe8] sm:$0xff]
  %v45 = vld [vmem:[%s0 + $0xf0] sm:$0xff]
  %v46 = vld [vmem:[%s0 + $0xf8] sm:$0xff]
  %v47 = vld [vmem:[%s0 + $0x100] sm:$0xff]
  %v48 = vld [vmem:[%s0 + $0x108] sm:$0xff]
  %v49 = vld [vmem:[%s0 + $0x110] sm:$0xff]
  %v50 = vld [vmem:[%s0 + $0x118] sm:$0xff]
  %v51 = vld [vmem:[%s0 + $0x120] sm:$0xff]
  %v52 = vld [vmem:[%s0 + $0x128] sm:$0xff]
  %v53 = vld [vmem:[%s0 + $0x130] sm:$0xff]
  %v54 = vld [vmem:[%s0 + $0x138] sm:$0xff]
  %v55 = vld [vmem:[%s0 + $0x140] sm:$0xff]
  %v56 = vld [vmem:[%s0 + $0x148] sm:$0xff]
  %v57 = vld [vmem:[%s0 + $0x150] sm:$0xff]
  %v58 = vld [vmem:[%s0 + $0x158] sm:$0xff]
  %v59 = vld [vmem:[%s0 + $0x160] sm:$0xff]
  %v60 = vld [vmem:[%s0 + $0x168] sm:$0xff]
  %v61 = vld [vmem:[%s0 + $0x170] sm:$0xff]
  %v62 = vld [vmem:[%s0 + $0x178] sm:$0xff]
  %v63 = vld [vmem:[%s0 + $0x180] sm:$0xff]
  %v64 = vld [vmem:[%s0 + $0x188] sm:$0xff]
  %v65 = vld [vmem:[%s0 + $0x190] sm:$0xff]
  %v66 = vld [vmem:[%s0 + $0x198] sm:$0xff]
  %v67 = vld [vmem:[%s0 + $0x1a0] sm:$0xff]
  %v68 = vld [vmem:[%s0 + $0x1a8] sm:$0xff]
  %v69 = vld [vmem:[%s0 + $0x1b0] sm:$0xff]
  %v70 = vld [vmem:[%s0 + $0x1b8] sm:$0xff]
  %v71 = vld [vmem:[%s0 + $0x1c0] sm:$0xff]
  %v72 = vld [vmem:[%s0 + $0x1c8] sm:$0xff]
  %v73 = vld [vmem:[%s0 + $0x1d0] sm:$0xff]
  %v74 = vld [vmem:[%s0 + $0x1d8] sm:$0xff]
  %v75 = vld [vmem:[%s0 + $0x1e0] sm:$0xff]
  %v76 = vld [vmem:[%s0 + $0x1e8] sm:$0xff]
  %v77 = vld [vmem:[%s0 + $0x1f0] sm:$0xff]
  %v78 = vld [vmem:[%s0 + $0x1f8] sm:$0xff]
  %v79 = vpack.c.bf16 %v16, %v15
  %v80 = vpack.c.bf16 %v18, %v17
  %v81 = vpack.c.bf16 %v20, %v19
  %v82 = vpack.c.bf16 %v22, %v21
  %v83 = vpack.c.bf16 %v24, %v23
  %v84 = vpack.c.bf16 %v26, %v25
  %v85 = vpack.c.bf16 %v28, %v27
  %v86 = vpack.c.bf16 %v30, %v29
  %v87 = vpack.c.bf16 %v32, %v31
  %v88 = vpack.c.bf16 %v34, %v33
  %v89 = vpack.c.bf16 %v36, %v35
  %v90 = vpack.c.bf16 %v38, %v37
  %v91 = vpack.c.bf16 %v40, %v39
  %v92 = vpack.c.bf16 %v42, %v41
  %v93 = vpack.c.bf16 %v44, %v43
  %v94 = vpack.c.bf16 %v46, %v45
  %v95 = vpack.c.bf16 %v48, %v47
  %v96 = vpack.c.bf16 %v50, %v49
  %v97 = vpack.c.bf16 %v52, %v51
  %v98 = vpack.c.bf16 %v54, %v53
  %v99 = vpack.c.bf16 %v56, %v55
  %v100 = vpack.c.bf16 %v58, %v57
  %v101 = vpack.c.bf16 %v60, %v59
  %v102 = vpack.c.bf16 %v62, %v61
  %v103 = vpack.c.bf16 %v64, %v63
  %v104 = vpack.c.bf16 %v66, %v65
  %v105 = vpack.c.bf16 %v68, %v67
  %v106 = vpack.c.bf16 %v70, %v69
  %v107 = vpack.c.bf16 %v72, %v71
  %v108 = vpack.c.bf16 %v74, %v73
  %v109 = vpack.c.bf16 %v76, %v75
  %v110 = vpack.c.bf16 %v78, %v77
  %v111 = vld [vmem:[%s1] sm:$0xf]
  %v112 = vld [vmem:[%s1 + $0x4] sm:$0xf]
  %v113 = vld [vmem:[%s1 + $0x8] sm:$0xf]
  %v114 = vld [vmem:[%s1 + $0xc] sm:$0xf]
  %v115 = vld [vmem:[%s1 + $0x10] sm:$0xf]
  %v116 = vld [vmem:[%s1 + $0x14] sm:$0xf]
  %v117 = vld [vmem:[%s1 + $0x18] sm:$0xf]
  %v118 = vld [vmem:[%s1 + $0x1c] sm:$0xf]
  %v119 = vld [vmem:[%s2] sm:$0x1]
  %v121 = vlaneseq
  %v122 = vshrl.u32 %v121, 7
  %v123 = vsub.s32 0, %v122
  %v124 = vrot.slane %v119, %v123
  %v134 = vunpack.c.l.b16 %v111
  %v135 = vunpack.c.l.b16 %v112
  %v136 = vunpack.c.l.b16 %v113
  %v137 = vunpack.c.l.b16 %v114
  %v138 = vunpack.c.l.b16 %v115
  %v139 = vunpack.c.l.b16 %v116
  %v140 = vunpack.c.l.b16 %v117
  %v141 = vunpack.c.l.b16 %v118
  %v142 = vpack.c.b16 %v135, %v134
  %v143 = vpack.c.b16 %v137, %v136
  %v144 = vpack.c.b16 %v139, %v138
  %v145 = vpack.c.b16 %v141, %v140
  %vm150 = vcmask 523264
  %v152 = vsel %vm150, %v79, 0
  %v155 = vsel %vm150, %v80, 0
  %v158 = vsel %vm150, %v81, 0
  %v161 = vsel %vm150, %v82, 0
  %v164 = vsel %vm150, %v83, 0
  %v167 = vsel %vm150, %v84, 0
  %v170 = vsel %vm150, %v85, 0
  %v173 = vsel %vm150, %v86, 0
  %v176 = vsel %vm150, %v87, 0
  %v179 = vsel %vm150, %v88, 0
  %v182 = vsel %vm150, %v89, 0
  %v185 = vsel %vm150, %v90, 0
  %v188 = vsel %vm150, %v91, 0
  %v191 = vsel %vm150, %v92, 0
  %v194 = vsel %vm150, %v93, 0
  %v197 = vsel %vm150, %v94, 0
  %v200 = vsel %vm150, %v95, 0
  %v203 = vsel %vm150, %v96, 0
  %v206 = vsel %vm150, %v97, 0
  %v209 = vsel %vm150, %v98, 0
  %v212 = vsel %vm150, %v99, 0
  %v215 = vsel %vm150, %v100, 0
  %v218 = vsel %vm150, %v101, 0
  %v221 = vsel %vm150, %v102, 0
  %v224 = vsel %vm150, %v103, 0
  %v227 = vsel %vm150, %v104, 0
  %v230 = vsel %vm150, %v105, 0
  %v233 = vsel %vm150, %v106, 0
  %v236 = vsel %vm150, %v107, 0
  %v239 = vsel %vm150, %v108, 0
  %v242 = vsel %vm150, %v109, 0
  %v245 = vsel %vm150, %v110, 0
  %247 = vmatprep.subr.bf16.mxu0 0
  %248 = vmatpush1.bf16.msra.mxu0 0
  %249 = vmatprep.subr.bf16.mxu0 0
  %250 = vmatpush1.bf16.msra.mxu0 0
  %251 = vmatprep.subr.bf16.mxu0 0
  %252 = vmatpush1.bf16.msra.mxu0 0
  %253 = vmatprep.subr.bf16.mxu0 0
  %254 = vmatpush1.bf16.msra.mxu0 0
  %255 = vmatprep.subr.bf16.mxu0 0
  %256 = vmatpush1.bf16.msra.mxu0 %v145
  %257 = vmatprep.subr.bf16.mxu0 0
  %258 = vmatpush1.bf16.msra.mxu0 %v144
  %259 = vmatprep.subr.bf16.mxu0 0
  %260 = vmatpush1.bf16.msra.mxu0 %v143
  %261 = vmatprep.subr.bf16.mxu0 0
  %262 = vmatpush1.bf16.msra.mxu0 %v142
  %263 = vmatprep.subr.bf16.mxu0 0
  %264 = vmatpush2.bf16.msra.mxu0 0
  %265 = vmatprep.subr.bf16.mxu0 0
  %266 = vmatpush2.bf16.msra.mxu0 0
  %267 = vmatprep.subr.bf16.mxu0 0
  %268 = vmatpush2.bf16.msra.mxu0 0
  %269 = vmatprep.subr.bf16.mxu0 0
  %270 = vmatpush2.bf16.msra.mxu0 0
  %271 = vmatprep.subr.bf16.mxu0 0
  %272 = vmatpush2.bf16.msra.mxu0 0
  %273 = vmatprep.subr.bf16.mxu0 0
  %274 = vmatpush2.bf16.msra.mxu0 0
  %275 = vmatprep.subr.bf16.mxu0 0
  %276 = vmatpush2.bf16.msra.mxu0 0
  %277 = vmatprep.subr.bf16.mxu0 0
  %278 = vmatpush2.bf16.msra.mxu0 0
  %279 = vmatprep.mubr.bf16.mxu0 0
  %280 = vmatmul.mubr.bf16.gmra.mxu0 %v152
  %v281 = vpop.f32.mrf.mxu0
  %v282 = vadd.f32 %v124, %v281
  %v283 = vpop.f32.mrf.mxu0
  %v284 = vpop.f32.mrf.mxu0
  %v285 = vadd.f32 %v124, %v284
  %v286 = vpop.f32.mrf.mxu0
  %287 = vmatprep.mubr.bf16.mxu0 0
  %288 = vmatmul.mubr.bf16.gmra.mxu0 %v155
  %v289 = vpop.f32.mrf.mxu0
  %v290 = vadd.f32 %v124, %v289
  %v291 = vpop.f32.mrf.mxu0
  %v292 = vpop.f32.mrf.mxu0
  %v293 = vadd.f32 %v124, %v292
  %v294 = vpop.f32.mrf.mxu0
  %295 = vmatprep.mubr.bf16.mxu0 0
  %296 = vmatmul.mubr.bf16.gmra.mxu0 %v158
  %v297 = vpop.f32.mrf.mxu0
  %v298 = vadd.f32 %v124, %v297
  %v299 = vpop.f32.mrf.mxu0
  %v300 = vpop.f32.mrf.mxu0
  %v301 = vadd.f32 %v124, %v300
  %v302 = vpop.f32.mrf.mxu0
  %303 = vmatprep.mubr.bf16.mxu0 0
  %304 = vmatmul.mubr.bf16.gmra.mxu0 %v161
  %v305 = vpop.f32.mrf.mxu0
  %v306 = vadd.f32 %v124, %v305
  %v307 = vpop.f32.mrf.mxu0
  %v308 = vpop.f32.mrf.mxu0
  %v309 = vadd.f32 %v124, %v308
  %v310 = vpop.f32.mrf.mxu0
  %311 = vmatprep.mubr.bf16.mxu0 0
  %312 = vmatmul.mubr.bf16.gmra.mxu0 %v164
  %v313 = vpop.f32.mrf.mxu0
  %v314 = vadd.f32 %v124, %v313
  %v315 = vpop.f32.mrf.mxu0
  %v316 = vpop.f32.mrf.mxu0
  %v317 = vadd.f32 %v124, %v316
  %v318 = vpop.f32.mrf.mxu0
  %319 = vmatprep.mubr.bf16.mxu0 0
  %320 = vmatmul.mubr.bf16.gmra.mxu0 %v167
  %v321 = vpop.f32.mrf.mxu0
  %v322 = vadd.f32 %v124, %v321
  %v323 = vpop.f32.mrf.mxu0
  %v324 = vpop.f32.mrf.mxu0
  %v325 = vadd.f32 %v124, %v324
  %v326 = vpop.f32.mrf.mxu0
  %327 = vmatprep.mubr.bf16.mxu0 0
  %328 = vmatmul.mubr.bf16.gmra.mxu0 %v170
  %v329 = vpop.f32.mrf.mxu0
  %v330 = vadd.f32 %v124, %v329
  %v331 = vpop.f32.mrf.mxu0
  %v332 = vpop.f32.mrf.mxu0
  %v333 = vadd.f32 %v124, %v332
  %v334 = vpop.f32.mrf.mxu0
  %335 = vmatprep.mubr.bf16.mxu0 0
  %336 = vmatmul.mubr.bf16.gmra.mxu0 %v173
  %v337 = vpop.f32.mrf.mxu0
  %v338 = vadd.f32 %v124, %v337
  %v339 = vpop.f32.mrf.mxu0
  %v340 = vpop.f32.mrf.mxu0
  %v341 = vadd.f32 %v124, %v340
  %v342 = vpop.f32.mrf.mxu0
  %343 = vmatprep.mubr.bf16.mxu0 0
  %344 = vmatmul.mubr.bf16.gmra.mxu0 %v176
  %v345 = vpop.f32.mrf.mxu0
  %v346 = vadd.f32 %v124, %v345
  %v347 = vpop.f32.mrf.mxu0
  %v348 = vpop.f32.mrf.mxu0
  %v349 = vadd.f32 %v124, %v348
  %v350 = vpop.f32.mrf.mxu0
  %351 = vmatprep.mubr.bf16.mxu0 0
  %352 = vmatmul.mubr.bf16.gmra.mxu0 %v179
  %v353 = vpop.f32.mrf.mxu0
  %v354 = vadd.f32 %v124, %v353
  %v355 = vpop.f32.mrf.mxu0
  %v356 = vpop.f32.mrf.mxu0
  %v357 = vadd.f32 %v124, %v356
  %v358 = vpop.f32.mrf.mxu0
  %359 = vmatprep.mubr.bf16.mxu0 0
  %360 = vmatmul.mubr.bf16.gmra.mxu0 %v182
  %v361 = vpop.f32.mrf.mxu0
  %v362 = vadd.f32 %v124, %v361
  %v363 = vpop.f32.mrf.mxu0
  %v364 = vpop.f32.mrf.mxu0
  %v365 = vadd.f32 %v124, %v364
  %v366 = vpop.f32.mrf.mxu0
  %367 = vmatprep.mubr.bf16.mxu0 0
  %368 = vmatmul.mubr.bf16.gmra.mxu0 %v185
  %v369 = vpop.f32.mrf.mxu0
  %v370 = vadd.f32 %v124, %v369
  %v371 = vpop.f32.mrf.mxu0
  %v372 = vpop.f32.mrf.mxu0
  %v373 = vadd.f32 %v124, %v372
  %v374 = vpop.f32.mrf.mxu0
  %375 = vmatprep.mubr.bf16.mxu0 0
  %376 = vmatmul.mubr.bf16.gmra.mxu0 %v188
  %v377 = vpop.f32.mrf.mxu0
  %v378 = vadd.f32 %v124, %v377
  %v379 = vpop.f32.mrf.mxu0
  %v380 = vpop.f32.mrf.mxu0
  %v381 = vadd.f32 %v124, %v380
  %v382 = vpop.f32.mrf.mxu0
  %383 = vmatprep.mubr.bf16.mxu0 0
  %384 = vmatmul.mubr.bf16.gmra.mxu0 %v191
  %v385 = vpop.f32.mrf.mxu0
  %v386 = vadd.f32 %v124, %v385
  %v387 = vpop.f32.mrf.mxu0
  %v388 = vpop.f32.mrf.mxu0
  %v389 = vadd.f32 %v124, %v388
  %v390 = vpop.f32.mrf.mxu0
  %391 = vmatprep.mubr.bf16.mxu0 0
  %392 = vmatmul.mubr.bf16.gmra.mxu0 %v194
  %v393 = vpop.f32.mrf.mxu0
  %v394 = vadd.f32 %v124, %v393
  %v395 = vpop.f32.mrf.mxu0
  %v396 = vpop.f32.mrf.mxu0
  %v397 = vadd.f32 %v124, %v396
  %v398 = vpop.f32.mrf.mxu0
  %399 = vmatprep.mubr.bf16.mxu0 0
  %400 = vmatmul.mubr.bf16.gmra.mxu0 %v197
  %v401 = vpop.f32.mrf.mxu0
  %v402 = vadd.f32 %v124, %v401
  %v403 = vpop.f32.mrf.mxu0
  %v404 = vpop.f32.mrf.mxu0
  %v405 = vadd.f32 %v124, %v404
  %v406 = vpop.f32.mrf.mxu0
  %407 = vmatprep.mubr.bf16.mxu0 0
  %408 = vmatmul.mubr.bf16.gmra.mxu0 %v200
  %v409 = vpop.f32.mrf.mxu0
  %v410 = vadd.f32 %v124, %v409
  %v411 = vpop.f32.mrf.mxu0
  %v412 = vpop.f32.mrf.mxu0
  %v413 = vadd.f32 %v124, %v412
  %v414 = vpop.f32.mrf.mxu0
  %415 = vmatprep.mubr.bf16.mxu0 0
  %416 = vmatmul.mubr.bf16.gmra.mxu0 %v203
  %v417 = vpop.f32.mrf.mxu0
  %v418 = vadd.f32 %v124, %v417
  %v419 = vpop.f32.mrf.mxu0
  %v420 = vpop.f32.mrf.mxu0
  %v421 = vadd.f32 %v124, %v420
  %v422 = vpop.f32.mrf.mxu0
  %423 = vmatprep.mubr.bf16.mxu0 0
  %424 = vmatmul.mubr.bf16.gmra.mxu0 %v206
  %v425 = vpop.f32.mrf.mxu0
  %v426 = vadd.f32 %v124, %v425
  %v427 = vpop.f32.mrf.mxu0
  %v428 = vpop.f32.mrf.mxu0
  %v429 = vadd.f32 %v124, %v428
  %v430 = vpop.f32.mrf.mxu0
  %431 = vmatprep.mubr.bf16.mxu0 0
  %432 = vmatmul.mubr.bf16.gmra.mxu0 %v209
  %v433 = vpop.f32.mrf.mxu0
  %v434 = vadd.f32 %v124, %v433
  %v435 = vpop.f32.mrf.mxu0
  %v436 = vpop.f32.mrf.mxu0
  %v437 = vadd.f32 %v124, %v436
  %v438 = vpop.f32.mrf.mxu0
  %439 = vmatprep.mubr.bf16.mxu0 0
  %440 = vmatmul.mubr.bf16.gmra.mxu0 %v212
  %v441 = vpop.f32.mrf.mxu0
  %v442 = vadd.f32 %v124, %v441
  %v443 = vpop.f32.mrf.mxu0
  %v444 = vpop.f32.mrf.mxu0
  %v445 = vadd.f32 %v124, %v444
  %v446 = vpop.f32.mrf.mxu0
  %447 = vmatprep.mubr.bf16.mxu0 0
  %448 = vmatmul.mubr.bf16.gmra.mxu0 %v215
  %v449 = vpop.f32.mrf.mxu0
  %v450 = vadd.f32 %v124, %v449
  %v451 = vpop.f32.mrf.mxu0
  %v452 = vpop.f32.mrf.mxu0
  %v453 = vadd.f32 %v124, %v452
  %v454 = vpop.f32.mrf.mxu0
  %455 = vmatprep.mubr.bf16.mxu0 0
  %456 = vmatmul.mubr.bf16.gmra.mxu0 %v218
  %v457 = vpop.f32.mrf.mxu0
  %v458 = vadd.f32 %v124, %v457
  %v459 = vpop.f32.mrf.mxu0
  %v460 = vpop.f32.mrf.mxu0
  %v461 = vadd.f32 %v124, %v460
  %v462 = vpop.f32.mrf.mxu0
  %463 = vmatprep.mubr.bf16.mxu0 0
  %464 = vmatmul.mubr.bf16.gmra.mxu0 %v221
  %v465 = vpop.f32.mrf.mxu0
  %v466 = vadd.f32 %v124, %v465
  %v467 = vpop.f32.mrf.mxu0
  %v468 = vpop.f32.mrf.mxu0
  %v469 = vadd.f32 %v124, %v468
  %v470 = vpop.f32.mrf.mxu0
  %471 = vmatprep.mubr.bf16.mxu0 0
  %472 = vmatmul.mubr.bf16.gmra.mxu0 %v224
  %v473 = vpop.f32.mrf.mxu0
  %v474 = vadd.f32 %v124, %v473
  %v475 = vpop.f32.mrf.mxu0
  %v476 = vpop.f32.mrf.mxu0
  %v477 = vadd.f32 %v124, %v476
  %v478 = vpop.f32.mrf.mxu0
  %479 = vmatprep.mubr.bf16.mxu0 0
  %480 = vmatmul.mubr.bf16.gmra.mxu0 %v227
  %v481 = vpop.f32.mrf.mxu0
  %v482 = vadd.f32 %v124, %v481
  %v483 = vpop.f32.mrf.mxu0
  %v484 = vpop.f32.mrf.mxu0
  %v485 = vadd.f32 %v124, %v484
  %v486 = vpop.f32.mrf.mxu0
  %487 = vmatprep.mubr.bf16.mxu0 0
  %488 = vmatmul.mubr.bf16.gmra.mxu0 %v230
  %v489 = vpop.f32.mrf.mxu0
  %v490 = vadd.f32 %v124, %v489
  %v491 = vpop.f32.mrf.mxu0
  %v492 = vpop.f32.mrf.mxu0
  %v493 = vadd.f32 %v124, %v492
  %v494 = vpop.f32.mrf.mxu0
  %495 = vmatprep.mubr.bf16.mxu0 0
  %496 = vmatmul.mubr.bf16.gmra.mxu0 %v233
  %v497 = vpop.f32.mrf.mxu0
  %v498 = vadd.f32 %v124, %v497
  %v499 = vpop.f32.mrf.mxu0
  %v500 = vpop.f32.mrf.mxu0
  %v501 = vadd.f32 %v124, %v500
  %v502 = vpop.f32.mrf.mxu0
  %503 = vmatprep.mubr.bf16.mxu0 0
  %504 = vmatmul.mubr.bf16.gmra.mxu0 %v236
  %v505 = vpop.f32.mrf.mxu0
  %v506 = vadd.f32 %v124, %v505
  %v507 = vpop.f32.mrf.mxu0
  %v508 = vpop.f32.mrf.mxu0
  %v509 = vadd.f32 %v124, %v508
  %v510 = vpop.f32.mrf.mxu0
  %511 = vmatprep.mubr.bf16.mxu0 0
  %512 = vmatmul.mubr.bf16.gmra.mxu0 %v239
  %v513 = vpop.f32.mrf.mxu0
  %v514 = vadd.f32 %v124, %v513
  %v515 = vpop.f32.mrf.mxu0
  %v516 = vpop.f32.mrf.mxu0
  %v517 = vadd.f32 %v124, %v516
  %v518 = vpop.f32.mrf.mxu0
  %519 = vmatprep.mubr.bf16.mxu0 0
  %520 = vmatmul.mubr.bf16.gmra.mxu0 %v242
  %v521 = vpop.f32.mrf.mxu0
  %v522 = vadd.f32 %v124, %v521
  %v523 = vpop.f32.mrf.mxu0
  %v524 = vpop.f32.mrf.mxu0
  %v525 = vadd.f32 %v124, %v524
  %v526 = vpop.f32.mrf.mxu0
  %527 = vmatprep.mubr.bf16.mxu0 0
  %528 = vmatmul.mubr.bf16.gmra.mxu0 %v245
  %v529 = vpop.f32.mrf.mxu0
  %v530 = vadd.f32 %v124, %v529
  %v531 = vpop.f32.mrf.mxu0
  %v532 = vpop.f32.mrf.mxu0
  %v533 = vadd.f32 %v124, %v532
  %v534 = vpop.f32.mrf.mxu0
  %535 = vdwg.mxu0
  %v536 = vmax.f32 %v282, 0.0
  %v537 = vmax.f32 %v285, 0.0
  %v538 = vmax.f32 %v290, 0.0
  %v539 = vmax.f32 %v293, 0.0
  %v540 = vmax.f32 %v298, 0.0
  %v541 = vmax.f32 %v301, 0.0
  %v542 = vmax.f32 %v306, 0.0
  %v543 = vmax.f32 %v309, 0.0
  %v544 = vmax.f32 %v314, 0.0
  %v545 = vmax.f32 %v317, 0.0
  %v546 = vmax.f32 %v322, 0.0
  %v547 = vmax.f32 %v325, 0.0
  %v548 = vmax.f32 %v330, 0.0
  %v549 = vmax.f32 %v333, 0.0
  %v550 = vmax.f32 %v338, 0.0
  %v551 = vmax.f32 %v341, 0.0
  %v552 = vmax.f32 %v346, 0.0
  %v553 = vmax.f32 %v349, 0.0
  %v554 = vmax.f32 %v354, 0.0
  %v555 = vmax.f32 %v357, 0.0
  %v556 = vmax.f32 %v362, 0.0
  %v557 = vmax.f32 %v365, 0.0
  %v558 = vmax.f32 %v370, 0.0
  %v559 = vmax.f32 %v373, 0.0
  %v560 = vmax.f32 %v378, 0.0
  %v561 = vmax.f32 %v381, 0.0
  %v562 = vmax.f32 %v386, 0.0
  %v563 = vmax.f32 %v389, 0.0
  %v564 = vmax.f32 %v394, 0.0
  %v565 = vmax.f32 %v397, 0.0
  %v566 = vmax.f32 %v402, 0.0
  %v567 = vmax.f32 %v405, 0.0
  %v568 = vmax.f32 %v410, 0.0
  %v569 = vmax.f32 %v413, 0.0
  %v570 = vmax.f32 %v418, 0.0
  %v571 = vmax.f32 %v421, 0.0
  %v572 = vmax.f32 %v426, 0.0
  %v573 = vmax.f32 %v429, 0.0
  %v574 = vmax.f32 %v434, 0.0
  %v575 = vmax.f32 %v437, 0.0
  %v576 = vmax.f32 %v442, 0.0
  %v577 = vmax.f32 %v445, 0.0
  %v578 = vmax.f32 %v450, 0.0
  %v579 = vmax.f32 %v453, 0.0
  %v580 = vmax.f32 %v458, 0.0
  %v581 = vmax.f32 %v461, 0.0
  %v582 = vmax.f32 %v466, 0.0
  %v583 = vmax.f32 %v469, 0.0
  %v584 = vmax.f32 %v474, 0.0
  %v585 = vmax.f32 %v477, 0.0
  %v586 = vmax.f32 %v482, 0.0
  %v587 = vmax.f32 %v485, 0.0
  %v588 = vmax.f32 %v490, 0.0
  %v589 = vmax.f32 %v493, 0.0
  %v590 = vmax.f32 %v498, 0.0
  %v591 = vmax.f32 %v501, 0.0
  %v592 = vmax.f32 %v506, 0.0
  %v593 = vmax.f32 %v509, 0.0
  %v594 = vmax.f32 %v514, 0.0
  %v595 = vmax.f32 %v517, 0.0
  %v596 = vmax.f32 %v522, 0.0
  %v597 = vmax.f32 %v525, 0.0
  %v598 = vmax.f32 %v530, 0.0
  %v599 = vmax.f32 %v533, 0.0
  %vm600 = vcmask 261120
  %601 = vst.msk [vmem:[%s3] sm:$0xff] %vm600, %v536
  %602 = vst.msk [vmem:[%s3 + $0x8] sm:$0xff] %vm600, %v537
  %603 = vst.msk [vmem:[%s3 + $0x10] sm:$0xff] %vm600, %v538
  %604 = vst.msk [vmem:[%s3 + $0x18] sm:$0xff] %vm600, %v539
  %605 = vst.msk [vmem:[%s3 + $0x20] sm:$0xff] %vm600, %v540
  %606 = vst.msk [vmem:[%s3 + $0x28] sm:$0xff] %vm600, %v541
  %607 = vst.msk [vmem:[%s3 + $0x30] sm:$0xff] %vm600, %v542
  %608 = vst.msk [vmem:[%s3 + $0x38] sm:$0xff] %vm600, %v543
  %609 = vst.msk [vmem:[%s3 + $0x40] sm:$0xff] %vm600, %v544
  %610 = vst.msk [vmem:[%s3 + $0x48] sm:$0xff] %vm600, %v545
  %611 = vst.msk [vmem:[%s3 + $0x50] sm:$0xff] %vm600, %v546
  %612 = vst.msk [vmem:[%s3 + $0x58] sm:$0xff] %vm600, %v547
  %613 = vst.msk [vmem:[%s3 + $0x60] sm:$0xff] %vm600, %v548
  %614 = vst.msk [vmem:[%s3 + $0x68] sm:$0xff] %vm600, %v549
  %615 = vst.msk [vmem:[%s3 + $0x70] sm:$0xff] %vm600, %v550
  %616 = vst.msk [vmem:[%s3 + $0x78] sm:$0xff] %vm600, %v551
  %617 = vst.msk [vmem:[%s3 + $0x80] sm:$0xff] %vm600, %v552
  %618 = vst.msk [vmem:[%s3 + $0x88] sm:$0xff] %vm600, %v553
  %619 = vst.msk [vmem:[%s3 + $0x90] sm:$0xff] %vm600, %v554
  %620 = vst.msk [vmem:[%s3 + $0x98] sm:$0xff] %vm600, %v555
  %621 = vst.msk [vmem:[%s3 + $0xa0] sm:$0xff] %vm600, %v556
  %622 = vst.msk [vmem:[%s3 + $0xa8] sm:$0xff] %vm600, %v557
  %623 = vst.msk [vmem:[%s3 + $0xb0] sm:$0xff] %vm600, %v558
  %624 = vst.msk [vmem:[%s3 + $0xb8] sm:$0xff] %vm600, %v559
  %625 = vst.msk [vmem:[%s3 + $0xc0] sm:$0xff] %vm600, %v560
  %626 = vst.msk [vmem:[%s3 + $0xc8] sm:$0xff] %vm600, %v561
  %627 = vst.msk [vmem:[%s3 + $0xd0] sm:$0xff] %vm600, %v562
  %628 = vst.msk [vmem:[%s3 + $0xd8] sm:$0xff] %vm600, %v563
  %629 = vst.msk [vmem:[%s3 + $0xe0] sm:$0xff] %vm600, %v564
  %630 = vst.msk [vmem:[%s3 + $0xe8] sm:$0xff] %vm600, %v565
  %631 = vst.msk [vmem:[%s3 + $0xf0] sm:$0xff] %vm600, %v566
  %632 = vst.msk [vmem:[%s3 + $0xf8] sm:$0xff] %vm600, %v567
  %633 = vst.msk [vmem:[%s3 + $0x100] sm:$0xff] %vm600, %v568
  %634 = vst.msk [vmem:[%s3 + $0x108] sm:$0xff] %vm600, %v569
  %635 = vst.msk [vmem:[%s3 + $0x110] sm:$0xff] %vm600, %v570
  %636 = vst.msk [vmem:[%s3 + $0x118] sm:$0xff] %vm600, %v571
  %637 = vst.msk [vmem:[%s3 + $0x120] sm:$0xff] %vm600, %v572
  %638 = vst.msk [vmem:[%s3 + $0x128] sm:$0xff] %vm600, %v573
  %639 = vst.msk [vmem:[%s3 + $0x130] sm:$0xff] %vm600, %v574
  %640 = vst.msk [vmem:[%s3 + $0x138] sm:$0xff] %vm600, %v575
  %641 = vst.msk [vmem:[%s3 + $0x140] sm:$0xff] %vm600, %v576
  %642 = vst.msk [vmem:[%s3 + $0x148] sm:$0xff] %vm600, %v577
  %643 = vst.msk [vmem:[%s3 + $0x150] sm:$0xff] %vm600, %v578
  %644 = vst.msk [vmem:[%s3 + $0x158] sm:$0xff] %vm600, %v579
  %645 = vst.msk [vmem:[%s3 + $0x160] sm:$0xff] %vm600, %v580
  %646 = vst.msk [vmem:[%s3 + $0x168] sm:$0xff] %vm600, %v581
  %647 = vst.msk [vmem:[%s3 + $0x170] sm:$0xff] %vm600, %v582
  %648 = vst.msk [vmem:[%s3 + $0x178] sm:$0xff] %vm600, %v583
  %649 = vst.msk [vmem:[%s3 + $0x180] sm:$0xff] %vm600, %v584
  %650 = vst.msk [vmem:[%s3 + $0x188] sm:$0xff] %vm600, %v585
  %651 = vst.msk [vmem:[%s3 + $0x190] sm:$0xff] %vm600, %v586
  %652 = vst.msk [vmem:[%s3 + $0x198] sm:$0xff] %vm600, %v587
  %653 = vst.msk [vmem:[%s3 + $0x1a0] sm:$0xff] %vm600, %v588
  %654 = vst.msk [vmem:[%s3 + $0x1a8] sm:$0xff] %vm600, %v589
  %655 = vst.msk [vmem:[%s3 + $0x1b0] sm:$0xff] %vm600, %v590
  %656 = vst.msk [vmem:[%s3 + $0x1b8] sm:$0xff] %vm600, %v591
  %657 = vst.msk [vmem:[%s3 + $0x1c0] sm:$0xff] %vm600, %v592
  %658 = vst.msk [vmem:[%s3 + $0x1c8] sm:$0xff] %vm600, %v593
  %659 = vst.msk [vmem:[%s3 + $0x1d0] sm:$0xff] %vm600, %v594
  %660 = vst.msk [vmem:[%s3 + $0x1d8] sm:$0xff] %vm600, %v595
  %661 = vst.msk [vmem:[%s3 + $0x1e0] sm:$0xff] %vm600, %v596
  %662 = vst.msk [vmem:[%s3 + $0x1e8] sm:$0xff] %vm600, %v597
  %663 = vst.msk [vmem:[%s3 + $0x1f0] sm:$0xff] %vm600, %v598
  %664 = vst.msk [vmem:[%s3 + $0x1f8] sm:$0xff] %vm600, %v599
  // Predicated region
  $region14: #{forward.68} parent=0 // pred_check
    _
  $region15: #{forward.68} parent=0 // pred_check_branch
    %666 = sbr.rel (0) target = $region17
  $region16: #{forward.68} parent=0 // pred_region
    _
  $region17: #{forward.68} parent=0 // pred_fallthru
    _
  // Predicated region
  $region18: #{forward.68} parent=0 // pred_check
    _
  $region19: #{forward.68} parent=0 // pred_check_branch
    %668 = sbr.rel (0) target = $region21
  $region20: #{forward.68} parent=0 // pred_region
    _
  $region21: #{forward.68} parent=0 // pred_fallthru
    _

// kernel: forward.69
$region0: #{forward.69}
  #allocation0 [shape = 'u32[]', space=smem, size = 0x4, offset = 0x4, fixed_abs, tag = 'smem constant byte address 0x4 - core index']
  #allocation1 [shape = 'u32[144,128]{1,0:T(1,128)}', space=vmem, size = 0x12000, scoped, tag = 'internal scratch']
  %s0 = inlined_call_operand.vmem [shape: bf16[128,288], index: 0, kind: input, shape index: {}]
  %s1 = inlined_call_operand.vmem [shape: bf16[288,32], index: 1, kind: input, shape index: {}]
  %s2 = inlined_call_operand.vmem [shape: f32[1,32], index: 2, kind: input, shape index: {}]
  %s3 = inlined_call_operand.vmem [shape: f32[128,32], index: 3, kind: output, shape index: {}]
  %s4 = sld [smem:[#allocation0]]
  $region22: #{forward.69} parent=0
    _
  %s6 = ssub.s32 1, %s4
  %s7 = scalar_select 0, %s6, %s4
  // Predicated region
  $region2: #{forward.69} parent=0 // pred_check
    _
  $region3: #{forward.69} parent=0 // pred_check_branch
    %9 = sbr.rel (0) target = $region5
  $region4: #{forward.69} parent=0 // pred_region
    _
  $region5: #{forward.69} parent=0 // pred_fallthru
    _
  // Predicated region
  $region6: #{forward.69} parent=0 // pred_check
    _
  $region7: #{forward.69} parent=0 // pred_check_branch
    %11 = sbr.rel (0) target = $region9
  $region8: #{forward.69} parent=0 // pred_region
    _
  $region9: #{forward.69} parent=0 // pred_fallthru
    _
  // Predicated region
  $region10: #{forward.69} parent=0 // pred_check
    _
  $region11: #{forward.69} parent=0 // pred_check_branch
    %13 = sbr.rel (0) target = $region13
  $region12: #{forward.69} parent=0 // pred_region
    _
  $region13: #{forward.69} parent=0 // pred_fallthru
    _
  %v15 = vld [vmem:[%s0] sm:$0xff]
  %v16 = vld [vmem:[%s0 + $0x8] sm:$0xf]
  %v17 = vld [vmem:[%s0 + $0xc] sm:$0xff]
  %v18 = vld [vmem:[%s0 + $0x14] sm:$0xf]
  %v19 = vld [vmem:[%s0 + $0x18] sm:$0xff]
  %v20 = vld [vmem:[%s0 + $0x20] sm:$0xf]
  %v21 = vld [vmem:[%s0 + $0x24] sm:$0xff]
  %v22 = vld [vmem:[%s0 + $0x2c] sm:$0xf]
  %v23 = vld [vmem:[%s0 + $0x30] sm:$0xff]
  %v24 = vld [vmem:[%s0 + $0x38] sm:$0xf]
  %v25 = vld [vmem:[%s0 + $0x3c] sm:$0xff]
  %v26 = vld [vmem:[%s0 + $0x44] sm:$0xf]
  %v27 = vld [vmem:[%s0 + $0x48] sm:$0xff]
  %v28 = vld [vmem:[%s0 + $0x50] sm:$0xf]
  %v29 = vld [vmem:[%s0 + $0x54] sm:$0xff]
  %v30 = vld [vmem:[%s0 + $0x5c] sm:$0xf]
  %v31 = vld [vmem:[%s0 + $0x60] sm:$0xff]
  %v32 = vld [vmem:[%s0 + $0x68] sm:$0xf]
  %v33 = vld [vmem:[%s0 + $0x6c] sm:$0xff]
  %v34 = vld [vmem:[%s0 + $0x74] sm:$0xf]
  %v35 = vld [vmem:[%s0 + $0x78] sm:$0xff]
  %v36 = vld [vmem:[%s0 + $0x80] sm:$0xf]
  %v37 = vld [vmem:[%s0 + $0x84] sm:$0xff]
  %v38 = vld [vmem:[%s0 + $0x8c] sm:$0xf]
  %v39 = vld [vmem:[%s0 + $0x90] sm:$0xff]
  %v40 = vld [vmem:[%s0 + $0x98] sm:$0xf]
  %v41 = vld [vmem:[%s0 + $0x9c] sm:$0xff]
  %v42 = vld [vmem:[%s0 + $0xa4] sm:$0xf]
  %v43 = vld [vmem:[%s0 + $0xa8] sm:$0xff]
  %v44 = vld [vmem:[%s0 + $0xb0] sm:$0xf]
  %v45 = vld [vmem:[%s0 + $0xb4] sm:$0xff]
  %v46 = vld [vmem:[%s0 + $0xbc] sm:$0xf]
  %v47 = vld [vmem:[%s1] sm:$0xf]
  %v48 = vld [vmem:[%s1 + $0x4] sm:$0xf]
  %v49 = vld [vmem:[%s1 + $0x8] sm:$0xf]
  %v50 = vld [vmem:[%s1 + $0xc] sm:$0xf]
  %v51 = vld [vmem:[%s1 + $0x10] sm:$0xf]
  %v52 = vld [vmem:[%s1 + $0x14] sm:$0xf]
  %v53 = vld [vmem:[%s1 + $0x18] sm:$0xf]
  %v54 = vld [vmem:[%s1 + $0x1c] sm:$0xf]
  %v55 = vld [vmem:[%s1 + $0x20] sm:$0xf]
  %v56 = vld [vmem:[%s1 + $0x24] sm:$0xf]
  %v57 = vld [vmem:[%s1 + $0x28] sm:$0xf]
  %v58 = vld [vmem:[%s1 + $0x2c] sm:$0xf]
  %v59 = vld [vmem:[%s1 + $0x30] sm:$0xf]
  %v60 = vld [vmem:[%s1 + $0x34] sm:$0xf]
  %v61 = vld [vmem:[%s1 + $0x38] sm:$0xf]
  %v62 = vld [vmem:[%s1 + $0x3c] sm:$0xf]
  %v63 = vld [vmem:[%s1 + $0x40] sm:$0xf]
  %v64 = vld [vmem:[%s1 + $0x44] sm:$0xf]
  %v65 = vld [vmem:[%s1 + $0x48] sm:$0xf]
  %v66 = vld [vmem:[%s1 + $0x4c] sm:$0xf]
  %v67 = vld [vmem:[%s1 + $0x50] sm:$0xf]
  %v68 = vld [vmem:[%s1 + $0x54] sm:$0xf]
  %v69 = vld [vmem:[%s1 + $0x58] sm:$0xf]
  %v70 = vld [vmem:[%s1 + $0x5c] sm:$0xf]
  %v71 = vld [vmem:[%s1 + $0x60] sm:$0xf]
  %v72 = vld [vmem:[%s1 + $0x64] sm:$0xf]
  %v73 = vld [vmem:[%s1 + $0x68] sm:$0xf]
  %v74 = vld [vmem:[%s1 + $0x6c] sm:$0xf]
  %v75 = vld [vmem:[%s1 + $0x70] sm:$0xf]
  %v76 = vld [vmem:[%s1 + $0x74] sm:$0xf]
  %v77 = vld [vmem:[%s1 + $0x78] sm:$0xf]
  %v78 = vld [vmem:[%s1 + $0x7c] sm:$0xf]
  %v79 = vld [vmem:[%s1 + $0x80] sm:$0xf]
  %v80 = vld [vmem:[%s1 + $0x84] sm:$0xf]
  %v81 = vld [vmem:[%s1 + $0x88] sm:$0xf]
  %v82 = vld [vmem:[%s1 + $0x8c] sm:$0xf]
  %v83 = vld [vmem:[%s2] sm:$0x1]
  %v85 = vlaneseq
  %v86 = vshrl.u32 %v85, 7
  %v87 = vsub.s32 0, %v86
  %v88 = vrot.slane %v83, %v87
  %v122 = vunpack.c.l.b16 %v15
  %v123 = vunpack.c.h.b16 %v15
  %v124 = vunpack.c.l.b16 %v16
  %v125 = vunpack.c.l.b16 %v17
  %v126 = vunpack.c.h.b16 %v17
  %v127 = vunpack.c.l.b16 %v18
  %v128 = vunpack.c.l.b16 %v19
  %v129 = vunpack.c.h.b16 %v19
  %v130 = vunpack.c.l.b16 %v20
  %v131 = vunpack.c.l.b16 %v21
  %v132 = vunpack.c.h.b16 %v21
  %v133 = vunpack.c.l.b16 %v22
  %v134 = vunpack.c.l.b16 %v23
  %v135 = vunpack.c.h.b16 %v23
  %v136 = vunpack.c.l.b16 %v24
  %v137 = vunpack.c.l.b16 %v25
  %v138 = vunpack.c.h.b16 %v25
  %v139 = vunpack.c.l.b16 %v26
  %v140 = vunpack.c.l.b16 %v27
  %v141 = vunpack.c.h.b16 %v27
  %v142 = vunpack.c.l.b16 %v28
  %v143 = vunpack.c.l.b16 %v29
  %v144 = vunpack.c.h.b16 %v29
  %v145 = vunpack.c.l.b16 %v30
  %v146 = vunpack.c.l.b16 %v31
  %v147 = vunpack.c.h.b16 %v31
  %v148 = vunpack.c.l.b16 %v32
  %v149 = vunpack.c.l.b16 %v33
  %v150 = vunpack.c.h.b16 %v33
  %v151 = vunpack.c.l.b16 %v34
  %v152 = vunpack.c.l.b16 %v35
  %v153 = vunpack.c.h.b16 %v35
  %v154 = vunpack.c.l.b16 %v36
  %v155 = vunpack.c.l.b16 %v37
  %v156 = vunpack.c.h.b16 %v37
  %v157 = vunpack.c.l.b16 %v38
  %v158 = vunpack.c.l.b16 %v39
  %v159 = vunpack.c.h.b16 %v39
  %v160 = vunpack.c.l.b16 %v40
  %v161 = vunpack.c.l.b16 %v41
  %v162 = vunpack.c.h.b16 %v41
  %v163 = vunpack.c.l.b16 %v42
  %v164 = vunpack.c.l.b16 %v43
  %v165 = vunpack.c.h.b16 %v43
  %v166 = vunpack.c.l.b16 %v44
  %v167 = vunpack.c.l.b16 %v45
  %v168 = vunpack.c.h.b16 %v45
  %v169 = vunpack.c.l.b16 %v46
  %v170 = vpack.c.b16 %v125, %v122
  %v171 = vpack.c.b16 %v126, %v123
  %v172 = vpack.c.b16 %v127, %v124
  %v173 = vpack.c.b16 %v131, %v128
  %v174 = vpack.c.b16 %v132, %v129
  %v175 = vpack.c.b16 %v133, %v130
  %v176 = vpack.c.b16 %v137, %v134
  %v177 = vpack.c.b16 %v138, %v135
  %v178 = vpack.c.b16 %v139, %v136
  %v179 = vpack.c.b16 %v143, %v140
  %v180 = vpack.c.b16 %v144, %v141
  %v181 = vpack.c.b16 %v145, %v142
  %v182 = vpack.c.b16 %v149, %v146
  %v183 = vpack.c.b16 %v150, %v147
  %v184 = vpack.c.b16 %v151, %v148
  %v185 = vpack.c.b16 %v155, %v152
  %v186 = vpack.c.b16 %v156, %v153
  %v187 = vpack.c.b16 %v157, %v154
  %v188 = vpack.c.b16 %v161, %v158
  %v189 = vpack.c.b16 %v162, %v159
  %v190 = vpack.c.b16 %v163, %v160
  %v191 = vpack.c.b16 %v167, %v164
  %v192 = vpack.c.b16 %v168, %v165
  %v193 = vpack.c.b16 %v169, %v166
  %v246 = vunpack.c.l.b16 %v47
  %v247 = vunpack.c.l.b16 %v48
  %v248 = vunpack.c.l.b16 %v49
  %v249 = vunpack.c.l.b16 %v50
  %v250 = vunpack.c.l.b16 %v51
  %v251 = vunpack.c.l.b16 %v52
  %v252 = vunpack.c.l.b16 %v53
  %v253 = vunpack.c.l.b16 %v54
  %v254 = vunpack.c.l.b16 %v55
  %v255 = vunpack.c.l.b16 %v56
  %v256 = vunpack.c.l.b16 %v57
  %v257 = vunpack.c.l.b16 %v58
  %v258 = vunpack.c.l.b16 %v59
  %v259 = vunpack.c.l.b16 %v60
  %v260 = vunpack.c.l.b16 %v61
  %v261 = vunpack.c.l.b16 %v62
  %v262 = vunpack.c.l.b16 %v63
  %v263 = vunpack.c.l.b16 %v64
  %v264 = vunpack.c.l.b16 %v65
  %v265 = vunpack.c.l.b16 %v66
  %v266 = vunpack.c.l.b16 %v67
  %v267 = vunpack.c.l.b16 %v68
  %v268 = vunpack.c.l.b16 %v69
  %v269 = vunpack.c.l.b16 %v70
  %v270 = vunpack.c.l.b16 %v71
  %v271 = vunpack.c.l.b16 %v72
  %v272 = vunpack.c.l.b16 %v73
  %v273 = vunpack.c.l.b16 %v74
  %v274 = vunpack.c.l.b16 %v75
  %v275 = vunpack.c.l.b16 %v76
  %v276 = vunpack.c.l.b16 %v77
  %v277 = vunpack.c.l.b16 %v78
  %v278 = vunpack.c.l.b16 %v79
  %v279 = vunpack.c.l.b16 %v80
  %v280 = vunpack.c.l.b16 %v81
  %v281 = vunpack.c.l.b16 %v82
  %v282 = vpack.c.b16 %v247, %v246
  %v283 = vpack.c.b16 %v249, %v248
  %v284 = vpack.c.b16 %v251, %v250
  %v285 = vpack.c.b16 %v253, %v252
  %v286 = vpack.c.b16 %v255, %v254
  %v287 = vpack.c.b16 %v257, %v256
  %v288 = vpack.c.b16 %v259, %v258
  %v289 = vpack.c.b16 %v261, %v260
  %v290 = vpack.c.b16 %v263, %v262
  %v291 = vpack.c.b16 %v265, %v264
  %v292 = vpack.c.b16 %v267, %v266
  %v293 = vpack.c.b16 %v269, %v268
  %v294 = vpack.c.b16 %v271, %v270
  %v295 = vpack.c.b16 %v273, %v272
  %v296 = vpack.c.b16 %v275, %v274
  %v297 = vpack.c.b16 %v277, %v276
  %v298 = vpack.c.b16 %v279, %v278
  %v299 = vpack.c.b16 %v281, %v280
  %vm318 = vcmask 261120
  %v320 = vsel %vm318, %v172, 0
  %v323 = vsel %vm318, %v175, 0
  %v326 = vsel %vm318, %v178, 0
  %v329 = vsel %vm318, %v181, 0
  %v332 = vsel %vm318, %v184, 0
  %v335 = vsel %vm318, %v187, 0
  %v338 = vsel %vm318, %v190, 0
  %v341 = vsel %vm318, %v193, 0
  %343 = vmatprep.subr.bf16.mxu0 0
  %344 = vmatpush1.bf16.msra.mxu0 %v289
  %345 = vmatprep.subr.bf16.mxu0 0
  %346 = vmatpush1.bf16.msra.mxu0 %v288
  %347 = vmatprep.subr.bf16.mxu0 0
  %348 = vmatpush1.bf16.msra.mxu0 %v287
  %349 = vmatprep.subr.bf16.mxu0 0
  %350 = vmatpush1.bf16.msra.mxu0 %v286
  %351 = vmatprep.subr.bf16.mxu0 0
  %352 = vmatpush1.bf16.msra.mxu0 %v285
  %353 = vmatprep.subr.bf16.mxu0 0
  %354 = vmatpush1.bf16.msra.mxu0 %v284
  %355 = vmatprep.subr.bf16.mxu0 0
  %356 = vmatpush1.bf16.msra.mxu0 %v283
  %357 = vmatprep.subr.bf16.mxu0 0
  %358 = vmatpush1.bf16.msra.mxu0 %v282
  %359 = vmatprep.subr.bf16.mxu0 0
  %360 = vmatpush2.bf16.msra.mxu0 %v297
  %361 = vmatprep.subr.bf16.mxu0 0
  %362 = vmatpush2.bf16.msra.mxu0 %v296
  %363 = vmatprep.subr.bf16.mxu0 0
  %364 = vmatpush2.bf16.msra.mxu0 %v295
  %365 = vmatprep.subr.bf16.mxu0 0
  %366 = vmatpush2.bf16.msra.mxu0 %v294
  %367 = vmatprep.subr.bf16.mxu0 0
  %368 = vmatpush2.bf16.msra.mxu0 %v293
  %369 = vmatprep.subr.bf16.mxu0 0
  %370 = vmatpush2.bf16.msra.mxu0 %v292
  %371 = vmatprep.subr.bf16.mxu0 0
  %372 = vmatpush2.bf16.msra.mxu0 %v291
  %373 = vmatprep.subr.bf16.mxu0 0
  %374 = vmatpush2.bf16.msra.mxu0 %v290
  %375 = vmatprep.mubr.bf16.mxu0 %v171
  %376 = vmatmul.mubr.bf16.gmra.mxu0 %v170
  %v377 = vpop.f32.mrf.mxu0
  %v378 = vadd.f32 %v88, %v377
  %v379 = vpop.f32.mrf.mxu0
  %v380 = vpop.f32.mrf.mxu0
  %v381 = vadd.f32 %v88, %v380
  %v382 = vpop.f32.mrf.mxu0
  %383 = vmatprep.mubr.bf16.mxu0 %v174
  %384 = vmatmul.mubr.bf16.gmra.mxu0 %v173
  %v385 = vpop.f32.mrf.mxu0
  %v386 = vadd.f32 %v88, %v385
  %v387 = vpop.f32.mrf.mxu0
  %v388 = vpop.f32.mrf.mxu0
  %v389 = vadd.f32 %v88, %v388
  %v390 = vpop.f32.mrf.mxu0
  %391 = vmatprep.mubr.bf16.mxu0 %v177
  %392 = vmatmul.mubr.bf16.gmra.mxu0 %v176
  %v393 = vpop.f32.mrf.mxu0
  %v394 = vadd.f32 %v88, %v393
  %v395 = vpop.f32.mrf.mxu0
  %v396 = vpop.f32.mrf.mxu0
  %v397 = vadd.f32 %v88, %v396
  %v398 = vpop.f32.mrf.mxu0
  %399 = vmatprep.mubr.bf16.mxu0 %v180
  %400 = vmatmul.mubr.bf16.gmra.mxu0 %v179
  %v401 = vpop.f32.mrf.mxu0
  %v402 = vadd.f32 %v88, %v401
  %v403 = vpop.f32.mrf.mxu0
  %v404 = vpop.f32.mrf.mxu0
  %v405 = vadd.f32 %v88, %v404
  %v406 = vpop.f32.mrf.mxu0
  %407 = vmatprep.mubr.bf16.mxu0 %v183
  %408 = vmatmul.mubr.bf16.gmra.mxu0 %v182
  %v409 = vpop.f32.mrf.mxu0
  %v410 = vadd.f32 %v88, %v409
  %v411 = vpop.f32.mrf.mxu0
  %v412 = vpop.f32.mrf.mxu0
  %v413 = vadd.f32 %v88, %v412
  %v414 = vpop.f32.mrf.mxu0
  %415 = vmatprep.mubr.bf16.mxu0 %v186
  %416 = vmatmul.mubr.bf16.gmra.mxu0 %v185
  %v417 = vpop.f32.mrf.mxu0
  %v418 = vadd.f32 %v88, %v417
  %v419 = vpop.f32.mrf.mxu0
  %v420 = vpop.f32.mrf.mxu0
  %v421 = vadd.f32 %v88, %v420
  %v422 = vpop.f32.mrf.mxu0
  %423 = vmatprep.mubr.bf16.mxu0 %v189
  %424 = vmatmul.mubr.bf16.gmra.mxu0 %v188
  %v425 = vpop.f32.mrf.mxu0
  %v426 = vadd.f32 %v88, %v425
  %v427 = vpop.f32.mrf.mxu0
  %v428 = vpop.f32.mrf.mxu0
  %v429 = vadd.f32 %v88, %v428
  %v430 = vpop.f32.mrf.mxu0
  %431 = vmatprep.mubr.bf16.mxu0 %v192
  %432 = vmatmul.mubr.bf16.gmra.mxu0 %v191
  %v433 = vpop.f32.mrf.mxu0
  %v434 = vadd.f32 %v88, %v433
  %v435 = vpop.f32.mrf.mxu0
  %v436 = vpop.f32.mrf.mxu0
  %v437 = vadd.f32 %v88, %v436
  %v438 = vpop.f32.mrf.mxu0
  %439 = vdwg.mxu0
  %440 = vmatprep.subr.bf16.mxu0 0
  %441 = vmatpush1.bf16.msra.mxu0 0
  %442 = vmatprep.subr.bf16.mxu0 0
  %443 = vmatpush1.bf16.msra.mxu0 0
  %444 = vmatprep.subr.bf16.mxu0 0
  %445 = vmatpush1.bf16.msra.mxu0 0
  %446 = vmatprep.subr.bf16.mxu0 0
  %447 = vmatpush1.bf16.msra.mxu0 0
  %448 = vmatprep.subr.bf16.mxu0 0
  %449 = vmatpush1.bf16.msra.mxu0 0
  %450 = vmatprep.subr.bf16.mxu0 0
  %451 = vmatpush1.bf16.msra.mxu0 0
  %452 = vmatprep.subr.bf16.mxu0 0
  %453 = vmatpush1.bf16.msra.mxu0 %v299
  %454 = vmatprep.subr.bf16.mxu0 0
  %455 = vmatpush1.bf16.msra.mxu0 %v298
  %456 = vmatprep.subr.bf16.mxu0 0
  %457 = vmatpush2.bf16.msra.mxu0 0
  %458 = vmatprep.subr.bf16.mxu0 0
  %459 = vmatpush2.bf16.msra.mxu0 0
  %460 = vmatprep.subr.bf16.mxu0 0
  %461 = vmatpush2.bf16.msra.mxu0 0
  %462 = vmatprep.subr.bf16.mxu0 0
  %463 = vmatpush2.bf16.msra.mxu0 0
  %464 = vmatprep.subr.bf16.mxu0 0
  %465 = vmatpush2.bf16.msra.mxu0 0
  %466 = vmatprep.subr.bf16.mxu0 0
  %467 = vmatpush2.bf16.msra.mxu0 0
  %468 = vmatprep.subr.bf16.mxu0 0
  %469 = vmatpush2.bf16.msra.mxu0 0
  %470 = vmatprep.subr.bf16.mxu0 0
  %471 = vmatpush2.bf16.msra.mxu0 0
  %472 = vmatprep.mubr.bf16.mxu0 0
  %473 = vmatmul.mubr.bf16.gmra.mxu0 %v320
  %v474 = vpop.f32.mrf.mxu0
  %v475 = vadd.f32 %v378, %v474
  %v476 = vpop.f32.mrf.mxu0
  %v477 = vpop.f32.mrf.mxu0
  %v478 = vadd.f32 %v381, %v477
  %v479 = vpop.f32.mrf.mxu0
  %480 = vmatprep.mubr.bf16.mxu0 0
  %481 = vmatmul.mubr.bf16.gmra.mxu0 %v323
  %v482 = vpop.f32.mrf.mxu0
  %v483 = vadd.f32 %v386, %v482
  %v484 = vpop.f32.mrf.mxu0
  %v485 = vpop.f32.mrf.mxu0
  %v486 = vadd.f32 %v389, %v485
  %v487 = vpop.f32.mrf.mxu0
  %488 = vmatprep.mubr.bf16.mxu0 0
  %489 = vmatmul.mubr.bf16.gmra.mxu0 %v326
  %v490 = vpop.f32.mrf.mxu0
  %v491 = vadd.f32 %v394, %v490
  %v492 = vpop.f32.mrf.mxu0
  %v493 = vpop.f32.mrf.mxu0
  %v494 = vadd.f32 %v397, %v493
  %v495 = vpop.f32.mrf.mxu0
  %496 = vmatprep.mubr.bf16.mxu0 0
  %497 = vmatmul.mubr.bf16.gmra.mxu0 %v329
  %v498 = vpop.f32.mrf.mxu0
  %v499 = vadd.f32 %v402, %v498
  %v500 = vpop.f32.mrf.mxu0
  %v501 = vpop.f32.mrf.mxu0
  %v502 = vadd.f32 %v405, %v501
  %v503 = vpop.f32.mrf.mxu0
  %504 = vmatprep.mubr.bf16.mxu0 0
  %505 = vmatmul.mubr.bf16.gmra.mxu0 %v332
  %v506 = vpop.f32.mrf.mxu0
  %v507 = vadd.f32 %v410, %v506
  %v508 = vpop.f32.mrf.mxu0
  %v509 = vpop.f32.mrf.mxu0
  %v510 = vadd.f32 %v413, %v509
  %v511 = vpop.f32.mrf.mxu0
  %512 = vmatprep.mubr.bf16.mxu0 0
  %513 = vmatmul.mubr.bf16.gmra.mxu0 %v335
  %v514 = vpop.f32.mrf.mxu0
  %v515 = vadd.f32 %v418, %v514
  %v516 = vpop.f32.mrf.mxu0
  %v517 = vpop.f32.mrf.mxu0
  %v518 = vadd.f32 %v421, %v517
  %v519 = vpop.f32.mrf.mxu0
  %520 = vmatprep.mubr.bf16.mxu0 0
  %521 = vmatmul.mubr.bf16.gmra.mxu0 %v338
  %v522 = vpop.f32.mrf.mxu0
  %v523 = vadd.f32 %v426, %v522
  %v524 = vpop.f32.mrf.mxu0
  %v525 = vpop.f32.mrf.mxu0
  %v526 = vadd.f32 %v429, %v525
  %v527 = vpop.f32.mrf.mxu0
  %528 = vmatprep.mubr.bf16.mxu0 0
  %529 = vmatmul.mubr.bf16.gmra.mxu0 %v341
  %v530 = vpop.f32.mrf.mxu0
  %v531 = vadd.f32 %v434, %v530
  %v532 = vpop.f32.mrf.mxu0
  %v533 = vpop.f32.mrf.mxu0
  %v534 = vadd.f32 %v437, %v533
  %v535 = vpop.f32.mrf.mxu0
  %536 = vdwg.mxu0
  %v537 = vmax.f32 %v475, 0.0
  %v538 = vmax.f32 %v478, 0.0
  %v539 = vmax.f32 %v483, 0.0
  %v540 = vmax.f32 %v486, 0.0
  %v541 = vmax.f32 %v491, 0.0
  %v542 = vmax.f32 %v494, 0.0
  %v543 = vmax.f32 %v499, 0.0
  %v544 = vmax.f32 %v502, 0.0
  %v545 = vmax.f32 %v507, 0.0
  %v546 = vmax.f32 %v510, 0.0
  %v547 = vmax.f32 %v515, 0.0
  %v548 = vmax.f32 %v518, 0.0
  %v549 = vmax.f32 %v523, 0.0
  %v550 = vmax.f32 %v526, 0.0
  %v551 = vmax.f32 %v531, 0.0
  %v552 = vmax.f32 %v534, 0.0
  %553 = vst.msk [vmem:[%s3] sm:$0xff] %vm318, %v537
  %554 = vst.msk [vmem:[%s3 + $0x8] sm:$0xff] %vm318, %v538
  %555 = vst.msk [vmem:[%s3 + $0x10] sm:$0xff] %vm318, %v539
  %556 = vst.msk [vmem:[%s3 + $0x18] sm:$0xff] %vm318, %v540
  %557 = vst.msk [vmem:[%s3 + $0x20] sm:$0xff] %vm318, %v541
  %558 = vst.msk [vmem:[%s3 + $0x28] sm:$0xff] %vm318, %v542
  %559 = vst.msk [vmem:[%s3 + $0x30] sm:$0xff] %vm318, %v543
  %560 = vst.msk [vmem:[%s3 + $0x38] sm:$0xff] %vm318, %v544
  %561 = vst.msk [vmem:[%s3 + $0x40] sm:$0xff] %vm318, %v545
  %562 = vst.msk [vmem:[%s3 + $0x48] sm:$0xff] %vm318, %v546
  %563 = vst.msk [vmem:[%s3 + $0x50] sm:$0xff] %vm318, %v547
  %564 = vst.msk [vmem:[%s3 + $0x58] sm:$0xff] %vm318, %v548
  %565 = vst.msk [vmem:[%s3 + $0x60] sm:$0xff] %vm318, %v549
  %566 = vst.msk [vmem:[%s3 + $0x68] sm:$0xff] %vm318, %v550
  %567 = vst.msk [vmem:[%s3 + $0x70] sm:$0xff] %vm318, %v551
  %568 = vst.msk [vmem:[%s3 + $0x78] sm:$0xff] %vm318, %v552
  // Predicated region
  $region14: #{forward.69} parent=0 // pred_check
    _
  $region15: #{forward.69} parent=0 // pred_check_branch
    %570 = sbr.rel (0) target = $region17
  $region16: #{forward.69} parent=0 // pred_region
    _
  $region17: #{forward.69} parent=0 // pred_fallthru
    _
  // Predicated region
  $region18: #{forward.69} parent=0 // pred_check
    _
  $region19: #{forward.69} parent=0 // pred_check_branch
    %572 = sbr.rel (0) target = $region21
  $region20: #{forward.69} parent=0 // pred_region
    _
  $region21: #{forward.69} parent=0 // pred_fallthru
    _

// kernel: forward.67
$region0: #{forward.67}
  #allocation0 [shape = 'u32[]', space=smem, size = 0x4, offset = 0x4, fixed_abs, tag = 'smem constant byte address 0x4 - core index']
  #allocation1 [shape = 'u32[144,128]{1,0:T(1,128)}', space=vmem, size = 0x12000, scoped, tag = 'internal scratch']
  %s0 = inlined_call_operand.vmem [shape: f32[128,64], index: 0, kind: input, shape index: {}]
  %s1 = inlined_call_operand.vmem [shape: bf16[64,128], index: 1, kind: input, shape index: {}]
  %s2 = inlined_call_operand.vmem [shape: f32[1,128], index: 2, kind: input, shape index: {}]
  %s3 = inlined_call_operand.vmem [shape: f32[128,128], index: 3, kind: output, shape index: {}]
  %s4 = sld [smem:[#allocation0]]
  $region22: #{forward.67} parent=0
    _
  %s6 = ssub.s32 1, %s4
  %s7 = scalar_select 0, %s6, %s4
  // Predicated region
  $region2: #{forward.67} parent=0 // pred_check
    _
  $region3: #{forward.67} parent=0 // pred_check_branch
    %9 = sbr.rel (0) target = $region5
  $region4: #{forward.67} parent=0 // pred_region
    _
  $region5: #{forward.67} parent=0 // pred_fallthru
    _
  // Predicated region
  $region6: #{forward.67} parent=0 // pred_check
    _
  $region7: #{forward.67} parent=0 // pred_check_branch
    %11 = sbr.rel (0) target = $region9
  $region8: #{forward.67} parent=0 // pred_region
    _
  $region9: #{forward.67} parent=0 // pred_fallthru
    _
  // Predicated region
  $region10: #{forward.67} parent=0 // pred_check
    _
  $region11: #{forward.67} parent=0 // pred_check_branch
    %13 = sbr.rel (0) target = $region13
  $region12: #{forward.67} parent=0 // pred_region
    _
  $region13: #{forward.67} parent=0 // pred_fallthru
    _
  %v15 = vld [vmem:[%s0] sm:$0xff]
  %v16 = vld [vmem:[%s0 + $0x8] sm:$0xff]
  %v17 = vld [vmem:[%s0 + $0x10] sm:$0xff]
  %v18 = vld [vmem:[%s0 + $0x18] sm:$0xff]
  %v19 = vld [vmem:[%s0 + $0x20] sm:$0xff]
  %v20 = vld [vmem:[%s0 + $0x28] sm:$0xff]
  %v21 = vld [vmem:[%s0 + $0x30] sm:$0xff]
  %v22 = vld [vmem:[%s0 + $0x38] sm:$0xff]
  %v23 = vld [vmem:[%s0 + $0x40] sm:$0xff]
  %v24 = vld [vmem:[%s0 + $0x48] sm:$0xff]
  %v25 = vld [vmem:[%s0 + $0x50] sm:$0xff]
  %v26 = vld [vmem:[%s0 + $0x58] sm:$0xff]
  %v27 = vld [vmem:[%s0 + $0x60] sm:$0xff]
  %v28 = vld [vmem:[%s0 + $0x68] sm:$0xff]
  %v29 = vld [vmem:[%s0 + $0x70] sm:$0xff]
  %v30 = vld [vmem:[%s0 + $0x78] sm:$0xff]
  %v31 = vpack.c.bf16 %v16, %v15
  %v32 = vpack.c.bf16 %v18, %v17
  %v33 = vpack.c.bf16 %v20, %v19
  %v34 = vpack.c.bf16 %v22, %v21
  %v35 = vpack.c.bf16 %v24, %v23
  %v36 = vpack.c.bf16 %v26, %v25
  %v37 = vpack.c.bf16 %v28, %v27
  %v38 = vpack.c.bf16 %v30, %v29
  %v39 = vld [vmem:[%s1] sm:$0xf]
  %v40 = vld [vmem:[%s1 + $0x4] sm:$0xf]
  %v41 = vld [vmem:[%s1 + $0x8] sm:$0xf]
  %v42 = vld [vmem:[%s1 + $0xc] sm:$0xf]
  %v43 = vld [vmem:[%s1 + $0x10] sm:$0xf]
  %v44 = vld [vmem:[%s1 + $0x14] sm:$0xf]
  %v45 = vld [vmem:[%s1 + $0x18] sm:$0xf]
  %v46 = vld [vmem:[%s1 + $0x1c] sm:$0xf]
  %v47 = vld [vmem:[%s2] sm:$0x1]
  %v49 = vlaneseq
  %v50 = vshrl.u32 %v49, 7
  %v51 = vsub.s32 0, %v50
  %v52 = vrot.slane %v47, %v51
  %v62 = vunpack.c.l.b16 %v39
  %v63 = vunpack.c.l.b16 %v40
  %v64 = vunpack.c.l.b16 %v41
  %v65 = vunpack.c.l.b16 %v42
  %v66 = vunpack.c.l.b16 %v43
  %v67 = vunpack.c.l.b16 %v44
  %v68 = vunpack.c.l.b16 %v45
  %v69 = vunpack.c.l.b16 %v46
  %v70 = vpack.c.b16 %v63, %v62
  %v71 = vpack.c.b16 %v65, %v64
  %v72 = vpack.c.b16 %v67, %v66
  %v73 = vpack.c.b16 %v69, %v68
  %vm78 = vcmask 523264
  %v80 = vsel %vm78, %v31, 0
  %v83 = vsel %vm78, %v32, 0
  %v86 = vsel %vm78, %v33, 0
  %v89 = vsel %vm78, %v34, 0
  %v92 = vsel %vm78, %v35, 0
  %v95 = vsel %vm78, %v36, 0
  %v98 = vsel %vm78, %v37, 0
  %v101 = vsel %vm78, %v38, 0
  %103 = vmatprep.subr.bf16.mxu0 0
  %104 = vmatpush1.bf16.msra.mxu0 0
  %105 = vmatprep.subr.bf16.mxu0 0
  %106 = vmatpush1.bf16.msra.mxu0 0
  %107 = vmatprep.subr.bf16.mxu0 0
  %108 = vmatpush1.bf16.msra.mxu0 0
  %109 = vmatprep.subr.bf16.mxu0 0
  %110 = vmatpush1.bf16.msra.mxu0 0
  %111 = vmatprep.subr.bf16.mxu0 0
  %112 = vmatpush1.bf16.msra.mxu0 %v73
  %113 = vmatprep.subr.bf16.mxu0 0
  %114 = vmatpush1.bf16.msra.mxu0 %v72
  %115 = vmatprep.subr.bf16.mxu0 0
  %116 = vmatpush1.bf16.msra.mxu0 %v71
  %117 = vmatprep.subr.bf16.mxu0 0
  %118 = vmatpush1.bf16.msra.mxu0 %v70
  %119 = vmatprep.subr.bf16.mxu0 0
  %120 = vmatpush2.bf16.msra.mxu0 0
  %121 = vmatprep.subr.bf16.mxu0 0
  %122 = vmatpush2.bf16.msra.mxu0 0
  %123 = vmatprep.subr.bf16.mxu0 0
  %124 = vmatpush2.bf16.msra.mxu0 0
  %125 = vmatprep.subr.bf16.mxu0 0
  %126 = vmatpush2.bf16.msra.mxu0 0
  %127 = vmatprep.subr.bf16.mxu0 0
  %128 = vmatpush2.bf16.msra.mxu0 0
  %129 = vmatprep.subr.bf16.mxu0 0
  %130 = vmatpush2.bf16.msra.mxu0 0
  %131 = vmatprep.subr.bf16.mxu0 0
  %132 = vmatpush2.bf16.msra.mxu0 0
  %133 = vmatprep.subr.bf16.mxu0 0
  %134 = vmatpush2.bf16.msra.mxu0 0
  %135 = vmatprep.mubr.bf16.mxu0 0
  %136 = vmatmul.mubr.bf16.gmra.mxu0 %v80
  %v137 = vpop.f32.mrf.mxu0
  %v138 = vadd.f32 %v52, %v137
  %v139 = vpop.f32.mrf.mxu0
  %v140 = vpop.f32.mrf.mxu0
  %v141 = vadd.f32 %v52, %v140
  %v142 = vpop.f32.mrf.mxu0
  %143 = vmatprep.mubr.bf16.mxu0 0
  %144 = vmatmul.mubr.bf16.gmra.mxu0 %v83
  %v145 = vpop.f32.mrf.mxu0
  %v146 = vadd.f32 %v52, %v145
  %v147 = vpop.f32.mrf.mxu0
  %v148 = vpop.f32.mrf.mxu0
  %v149 = vadd.f32 %v52, %v148
  %v150 = vpop.f32.mrf.mxu0
  %151 = vmatprep.mubr.bf16.mxu0 0
  %152 = vmatmul.mubr.bf16.gmra.mxu0 %v86
  %v153 = vpop.f32.mrf.mxu0
  %v154 = vadd.f32 %v52, %v153
  %v155 = vpop.f32.mrf.mxu0
  %v156 = vpop.f32.mrf.mxu0
  %v157 = vadd.f32 %v52, %v156
  %v158 = vpop.f32.mrf.mxu0
  %159 = vmatprep.mubr.bf16.mxu0 0
  %160 = vmatmul.mubr.bf16.gmra.mxu0 %v89
  %v161 = vpop.f32.mrf.mxu0
  %v162 = vadd.f32 %v52, %v161
  %v163 = vpop.f32.mrf.mxu0
  %v164 = vpop.f32.mrf.mxu0
  %v165 = vadd.f32 %v52, %v164
  %v166 = vpop.f32.mrf.mxu0
  %167 = vmatprep.mubr.bf16.mxu0 0
  %168 = vmatmul.mubr.bf16.gmra.mxu0 %v92
  %v169 = vpop.f32.mrf.mxu0
  %v170 = vadd.f32 %v52, %v169
  %v171 = vpop.f32.mrf.mxu0
  %v172 = vpop.f32.mrf.mxu0
  %v173 = vadd.f32 %v52, %v172
  %v174 = vpop.f32.mrf.mxu0
  %175 = vmatprep.mubr.bf16.mxu0 0
  %176 = vmatmul.mubr.bf16.gmra.mxu0 %v95
  %v177 = vpop.f32.mrf.mxu0
  %v178 = vadd.f32 %v52, %v177
  %v179 = vpop.f32.mrf.mxu0
  %v180 = vpop.f32.mrf.mxu0
  %v181 = vadd.f32 %v52, %v180
  %v182 = vpop.f32.mrf.mxu0
  %183 = vmatprep.mubr.bf16.mxu0 0
  %184 = vmatmul.mubr.bf16.gmra.mxu0 %v98
  %v185 = vpop.f32.mrf.mxu0
  %v186 = vadd.f32 %v52, %v185
  %v187 = vpop.f32.mrf.mxu0
  %v188 = vpop.f32.mrf.mxu0
  %v189 = vadd.f32 %v52, %v188
  %v190 = vpop.f32.mrf.mxu0
  %191 = vmatprep.mubr.bf16.mxu0 0
  %192 = vmatmul.mubr.bf16.gmra.mxu0 %v101
  %v193 = vpop.f32.mrf.mxu0
  %v194 = vadd.f32 %v52, %v193
  %v195 = vpop.f32.mrf.mxu0
  %v196 = vpop.f32.mrf.mxu0
  %v197 = vadd.f32 %v52, %v196
  %v198 = vpop.f32.mrf.mxu0
  %199 = vdwg.mxu0
  %200 = vst [vmem:[%s3] sm:$0xff] %v138
  %201 = vst [vmem:[%s3 + $0x8] sm:$0xff] %v141
  %202 = vst [vmem:[%s3 + $0x10] sm:$0xff] %v146
  %203 = vst [vmem:[%s3 + $0x18] sm:$0xff] %v149
  %204 = vst [vmem:[%s3 + $0x20] sm:$0xff] %v154
  %205 = vst [vmem:[%s3 + $0x28] sm:$0xff] %v157
  %206 = vst [vmem:[%s3 + $0x30] sm:$0xff] %v162
  %207 = vst [vmem:[%s3 + $0x38] sm:$0xff] %v165
  %208 = vst [vmem:[%s3 + $0x40] sm:$0xff] %v170
  %209 = vst [vmem:[%s3 + $0x48] sm:$0xff] %v173
  %210 = vst [vmem:[%s3 + $0x50] sm:$0xff] %v178
  %211 = vst [vmem:[%s3 + $0x58] sm:$0xff] %v181
  %212 = vst [vmem:[%s3 + $0x60] sm:$0xff] %v186
  %213 = vst [vmem:[%s3 + $0x68] sm:$0xff] %v189
  %214 = vst [vmem:[%s3 + $0x70] sm:$0xff] %v194
  %215 = vst [vmem:[%s3 + $0x78] sm:$0xff] %v197
  // Predicated region
  $region14: #{forward.67} parent=0 // pred_check
    _
  $region15: #{forward.67} parent=0 // pred_check_branch
    %217 = sbr.rel (0) target = $region17
  $region16: #{forward.67} parent=0 // pred_region
    _
  $region17: #{forward.67} parent=0 // pred_fallthru
    _
  // Predicated region
  $region18: #{forward.67} parent=0 // pred_check
    _
  $region19: #{forward.67} parent=0 // pred_check_branch
    %219 = sbr.rel (0) target = $region21
  $region20: #{forward.67} parent=0 // pred_region
    _
  $region21: #{forward.67} parent=0 // pred_fallthru
    _

// kernel: forward.70
$region0: #{forward.70}
  #allocation0 [shape = 'u32[]', space=smem, size = 0x4, offset = 0x4, fixed_abs, tag = 'smem constant byte address 0x4 - core index']
  #allocation1 [shape = 'u32[144,128]{1,0:T(1,128)}', space=vmem, size = 0x12000, scoped, tag = 'internal scratch']
  %s0 = inlined_call_operand.vmem [shape: f32[128,32], index: 0, kind: input, shape index: {}]
  %s1 = inlined_call_operand.vmem [shape: bf16[32,128], index: 1, kind: input, shape index: {}]
  %s2 = inlined_call_operand.vmem [shape: f32[1,128], index: 2, kind: input, shape index: {}]
  %s3 = inlined_call_operand.vmem [shape: f32[128,128], index: 3, kind: input, shape index: {}]
  %s4 = inlined_call_operand.vmem [shape: f32[128,128], index: 4, kind: output, shape index: {}]
  %s5 = sld [smem:[#allocation0]]
  $region26: #{forward.70} parent=0
    _
  %s7 = ssub.s32 1, %s5
  %s8 = scalar_select 0, %s7, %s5
  // Predicated region
  $region2: #{forward.70} parent=0 // pred_check
    _
  $region3: #{forward.70} parent=0 // pred_check_branch
    %10 = sbr.rel (0) target = $region5
  $region4: #{forward.70} parent=0 // pred_region
    _
  $region5: #{forward.70} parent=0 // pred_fallthru
    _
  // Predicated region
  $region6: #{forward.70} parent=0 // pred_check
    _
  $region7: #{forward.70} parent=0 // pred_check_branch
    %12 = sbr.rel (0) target = $region9
  $region8: #{forward.70} parent=0 // pred_region
    _
  $region9: #{forward.70} parent=0 // pred_fallthru
    _
  // Predicated region
  $region10: #{forward.70} parent=0 // pred_check
    _
  $region11: #{forward.70} parent=0 // pred_check_branch
    %14 = sbr.rel (0) target = $region13
  $region12: #{forward.70} parent=0 // pred_region
    _
  $region13: #{forward.70} parent=0 // pred_fallthru
    _
  // Predicated region
  $region14: #{forward.70} parent=0 // pred_check
    _
  $region15: #{forward.70} parent=0 // pred_check_branch
    %16 = sbr.rel (0) target = $region17
  $region16: #{forward.70} parent=0 // pred_region
    _
  $region17: #{forward.70} parent=0 // pred_fallthru
    _
  %v18 = vld [vmem:[%s0] sm:$0xff]
  %v19 = vld [vmem:[%s0 + $0x8] sm:$0xff]
  %v20 = vld [vmem:[%s0 + $0x10] sm:$0xff]
  %v21 = vld [vmem:[%s0 + $0x18] sm:$0xff]
  %v22 = vld [vmem:[%s0 + $0x20] sm:$0xff]
  %v23 = vld [vmem:[%s0 + $0x28] sm:$0xff]
  %v24 = vld [vmem:[%s0 + $0x30] sm:$0xff]
  %v25 = vld [vmem:[%s0 + $0x38] sm:$0xff]
  %v26 = vld [vmem:[%s0 + $0x40] sm:$0xff]
  %v27 = vld [vmem:[%s0 + $0x48] sm:$0xff]
  %v28 = vld [vmem:[%s0 + $0x50] sm:$0xff]
  %v29 = vld [vmem:[%s0 + $0x58] sm:$0xff]
  %v30 = vld [vmem:[%s0 + $0x60] sm:$0xff]
  %v31 = vld [vmem:[%s0 + $0x68] sm:$0xff]
  %v32 = vld [vmem:[%s0 + $0x70] sm:$0xff]
  %v33 = vld [vmem:[%s0 + $0x78] sm:$0xff]
  %v34 = vpack.c.bf16 %v19, %v18
  %v35 = vpack.c.bf16 %v21, %v20
  %v36 = vpack.c.bf16 %v23, %v22
  %v37 = vpack.c.bf16 %v25, %v24
  %v38 = vpack.c.bf16 %v27, %v26
  %v39 = vpack.c.bf16 %v29, %v28
  %v40 = vpack.c.bf16 %v31, %v30
  %v41 = vpack.c.bf16 %v33, %v32
  %v42 = vld [vmem:[%s1] sm:$0xf]
  %v43 = vld [vmem:[%s1 + $0x4] sm:$0xf]
  %v44 = vld [vmem:[%s1 + $0x8] sm:$0xf]
  %v45 = vld [vmem:[%s1 + $0xc] sm:$0xf]
  %v46 = vld [vmem:[%s2] sm:$0x1]
  %v48 = vlaneseq
  %v49 = vshrl.u32 %v48, 7
  %v50 = vsub.s32 0, %v49
  %v51 = vrot.slane %v46, %v50
  %v57 = vunpack.c.l.b16 %v42
  %v58 = vunpack.c.l.b16 %v43
  %v59 = vunpack.c.l.b16 %v44
  %v60 = vunpack.c.l.b16 %v45
  %v61 = vpack.c.b16 %v58, %v57
  %v62 = vpack.c.b16 %v60, %v59
  %vm65 = vcmask 261120
  %v67 = vsel %vm65, %v34, 0
  %v70 = vsel %vm65, %v35, 0
  %v73 = vsel %vm65, %v36, 0
  %v76 = vsel %vm65, %v37, 0
  %v79 = vsel %vm65, %v38, 0
  %v82 = vsel %vm65, %v39, 0
  %v85 = vsel %vm65, %v40, 0
  %v88 = vsel %vm65, %v41, 0
  %90 = vmatprep.subr.bf16.mxu0 0
  %91 = vmatpush1.bf16.msra.mxu0 0
  %92 = vmatprep.subr.bf16.mxu0 0
  %93 = vmatpush1.bf16.msra.mxu0 0
  %94 = vmatprep.subr.bf16.mxu0 0
  %95 = vmatpush1.bf16.msra.mxu0 0
  %96 = vmatprep.subr.bf16.mxu0 0
  %97 = vmatpush1.bf16.msra.mxu0 0
  %98 = vmatprep.subr.bf16.mxu0 0
  %99 = vmatpush1.bf16.msra.mxu0 0
  %100 = vmatprep.subr.bf16.mxu0 0
  %101 = vmatpush1.bf16.msra.mxu0 0
  %102 = vmatprep.subr.bf16.mxu0 0
  %103 = vmatpush1.bf16.msra.mxu0 %v62
  %104 = vmatprep.subr.bf16.mxu0 0
  %105 = vmatpush1.bf16.msra.mxu0 %v61
  %106 = vmatprep.subr.bf16.mxu0 0
  %107 = vmatpush2.bf16.msra.mxu0 0
  %108 = vmatprep.subr.bf16.mxu0 0
  %109 = vmatpush2.bf16.msra.mxu0 0
  %110 = vmatprep.subr.bf16.mxu0 0
  %111 = vmatpush2.bf16.msra.mxu0 0
  %112 = vmatprep.subr.bf16.mxu0 0
  %113 = vmatpush2.bf16.msra.mxu0 0
  %114 = vmatprep.subr.bf16.mxu0 0
  %115 = vmatpush2.bf16.msra.mxu0 0
  %116 = vmatprep.subr.bf16.mxu0 0
  %117 = vmatpush2.bf16.msra.mxu0 0
  %118 = vmatprep.subr.bf16.mxu0 0
  %119 = vmatpush2.bf16.msra.mxu0 0
  %120 = vmatprep.subr.bf16.mxu0 0
  %121 = vmatpush2.bf16.msra.mxu0 0
  %122 = vmatprep.mubr.bf16.mxu0 0
  %123 = vmatmul.mubr.bf16.gmra.mxu0 %v67
  %v124 = vpop.f32.mrf.mxu0
  %v125 = vadd.f32 %v51, %v124
  %v126 = vpop.f32.mrf.mxu0
  %v127 = vpop.f32.mrf.mxu0
  %v128 = vadd.f32 %v51, %v127
  %v129 = vpop.f32.mrf.mxu0
  %130 = vmatprep.mubr.bf16.mxu0 0
  %131 = vmatmul.mubr.bf16.gmra.mxu0 %v70
  %v132 = vpop.f32.mrf.mxu0
  %v133 = vadd.f32 %v51, %v132
  %v134 = vpop.f32.mrf.mxu0
  %v135 = vpop.f32.mrf.mxu0
  %v136 = vadd.f32 %v51, %v135
  %v137 = vpop.f32.mrf.mxu0
  %138 = vmatprep.mubr.bf16.mxu0 0
  %139 = vmatmul.mubr.bf16.gmra.mxu0 %v73
  %v140 = vpop.f32.mrf.mxu0
  %v141 = vadd.f32 %v51, %v140
  %v142 = vpop.f32.mrf.mxu0
  %v143 = vpop.f32.mrf.mxu0
  %v144 = vadd.f32 %v51, %v143
  %v145 = vpop.f32.mrf.mxu0
  %146 = vmatprep.mubr.bf16.mxu0 0
  %147 = vmatmul.mubr.bf16.gmra.mxu0 %v76
  %v148 = vpop.f32.mrf.mxu0
  %v149 = vadd.f32 %v51, %v148
  %v150 = vpop.f32.mrf.mxu0
  %v151 = vpop.f32.mrf.mxu0
  %v152 = vadd.f32 %v51, %v151
  %v153 = vpop.f32.mrf.mxu0
  %154 = vmatprep.mubr.bf16.mxu0 0
  %155 = vmatmul.mubr.bf16.gmra.mxu0 %v79
  %v156 = vpop.f32.mrf.mxu0
  %v157 = vadd.f32 %v51, %v156
  %v158 = vpop.f32.mrf.mxu0
  %v159 = vpop.f32.mrf.mxu0
  %v160 = vadd.f32 %v51, %v159
  %v161 = vpop.f32.mrf.mxu0
  %162 = vmatprep.mubr.bf16.mxu0 0
  %163 = vmatmul.mubr.bf16.gmra.mxu0 %v82
  %v164 = vpop.f32.mrf.mxu0
  %v165 = vadd.f32 %v51, %v164
  %v166 = vpop.f32.mrf.mxu0
  %v167 = vpop.f32.mrf.mxu0
  %v168 = vadd.f32 %v51, %v167
  %v169 = vpop.f32.mrf.mxu0
  %170 = vmatprep.mubr.bf16.mxu0 0
  %171 = vmatmul.mubr.bf16.gmra.mxu0 %v85
  %v172 = vpop.f32.mrf.mxu0
  %v173 = vadd.f32 %v51, %v172
  %v174 = vpop.f32.mrf.mxu0
  %v175 = vpop.f32.mrf.mxu0
  %v176 = vadd.f32 %v51, %v175
  %v177 = vpop.f32.mrf.mxu0
  %178 = vmatprep.mubr.bf16.mxu0 0
  %179 = vmatmul.mubr.bf16.gmra.mxu0 %v88
  %v180 = vpop.f32.mrf.mxu0
  %v181 = vadd.f32 %v51, %v180
  %v182 = vpop.f32.mrf.mxu0
  %v183 = vpop.f32.mrf.mxu0
  %v184 = vadd.f32 %v51, %v183
  %v185 = vpop.f32.mrf.mxu0
  %186 = vdwg.mxu0
  %v187 = vld [vmem:[%s3] sm:$0xff]
  %v188 = vld [vmem:[%s3 + $0x8] sm:$0xff]
  %v189 = vld [vmem:[%s3 + $0x10] sm:$0xff]
  %v190 = vld [vmem:[%s3 + $0x18] sm:$0xff]
  %v191 = vld [vmem:[%s3 + $0x20] sm:$0xff]
  %v192 = vld [vmem:[%s3 + $0x28] sm:$0xff]
  %v193 = vld [vmem:[%s3 + $0x30] sm:$0xff]
  %v194 = vld [vmem:[%s3 + $0x38] sm:$0xff]
  %v195 = vld [vmem:[%s3 + $0x40] sm:$0xff]
  %v196 = vld [vmem:[%s3 + $0x48] sm:$0xff]
  %v197 = vld [vmem:[%s3 + $0x50] sm:$0xff]
  %v198 = vld [vmem:[%s3 + $0x58] sm:$0xff]
  %v199 = vld [vmem:[%s3 + $0x60] sm:$0xff]
  %v200 = vld [vmem:[%s3 + $0x68] sm:$0xff]
  %v201 = vld [vmem:[%s3 + $0x70] sm:$0xff]
  %v202 = vld [vmem:[%s3 + $0x78] sm:$0xff]
  %v203 = vadd.f32 %v125, %v187
  %v204 = vadd.f32 %v128, %v188
  %v205 = vadd.f32 %v133, %v189
  %v206 = vadd.f32 %v136, %v190
  %v207 = vadd.f32 %v141, %v191
  %v208 = vadd.f32 %v144, %v192
  %v209 = vadd.f32 %v149, %v193
  %v210 = vadd.f32 %v152, %v194
  %v211 = vadd.f32 %v157, %v195
  %v212 = vadd.f32 %v160, %v196
  %v213 = vadd.f32 %v165, %v197
  %v214 = vadd.f32 %v168, %v198
  %v215 = vadd.f32 %v173, %v199
  %v216 = vadd.f32 %v176, %v200
  %v217 = vadd.f32 %v181, %v201
  %v218 = vadd.f32 %v184, %v202
  %v219 = vmax.f32 %v203, 0.0
  %v220 = vmax.f32 %v204, 0.0
  %v221 = vmax.f32 %v205, 0.0
  %v222 = vmax.f32 %v206, 0.0
  %v223 = vmax.f32 %v207, 0.0
  %v224 = vmax.f32 %v208, 0.0
  %v225 = vmax.f32 %v209, 0.0
  %v226 = vmax.f32 %v210, 0.0
  %v227 = vmax.f32 %v211, 0.0
  %v228 = vmax.f32 %v212, 0.0
  %v229 = vmax.f32 %v213, 0.0
  %v230 = vmax.f32 %v214, 0.0
  %v231 = vmax.f32 %v215, 0.0
  %v232 = vmax.f32 %v216, 0.0
  %v233 = vmax.f32 %v217, 0.0
  %v234 = vmax.f32 %v218, 0.0
  %235 = vst [vmem:[%s4] sm:$0xff] %v219
  %236 = vst [vmem:[%s4 + $0x8] sm:$0xff] %v220
  %237 = vst [vmem:[%s4 + $0x10] sm:$0xff] %v221
  %238 = vst [vmem:[%s4 + $0x18] sm:$0xff] %v222
  %239 = vst [vmem:[%s4 + $0x20] sm:$0xff] %v223
  %240 = vst [vmem:[%s4 + $0x28] sm:$0xff] %v224
  %241 = vst [vmem:[%s4 + $0x30] sm:$0xff] %v225
  %242 = vst [vmem:[%s4 + $0x38] sm:$0xff] %v226
  %243 = vst [vmem:[%s4 + $0x40] sm:$0xff] %v227
  %244 = vst [vmem:[%s4 + $0x48] sm:$0xff] %v228
  %245 = vst [vmem:[%s4 + $0x50] sm:$0xff] %v229
  %246 = vst [vmem:[%s4 + $0x58] sm:$0xff] %v230
  %247 = vst [vmem:[%s4 + $0x60] sm:$0xff] %v231
  %248 = vst [vmem:[%s4 + $0x68] sm:$0xff] %v232
  %249 = vst [vmem:[%s4 + $0x70] sm:$0xff] %v233
  %250 = vst [vmem:[%s4 + $0x78] sm:$0xff] %v234
  // Predicated region
  $region18: #{forward.70} parent=0 // pred_check
    _
  $region19: #{forward.70} parent=0 // pred_check_branch
    %252 = sbr.rel (0) target = $region21
  $region20: #{forward.70} parent=0 // pred_region
    _
  $region21: #{forward.70} parent=0 // pred_fallthru
    _
  // Predicated region
  $region22: #{forward.70} parent=0 // pred_check
    _
  $region23: #{forward.70} parent=0 // pred_check_branch
    %254 = sbr.rel (0) target = $region25
  $region24: #{forward.70} parent=0 // pred_region
    _
  $region25: #{forward.70} parent=0 // pred_fallthru
    _

// kernel: forward.71
$region0: #{forward.71}
  #allocation0 [shape = 'u32[]', space=smem, size = 0x4, offset = 0x4, fixed_abs, tag = 'smem constant byte address 0x4 - core index']
  #allocation1 [shape = 'u32[144,128]{1,0:T(1,128)}', space=vmem, size = 0x12000, scoped, tag = 'internal scratch']
  %s0 = inlined_call_operand.vmem [shape: f32[128,128], index: 0, kind: input, shape index: {}]
  %s1 = inlined_call_operand.vmem [shape: bf16[128,32], index: 1, kind: input, shape index: {}]
  %s2 = inlined_call_operand.vmem [shape: f32[1,32], index: 2, kind: input, shape index: {}]
  %s3 = inlined_call_operand.vmem [shape: f32[128,32], index: 3, kind: output, shape index: {}]
  %s4 = sld [smem:[#allocation0]]
  $region22: #{forward.71} parent=0
    _
  %s6 = ssub.s32 1, %s4
  %s7 = scalar_select 0, %s6, %s4
  // Predicated region
  $region2: #{forward.71} parent=0 // pred_check
    _
  $region3: #{forward.71} parent=0 // pred_check_branch
    %9 = sbr.rel (0) target = $region5
  $region4: #{forward.71} parent=0 // pred_region
    _
  $region5: #{forward.71} parent=0 // pred_fallthru
    _
  // Predicated region
  $region6: #{forward.71} parent=0 // pred_check
    _
  $region7: #{forward.71} parent=0 // pred_check_branch
    %11 = sbr.rel (0) target = $region9
  $region8: #{forward.71} parent=0 // pred_region
    _
  $region9: #{forward.71} parent=0 // pred_fallthru
    _
  // Predicated region
  $region10: #{forward.71} parent=0 // pred_check
    _
  $region11: #{forward.71} parent=0 // pred_check_branch
    %13 = sbr.rel (0) target = $region13
  $region12: #{forward.71} parent=0 // pred_region
    _
  $region13: #{forward.71} parent=0 // pred_fallthru
    _
  %v15 = vld [vmem:[%s0] sm:$0xff]
  %v16 = vld [vmem:[%s0 + $0x8] sm:$0xff]
  %v17 = vld [vmem:[%s0 + $0x10] sm:$0xff]
  %v18 = vld [vmem:[%s0 + $0x18] sm:$0xff]
  %v19 = vld [vmem:[%s0 + $0x20] sm:$0xff]
  %v20 = vld [vmem:[%s0 + $0x28] sm:$0xff]
  %v21 = vld [vmem:[%s0 + $0x30] sm:$0xff]
  %v22 = vld [vmem:[%s0 + $0x38] sm:$0xff]
  %v23 = vld [vmem:[%s0 + $0x40] sm:$0xff]
  %v24 = vld [vmem:[%s0 + $0x48] sm:$0xff]
  %v25 = vld [vmem:[%s0 + $0x50] sm:$0xff]
  %v26 = vld [vmem:[%s0 + $0x58] sm:$0xff]
  %v27 = vld [vmem:[%s0 + $0x60] sm:$0xff]
  %v28 = vld [vmem:[%s0 + $0x68] sm:$0xff]
  %v29 = vld [vmem:[%s0 + $0x70] sm:$0xff]
  %v30 = vld [vmem:[%s0 + $0x78] sm:$0xff]
  %v31 = vpack.c.bf16 %v16, %v15
  %v32 = vpack.c.bf16 %v18, %v17
  %v33 = vpack.c.bf16 %v20, %v19
  %v34 = vpack.c.bf16 %v22, %v21
  %v35 = vpack.c.bf16 %v24, %v23
  %v36 = vpack.c.bf16 %v26, %v25
  %v37 = vpack.c.bf16 %v28, %v27
  %v38 = vpack.c.bf16 %v30, %v29
  %v39 = vld [vmem:[%s1] sm:$0xf]
  %v40 = vld [vmem:[%s1 + $0x4] sm:$0xf]
  %v41 = vld [vmem:[%s1 + $0x8] sm:$0xf]
  %v42 = vld [vmem:[%s1 + $0xc] sm:$0xf]
  %v43 = vld [vmem:[%s1 + $0x10] sm:$0xf]
  %v44 = vld [vmem:[%s1 + $0x14] sm:$0xf]
  %v45 = vld [vmem:[%s1 + $0x18] sm:$0xf]
  %v46 = vld [vmem:[%s1 + $0x1c] sm:$0xf]
  %v47 = vld [vmem:[%s1 + $0x20] sm:$0xf]
  %v48 = vld [vmem:[%s1 + $0x24] sm:$0xf]
  %v49 = vld [vmem:[%s1 + $0x28] sm:$0xf]
  %v50 = vld [vmem:[%s1 + $0x2c] sm:$0xf]
  %v51 = vld [vmem:[%s1 + $0x30] sm:$0xf]
  %v52 = vld [vmem:[%s1 + $0x34] sm:$0xf]
  %v53 = vld [vmem:[%s1 + $0x38] sm:$0xf]
  %v54 = vld [vmem:[%s1 + $0x3c] sm:$0xf]
  %v55 = vld [vmem:[%s2] sm:$0x1]
  %v57 = vlaneseq
  %v58 = vshrl.u32 %v57, 7
  %v59 = vsub.s32 0, %v58
  %v60 = vrot.slane %v55, %v59
  %v78 = vunpack.c.l.b16 %v39
  %v79 = vunpack.c.l.b16 %v40
  %v80 = vunpack.c.l.b16 %v41
  %v81 = vunpack.c.l.b16 %v42
  %v82 = vunpack.c.l.b16 %v43
  %v83 = vunpack.c.l.b16 %v44
  %v84 = vunpack.c.l.b16 %v45
  %v85 = vunpack.c.l.b16 %v46
  %v86 = vunpack.c.l.b16 %v47
  %v87 = vunpack.c.l.b16 %v48
  %v88 = vunpack.c.l.b16 %v49
  %v89 = vunpack.c.l.b16 %v50
  %v90 = vunpack.c.l.b16 %v51
  %v91 = vunpack.c.l.b16 %v52
  %v92 = vunpack.c.l.b16 %v53
  %v93 = vunpack.c.l.b16 %v54
  %v94 = vpack.c.b16 %v79, %v78
  %v95 = vpack.c.b16 %v81, %v80
  %v96 = vpack.c.b16 %v83, %v82
  %v97 = vpack.c.b16 %v85, %v84
  %v98 = vpack.c.b16 %v87, %v86
  %v99 = vpack.c.b16 %v89, %v88
  %v100 = vpack.c.b16 %v91, %v90
  %v101 = vpack.c.b16 %v93, %v92
  %110 = vmatprep.subr.bf16.mxu0 0
  %111 = vmatpush1.bf16.msra.mxu0 %v101
  %112 = vmatprep.subr.bf16.mxu0 0
  %113 = vmatpush1.bf16.msra.mxu0 %v100
  %114 = vmatprep.subr.bf16.mxu0 0
  %115 = vmatpush1.bf16.msra.mxu0 %v99
  %116 = vmatprep.subr.bf16.mxu0 0
  %117 = vmatpush1.bf16.msra.mxu0 %v98
  %118 = vmatprep.subr.bf16.mxu0 0
  %119 = vmatpush1.bf16.msra.mxu0 %v97
  %120 = vmatprep.subr.bf16.mxu0 0
  %121 = vmatpush1.bf16.msra.mxu0 %v96
  %122 = vmatprep.subr.bf16.mxu0 0
  %123 = vmatpush1.bf16.msra.mxu0 %v95
  %124 = vmatprep.subr.bf16.mxu0 0
  %125 = vmatpush1.bf16.msra.mxu0 %v94
  %126 = vmatprep.subr.bf16.mxu0 0
  %127 = vmatpush2.bf16.msra.mxu0 0
  %128 = vmatprep.subr.bf16.mxu0 0
  %129 = vmatpush2.bf16.msra.mxu0 0
  %130 = vmatprep.subr.bf16.mxu0 0
  %131 = vmatpush2.bf16.msra.mxu0 0
  %132 = vmatprep.subr.bf16.mxu0 0
  %133 = vmatpush2.bf16.msra.mxu0 0
  %134 = vmatprep.subr.bf16.mxu0 0
  %135 = vmatpush2.bf16.msra.mxu0 0
  %136 = vmatprep.subr.bf16.mxu0 0
  %137 = vmatpush2.bf16.msra.mxu0 0
  %138 = vmatprep.subr.bf16.mxu0 0
  %139 = vmatpush2.bf16.msra.mxu0 0
  %140 = vmatprep.subr.bf16.mxu0 0
  %141 = vmatpush2.bf16.msra.mxu0 0
  %142 = vmatprep.mubr.bf16.mxu0 0
  %143 = vmatmul.mubr.bf16.gmra.mxu0 %v31
  %v144 = vpop.f32.mrf.mxu0
  %v145 = vadd.f32 %v60, %v144
  %v146 = vpop.f32.mrf.mxu0
  %v147 = vpop.f32.mrf.mxu0
  %v148 = vadd.f32 %v60, %v147
  %v149 = vpop.f32.mrf.mxu0
  %150 = vmatprep.mubr.bf16.mxu0 0
  %151 = vmatmul.mubr.bf16.gmra.mxu0 %v32
  %v152 = vpop.f32.mrf.mxu0
  %v153 = vadd.f32 %v60, %v152
  %v154 = vpop.f32.mrf.mxu0
  %v155 = vpop.f32.mrf.mxu0
  %v156 = vadd.f32 %v60, %v155
  %v157 = vpop.f32.mrf.mxu0
  %158 = vmatprep.mubr.bf16.mxu0 0
  %159 = vmatmul.mubr.bf16.gmra.mxu0 %v33
  %v160 = vpop.f32.mrf.mxu0
  %v161 = vadd.f32 %v60, %v160
  %v162 = vpop.f32.mrf.mxu0
  %v163 = vpop.f32.mrf.mxu0
  %v164 = vadd.f32 %v60, %v163
  %v165 = vpop.f32.mrf.mxu0
  %166 = vmatprep.mubr.bf16.mxu0 0
  %167 = vmatmul.mubr.bf16.gmra.mxu0 %v34
  %v168 = vpop.f32.mrf.mxu0
  %v169 = vadd.f32 %v60, %v168
  %v170 = vpop.f32.mrf.mxu0
  %v171 = vpop.f32.mrf.mxu0
  %v172 = vadd.f32 %v60, %v171
  %v173 = vpop.f32.mrf.mxu0
  %174 = vmatprep.mubr.bf16.mxu0 0
  %175 = vmatmul.mubr.bf16.gmra.mxu0 %v35
  %v176 = vpop.f32.mrf.mxu0
  %v177 = vadd.f32 %v60, %v176
  %v178 = vpop.f32.mrf.mxu0
  %v179 = vpop.f32.mrf.mxu0
  %v180 = vadd.f32 %v60, %v179
  %v181 = vpop.f32.mrf.mxu0
  %182 = vmatprep.mubr.bf16.mxu0 0
  %183 = vmatmul.mubr.bf16.gmra.mxu0 %v36
  %v184 = vpop.f32.mrf.mxu0
  %v185 = vadd.f32 %v60, %v184
  %v186 = vpop.f32.mrf.mxu0
  %v187 = vpop.f32.mrf.mxu0
  %v188 = vadd.f32 %v60, %v187
  %v189 = vpop.f32.mrf.mxu0
  %190 = vmatprep.mubr.bf16.mxu0 0
  %191 = vmatmul.mubr.bf16.gmra.mxu0 %v37
  %v192 = vpop.f32.mrf.mxu0
  %v193 = vadd.f32 %v60, %v192
  %v194 = vpop.f32.mrf.mxu0
  %v195 = vpop.f32.mrf.mxu0
  %v196 = vadd.f32 %v60, %v195
  %v197 = vpop.f32.mrf.mxu0
  %198 = vmatprep.mubr.bf16.mxu0 0
  %199 = vmatmul.mubr.bf16.gmra.mxu0 %v38
  %v200 = vpop.f32.mrf.mxu0
  %v201 = vadd.f32 %v60, %v200
  %v202 = vpop.f32.mrf.mxu0
  %v203 = vpop.f32.mrf.mxu0
  %v204 = vadd.f32 %v60, %v203
  %v205 = vpop.f32.mrf.mxu0
  %206 = vdwg.mxu0
  %v207 = vmax.f32 %v145, 0.0
  %v208 = vmax.f32 %v148, 0.0
  %v209 = vmax.f32 %v153, 0.0
  %v210 = vmax.f32 %v156, 0.0
  %v211 = vmax.f32 %v161, 0.0
  %v212 = vmax.f32 %v164, 0.0
  %v213 = vmax.f32 %v169, 0.0
  %v214 = vmax.f32 %v172, 0.0
  %v215 = vmax.f32 %v177, 0.0
  %v216 = vmax.f32 %v180, 0.0
  %v217 = vmax.f32 %v185, 0.0
  %v218 = vmax.f32 %v188, 0.0
  %v219 = vmax.f32 %v193, 0.0
  %v220 = vmax.f32 %v196, 0.0
  %v221 = vmax.f32 %v201, 0.0
  %v222 = vmax.f32 %v204, 0.0
  %vm223 = vcmask 261120
  %224 = vst.msk [vmem:[%s3] sm:$0xff] %vm223, %v207
  %225 = vst.msk [vmem:[%s3 + $0x8] sm:$0xff] %vm223, %v208
  %226 = vst.msk [vmem:[%s3 + $0x10] sm:$0xff] %vm223, %v209
  %227 = vst.msk [vmem:[%s3 + $0x18] sm:$0xff] %vm223, %v210
  %228 = vst.msk [vmem:[%s3 + $0x20] sm:$0xff] %vm223, %v211
  %229 = vst.msk [vmem:[%s3 + $0x28] sm:$0xff] %vm223, %v212
  %230 = vst.msk [vmem:[%s3 + $0x30] sm:$0xff] %vm223, %v213
  %231 = vst.msk [vmem:[%s3 + $0x38] sm:$0xff] %vm223, %v214
  %232 = vst.msk [vmem:[%s3 + $0x40] sm:$0xff] %vm223, %v215
  %233 = vst.msk [vmem:[%s3 + $0x48] sm:$0xff] %vm223, %v216
  %234 = vst.msk [vmem:[%s3 + $0x50] sm:$0xff] %vm223, %v217
  %235 = vst.msk [vmem:[%s3 + $0x58] sm:$0xff] %vm223, %v218
  %236 = vst.msk [vmem:[%s3 + $0x60] sm:$0xff] %vm223, %v219
  %237 = vst.msk [vmem:[%s3 + $0x68] sm:$0xff] %vm223, %v220
  %238 = vst.msk [vmem:[%s3 + $0x70] sm:$0xff] %vm223, %v221
  %239 = vst.msk [vmem:[%s3 + $0x78] sm:$0xff] %vm223, %v222
  // Predicated region
  $region14: #{forward.71} parent=0 // pred_check
    _
  $region15: #{forward.71} parent=0 // pred_check_branch
    %241 = sbr.rel (0) target = $region17
  $region16: #{forward.71} parent=0 // pred_region
    _
  $region17: #{forward.71} parent=0 // pred_fallthru
    _
  // Predicated region
  $region18: #{forward.71} parent=0 // pred_check
    _
  $region19: #{forward.71} parent=0 // pred_check_branch
    %243 = sbr.rel (0) target = $region21
  $region20: #{forward.71} parent=0 // pred_region
    _
  $region21: #{forward.71} parent=0 // pred_fallthru
    _

// kernel: forward.81
$region0: #{forward.81}
  #allocation0 [shape = 'u32[]', space=smem, size = 0x4, offset = 0x4, fixed_abs, tag = 'smem constant byte address 0x4 - core index']
  #allocation1 [shape = 'u32[144,128]{1,0:T(1,128)}', space=vmem, size = 0x12000, scoped, tag = 'internal scratch']
  %s0 = inlined_call_operand.vmem [shape: f32[128,128], index: 0, kind: input, shape index: {}]
  %s1 = inlined_call_operand.vmem [shape: bf16[128,64], index: 1, kind: input, shape index: {}]
  %s2 = inlined_call_operand.vmem [shape: f32[1,64], index: 2, kind: input, shape index: {}]
  %s3 = inlined_call_operand.vmem [shape: f32[128,64], index: 3, kind: output, shape index: {}]
  %s4 = sld [smem:[#allocation0]]
  $region22: #{forward.81} parent=0
    _
  %s6 = ssub.s32 1, %s4
  %s7 = scalar_select 0, %s6, %s4
  // Predicated region
  $region2: #{forward.81} parent=0 // pred_check
    _
  $region3: #{forward.81} parent=0 // pred_check_branch
    %9 = sbr.rel (0) target = $region5
  $region4: #{forward.81} parent=0 // pred_region
    _
  $region5: #{forward.81} parent=0 // pred_fallthru
    _
  // Predicated region
  $region6: #{forward.81} parent=0 // pred_check
    _
  $region7: #{forward.81} parent=0 // pred_check_branch
    %11 = sbr.rel (0) target = $region9
  $region8: #{forward.81} parent=0 // pred_region
    _
  $region9: #{forward.81} parent=0 // pred_fallthru
    _
  // Predicated region
  $region10: #{forward.81} parent=0 // pred_check
    _
  $region11: #{forward.81} parent=0 // pred_check_branch
    %13 = sbr.rel (0) target = $region13
  $region12: #{forward.81} parent=0 // pred_region
    _
  $region13: #{forward.81} parent=0 // pred_fallthru
    _
  %v15 = vld [vmem:[%s0] sm:$0xff]
  %v16 = vld [vmem:[%s0 + $0x8] sm:$0xff]
  %v17 = vld [vmem:[%s0 + $0x10] sm:$0xff]
  %v18 = vld [vmem:[%s0 + $0x18] sm:$0xff]
  %v19 = vld [vmem:[%s0 + $0x20] sm:$0xff]
  %v20 = vld [vmem:[%s0 + $0x28] sm:$0xff]
  %v21 = vld [vmem:[%s0 + $0x30] sm:$0xff]
  %v22 = vld [vmem:[%s0 + $0x38] sm:$0xff]
  %v23 = vld [vmem:[%s0 + $0x40] sm:$0xff]
  %v24 = vld [vmem:[%s0 + $0x48] sm:$0xff]
  %v25 = vld [vmem:[%s0 + $0x50] sm:$0xff]
  %v26 = vld [vmem:[%s0 + $0x58] sm:$0xff]
  %v27 = vld [vmem:[%s0 + $0x60] sm:$0xff]
  %v28 = vld [vmem:[%s0 + $0x68] sm:$0xff]
  %v29 = vld [vmem:[%s0 + $0x70] sm:$0xff]
  %v30 = vld [vmem:[%s0 + $0x78] sm:$0xff]
  %v31 = vpack.c.bf16 %v16, %v15
  %v32 = vpack.c.bf16 %v18, %v17
  %v33 = vpack.c.bf16 %v20, %v19
  %v34 = vpack.c.bf16 %v22, %v21
  %v35 = vpack.c.bf16 %v24, %v23
  %v36 = vpack.c.bf16 %v26, %v25
  %v37 = vpack.c.bf16 %v28, %v27
  %v38 = vpack.c.bf16 %v30, %v29
  %v39 = vld [vmem:[%s1] sm:$0xf]
  %v40 = vld [vmem:[%s1 + $0x4] sm:$0xf]
  %v41 = vld [vmem:[%s1 + $0x8] sm:$0xf]
  %v42 = vld [vmem:[%s1 + $0xc] sm:$0xf]
  %v43 = vld [vmem:[%s1 + $0x10] sm:$0xf]
  %v44 = vld [vmem:[%s1 + $0x14] sm:$0xf]
  %v45 = vld [vmem:[%s1 + $0x18] sm:$0xf]
  %v46 = vld [vmem:[%s1 + $0x1c] sm:$0xf]
  %v47 = vld [vmem:[%s1 + $0x20] sm:$0xf]
  %v48 = vld [vmem:[%s1 + $0x24] sm:$0xf]
  %v49 = vld [vmem:[%s1 + $0x28] sm:$0xf]
  %v50 = vld [vmem:[%s1 + $0x2c] sm:$0xf]
  %v51 = vld [vmem:[%s1 + $0x30] sm:$0xf]
  %v52 = vld [vmem:[%s1 + $0x34] sm:$0xf]
  %v53 = vld [vmem:[%s1 + $0x38] sm:$0xf]
  %v54 = vld [vmem:[%s1 + $0x3c] sm:$0xf]
  %v55 = vld [vmem:[%s2] sm:$0x1]
  %v57 = vlaneseq
  %v58 = vshrl.u32 %v57, 7
  %v59 = vsub.s32 0, %v58
  %v60 = vrot.slane %v55, %v59
  %v78 = vunpack.c.l.b16 %v39
  %v79 = vunpack.c.l.b16 %v40
  %v80 = vunpack.c.l.b16 %v41
  %v81 = vunpack.c.l.b16 %v42
  %v82 = vunpack.c.l.b16 %v43
  %v83 = vunpack.c.l.b16 %v44
  %v84 = vunpack.c.l.b16 %v45
  %v85 = vunpack.c.l.b16 %v46
  %v86 = vunpack.c.l.b16 %v47
  %v87 = vunpack.c.l.b16 %v48
  %v88 = vunpack.c.l.b16 %v49
  %v89 = vunpack.c.l.b16 %v50
  %v90 = vunpack.c.l.b16 %v51
  %v91 = vunpack.c.l.b16 %v52
  %v92 = vunpack.c.l.b16 %v53
  %v93 = vunpack.c.l.b16 %v54
  %v94 = vpack.c.b16 %v79, %v78
  %v95 = vpack.c.b16 %v81, %v80
  %v96 = vpack.c.b16 %v83, %v82
  %v97 = vpack.c.b16 %v85, %v84
  %v98 = vpack.c.b16 %v87, %v86
  %v99 = vpack.c.b16 %v89, %v88
  %v100 = vpack.c.b16 %v91, %v90
  %v101 = vpack.c.b16 %v93, %v92
  %110 = vmatprep.subr.bf16.mxu0 0
  %111 = vmatpush1.bf16.msra.mxu0 %v101
  %112 = vmatprep.subr.bf16.mxu0 0
  %113 = vmatpush1.bf16.msra.mxu0 %v100
  %114 = vmatprep.subr.bf16.mxu0 0
  %115 = vmatpush1.bf16.msra.mxu0 %v99
  %116 = vmatprep.subr.bf16.mxu0 0
  %117 = vmatpush1.bf16.msra.mxu0 %v98
  %118 = vmatprep.subr.bf16.mxu0 0
  %119 = vmatpush1.bf16.msra.mxu0 %v97
  %120 = vmatprep.subr.bf16.mxu0 0
  %121 = vmatpush1.bf16.msra.mxu0 %v96
  %122 = vmatprep.subr.bf16.mxu0 0
  %123 = vmatpush1.bf16.msra.mxu0 %v95
  %124 = vmatprep.subr.bf16.mxu0 0
  %125 = vmatpush1.bf16.msra.mxu0 %v94
  %126 = vmatprep.subr.bf16.mxu0 0
  %127 = vmatpush2.bf16.msra.mxu0 0
  %128 = vmatprep.subr.bf16.mxu0 0
  %129 = vmatpush2.bf16.msra.mxu0 0
  %130 = vmatprep.subr.bf16.mxu0 0
  %131 = vmatpush2.bf16.msra.mxu0 0
  %132 = vmatprep.subr.bf16.mxu0 0
  %133 = vmatpush2.bf16.msra.mxu0 0
  %134 = vmatprep.subr.bf16.mxu0 0
  %135 = vmatpush2.bf16.msra.mxu0 0
  %136 = vmatprep.subr.bf16.mxu0 0
  %137 = vmatpush2.bf16.msra.mxu0 0
  %138 = vmatprep.subr.bf16.mxu0 0
  %139 = vmatpush2.bf16.msra.mxu0 0
  %140 = vmatprep.subr.bf16.mxu0 0
  %141 = vmatpush2.bf16.msra.mxu0 0
  %142 = vmatprep.mubr.bf16.mxu0 0
  %143 = vmatmul.mubr.bf16.gmra.mxu0 %v31
  %v144 = vpop.f32.mrf.mxu0
  %v145 = vadd.f32 %v60, %v144
  %v146 = vpop.f32.mrf.mxu0
  %v147 = vpop.f32.mrf.mxu0
  %v148 = vadd.f32 %v60, %v147
  %v149 = vpop.f32.mrf.mxu0
  %150 = vmatprep.mubr.bf16.mxu0 0
  %151 = vmatmul.mubr.bf16.gmra.mxu0 %v32
  %v152 = vpop.f32.mrf.mxu0
  %v153 = vadd.f32 %v60, %v152
  %v154 = vpop.f32.mrf.mxu0
  %v155 = vpop.f32.mrf.mxu0
  %v156 = vadd.f32 %v60, %v155
  %v157 = vpop.f32.mrf.mxu0
  %158 = vmatprep.mubr.bf16.mxu0 0
  %159 = vmatmul.mubr.bf16.gmra.mxu0 %v33
  %v160 = vpop.f32.mrf.mxu0
  %v161 = vadd.f32 %v60, %v160
  %v162 = vpop.f32.mrf.mxu0
  %v163 = vpop.f32.mrf.mxu0
  %v164 = vadd.f32 %v60, %v163
  %v165 = vpop.f32.mrf.mxu0
  %166 = vmatprep.mubr.bf16.mxu0 0
  %167 = vmatmul.mubr.bf16.gmra.mxu0 %v34
  %v168 = vpop.f32.mrf.mxu0
  %v169 = vadd.f32 %v60, %v168
  %v170 = vpop.f32.mrf.mxu0
  %v171 = vpop.f32.mrf.mxu0
  %v172 = vadd.f32 %v60, %v171
  %v173 = vpop.f32.mrf.mxu0
  %174 = vmatprep.mubr.bf16.mxu0 0
  %175 = vmatmul.mubr.bf16.gmra.mxu0 %v35
  %v176 = vpop.f32.mrf.mxu0
  %v177 = vadd.f32 %v60, %v176
  %v178 = vpop.f32.mrf.mxu0
  %v179 = vpop.f32.mrf.mxu0
  %v180 = vadd.f32 %v60, %v179
  %v181 = vpop.f32.mrf.mxu0
  %182 = vmatprep.mubr.bf16.mxu0 0
  %183 = vmatmul.mubr.bf16.gmra.mxu0 %v36
  %v184 = vpop.f32.mrf.mxu0
  %v185 = vadd.f32 %v60, %v184
  %v186 = vpop.f32.mrf.mxu0
  %v187 = vpop.f32.mrf.mxu0
  %v188 = vadd.f32 %v60, %v187
  %v189 = vpop.f32.mrf.mxu0
  %190 = vmatprep.mubr.bf16.mxu0 0
  %191 = vmatmul.mubr.bf16.gmra.mxu0 %v37
  %v192 = vpop.f32.mrf.mxu0
  %v193 = vadd.f32 %v60, %v192
  %v194 = vpop.f32.mrf.mxu0
  %v195 = vpop.f32.mrf.mxu0
  %v196 = vadd.f32 %v60, %v195
  %v197 = vpop.f32.mrf.mxu0
  %198 = vmatprep.mubr.bf16.mxu0 0
  %199 = vmatmul.mubr.bf16.gmra.mxu0 %v38
  %v200 = vpop.f32.mrf.mxu0
  %v201 = vadd.f32 %v60, %v200
  %v202 = vpop.f32.mrf.mxu0
  %v203 = vpop.f32.mrf.mxu0
  %v204 = vadd.f32 %v60, %v203
  %v205 = vpop.f32.mrf.mxu0
  %206 = vdwg.mxu0
  %v207 = vmax.f32 %v145, 0.0
  %v208 = vmax.f32 %v148, 0.0
  %v209 = vmax.f32 %v153, 0.0
  %v210 = vmax.f32 %v156, 0.0
  %v211 = vmax.f32 %v161, 0.0
  %v212 = vmax.f32 %v164, 0.0
  %v213 = vmax.f32 %v169, 0.0
  %v214 = vmax.f32 %v172, 0.0
  %v215 = vmax.f32 %v177, 0.0
  %v216 = vmax.f32 %v180, 0.0
  %v217 = vmax.f32 %v185, 0.0
  %v218 = vmax.f32 %v188, 0.0
  %v219 = vmax.f32 %v193, 0.0
  %v220 = vmax.f32 %v196, 0.0
  %v221 = vmax.f32 %v201, 0.0
  %v222 = vmax.f32 %v204, 0.0
  %vm223 = vcmask 523264
  %224 = vst.msk [vmem:[%s3] sm:$0xff] %vm223, %v207
  %225 = vst.msk [vmem:[%s3 + $0x8] sm:$0xff] %vm223, %v208
  %226 = vst.msk [vmem:[%s3 + $0x10] sm:$0xff] %vm223, %v209
  %227 = vst.msk [vmem:[%s3 + $0x18] sm:$0xff] %vm223, %v210
  %228 = vst.msk [vmem:[%s3 + $0x20] sm:$0xff] %vm223, %v211
  %229 = vst.msk [vmem:[%s3 + $0x28] sm:$0xff] %vm223, %v212
  %230 = vst.msk [vmem:[%s3 + $0x30] sm:$0xff] %vm223, %v213
  %231 = vst.msk [vmem:[%s3 + $0x38] sm:$0xff] %vm223, %v214
  %232 = vst.msk [vmem:[%s3 + $0x40] sm:$0xff] %vm223, %v215
  %233 = vst.msk [vmem:[%s3 + $0x48] sm:$0xff] %vm223, %v216
  %234 = vst.msk [vmem:[%s3 + $0x50] sm:$0xff] %vm223, %v217
  %235 = vst.msk [vmem:[%s3 + $0x58] sm:$0xff] %vm223, %v218
  %236 = vst.msk [vmem:[%s3 + $0x60] sm:$0xff] %vm223, %v219
  %237 = vst.msk [vmem:[%s3 + $0x68] sm:$0xff] %vm223, %v220
  %238 = vst.msk [vmem:[%s3 + $0x70] sm:$0xff] %vm223, %v221
  %239 = vst.msk [vmem:[%s3 + $0x78] sm:$0xff] %vm223, %v222
  // Predicated region
  $region14: #{forward.81} parent=0 // pred_check
    _
  $region15: #{forward.81} parent=0 // pred_check_branch
    %241 = sbr.rel (0) target = $region17
  $region16: #{forward.81} parent=0 // pred_region
    _
  $region17: #{forward.81} parent=0 // pred_fallthru
    _
  // Predicated region
  $region18: #{forward.81} parent=0 // pred_check
    _
  $region19: #{forward.81} parent=0 // pred_check_branch
    %243 = sbr.rel (0) target = $region21
  $region20: #{forward.81} parent=0 // pred_region
    _
  $region21: #{forward.81} parent=0 // pred_fallthru
    _

// kernel: forward.82
$region0: #{forward.82}
  #allocation0 [shape = 'u32[]', space=smem, size = 0x4, offset = 0x4, fixed_abs, tag = 'smem constant byte address 0x4 - core index']
  #allocation1 [shape = 'u32[144,128]{1,0:T(1,128)}', space=vmem, size = 0x12000, scoped, tag = 'internal scratch']
  %s0 = inlined_call_operand.vmem [shape: bf16[32,576], index: 0, kind: input, shape index: {}]
  %s1 = inlined_call_operand.vmem [shape: bf16[576,64], index: 1, kind: input, shape index: {}]
  %s2 = inlined_call_operand.vmem [shape: f32[1,64], index: 2, kind: input, shape index: {}]
  %s3 = inlined_call_operand.vmem [shape: f32[32,64], index: 3, kind: output, shape index: {}]
  %s4 = sld [smem:[#allocation0]]
  $region22: #{forward.82} parent=0
    _
  %s6 = ssub.s32 1, %s4
  %s7 = scalar_select 0, %s6, %s4
  // Predicated region
  $region2: #{forward.82} parent=0 // pred_check
    _
  $region3: #{forward.82} parent=0 // pred_check_branch
    %9 = sbr.rel (0) target = $region5
  $region4: #{forward.82} parent=0 // pred_region
    _
  $region5: #{forward.82} parent=0 // pred_fallthru
    _
  // Predicated region
  $region6: #{forward.82} parent=0 // pred_check
    _
  $region7: #{forward.82} parent=0 // pred_check_branch
    %11 = sbr.rel (0) target = $region9
  $region8: #{forward.82} parent=0 // pred_region
    _
  $region9: #{forward.82} parent=0 // pred_fallthru
    _
  // Predicated region
  $region10: #{forward.82} parent=0 // pred_check
    _
  $region11: #{forward.82} parent=0 // pred_check_branch
    %13 = sbr.rel (0) target = $region13
  $region12: #{forward.82} parent=0 // pred_region
    _
  $region13: #{forward.82} parent=0 // pred_fallthru
    _
  %v15 = vld [vmem:[%s0] sm:$0xff]
  %v16 = vld [vmem:[%s0 + $0x8] sm:$0xff]
  %v17 = vld [vmem:[%s0 + $0x10] sm:$0xf]
  %v18 = vld [vmem:[%s0 + $0x14] sm:$0xff]
  %v19 = vld [vmem:[%s0 + $0x1c] sm:$0xff]
  %v20 = vld [vmem:[%s0 + $0x24] sm:$0xf]
  %v21 = vld [vmem:[%s0 + $0x28] sm:$0xff]
  %v22 = vld [vmem:[%s0 + $0x30] sm:$0xff]
  %v23 = vld [vmem:[%s0 + $0x38] sm:$0xf]
  %v24 = vld [vmem:[%s0 + $0x3c] sm:$0xff]
  %v25 = vld [vmem:[%s0 + $0x44] sm:$0xff]
  %v26 = vld [vmem:[%s0 + $0x4c] sm:$0xf]
  %v27 = vld [vmem:[%s1] sm:$0xf]
  %v28 = vld [vmem:[%s1 + $0x4] sm:$0xf]
  %v29 = vld [vmem:[%s1 + $0x8] sm:$0xf]
  %v30 = vld [vmem:[%s1 + $0xc] sm:$0xf]
  %v31 = vld [vmem:[%s1 + $0x10] sm:$0xf]
  %v32 = vld [vmem:[%s1 + $0x14] sm:$0xf]
  %v33 = vld [vmem:[%s1 + $0x18] sm:$0xf]
  %v34 = vld [vmem:[%s1 + $0x1c] sm:$0xf]
  %v35 = vld [vmem:[%s1 + $0x20] sm:$0xf]
  %v36 = vld [vmem:[%s1 + $0x24] sm:$0xf]
  %v37 = vld [vmem:[%s1 + $0x28] sm:$0xf]
  %v38 = vld [vmem:[%s1 + $0x2c] sm:$0xf]
  %v39 = vld [vmem:[%s1 + $0x30] sm:$0xf]
  %v40 = vld [vmem:[%s1 + $0x34] sm:$0xf]
  %v41 = vld [vmem:[%s1 + $0x38] sm:$0xf]
  %v42 = vld [vmem:[%s1 + $0x3c] sm:$0xf]
  %v43 = vld [vmem:[%s1 + $0x40] sm:$0xf]
  %v44 = vld [vmem:[%s1 + $0x44] sm:$0xf]
  %v45 = vld [vmem:[%s1 + $0x48] sm:$0xf]
  %v46 = vld [vmem:[%s1 + $0x4c] sm:$0xf]
  %v47 = vld [vmem:[%s1 + $0x50] sm:$0xf]
  %v48 = vld [vmem:[%s1 + $0x54] sm:$0xf]
  %v49 = vld [vmem:[%s1 + $0x58] sm:$0xf]
  %v50 = vld [vmem:[%s1 + $0x5c] sm:$0xf]
  %v51 = vld [vmem:[%s1 + $0x60] sm:$0xf]
  %v52 = vld [vmem:[%s1 + $0x64] sm:$0xf]
  %v53 = vld [vmem:[%s1 + $0x68] sm:$0xf]
  %v54 = vld [vmem:[%s1 + $0x6c] sm:$0xf]
  %v55 = vld [vmem:[%s1 + $0x70] sm:$0xf]
  %v56 = vld [vmem:[%s1 + $0x74] sm:$0xf]
  %v57 = vld [vmem:[%s1 + $0x78] sm:$0xf]
  %v58 = vld [vmem:[%s1 + $0x7c] sm:$0xf]
  %v59 = vld [vmem:[%s1 + $0x80] sm:$0xf]
  %v60 = vld [vmem:[%s1 + $0x84] sm:$0xf]
  %v61 = vld [vmem:[%s1 + $0x88] sm:$0xf]
  %v62 = vld [vmem:[%s1 + $0x8c] sm:$0xf]
  %v63 = vld [vmem:[%s1 + $0x90] sm:$0xf]
  %v64 = vld [vmem:[%s1 + $0x94] sm:$0xf]
  %v65 = vld [vmem:[%s1 + $0x98] sm:$0xf]
  %v66 = vld [vmem:[%s1 + $0x9c] sm:$0xf]
  %v67 = vld [vmem:[%s1 + $0xa0] sm:$0xf]
  %v68 = vld [vmem:[%s1 + $0xa4] sm:$0xf]
  %v69 = vld [vmem:[%s1 + $0xa8] sm:$0xf]
  %v70 = vld [vmem:[%s1 + $0xac] sm:$0xf]
  %v71 = vld [vmem:[%s1 + $0xb0] sm:$0xf]
  %v72 = vld [vmem:[%s1 + $0xb4] sm:$0xf]
  %v73 = vld [vmem:[%s1 + $0xb8] sm:$0xf]
  %v74 = vld [vmem:[%s1 + $0xbc] sm:$0xf]
  %v75 = vld [vmem:[%s1 + $0xc0] sm:$0xf]
  %v76 = vld [vmem:[%s1 + $0xc4] sm:$0xf]
  %v77 = vld [vmem:[%s1 + $0xc8] sm:$0xf]
  %v78 = vld [vmem:[%s1 + $0xcc] sm:$0xf]
  %v79 = vld [vmem:[%s1 + $0xd0] sm:$0xf]
  %v80 = vld [vmem:[%s1 + $0xd4] sm:$0xf]
  %v81 = vld [vmem:[%s1 + $0xd8] sm:$0xf]
  %v82 = vld [vmem:[%s1 + $0xdc] sm:$0xf]
  %v83 = vld [vmem:[%s1 + $0xe0] sm:$0xf]
  %v84 = vld [vmem:[%s1 + $0xe4] sm:$0xf]
  %v85 = vld [vmem:[%s1 + $0xe8] sm:$0xf]
  %v86 = vld [vmem:[%s1 + $0xec] sm:$0xf]
  %v87 = vld [vmem:[%s1 + $0xf0] sm:$0xf]
  %v88 = vld [vmem:[%s1 + $0xf4] sm:$0xf]
  %v89 = vld [vmem:[%s1 + $0xf8] sm:$0xf]
  %v90 = vld [vmem:[%s1 + $0xfc] sm:$0xf]
  %v91 = vld [vmem:[%s1 + $0x100] sm:$0xf]
  %v92 = vld [vmem:[%s1 + $0x104] sm:$0xf]
  %v93 = vld [vmem:[%s1 + $0x108] sm:$0xf]
  %v94 = vld [vmem:[%s1 + $0x10c] sm:$0xf]
  %v95 = vld [vmem:[%s1 + $0x110] sm:$0xf]
  %v96 = vld [vmem:[%s1 + $0x114] sm:$0xf]
  %v97 = vld [vmem:[%s1 + $0x118] sm:$0xf]
  %v98 = vld [vmem:[%s1 + $0x11c] sm:$0xf]
  %v99 = vld [vmem:[%s2] sm:$0x1]
  %v101 = vlaneseq
  %v102 = vshrl.u32 %v101, 7
  %v103 = vsub.s32 0, %v102
  %v104 = vrot.slane %v99, %v103
  %v118 = vunpack.c.l.b16 %v15
  %v119 = vunpack.c.h.b16 %v15
  %v120 = vunpack.c.l.b16 %v16
  %v121 = vunpack.c.h.b16 %v16
  %v122 = vunpack.c.l.b16 %v17
  %v123 = vunpack.c.l.b16 %v18
  %v124 = vunpack.c.h.b16 %v18
  %v125 = vunpack.c.l.b16 %v19
  %v126 = vunpack.c.h.b16 %v19
  %v127 = vunpack.c.l.b16 %v20
  %v128 = vunpack.c.l.b16 %v21
  %v129 = vunpack.c.h.b16 %v21
  %v130 = vunpack.c.l.b16 %v22
  %v131 = vunpack.c.h.b16 %v22
  %v132 = vunpack.c.l.b16 %v23
  %v133 = vunpack.c.l.b16 %v24
  %v134 = vunpack.c.h.b16 %v24
  %v135 = vunpack.c.l.b16 %v25
  %v136 = vunpack.c.h.b16 %v25
  %v137 = vunpack.c.l.b16 %v26
  %v138 = vpack.c.b16 %v123, %v118
  %v139 = vpack.c.b16 %v124, %v119
  %v140 = vpack.c.b16 %v125, %v120
  %v141 = vpack.c.b16 %v126, %v121
  %v142 = vpack.c.b16 %v127, %v122
  %v143 = vpack.c.b16 %v133, %v128
  %v144 = vpack.c.b16 %v134, %v129
  %v145 = vpack.c.b16 %v135, %v130
  %v146 = vpack.c.b16 %v136, %v131
  %v147 = vpack.c.b16 %v137, %v132
  %v228 = vunpack.c.l.b16 %v27
  %v229 = vunpack.c.l.b16 %v28
  %v230 = vunpack.c.l.b16 %v29
  %v231 = vunpack.c.l.b16 %v30
  %v232 = vunpack.c.l.b16 %v31
  %v233 = vunpack.c.l.b16 %v32
  %v234 = vunpack.c.l.b16 %v33
  %v235 = vunpack.c.l.b16 %v34
  %v236 = vunpack.c.l.b16 %v35
  %v237 = vunpack.c.l.b16 %v36
  %v238 = vunpack.c.l.b16 %v37
  %v239 = vunpack.c.l.b16 %v38
  %v240 = vunpack.c.l.b16 %v39
  %v241 = vunpack.c.l.b16 %v40
  %v242 = vunpack.c.l.b16 %v41
  %v243 = vunpack.c.l.b16 %v42
  %v244 = vunpack.c.l.b16 %v43
  %v245 = vunpack.c.l.b16 %v44
  %v246 = vunpack.c.l.b16 %v45
  %v247 = vunpack.c.l.b16 %v46
  %v248 = vunpack.c.l.b16 %v47
  %v249 = vunpack.c.l.b16 %v48
  %v250 = vunpack.c.l.b16 %v49
  %v251 = vunpack.c.l.b16 %v50
  %v252 = vunpack.c.l.b16 %v51
  %v253 = vunpack.c.l.b16 %v52
  %v254 = vunpack.c.l.b16 %v53
  %v255 = vunpack.c.l.b16 %v54
  %v256 = vunpack.c.l.b16 %v55
  %v257 = vunpack.c.l.b16 %v56
  %v258 = vunpack.c.l.b16 %v57
  %v259 = vunpack.c.l.b16 %v58
  %v260 = vunpack.c.l.b16 %v59
  %v261 = vunpack.c.l.b16 %v60
  %v262 = vunpack.c.l.b16 %v61
  %v263 = vunpack.c.l.b16 %v62
  %v264 = vunpack.c.l.b16 %v63
  %v265 = vunpack.c.l.b16 %v64
  %v266 = vunpack.c.l.b16 %v65
  %v267 = vunpack.c.l.b16 %v66
  %v268 = vunpack.c.l.b16 %v67
  %v269 = vunpack.c.l.b16 %v68
  %v270 = vunpack.c.l.b16 %v69
  %v271 = vunpack.c.l.b16 %v70
  %v272 = vunpack.c.l.b16 %v71
  %v273 = vunpack.c.l.b16 %v72
  %v274 = vunpack.c.l.b16 %v73
  %v275 = vunpack.c.l.b16 %v74
  %v276 = vunpack.c.l.b16 %v75
  %v277 = vunpack.c.l.b16 %v76
  %v278 = vunpack.c.l.b16 %v77
  %v279 = vunpack.c.l.b16 %v78
  %v280 = vunpack.c.l.b16 %v79
  %v281 = vunpack.c.l.b16 %v80
  %v282 = vunpack.c.l.b16 %v81
  %v283 = vunpack.c.l.b16 %v82
  %v284 = vunpack.c.l.b16 %v83
  %v285 = vunpack.c.l.b16 %v84
  %v286 = vunpack.c.l.b16 %v85
  %v287 = vunpack.c.l.b16 %v86
  %v288 = vunpack.c.l.b16 %v87
  %v289 = vunpack.c.l.b16 %v88
  %v290 = vunpack.c.l.b16 %v89
  %v291 = vunpack.c.l.b16 %v90
  %v292 = vunpack.c.l.b16 %v91
  %v293 = vunpack.c.l.b16 %v92
  %v294 = vunpack.c.l.b16 %v93
  %v295 = vunpack.c.l.b16 %v94
  %v296 = vunpack.c.l.b16 %v95
  %v297 = vunpack.c.l.b16 %v96
  %v298 = vunpack.c.l.b16 %v97
  %v299 = vunpack.c.l.b16 %v98
  %v300 = vpack.c.b16 %v229, %v228
  %v301 = vpack.c.b16 %v231, %v230
  %v302 = vpack.c.b16 %v233, %v232
  %v303 = vpack.c.b16 %v235, %v234
  %v304 = vpack.c.b16 %v237, %v236
  %v305 = vpack.c.b16 %v239, %v238
  %v306 = vpack.c.b16 %v241, %v240
  %v307 = vpack.c.b16 %v243, %v242
  %v308 = vpack.c.b16 %v245, %v244
  %v309 = vpack.c.b16 %v247, %v246
  %v310 = vpack.c.b16 %v249, %v248
  %v311 = vpack.c.b16 %v251, %v250
  %v312 = vpack.c.b16 %v253, %v252
  %v313 = vpack.c.b16 %v255, %v254
  %v314 = vpack.c.b16 %v257, %v256
  %v315 = vpack.c.b16 %v259, %v258
  %v316 = vpack.c.b16 %v261, %v260
  %v317 = vpack.c.b16 %v263, %v262
  %v318 = vpack.c.b16 %v265, %v264
  %v319 = vpack.c.b16 %v267, %v266
  %v320 = vpack.c.b16 %v269, %v268
  %v321 = vpack.c.b16 %v271, %v270
  %v322 = vpack.c.b16 %v273, %v272
  %v323 = vpack.c.b16 %v275, %v274
  %v324 = vpack.c.b16 %v277, %v276
  %v325 = vpack.c.b16 %v279, %v278
  %v326 = vpack.c.b16 %v281, %v280
  %v327 = vpack.c.b16 %v283, %v282
  %v328 = vpack.c.b16 %v285, %v284
  %v329 = vpack.c.b16 %v287, %v286
  %v330 = vpack.c.b16 %v289, %v288
  %v331 = vpack.c.b16 %v291, %v290
  %v332 = vpack.c.b16 %v293, %v292
  %v333 = vpack.c.b16 %v295, %v294
  %v334 = vpack.c.b16 %v297, %v296
  %v335 = vpack.c.b16 %v299, %v298
  %vm372 = vcmask 523264
  %v374 = vsel %vm372, %v142, 0
  %v377 = vsel %vm372, %v147, 0
  %379 = vmatprep.subr.bf16.mxu0 0
  %380 = vmatpush1.bf16.msra.mxu0 %v307
  %381 = vmatprep.subr.bf16.mxu0 0
  %382 = vmatpush1.bf16.msra.mxu0 %v306
  %383 = vmatprep.subr.bf16.mxu0 0
  %384 = vmatpush1.bf16.msra.mxu0 %v305
  %385 = vmatprep.subr.bf16.mxu0 0
  %386 = vmatpush1.bf16.msra.mxu0 %v304
  %387 = vmatprep.subr.bf16.mxu0 0
  %388 = vmatpush1.bf16.msra.mxu0 %v303
  %389 = vmatprep.subr.bf16.mxu0 0
  %390 = vmatpush1.bf16.msra.mxu0 %v302
  %391 = vmatprep.subr.bf16.mxu0 0
  %392 = vmatpush1.bf16.msra.mxu0 %v301
  %393 = vmatprep.subr.bf16.mxu0 0
  %394 = vmatpush1.bf16.msra.mxu0 %v300
  %395 = vmatprep.subr.bf16.mxu0 0
  %396 = vmatpush2.bf16.msra.mxu0 %v315
  %397 = vmatprep.subr.bf16.mxu0 0
  %398 = vmatpush2.bf16.msra.mxu0 %v314
  %399 = vmatprep.subr.bf16.mxu0 0
  %400 = vmatpush2.bf16.msra.mxu0 %v313
  %401 = vmatprep.subr.bf16.mxu0 0
  %402 = vmatpush2.bf16.msra.mxu0 %v312
  %403 = vmatprep.subr.bf16.mxu0 0
  %404 = vmatpush2.bf16.msra.mxu0 %v311
  %405 = vmatprep.subr.bf16.mxu0 0
  %406 = vmatpush2.bf16.msra.mxu0 %v310
  %407 = vmatprep.subr.bf16.mxu0 0
  %408 = vmatpush2.bf16.msra.mxu0 %v309
  %409 = vmatprep.subr.bf16.mxu0 0
  %410 = vmatpush2.bf16.msra.mxu0 %v308
  %411 = vmatprep.mubr.bf16.mxu0 %v139
  %412 = vmatmul.mubr.bf16.gmra.mxu0 %v138
  %v413 = vpop.f32.mrf.mxu0
  %v414 = vadd.f32 %v104, %v413
  %v415 = vpop.f32.mrf.mxu0
  %v416 = vpop.f32.mrf.mxu0
  %v417 = vadd.f32 %v104, %v416
  %v418 = vpop.f32.mrf.mxu0
  %419 = vmatprep.mubr.bf16.mxu0 %v144
  %420 = vmatmul.mubr.bf16.gmra.mxu0 %v143
  %v421 = vpop.f32.mrf.mxu0
  %v422 = vadd.f32 %v104, %v421
  %v423 = vpop.f32.mrf.mxu0
  %v424 = vpop.f32.mrf.mxu0
  %v425 = vadd.f32 %v104, %v424
  %v426 = vpop.f32.mrf.mxu0
  %427 = vdwg.mxu0
  %428 = vmatprep.subr.bf16.mxu0 0
  %429 = vmatpush1.bf16.msra.mxu0 %v323
  %430 = vmatprep.subr.bf16.mxu0 0
  %431 = vmatpush1.bf16.msra.mxu0 %v322
  %432 = vmatprep.subr.bf16.mxu0 0
  %433 = vmatpush1.bf16.msra.mxu0 %v321
  %434 = vmatprep.subr.bf16.mxu0 0
  %435 = vmatpush1.bf16.msra.mxu0 %v320
  %436 = vmatprep.subr.bf16.mxu0 0
  %437 = vmatpush1.bf16.msra.mxu0 %v319
  %438 = vmatprep.subr.bf16.mxu0 0
  %439 = vmatpush1.bf16.msra.mxu0 %v318
  %440 = vmatprep.subr.bf16.mxu0 0
  %441 = vmatpush1.bf16.msra.mxu0 %v317
  %442 = vmatprep.subr.bf16.mxu0 0
  %443 = vmatpush1.bf16.msra.mxu0 %v316
  %444 = vmatprep.subr.bf16.mxu0 0
  %445 = vmatpush2.bf16.msra.mxu0 %v331
  %446 = vmatprep.subr.bf16.mxu0 0
  %447 = vmatpush2.bf16.msra.mxu0 %v330
  %448 = vmatprep.subr.bf16.mxu0 0
  %449 = vmatpush2.bf16.msra.mxu0 %v329
  %450 = vmatprep.subr.bf16.mxu0 0
  %451 = vmatpush2.bf16.msra.mxu0 %v328
  %452 = vmatprep.subr.bf16.mxu0 0
  %453 = vmatpush2.bf16.msra.mxu0 %v327
  %454 = vmatprep.subr.bf16.mxu0 0
  %455 = vmatpush2.bf16.msra.mxu0 %v326
  %456 = vmatprep.subr.bf16.mxu0 0
  %457 = vmatpush2.bf16.msra.mxu0 %v325
  %458 = vmatprep.subr.bf16.mxu0 0
  %459 = vmatpush2.bf16.msra.mxu0 %v324
  %460 = vmatprep.mubr.bf16.mxu0 %v141
  %461 = vmatmul.mubr.bf16.gmra.mxu0 %v140
  %v462 = vpop.f32.mrf.mxu0
  %v463 = vadd.f32 %v414, %v462
  %v464 = vpop.f32.mrf.mxu0
  %v465 = vpop.f32.mrf.mxu0
  %v466 = vadd.f32 %v417, %v465
  %v467 = vpop.f32.mrf.mxu0
  %468 = vmatprep.mubr.bf16.mxu0 %v146
  %469 = vmatmul.mubr.bf16.gmra.mxu0 %v145
  %v470 = vpop.f32.mrf.mxu0
  %v471 = vadd.f32 %v422, %v470
  %v472 = vpop.f32.mrf.mxu0
  %v473 = vpop.f32.mrf.mxu0
  %v474 = vadd.f32 %v425, %v473
  %v475 = vpop.f32.mrf.mxu0
  %476 = vdwg.mxu0
  %477 = vmatprep.subr.bf16.mxu0 0
  %478 = vmatpush1.bf16.msra.mxu0 0
  %479 = vmatprep.subr.bf16.mxu0 0
  %480 = vmatpush1.bf16.msra.mxu0 0
  %481 = vmatprep.subr.bf16.mxu0 0
  %482 = vmatpush1.bf16.msra.mxu0 0
  %483 = vmatprep.subr.bf16.mxu0 0
  %484 = vmatpush1.bf16.msra.mxu0 0
  %485 = vmatprep.subr.bf16.mxu0 0
  %486 = vmatpush1.bf16.msra.mxu0 %v335
  %487 = vmatprep.subr.bf16.mxu0 0
  %488 = vmatpush1.bf16.msra.mxu0 %v334
  %489 = vmatprep.subr.bf16.mxu0 0
  %490 = vmatpush1.bf16.msra.mxu0 %v333
  %491 = vmatprep.subr.bf16.mxu0 0
  %492 = vmatpush1.bf16.msra.mxu0 %v332
  %493 = vmatprep.subr.bf16.mxu0 0
  %494 = vmatpush2.bf16.msra.mxu0 0
  %495 = vmatprep.subr.bf16.mxu0 0
  %496 = vmatpush2.bf16.msra.mxu0 0
  %497 = vmatprep.subr.bf16.mxu0 0
  %498 = vmatpush2.bf16.msra.mxu0 0
  %499 = vmatprep.subr.bf16.mxu0 0
  %500 = vmatpush2.bf16.msra.mxu0 0
  %501 = vmatprep.subr.bf16.mxu0 0
  %502 = vmatpush2.bf16.msra.mxu0 0
  %503 = vmatprep.subr.bf16.mxu0 0
  %504 = vmatpush2.bf16.msra.mxu0 0
  %505 = vmatprep.subr.bf16.mxu0 0
  %506 = vmatpush2.bf16.msra.mxu0 0
  %507 = vmatprep.subr.bf16.mxu0 0
  %508 = vmatpush2.bf16.msra.mxu0 0
  %509 = vmatprep.mubr.bf16.mxu0 0
  %510 = vmatmul.mubr.bf16.gmra.mxu0 %v374
  %v511 = vpop.f32.mrf.mxu0
  %v512 = vadd.f32 %v463, %v511
  %v513 = vpop.f32.mrf.mxu0
  %v514 = vpop.f32.mrf.mxu0
  %v515 = vadd.f32 %v466, %v514
  %v516 = vpop.f32.mrf.mxu0
  %517 = vmatprep.mubr.bf16.mxu0 0
  %518 = vmatmul.mubr.bf16.gmra.mxu0 %v377
  %v519 = vpop.f32.mrf.mxu0
  %v520 = vadd.f32 %v471, %v519
  %v521 = vpop.f32.mrf.mxu0
  %v522 = vpop.f32.mrf.mxu0
  %v523 = vadd.f32 %v474, %v522
  %v524 = vpop.f32.mrf.mxu0
  %525 = vdwg.mxu0
  %v526 = vmax.f32 %v512, 0.0
  %v527 = vmax.f32 %v515, 0.0
  %v528 = vmax.f32 %v520, 0.0
  %v529 = vmax.f32 %v523, 0.0
  %530 = vst.msk [vmem:[%s3] sm:$0xff] %vm372, %v526
  %531 = vst.msk [vmem:[%s3 + $0x8] sm:$0xff] %vm372, %v527
  %532 = vst.msk [vmem:[%s3 + $0x10] sm:$0xff] %vm372, %v528
  %533 = vst.msk [vmem:[%s3 + $0x18] sm:$0xff] %vm372, %v529
  // Predicated region
  $region14: #{forward.82} parent=0 // pred_check
    _
  $region15: #{forward.82} parent=0 // pred_check_branch
    %535 = sbr.rel (0) target = $region17
  $region16: #{forward.82} parent=0 // pred_region
    _
  $region17: #{forward.82} parent=0 // pred_fallthru
    _
  // Predicated region
  $region18: #{forward.82} parent=0 // pred_check
    _
  $region19: #{forward.82} parent=0 // pred_check_branch
    %537 = sbr.rel (0) target = $region21
  $region20: #{forward.82} parent=0 // pred_region
    _
  $region21: #{forward.82} parent=0 // pred_fallthru
    _

// kernel: forward.80
$region0: #{forward.80}
  #allocation0 [shape = 'u32[]', space=smem, size = 0x4, offset = 0x4, fixed_abs, tag = 'smem constant byte address 0x4 - core index']
  #allocation1 [shape = 'u32[144,128]{1,0:T(1,128)}', space=vmem, size = 0x12000, scoped, tag = 'internal scratch']
  %s0 = inlined_call_operand.vmem [shape: f32[32,128], index: 0, kind: input, shape index: {}]
  %s1 = inlined_call_operand.vmem [shape: bf16[128,256], index: 1, kind: input, shape index: {}]
  %s2 = inlined_call_operand.vmem [shape: f32[1,256], index: 2, kind: input, shape index: {}]
  %s3 = inlined_call_operand.vmem [shape: f32[32,256], index: 3, kind: output, shape index: {}]
  %s4 = sld [smem:[#allocation0]]
  $region22: #{forward.80} parent=0
    _
  %s6 = ssub.s32 1, %s4
  %s7 = scalar_select 0, %s6, %s4
  // Predicated region
  $region2: #{forward.80} parent=0 // pred_check
    _
  $region3: #{forward.80} parent=0 // pred_check_branch
    %9 = sbr.rel (0) target = $region5
  $region4: #{forward.80} parent=0 // pred_region
    _
  $region5: #{forward.80} parent=0 // pred_fallthru
    _
  // Predicated region
  $region6: #{forward.80} parent=0 // pred_check
    _
  $region7: #{forward.80} parent=0 // pred_check_branch
    %11 = sbr.rel (0) target = $region9
  $region8: #{forward.80} parent=0 // pred_region
    _
  $region9: #{forward.80} parent=0 // pred_fallthru
    _
  // Predicated region
  $region10: #{forward.80} parent=0 // pred_check
    _
  $region11: #{forward.80} parent=0 // pred_check_branch
    %13 = sbr.rel (0) target = $region13
  $region12: #{forward.80} parent=0 // pred_region
    _
  $region13: #{forward.80} parent=0 // pred_fallthru
    _
  %v15 = vld [vmem:[%s0] sm:$0xff]
  %v16 = vld [vmem:[%s0 + $0x8] sm:$0xff]
  %v17 = vld [vmem:[%s0 + $0x10] sm:$0xff]
  %v18 = vld [vmem:[%s0 + $0x18] sm:$0xff]
  %v19 = vpack.c.bf16 %v16, %v15
  %v20 = vpack.c.bf16 %v18, %v17
  %v21 = vld [vmem:[%s1] sm:$0xff]
  %v22 = vld [vmem:[%s1 + $0x8] sm:$0xff]
  %v23 = vld [vmem:[%s1 + $0x10] sm:$0xff]
  %v24 = vld [vmem:[%s1 + $0x18] sm:$0xff]
  %v25 = vld [vmem:[%s1 + $0x20] sm:$0xff]
  %v26 = vld [vmem:[%s1 + $0x28] sm:$0xff]
  %v27 = vld [vmem:[%s1 + $0x30] sm:$0xff]
  %v28 = vld [vmem:[%s1 + $0x38] sm:$0xff]
  %v29 = vld [vmem:[%s1 + $0x40] sm:$0xff]
  %v30 = vld [vmem:[%s1 + $0x48] sm:$0xff]
  %v31 = vld [vmem:[%s1 + $0x50] sm:$0xff]
  %v32 = vld [vmem:[%s1 + $0x58] sm:$0xff]
  %v33 = vld [vmem:[%s1 + $0x60] sm:$0xff]
  %v34 = vld [vmem:[%s1 + $0x68] sm:$0xff]
  %v35 = vld [vmem:[%s1 + $0x70] sm:$0xff]
  %v36 = vld [vmem:[%s1 + $0x78] sm:$0xff]
  %v37 = vld [vmem:[%s2] sm:$0x3]
  %v39 = vlaneseq
  %v40 = vshrl.u32 %v39, 7
  %v41 = vsub.s32 0, %v40
  %v42 = vrot.slane %v37, %v41
  %v43 = vlaneseq
  %v44 = vshrl.u32 %v43, 7
  %v45 = vsub.s32 1, %v44
  %v46 = vrot.slane %v37, %v45
  %v65 = vunpack.c.l.b16 %v21
  %v66 = vunpack.c.h.b16 %v21
  %v67 = vunpack.c.l.b16 %v22
  %v68 = vunpack.c.h.b16 %v22
  %v69 = vunpack.c.l.b16 %v23
  %v70 = vunpack.c.h.b16 %v23
  %v71 = vunpack.c.l.b16 %v24
  %v72 = vunpack.c.h.b16 %v24
  %v73 = vunpack.c.l.b16 %v25
  %v74 = vunpack.c.h.b16 %v25
  %v75 = vunpack.c.l.b16 %v26
  %v76 = vunpack.c.h.b16 %v26
  %v77 = vunpack.c.l.b16 %v27
  %v78 = vunpack.c.h.b16 %v27
  %v79 = vunpack.c.l.b16 %v28
  %v80 = vunpack.c.h.b16 %v28
  %v81 = vunpack.c.l.b16 %v29
  %v82 = vunpack.c.h.b16 %v29
  %v83 = vunpack.c.l.b16 %v30
  %v84 = vunpack.c.h.b16 %v30
  %v85 = vunpack.c.l.b16 %v31
  %v86 = vunpack.c.h.b16 %v31
  %v87 = vunpack.c.l.b16 %v32
  %v88 = vunpack.c.h.b16 %v32
  %v89 = vunpack.c.l.b16 %v33
  %v90 = vunpack.c.h.b16 %v33
  %v91 = vunpack.c.l.b16 %v34
  %v92 = vunpack.c.h.b16 %v34
  %v93 = vunpack.c.l.b16 %v35
  %v94 = vunpack.c.h.b16 %v35
  %v95 = vunpack.c.l.b16 %v36
  %v96 = vunpack.c.h.b16 %v36
  %v97 = vpack.c.b16 %v67, %v65
  %v98 = vpack.c.b16 %v68, %v66
  %v99 = vpack.c.b16 %v71, %v69
  %v100 = vpack.c.b16 %v72, %v70
  %v101 = vpack.c.b16 %v75, %v73
  %v102 = vpack.c.b16 %v76, %v74
  %v103 = vpack.c.b16 %v79, %v77
  %v104 = vpack.c.b16 %v80, %v78
  %v105 = vpack.c.b16 %v83, %v81
  %v106 = vpack.c.b16 %v84, %v82
  %v107 = vpack.c.b16 %v87, %v85
  %v108 = vpack.c.b16 %v88, %v86
  %v109 = vpack.c.b16 %v91, %v89
  %v110 = vpack.c.b16 %v92, %v90
  %v111 = vpack.c.b16 %v95, %v93
  %v112 = vpack.c.b16 %v96, %v94
  %129 = vmatprep.subr.bf16.mxu0 %v112
  %130 = vmatpush1.bf16.msra.mxu0 %v111
  %131 = vmatprep.subr.bf16.mxu0 %v110
  %132 = vmatpush1.bf16.msra.mxu0 %v109
  %133 = vmatprep.subr.bf16.mxu0 %v108
  %134 = vmatpush1.bf16.msra.mxu0 %v107
  %135 = vmatprep.subr.bf16.mxu0 %v106
  %136 = vmatpush1.bf16.msra.mxu0 %v105
  %137 = vmatprep.subr.bf16.mxu0 %v104
  %138 = vmatpush1.bf16.msra.mxu0 %v103
  %139 = vmatprep.subr.bf16.mxu0 %v102
  %140 = vmatpush1.bf16.msra.mxu0 %v101
  %141 = vmatprep.subr.bf16.mxu0 %v100
  %142 = vmatpush1.bf16.msra.mxu0 %v99
  %143 = vmatprep.subr.bf16.mxu0 %v98
  %144 = vmatpush1.bf16.msra.mxu0 %v97
  %145 = vmatprep.subr.bf16.mxu0 0
  %146 = vmatpush2.bf16.msra.mxu0 0
  %147 = vmatprep.subr.bf16.mxu0 0
  %148 = vmatpush2.bf16.msra.mxu0 0
  %149 = vmatprep.subr.bf16.mxu0 0
  %150 = vmatpush2.bf16.msra.mxu0 0
  %151 = vmatprep.subr.bf16.mxu0 0
  %152 = vmatpush2.bf16.msra.mxu0 0
  %153 = vmatprep.subr.bf16.mxu0 0
  %154 = vmatpush2.bf16.msra.mxu0 0
  %155 = vmatprep.subr.bf16.mxu0 0
  %156 = vmatpush2.bf16.msra.mxu0 0
  %157 = vmatprep.subr.bf16.mxu0 0
  %158 = vmatpush2.bf16.msra.mxu0 0
  %159 = vmatprep.subr.bf16.mxu0 0
  %160 = vmatpush2.bf16.msra.mxu0 0
  %161 = vmatprep.mubr.bf16.mxu0 0
  %162 = vmatmul.mubr.bf16.gmra.mxu0 %v19
  %v163 = vpop.f32.mrf.mxu0
  %v164 = vadd.f32 %v42, %v163
  %v165 = vpop.f32.mrf.mxu0
  %v166 = vadd.f32 %v46, %v165
  %v167 = vpop.f32.mrf.mxu0
  %v168 = vadd.f32 %v42, %v167
  %v169 = vpop.f32.mrf.mxu0
  %v170 = vadd.f32 %v46, %v169
  %171 = vmatprep.mubr.bf16.mxu0 0
  %172 = vmatmul.mubr.bf16.gmra.mxu0 %v20
  %v173 = vpop.f32.mrf.mxu0
  %v174 = vadd.f32 %v42, %v173
  %v175 = vpop.f32.mrf.mxu0
  %v176 = vadd.f32 %v46, %v175
  %v177 = vpop.f32.mrf.mxu0
  %v178 = vadd.f32 %v42, %v177
  %v179 = vpop.f32.mrf.mxu0
  %v180 = vadd.f32 %v46, %v179
  %181 = vdwg.mxu0
  %182 = vst [vmem:[%s3] sm:$0xff] %v164
  %183 = vst [vmem:[%s3 + $0x8] sm:$0xff] %v166
  %184 = vst [vmem:[%s3 + $0x10] sm:$0xff] %v168
  %185 = vst [vmem:[%s3 + $0x18] sm:$0xff] %v170
  %186 = vst [vmem:[%s3 + $0x20] sm:$0xff] %v174
  %187 = vst [vmem:[%s3 + $0x28] sm:$0xff] %v176
  %188 = vst [vmem:[%s3 + $0x30] sm:$0xff] %v178
  %189 = vst [vmem:[%s3 + $0x38] sm:$0xff] %v180
  // Predicated region
  $region14: #{forward.80} parent=0 // pred_check
    _
  $region15: #{forward.80} parent=0 // pred_check_branch
    %191 = sbr.rel (0) target = $region17
  $region16: #{forward.80} parent=0 // pred_region
    _
  $region17: #{forward.80} parent=0 // pred_fallthru
    _
  // Predicated region
  $region18: #{forward.80} parent=0 // pred_check
    _
  $region19: #{forward.80} parent=0 // pred_check_branch
    %193 = sbr.rel (0) target = $region21
  $region20: #{forward.80} parent=0 // pred_region
    _
  $region21: #{forward.80} parent=0 // pred_fallthru
    _

// kernel: forward.83
$region0: #{forward.83}
  #allocation0 [shape = 'u32[]', space=smem, size = 0x4, offset = 0x4, fixed_abs, tag = 'smem constant byte address 0x4 - core index']
  #allocation1 [shape = 'u32[144,128]{1,0:T(1,128)}', space=vmem, size = 0x12000, scoped, tag = 'internal scratch']
  %s0 = inlined_call_operand.vmem [shape: f32[32,64], index: 0, kind: input, shape index: {}]
  %s1 = inlined_call_operand.vmem [shape: bf16[64,256], index: 1, kind: input, shape index: {}]
  %s2 = inlined_call_operand.vmem [shape: f32[1,256], index: 2, kind: input, shape index: {}]
  %s3 = inlined_call_operand.vmem [shape: f32[32,256], index: 3, kind: input, shape index: {}]
  %s4 = inlined_call_operand.vmem [shape: f32[32,256], index: 4, kind: output, shape index: {}]
  %s5 = sld [smem:[#allocation0]]
  $region26: #{forward.83} parent=0
    _
  %s7 = ssub.s32 1, %s5
  %s8 = scalar_select 0, %s7, %s5
  // Predicated region
  $region2: #{forward.83} parent=0 // pred_check
    _
  $region3: #{forward.83} parent=0 // pred_check_branch
    %10 = sbr.rel (0) target = $region5
  $region4: #{forward.83} parent=0 // pred_region
    _
  $region5: #{forward.83} parent=0 // pred_fallthru
    _
  // Predicated region
  $region6: #{forward.83} parent=0 // pred_check
    _
  $region7: #{forward.83} parent=0 // pred_check_branch
    %12 = sbr.rel (0) target = $region9
  $region8: #{forward.83} parent=0 // pred_region
    _
  $region9: #{forward.83} parent=0 // pred_fallthru
    _
  // Predicated region
  $region10: #{forward.83} parent=0 // pred_check
    _
  $region11: #{forward.83} parent=0 // pred_check_branch
    %14 = sbr.rel (0) target = $region13
  $region12: #{forward.83} parent=0 // pred_region
    _
  $region13: #{forward.83} parent=0 // pred_fallthru
    _
  // Predicated region
  $region14: #{forward.83} parent=0 // pred_check
    _
  $region15: #{forward.83} parent=0 // pred_check_branch
    %16 = sbr.rel (0) target = $region17
  $region16: #{forward.83} parent=0 // pred_region
    _
  $region17: #{forward.83} parent=0 // pred_fallthru
    _
  %v18 = vld [vmem:[%s0] sm:$0xff]
  %v19 = vld [vmem:[%s0 + $0x8] sm:$0xff]
  %v20 = vld [vmem:[%s0 + $0x10] sm:$0xff]
  %v21 = vld [vmem:[%s0 + $0x18] sm:$0xff]
  %v22 = vpack.c.bf16 %v19, %v18
  %v23 = vpack.c.bf16 %v21, %v20
  %v24 = vld [vmem:[%s1] sm:$0xff]
  %v25 = vld [vmem:[%s1 + $0x8] sm:$0xff]
  %v26 = vld [vmem:[%s1 + $0x10] sm:$0xff]
  %v27 = vld [vmem:[%s1 + $0x18] sm:$0xff]
  %v28 = vld [vmem:[%s1 + $0x20] sm:$0xff]
  %v29 = vld [vmem:[%s1 + $0x28] sm:$0xff]
  %v30 = vld [vmem:[%s1 + $0x30] sm:$0xff]
  %v31 = vld [vmem:[%s1 + $0x38] sm:$0xff]
  %v32 = vld [vmem:[%s2] sm:$0x3]
  %v34 = vlaneseq
  %v35 = vshrl.u32 %v34, 7
  %v36 = vsub.s32 0, %v35
  %v37 = vrot.slane %v32, %v36
  %v38 = vlaneseq
  %v39 = vshrl.u32 %v38, 7
  %v40 = vsub.s32 1, %v39
  %v41 = vrot.slane %v32, %v40
  %v52 = vunpack.c.l.b16 %v24
  %v53 = vunpack.c.h.b16 %v24
  %v54 = vunpack.c.l.b16 %v25
  %v55 = vunpack.c.h.b16 %v25
  %v56 = vunpack.c.l.b16 %v26
  %v57 = vunpack.c.h.b16 %v26
  %v58 = vunpack.c.l.b16 %v27
  %v59 = vunpack.c.h.b16 %v27
  %v60 = vunpack.c.l.b16 %v28
  %v61 = vunpack.c.h.b16 %v28
  %v62 = vunpack.c.l.b16 %v29
  %v63 = vunpack.c.h.b16 %v29
  %v64 = vunpack.c.l.b16 %v30
  %v65 = vunpack.c.h.b16 %v30
  %v66 = vunpack.c.l.b16 %v31
  %v67 = vunpack.c.h.b16 %v31
  %v68 = vpack.c.b16 %v54, %v52
  %v69 = vpack.c.b16 %v55, %v53
  %v70 = vpack.c.b16 %v58, %v56
  %v71 = vpack.c.b16 %v59, %v57
  %v72 = vpack.c.b16 %v62, %v60
  %v73 = vpack.c.b16 %v63, %v61
  %v74 = vpack.c.b16 %v66, %v64
  %v75 = vpack.c.b16 %v67, %v65
  %vm84 = vcmask 523264
  %v86 = vsel %vm84, %v22, 0
  %v89 = vsel %vm84, %v23, 0
  %91 = vmatprep.subr.bf16.mxu0 0
  %92 = vmatpush1.bf16.msra.mxu0 0
  %93 = vmatprep.subr.bf16.mxu0 0
  %94 = vmatpush1.bf16.msra.mxu0 0
  %95 = vmatprep.subr.bf16.mxu0 0
  %96 = vmatpush1.bf16.msra.mxu0 0
  %97 = vmatprep.subr.bf16.mxu0 0
  %98 = vmatpush1.bf16.msra.mxu0 0
  %99 = vmatprep.subr.bf16.mxu0 %v75
  %100 = vmatpush1.bf16.msra.mxu0 %v74
  %101 = vmatprep.subr.bf16.mxu0 %v73
  %102 = vmatpush1.bf16.msra.mxu0 %v72
  %103 = vmatprep.subr.bf16.mxu0 %v71
  %104 = vmatpush1.bf16.msra.mxu0 %v70
  %105 = vmatprep.subr.bf16.mxu0 %v69
  %106 = vmatpush1.bf16.msra.mxu0 %v68
  %107 = vmatprep.subr.bf16.mxu0 0
  %108 = vmatpush2.bf16.msra.mxu0 0
  %109 = vmatprep.subr.bf16.mxu0 0
  %110 = vmatpush2.bf16.msra.mxu0 0
  %111 = vmatprep.subr.bf16.mxu0 0
  %112 = vmatpush2.bf16.msra.mxu0 0
  %113 = vmatprep.subr.bf16.mxu0 0
  %114 = vmatpush2.bf16.msra.mxu0 0
  %115 = vmatprep.subr.bf16.mxu0 0
  %116 = vmatpush2.bf16.msra.mxu0 0
  %117 = vmatprep.subr.bf16.mxu0 0
  %118 = vmatpush2.bf16.msra.mxu0 0
  %119 = vmatprep.subr.bf16.mxu0 0
  %120 = vmatpush2.bf16.msra.mxu0 0
  %121 = vmatprep.subr.bf16.mxu0 0
  %122 = vmatpush2.bf16.msra.mxu0 0
  %123 = vmatprep.mubr.bf16.mxu0 0
  %124 = vmatmul.mubr.bf16.gmra.mxu0 %v86
  %v125 = vpop.f32.mrf.mxu0
  %v126 = vadd.f32 %v37, %v125
  %v127 = vpop.f32.mrf.mxu0
  %v128 = vadd.f32 %v41, %v127
  %v129 = vpop.f32.mrf.mxu0
  %v130 = vadd.f32 %v37, %v129
  %v131 = vpop.f32.mrf.mxu0
  %v132 = vadd.f32 %v41, %v131
  %133 = vmatprep.mubr.bf16.mxu0 0
  %134 = vmatmul.mubr.bf16.gmra.mxu0 %v89
  %v135 = vpop.f32.mrf.mxu0
  %v136 = vadd.f32 %v37, %v135
  %v137 = vpop.f32.mrf.mxu0
  %v138 = vadd.f32 %v41, %v137
  %v139 = vpop.f32.mrf.mxu0
  %v140 = vadd.f32 %v37, %v139
  %v141 = vpop.f32.mrf.mxu0
  %v142 = vadd.f32 %v41, %v141
  %143 = vdwg.mxu0
  %v144 = vld [vmem:[%s3] sm:$0xff]
  %v145 = vld [vmem:[%s3 + $0x8] sm:$0xff]
  %v146 = vld [vmem:[%s3 + $0x10] sm:$0xff]
  %v147 = vld [vmem:[%s3 + $0x18] sm:$0xff]
  %v148 = vld [vmem:[%s3 + $0x20] sm:$0xff]
  %v149 = vld [vmem:[%s3 + $0x28] sm:$0xff]
  %v150 = vld [vmem:[%s3 + $0x30] sm:$0xff]
  %v151 = vld [vmem:[%s3 + $0x38] sm:$0xff]
  %v152 = vadd.f32 %v126, %v144
  %v153 = vadd.f32 %v128, %v145
  %v154 = vadd.f32 %v130, %v146
  %v155 = vadd.f32 %v132, %v147
  %v156 = vadd.f32 %v136, %v148
  %v157 = vadd.f32 %v138, %v149
  %v158 = vadd.f32 %v140, %v150
  %v159 = vadd.f32 %v142, %v151
  %v160 = vmax.f32 %v152, 0.0
  %v161 = vmax.f32 %v153, 0.0
  %v162 = vmax.f32 %v154, 0.0
  %v163 = vmax.f32 %v155, 0.0
  %v164 = vmax.f32 %v156, 0.0
  %v165 = vmax.f32 %v157, 0.0
  %v166 = vmax.f32 %v158, 0.0
  %v167 = vmax.f32 %v159, 0.0
  %168 = vst [vmem:[%s4] sm:$0xff] %v160
  %169 = vst [vmem:[%s4 + $0x8] sm:$0xff] %v161
  %170 = vst [vmem:[%s4 + $0x10] sm:$0xff] %v162
  %171 = vst [vmem:[%s4 + $0x18] sm:$0xff] %v163
  %172 = vst [vmem:[%s4 + $0x20] sm:$0xff] %v164
  %173 = vst [vmem:[%s4 + $0x28] sm:$0xff] %v165
  %174 = vst [vmem:[%s4 + $0x30] sm:$0xff] %v166
  %175 = vst [vmem:[%s4 + $0x38] sm:$0xff] %v167
  // Predicated region
  $region18: #{forward.83} parent=0 // pred_check
    _
  $region19: #{forward.83} parent=0 // pred_check_branch
    %177 = sbr.rel (0) target = $region21
  $region20: #{forward.83} parent=0 // pred_region
    _
  $region21: #{forward.83} parent=0 // pred_fallthru
    _
  // Predicated region
  $region22: #{forward.83} parent=0 // pred_check
    _
  $region23: #{forward.83} parent=0 // pred_check_branch
    %179 = sbr.rel (0) target = $region25
  $region24: #{forward.83} parent=0 // pred_region
    _
  $region25: #{forward.83} parent=0 // pred_fallthru
    _

// kernel: forward.84
$region0: #{forward.84}
  #allocation0 [shape = 'u32[]', space=smem, size = 0x4, offset = 0x4, fixed_abs, tag = 'smem constant byte address 0x4 - core index']
  #allocation1 [shape = 'u32[144,128]{1,0:T(1,128)}', space=vmem, size = 0x12000, scoped, tag = 'internal scratch']
  %s0 = inlined_call_operand.vmem [shape: f32[32,256], index: 0, kind: input, shape index: {}]
  %s1 = inlined_call_operand.vmem [shape: bf16[256,64], index: 1, kind: input, shape index: {}]
  %s2 = inlined_call_operand.vmem [shape: f32[1,64], index: 2, kind: input, shape index: {}]
  %s3 = inlined_call_operand.vmem [shape: f32[32,64], index: 3, kind: output, shape index: {}]
  %s4 = sld [smem:[#allocation0]]
  $region22: #{forward.84} parent=0
    _
  %s6 = ssub.s32 1, %s4
  %s7 = scalar_select 0, %s6, %s4
  // Predicated region
  $region2: #{forward.84} parent=0 // pred_check
    _
  $region3: #{forward.84} parent=0 // pred_check_branch
    %9 = sbr.rel (0) target = $region5
  $region4: #{forward.84} parent=0 // pred_region
    _
  $region5: #{forward.84} parent=0 // pred_fallthru
    _
  // Predicated region
  $region6: #{forward.84} parent=0 // pred_check
    _
  $region7: #{forward.84} parent=0 // pred_check_branch
    %11 = sbr.rel (0) target = $region9
  $region8: #{forward.84} parent=0 // pred_region
    _
  $region9: #{forward.84} parent=0 // pred_fallthru
    _
  // Predicated region
  $region10: #{forward.84} parent=0 // pred_check
    _
  $region11: #{forward.84} parent=0 // pred_check_branch
    %13 = sbr.rel (0) target = $region13
  $region12: #{forward.84} parent=0 // pred_region
    _
  $region13: #{forward.84} parent=0 // pred_fallthru
    _
  %v15 = vld [vmem:[%s0] sm:$0xff]
  %v16 = vld [vmem:[%s0 + $0x8] sm:$0xff]
  %v17 = vld [vmem:[%s0 + $0x10] sm:$0xff]
  %v18 = vld [vmem:[%s0 + $0x18] sm:$0xff]
  %v19 = vld [vmem:[%s0 + $0x20] sm:$0xff]
  %v20 = vld [vmem:[%s0 + $0x28] sm:$0xff]
  %v21 = vld [vmem:[%s0 + $0x30] sm:$0xff]
  %v22 = vld [vmem:[%s0 + $0x38] sm:$0xff]
  %v23 = vpack.c.bf16 %v17, %v15
  %v24 = vpack.c.bf16 %v18, %v16
  %v25 = vpack.c.bf16 %v21, %v19
  %v26 = vpack.c.bf16 %v22, %v20
  %v27 = vld [vmem:[%s1] sm:$0xf]
  %v28 = vld [vmem:[%s1 + $0x4] sm:$0xf]
  %v29 = vld [vmem:[%s1 + $0x8] sm:$0xf]
  %v30 = vld [vmem:[%s1 + $0xc] sm:$0xf]
  %v31 = vld [vmem:[%s1 + $0x10] sm:$0xf]
  %v32 = vld [vmem:[%s1 + $0x14] sm:$0xf]
  %v33 = vld [vmem:[%s1 + $0x18] sm:$0xf]
  %v34 = vld [vmem:[%s1 + $0x1c] sm:$0xf]
  %v35 = vld [vmem:[%s1 + $0x20] sm:$0xf]
  %v36 = vld [vmem:[%s1 + $0x24] sm:$0xf]
  %v37 = vld [vmem:[%s1 + $0x28] sm:$0xf]
  %v38 = vld [vmem:[%s1 + $0x2c] sm:$0xf]
  %v39 = vld [vmem:[%s1 + $0x30] sm:$0xf]
  %v40 = vld [vmem:[%s1 + $0x34] sm:$0xf]
  %v41 = vld [vmem:[%s1 + $0x38] sm:$0xf]
  %v42 = vld [vmem:[%s1 + $0x3c] sm:$0xf]
  %v43 = vld [vmem:[%s1 + $0x40] sm:$0xf]
  %v44 = vld [vmem:[%s1 + $0x44] sm:$0xf]
  %v45 = vld [vmem:[%s1 + $0x48] sm:$0xf]
  %v46 = vld [vmem:[%s1 + $0x4c] sm:$0xf]
  %v47 = vld [vmem:[%s1 + $0x50] sm:$0xf]
  %v48 = vld [vmem:[%s1 + $0x54] sm:$0xf]
  %v49 = vld [vmem:[%s1 + $0x58] sm:$0xf]
  %v50 = vld [vmem:[%s1 + $0x5c] sm:$0xf]
  %v51 = vld [vmem:[%s1 + $0x60] sm:$0xf]
  %v52 = vld [vmem:[%s1 + $0x64] sm:$0xf]
  %v53 = vld [vmem:[%s1 + $0x68] sm:$0xf]
  %v54 = vld [vmem:[%s1 + $0x6c] sm:$0xf]
  %v55 = vld [vmem:[%s1 + $0x70] sm:$0xf]
  %v56 = vld [vmem:[%s1 + $0x74] sm:$0xf]
  %v57 = vld [vmem:[%s1 + $0x78] sm:$0xf]
  %v58 = vld [vmem:[%s1 + $0x7c] sm:$0xf]
  %v59 = vld [vmem:[%s2] sm:$0x1]
  %v61 = vlaneseq
  %v62 = vshrl.u32 %v61, 7
  %v63 = vsub.s32 0, %v62
  %v64 = vrot.slane %v59, %v63
  %v98 = vunpack.c.l.b16 %v27
  %v99 = vunpack.c.l.b16 %v28
  %v100 = vunpack.c.l.b16 %v29
  %v101 = vunpack.c.l.b16 %v30
  %v102 = vunpack.c.l.b16 %v31
  %v103 = vunpack.c.l.b16 %v32
  %v104 = vunpack.c.l.b16 %v33
  %v105 = vunpack.c.l.b16 %v34
  %v106 = vunpack.c.l.b16 %v35
  %v107 = vunpack.c.l.b16 %v36
  %v108 = vunpack.c.l.b16 %v37
  %v109 = vunpack.c.l.b16 %v38
  %v110 = vunpack.c.l.b16 %v39
  %v111 = vunpack.c.l.b16 %v40
  %v112 = vunpack.c.l.b16 %v41
  %v113 = vunpack.c.l.b16 %v42
  %v114 = vunpack.c.l.b16 %v43
  %v115 = vunpack.c.l.b16 %v44
  %v116 = vunpack.c.l.b16 %v45
  %v117 = vunpack.c.l.b16 %v46
  %v118 = vunpack.c.l.b16 %v47
  %v119 = vunpack.c.l.b16 %v48
  %v120 = vunpack.c.l.b16 %v49
  %v121 = vunpack.c.l.b16 %v50
  %v122 = vunpack.c.l.b16 %v51
  %v123 = vunpack.c.l.b16 %v52
  %v124 = vunpack.c.l.b16 %v53
  %v125 = vunpack.c.l.b16 %v54
  %v126 = vunpack.c.l.b16 %v55
  %v127 = vunpack.c.l.b16 %v56
  %v128 = vunpack.c.l.b16 %v57
  %v129 = vunpack.c.l.b16 %v58
  %v130 = vpack.c.b16 %v99, %v98
  %v131 = vpack.c.b16 %v101, %v100
  %v132 = vpack.c.b16 %v103, %v102
  %v133 = vpack.c.b16 %v105, %v104
  %v134 = vpack.c.b16 %v107, %v106
  %v135 = vpack.c.b16 %v109, %v108
  %v136 = vpack.c.b16 %v111, %v110
  %v137 = vpack.c.b16 %v113, %v112
  %v138 = vpack.c.b16 %v115, %v114
  %v139 = vpack.c.b16 %v117, %v116
  %v140 = vpack.c.b16 %v119, %v118
  %v141 = vpack.c.b16 %v121, %v120
  %v142 = vpack.c.b16 %v123, %v122
  %v143 = vpack.c.b16 %v125, %v124
  %v144 = vpack.c.b16 %v127, %v126
  %v145 = vpack.c.b16 %v129, %v128
  %162 = vmatprep.subr.bf16.mxu0 0
  %163 = vmatpush1.bf16.msra.mxu0 %v137
  %164 = vmatprep.subr.bf16.mxu0 0
  %165 = vmatpush1.bf16.msra.mxu0 %v136
  %166 = vmatprep.subr.bf16.mxu0 0
  %167 = vmatpush1.bf16.msra.mxu0 %v135
  %168 = vmatprep.subr.bf16.mxu0 0
  %169 = vmatpush1.bf16.msra.mxu0 %v134
  %170 = vmatprep.subr.bf16.mxu0 0
  %171 = vmatpush1.bf16.msra.mxu0 %v133
  %172 = vmatprep.subr.bf16.mxu0 0
  %173 = vmatpush1.bf16.msra.mxu0 %v132
  %174 = vmatprep.subr.bf16.mxu0 0
  %175 = vmatpush1.bf16.msra.mxu0 %v131
  %176 = vmatprep.subr.bf16.mxu0 0
  %177 = vmatpush1.bf16.msra.mxu0 %v130
  %178 = vmatprep.subr.bf16.mxu0 0
  %179 = vmatpush2.bf16.msra.mxu0 %v145
  %180 = vmatprep.subr.bf16.mxu0 0
  %181 = vmatpush2.bf16.msra.mxu0 %v144
  %182 = vmatprep.subr.bf16.mxu0 0
  %183 = vmatpush2.bf16.msra.mxu0 %v143
  %184 = vmatprep.subr.bf16.mxu0 0
  %185 = vmatpush2.bf16.msra.mxu0 %v142
  %186 = vmatprep.subr.bf16.mxu0 0
  %187 = vmatpush2.bf16.msra.mxu0 %v141
  %188 = vmatprep.subr.bf16.mxu0 0
  %189 = vmatpush2.bf16.msra.mxu0 %v140
  %190 = vmatprep.subr.bf16.mxu0 0
  %191 = vmatpush2.bf16.msra.mxu0 %v139
  %192 = vmatprep.subr.bf16.mxu0 0
  %193 = vmatpush2.bf16.msra.mxu0 %v138
  %194 = vmatprep.mubr.bf16.mxu0 %v24
  %195 = vmatmul.mubr.bf16.gmra.mxu0 %v23
  %v196 = vpop.f32.mrf.mxu0
  %v197 = vadd.f32 %v64, %v196
  %v198 = vpop.f32.mrf.mxu0
  %v199 = vpop.f32.mrf.mxu0
  %v200 = vadd.f32 %v64, %v199
  %v201 = vpop.f32.mrf.mxu0
  %202 = vmatprep.mubr.bf16.mxu0 %v26
  %203 = vmatmul.mubr.bf16.gmra.mxu0 %v25
  %v204 = vpop.f32.mrf.mxu0
  %v205 = vadd.f32 %v64, %v204
  %v206 = vpop.f32.mrf.mxu0
  %v207 = vpop.f32.mrf.mxu0
  %v208 = vadd.f32 %v64, %v207
  %v209 = vpop.f32.mrf.mxu0
  %210 = vdwg.mxu0
  %v211 = vmax.f32 %v197, 0.0
  %v212 = vmax.f32 %v200, 0.0
  %v213 = vmax.f32 %v205, 0.0
  %v214 = vmax.f32 %v208, 0.0
  %vm215 = vcmask 523264
  %216 = vst.msk [vmem:[%s3] sm:$0xff] %vm215, %v211
  %217 = vst.msk [vmem:[%s3 + $0x8] sm:$0xff] %vm215, %v212
  %218 = vst.msk [vmem:[%s3 + $0x10] sm:$0xff] %vm215, %v213
  %219 = vst.msk [vmem:[%s3 + $0x18] sm:$0xff] %vm215, %v214
  // Predicated region
  $region14: #{forward.84} parent=0 // pred_check
    _
  $region15: #{forward.84} parent=0 // pred_check_branch
    %221 = sbr.rel (0) target = $region17
  $region16: #{forward.84} parent=0 // pred_region
    _
  $region17: #{forward.84} parent=0 // pred_fallthru
    _
  // Predicated region
  $region18: #{forward.84} parent=0 // pred_check
    _
  $region19: #{forward.84} parent=0 // pred_check_branch
    %223 = sbr.rel (0) target = $region21
  $region20: #{forward.84} parent=0 // pred_region
    _
  $region21: #{forward.84} parent=0 // pred_fallthru
    _

// kernel: forward.100
$region0: #{forward.100}
  #allocation0 [shape = 'u32[]', space=smem, size = 0x4, offset = 0x4, fixed_abs, tag = 'smem constant byte address 0x4 - core index']
  #allocation1 [shape = 'u32[144,128]{1,0:T(1,128)}', space=vmem, size = 0x12000, scoped, tag = 'internal scratch']
  %s0 = inlined_call_operand.vmem [shape: f32[32,256], index: 0, kind: input, shape index: {}]
  %s1 = inlined_call_operand.vmem [shape: bf16[256,128], index: 1, kind: input, shape index: {}]
  %s2 = inlined_call_operand.vmem [shape: f32[1,128], index: 2, kind: input, shape index: {}]
  %s3 = inlined_call_operand.vmem [shape: f32[32,128], index: 3, kind: output, shape index: {}]
  %s4 = sld [smem:[#allocation0]]
  $region22: #{forward.100} parent=0
    _
  %s6 = ssub.s32 1, %s4
  %s7 = scalar_select 0, %s6, %s4
  // Predicated region
  $region2: #{forward.100} parent=0 // pred_check
    _
  $region3: #{forward.100} parent=0 // pred_check_branch
    %9 = sbr.rel (0) target = $region5
  $region4: #{forward.100} parent=0 // pred_region
    _
  $region5: #{forward.100} parent=0 // pred_fallthru
    _
  // Predicated region
  $region6: #{forward.100} parent=0 // pred_check
    _
  $region7: #{forward.100} parent=0 // pred_check_branch
    %11 = sbr.rel (0) target = $region9
  $region8: #{forward.100} parent=0 // pred_region
    _
  $region9: #{forward.100} parent=0 // pred_fallthru
    _
  // Predicated region
  $region10: #{forward.100} parent=0 // pred_check
    _
  $region11: #{forward.100} parent=0 // pred_check_branch
    %13 = sbr.rel (0) target = $region13
  $region12: #{forward.100} parent=0 // pred_region
    _
  $region13: #{forward.100} parent=0 // pred_fallthru
    _
  %v15 = vld [vmem:[%s0] sm:$0xff]
  %v16 = vld [vmem:[%s0 + $0x8] sm:$0xff]
  %v17 = vld [vmem:[%s0 + $0x10] sm:$0xff]
  %v18 = vld [vmem:[%s0 + $0x18] sm:$0xff]
  %v19 = vld [vmem:[%s0 + $0x20] sm:$0xff]
  %v20 = vld [vmem:[%s0 + $0x28] sm:$0xff]
  %v21 = vld [vmem:[%s0 + $0x30] sm:$0xff]
  %v22 = vld [vmem:[%s0 + $0x38] sm:$0xff]
  %v23 = vpack.c.bf16 %v17, %v15
  %v24 = vpack.c.bf16 %v18, %v16
  %v25 = vpack.c.bf16 %v21, %v19
  %v26 = vpack.c.bf16 %v22, %v20
  %v27 = vld [vmem:[%s1] sm:$0xf]
  %v28 = vld [vmem:[%s1 + $0x4] sm:$0xf]
  %v29 = vld [vmem:[%s1 + $0x8] sm:$0xf]
  %v30 = vld [vmem:[%s1 + $0xc] sm:$0xf]
  %v31 = vld [vmem:[%s1 + $0x10] sm:$0xf]
  %v32 = vld [vmem:[%s1 + $0x14] sm:$0xf]
  %v33 = vld [vmem:[%s1 + $0x18] sm:$0xf]
  %v34 = vld [vmem:[%s1 + $0x1c] sm:$0xf]
  %v35 = vld [vmem:[%s1 + $0x20] sm:$0xf]
  %v36 = vld [vmem:[%s1 + $0x24] sm:$0xf]
  %v37 = vld [vmem:[%s1 + $0x28] sm:$0xf]
  %v38 = vld [vmem:[%s1 + $0x2c] sm:$0xf]
  %v39 = vld [vmem:[%s1 + $0x30] sm:$0xf]
  %v40 = vld [vmem:[%s1 + $0x34] sm:$0xf]
  %v41 = vld [vmem:[%s1 + $0x38] sm:$0xf]
  %v42 = vld [vmem:[%s1 + $0x3c] sm:$0xf]
  %v43 = vld [vmem:[%s1 + $0x40] sm:$0xf]
  %v44 = vld [vmem:[%s1 + $0x44] sm:$0xf]
  %v45 = vld [vmem:[%s1 + $0x48] sm:$0xf]
  %v46 = vld [vmem:[%s1 + $0x4c] sm:$0xf]
  %v47 = vld [vmem:[%s1 + $0x50] sm:$0xf]
  %v48 = vld [vmem:[%s1 + $0x54] sm:$0xf]
  %v49 = vld [vmem:[%s1 + $0x58] sm:$0xf]
  %v50 = vld [vmem:[%s1 + $0x5c] sm:$0xf]
  %v51 = vld [vmem:[%s1 + $0x60] sm:$0xf]
  %v52 = vld [vmem:[%s1 + $0x64] sm:$0xf]
  %v53 = vld [vmem:[%s1 + $0x68] sm:$0xf]
  %v54 = vld [vmem:[%s1 + $0x6c] sm:$0xf]
  %v55 = vld [vmem:[%s1 + $0x70] sm:$0xf]
  %v56 = vld [vmem:[%s1 + $0x74] sm:$0xf]
  %v57 = vld [vmem:[%s1 + $0x78] sm:$0xf]
  %v58 = vld [vmem:[%s1 + $0x7c] sm:$0xf]
  %v59 = vld [vmem:[%s2] sm:$0x1]
  %v61 = vlaneseq
  %v62 = vshrl.u32 %v61, 7
  %v63 = vsub.s32 0, %v62
  %v64 = vrot.slane %v59, %v63
  %v98 = vunpack.c.l.b16 %v27
  %v99 = vunpack.c.l.b16 %v28
  %v100 = vunpack.c.l.b16 %v29
  %v101 = vunpack.c.l.b16 %v30
  %v102 = vunpack.c.l.b16 %v31
  %v103 = vunpack.c.l.b16 %v32
  %v104 = vunpack.c.l.b16 %v33
  %v105 = vunpack.c.l.b16 %v34
  %v106 = vunpack.c.l.b16 %v35
  %v107 = vunpack.c.l.b16 %v36
  %v108 = vunpack.c.l.b16 %v37
  %v109 = vunpack.c.l.b16 %v38
  %v110 = vunpack.c.l.b16 %v39
  %v111 = vunpack.c.l.b16 %v40
  %v112 = vunpack.c.l.b16 %v41
  %v113 = vunpack.c.l.b16 %v42
  %v114 = vunpack.c.l.b16 %v43
  %v115 = vunpack.c.l.b16 %v44
  %v116 = vunpack.c.l.b16 %v45
  %v117 = vunpack.c.l.b16 %v46
  %v118 = vunpack.c.l.b16 %v47
  %v119 = vunpack.c.l.b16 %v48
  %v120 = vunpack.c.l.b16 %v49
  %v121 = vunpack.c.l.b16 %v50
  %v122 = vunpack.c.l.b16 %v51
  %v123 = vunpack.c.l.b16 %v52
  %v124 = vunpack.c.l.b16 %v53
  %v125 = vunpack.c.l.b16 %v54
  %v126 = vunpack.c.l.b16 %v55
  %v127 = vunpack.c.l.b16 %v56
  %v128 = vunpack.c.l.b16 %v57
  %v129 = vunpack.c.l.b16 %v58
  %v130 = vpack.c.b16 %v99, %v98
  %v131 = vpack.c.b16 %v101, %v100
  %v132 = vpack.c.b16 %v103, %v102
  %v133 = vpack.c.b16 %v105, %v104
  %v134 = vpack.c.b16 %v107, %v106
  %v135 = vpack.c.b16 %v109, %v108
  %v136 = vpack.c.b16 %v111, %v110
  %v137 = vpack.c.b16 %v113, %v112
  %v138 = vpack.c.b16 %v115, %v114
  %v139 = vpack.c.b16 %v117, %v116
  %v140 = vpack.c.b16 %v119, %v118
  %v141 = vpack.c.b16 %v121, %v120
  %v142 = vpack.c.b16 %v123, %v122
  %v143 = vpack.c.b16 %v125, %v124
  %v144 = vpack.c.b16 %v127, %v126
  %v145 = vpack.c.b16 %v129, %v128
  %162 = vmatprep.subr.bf16.mxu0 0
  %163 = vmatpush1.bf16.msra.mxu0 %v137
  %164 = vmatprep.subr.bf16.mxu0 0
  %165 = vmatpush1.bf16.msra.mxu0 %v136
  %166 = vmatprep.subr.bf16.mxu0 0
  %167 = vmatpush1.bf16.msra.mxu0 %v135
  %168 = vmatprep.subr.bf16.mxu0 0
  %169 = vmatpush1.bf16.msra.mxu0 %v134
  %170 = vmatprep.subr.bf16.mxu0 0
  %171 = vmatpush1.bf16.msra.mxu0 %v133
  %172 = vmatprep.subr.bf16.mxu0 0
  %173 = vmatpush1.bf16.msra.mxu0 %v132
  %174 = vmatprep.subr.bf16.mxu0 0
  %175 = vmatpush1.bf16.msra.mxu0 %v131
  %176 = vmatprep.subr.bf16.mxu0 0
  %177 = vmatpush1.bf16.msra.mxu0 %v130
  %178 = vmatprep.subr.bf16.mxu0 0
  %179 = vmatpush2.bf16.msra.mxu0 %v145
  %180 = vmatprep.subr.bf16.mxu0 0
  %181 = vmatpush2.bf16.msra.mxu0 %v144
  %182 = vmatprep.subr.bf16.mxu0 0
  %183 = vmatpush2.bf16.msra.mxu0 %v143
  %184 = vmatprep.subr.bf16.mxu0 0
  %185 = vmatpush2.bf16.msra.mxu0 %v142
  %186 = vmatprep.subr.bf16.mxu0 0
  %187 = vmatpush2.bf16.msra.mxu0 %v141
  %188 = vmatprep.subr.bf16.mxu0 0
  %189 = vmatpush2.bf16.msra.mxu0 %v140
  %190 = vmatprep.subr.bf16.mxu0 0
  %191 = vmatpush2.bf16.msra.mxu0 %v139
  %192 = vmatprep.subr.bf16.mxu0 0
  %193 = vmatpush2.bf16.msra.mxu0 %v138
  %194 = vmatprep.mubr.bf16.mxu0 %v24
  %195 = vmatmul.mubr.bf16.gmra.mxu0 %v23
  %v196 = vpop.f32.mrf.mxu0
  %v197 = vadd.f32 %v64, %v196
  %v198 = vpop.f32.mrf.mxu0
  %v199 = vpop.f32.mrf.mxu0
  %v200 = vadd.f32 %v64, %v199
  %v201 = vpop.f32.mrf.mxu0
  %202 = vmatprep.mubr.bf16.mxu0 %v26
  %203 = vmatmul.mubr.bf16.gmra.mxu0 %v25
  %v204 = vpop.f32.mrf.mxu0
  %v205 = vadd.f32 %v64, %v204
  %v206 = vpop.f32.mrf.mxu0
  %v207 = vpop.f32.mrf.mxu0
  %v208 = vadd.f32 %v64, %v207
  %v209 = vpop.f32.mrf.mxu0
  %210 = vdwg.mxu0
  %v211 = vmax.f32 %v197, 0.0
  %v212 = vmax.f32 %v200, 0.0
  %v213 = vmax.f32 %v205, 0.0
  %v214 = vmax.f32 %v208, 0.0
  %215 = vst [vmem:[%s3] sm:$0xff] %v211
  %216 = vst [vmem:[%s3 + $0x8] sm:$0xff] %v212
  %217 = vst [vmem:[%s3 + $0x10] sm:$0xff] %v213
  %218 = vst [vmem:[%s3 + $0x18] sm:$0xff] %v214
  // Predicated region
  $region14: #{forward.100} parent=0 // pred_check
    _
  $region15: #{forward.100} parent=0 // pred_check_branch
    %220 = sbr.rel (0) target = $region17
  $region16: #{forward.100} parent=0 // pred_region
    _
  $region17: #{forward.100} parent=0 // pred_fallthru
    _
  // Predicated region
  $region18: #{forward.100} parent=0 // pred_check
    _
  $region19: #{forward.100} parent=0 // pred_check_branch
    %222 = sbr.rel (0) target = $region21
  $region20: #{forward.100} parent=0 // pred_region
    _
  $region21: #{forward.100} parent=0 // pred_fallthru
    _

// kernel: forward.90
$region0: #{forward.90}
  #allocation0 [shape = 'u32[]', space=smem, size = 0x4, offset = 0x4, fixed_abs, tag = 'smem constant byte address 0x4 - core index']
  #allocation1 [shape = 'u32[144,128]{1,0:T(1,128)}', space=vmem, size = 0x12000, scoped, tag = 'internal scratch']
  %s0 = inlined_call_operand.vmem [shape: f32[32,256], index: 0, kind: input, shape index: {}]
  %s1 = inlined_call_operand.vmem [shape: bf16[256,64], index: 1, kind: input, shape index: {}]
  %s2 = inlined_call_operand.hbm [shape: f32[1,64], index: 2, kind: input, shape index: {}]
  %s3 = inlined_call_operand.vmem [shape: f32[32,64], index: 3, kind: output, shape index: {}]
  %s4 = sld [smem:[#allocation0]]
  $region26: #{forward.90} parent=0
    _
  %s6 = ssub.s32 1, %s4
  %s7 = scalar_select 0, %s6, %s4
  $region1: #{forward.90} parent=0
    #allocation2 [shape = 'u8[512]{0}', space=vmem, size = 0x400, scoped, tag = 'input window, operand 2, single buffered']
    #allocation3 [shape = 's32[1]{0}', space=sflag, size = 0x4, scoped, tag = 'scoped memory for forward.90']
    %8 = vsyncpa [#allocation3], 0
    // Predicated region
    $region2: #{forward.90} parent=1 // pred_check
      _
    $region3: #{forward.90} parent=1 // pred_check_branch
      %10 = sbr.rel (0) target = $region5
    $region4: #{forward.90} parent=1 // pred_region
      _
    $region5: #{forward.90} parent=1 // pred_fallthru
      _
    // Predicated region
    $region6: #{forward.90} parent=1 // pred_check
      _
    $region7: #{forward.90} parent=1 // pred_check_branch
      %12 = sbr.rel (0) target = $region9
    $region8: #{forward.90} parent=1 // pred_region
      _
    $region9: #{forward.90} parent=1 // pred_fallthru
      _
    // Predicated region
    $region10: #{forward.90} parent=1 // pred_check
      _
    $region11: #{forward.90} parent=1 // pred_check_branch
      %14 = sbr.rel (0) target = $region13
    $region12: #{forward.90} parent=1 // pred_region
      %s16 = ssub.s32 16, 16
      %17 = vsyncadd [#allocation3], %s16
      %s19 = sshll.u32 [#allocation2], 4
      %s20 = int_to_ptr.vmem [resolvable:$true] %s19
      %22 = dma.hbm_to_vmem [thread:$0]  %s2, 16, %s20, [#allocation3]
    $region13: #{forward.90} parent=1 // pred_fallthru
      _
    // Predicated region
    $region14: #{forward.90} parent=1 // pred_check
      _
    $region15: #{forward.90} parent=1 // pred_check_branch
      %24 = sbr.rel (0) target = $region17
    $region16: #{forward.90} parent=1 // pred_region
      %25 = dma.done [#allocation3], 16
    $region17: #{forward.90} parent=1 // pred_fallthru
      _
    %v27 = vld [vmem:[%s0] sm:$0xff]
    %v28 = vld [vmem:[%s0 + $0x8] sm:$0xff]
    %v29 = vld [vmem:[%s0 + $0x10] sm:$0xff]
    %v30 = vld [vmem:[%s0 + $0x18] sm:$0xff]
    %v31 = vld [vmem:[%s0 + $0x20] sm:$0xff]
    %v32 = vld [vmem:[%s0 + $0x28] sm:$0xff]
    %v33 = vld [vmem:[%s0 + $0x30] sm:$0xff]
    %v34 = vld [vmem:[%s0 + $0x38] sm:$0xff]
    %v35 = vpack.c.bf16 %v29, %v27
    %v36 = vpack.c.bf16 %v30, %v28
    %v37 = vpack.c.bf16 %v33, %v31
    %v38 = vpack.c.bf16 %v34, %v32
    %v39 = vld [vmem:[%s1] sm:$0xf]
    %v40 = vld [vmem:[%s1 + $0x4] sm:$0xf]
    %v41 = vld [vmem:[%s1 + $0x8] sm:$0xf]
    %v42 = vld [vmem:[%s1 + $0xc] sm:$0xf]
    %v43 = vld [vmem:[%s1 + $0x10] sm:$0xf]
    %v44 = vld [vmem:[%s1 + $0x14] sm:$0xf]
    %v45 = vld [vmem:[%s1 + $0x18] sm:$0xf]
    %v46 = vld [vmem:[%s1 + $0x1c] sm:$0xf]
    %v47 = vld [vmem:[%s1 + $0x20] sm:$0xf]
    %v48 = vld [vmem:[%s1 + $0x24] sm:$0xf]
    %v49 = vld [vmem:[%s1 + $0x28] sm:$0xf]
    %v50 = vld [vmem:[%s1 + $0x2c] sm:$0xf]
    %v51 = vld [vmem:[%s1 + $0x30] sm:$0xf]
    %v52 = vld [vmem:[%s1 + $0x34] sm:$0xf]
    %v53 = vld [vmem:[%s1 + $0x38] sm:$0xf]
    %v54 = vld [vmem:[%s1 + $0x3c] sm:$0xf]
    %v55 = vld [vmem:[%s1 + $0x40] sm:$0xf]
    %v56 = vld [vmem:[%s1 + $0x44] sm:$0xf]
    %v57 = vld [vmem:[%s1 + $0x48] sm:$0xf]
    %v58 = vld [vmem:[%s1 + $0x4c] sm:$0xf]
    %v59 = vld [vmem:[%s1 + $0x50] sm:$0xf]
    %v60 = vld [vmem:[%s1 + $0x54] sm:$0xf]
    %v61 = vld [vmem:[%s1 + $0x58] sm:$0xf]
    %v62 = vld [vmem:[%s1 + $0x5c] sm:$0xf]
    %v63 = vld [vmem:[%s1 + $0x60] sm:$0xf]
    %v64 = vld [vmem:[%s1 + $0x64] sm:$0xf]
    %v65 = vld [vmem:[%s1 + $0x68] sm:$0xf]
    %v66 = vld [vmem:[%s1 + $0x6c] sm:$0xf]
    %v67 = vld [vmem:[%s1 + $0x70] sm:$0xf]
    %v68 = vld [vmem:[%s1 + $0x74] sm:$0xf]
    %v69 = vld [vmem:[%s1 + $0x78] sm:$0xf]
    %v70 = vld [vmem:[%s1 + $0x7c] sm:$0xf]
    %v71 = vld [vmem:[#allocation2] sm:$0x1]
    %v73 = vlaneseq
    %v74 = vshrl.u32 %v73, 7
    %v75 = vsub.s32 0, %v74
    %v76 = vrot.slane %v71, %v75
    %v110 = vunpack.c.l.b16 %v39
    %v111 = vunpack.c.l.b16 %v40
    %v112 = vunpack.c.l.b16 %v41
    %v113 = vunpack.c.l.b16 %v42
    %v114 = vunpack.c.l.b16 %v43
    %v115 = vunpack.c.l.b16 %v44
    %v116 = vunpack.c.l.b16 %v45
    %v117 = vunpack.c.l.b16 %v46
    %v118 = vunpack.c.l.b16 %v47
    %v119 = vunpack.c.l.b16 %v48
    %v120 = vunpack.c.l.b16 %v49
    %v121 = vunpack.c.l.b16 %v50
    %v122 = vunpack.c.l.b16 %v51
    %v123 = vunpack.c.l.b16 %v52
    %v124 = vunpack.c.l.b16 %v53
    %v125 = vunpack.c.l.b16 %v54
    %v126 = vunpack.c.l.b16 %v55
    %v127 = vunpack.c.l.b16 %v56
    %v128 = vunpack.c.l.b16 %v57
    %v129 = vunpack.c.l.b16 %v58
    %v130 = vunpack.c.l.b16 %v59
    %v131 = vunpack.c.l.b16 %v60
    %v132 = vunpack.c.l.b16 %v61
    %v133 = vunpack.c.l.b16 %v62
    %v134 = vunpack.c.l.b16 %v63
    %v135 = vunpack.c.l.b16 %v64
    %v136 = vunpack.c.l.b16 %v65
    %v137 = vunpack.c.l.b16 %v66
    %v138 = vunpack.c.l.b16 %v67
    %v139 = vunpack.c.l.b16 %v68
    %v140 = vunpack.c.l.b16 %v69
    %v141 = vunpack.c.l.b16 %v70
    %v142 = vpack.c.b16 %v111, %v110
    %v143 = vpack.c.b16 %v113, %v112
    %v144 = vpack.c.b16 %v115, %v114
    %v145 = vpack.c.b16 %v117, %v116
    %v146 = vpack.c.b16 %v119, %v118
    %v147 = vpack.c.b16 %v121, %v120
    %v148 = vpack.c.b16 %v123, %v122
    %v149 = vpack.c.b16 %v125, %v124
    %v150 = vpack.c.b16 %v127, %v126
    %v151 = vpack.c.b16 %v129, %v128
    %v152 = vpack.c.b16 %v131, %v130
    %v153 = vpack.c.b16 %v133, %v132
    %v154 = vpack.c.b16 %v135, %v134
    %v155 = vpack.c.b16 %v137, %v136
    %v156 = vpack.c.b16 %v139, %v138
    %v157 = vpack.c.b16 %v141, %v140
    %174 = vmatprep.subr.bf16.mxu0 0
    %175 = vmatpush1.bf16.msra.mxu0 %v149
    %176 = vmatprep.subr.bf16.mxu0 0
    %177 = vmatpush1.bf16.msra.mxu0 %v148
    %178 = vmatprep.subr.bf16.mxu0 0
    %179 = vmatpush1.bf16.msra.mxu0 %v147
    %180 = vmatprep.subr.bf16.mxu0 0
    %181 = vmatpush1.bf16.msra.mxu0 %v146
    %182 = vmatprep.subr.bf16.mxu0 0
    %183 = vmatpush1.bf16.msra.mxu0 %v145
    %184 = vmatprep.subr.bf16.mxu0 0
    %185 = vmatpush1.bf16.msra.mxu0 %v144
    %186 = vmatprep.subr.bf16.mxu0 0
    %187 = vmatpush1.bf16.msra.mxu0 %v143
    %188 = vmatprep.subr.bf16.mxu0 0
    %189 = vmatpush1.bf16.msra.mxu0 %v142
    %190 = vmatprep.subr.bf16.mxu0 0
    %191 = vmatpush2.bf16.msra.mxu0 %v157
    %192 = vmatprep.subr.bf16.mxu0 0
    %193 = vmatpush2.bf16.msra.mxu0 %v156
    %194 = vmatprep.subr.bf16.mxu0 0
    %195 = vmatpush2.bf16.msra.mxu0 %v155
    %196 = vmatprep.subr.bf16.mxu0 0
    %197 = vmatpush2.bf16.msra.mxu0 %v154
    %198 = vmatprep.subr.bf16.mxu0 0
    %199 = vmatpush2.bf16.msra.mxu0 %v153
    %200 = vmatprep.subr.bf16.mxu0 0
    %201 = vmatpush2.bf16.msra.mxu0 %v152
    %202 = vmatprep.subr.bf16.mxu0 0
    %203 = vmatpush2.bf16.msra.mxu0 %v151
    %204 = vmatprep.subr.bf16.mxu0 0
    %205 = vmatpush2.bf16.msra.mxu0 %v150
    %206 = vmatprep.mubr.bf16.mxu0 %v36
    %207 = vmatmul.mubr.bf16.gmra.mxu0 %v35
    %v208 = vpop.f32.mrf.mxu0
    %v209 = vadd.f32 %v76, %v208
    %v210 = vpop.f32.mrf.mxu0
    %v211 = vpop.f32.mrf.mxu0
    %v212 = vadd.f32 %v76, %v211
    %v213 = vpop.f32.mrf.mxu0
    %214 = vmatprep.mubr.bf16.mxu0 %v38
    %215 = vmatmul.mubr.bf16.gmra.mxu0 %v37
    %v216 = vpop.f32.mrf.mxu0
    %v217 = vadd.f32 %v76, %v216
    %v218 = vpop.f32.mrf.mxu0
    %v219 = vpop.f32.mrf.mxu0
    %v220 = vadd.f32 %v76, %v219
    %v221 = vpop.f32.mrf.mxu0
    %222 = vdwg.mxu0
    %v223 = vmax.f32 %v209, 0.0
    %v224 = vmax.f32 %v212, 0.0
    %v225 = vmax.f32 %v217, 0.0
    %v226 = vmax.f32 %v220, 0.0
    %vm227 = vcmask 523264
    %228 = vst.msk [vmem:[%s3] sm:$0xff] %vm227, %v223
    %229 = vst.msk [vmem:[%s3 + $0x8] sm:$0xff] %vm227, %v224
    %230 = vst.msk [vmem:[%s3 + $0x10] sm:$0xff] %vm227, %v225
    %231 = vst.msk [vmem:[%s3 + $0x18] sm:$0xff] %vm227, %v226
    // Predicated region
    $region18: #{forward.90} parent=1 // pred_check
      _
    $region19: #{forward.90} parent=1 // pred_check_branch
      %233 = sbr.rel (0) target = $region21
    $region20: #{forward.90} parent=1 // pred_region
      _
    $region21: #{forward.90} parent=1 // pred_fallthru
      _
    // Predicated region
    $region22: #{forward.90} parent=1 // pred_check
      _
    $region23: #{forward.90} parent=1 // pred_check_branch
      %235 = sbr.rel (0) target = $region25
    $region24: #{forward.90} parent=1 // pred_region
      _
    $region25: #{forward.90} parent=1 // pred_fallthru
      _
    %236 = vsyncpa [#allocation3], 1

// kernel: forward.101
$region0: #{forward.101}
  #allocation0 [shape = 'u32[]', space=smem, size = 0x4, offset = 0x4, fixed_abs, tag = 'smem constant byte address 0x4 - core index']
  #allocation1 [shape = 'u32[144,128]{1,0:T(1,128)}', space=vmem, size = 0x12000, scoped, tag = 'internal scratch']
  %s0 = inlined_call_operand.vmem [shape: bf16[8,1152], index: 0, kind: input, shape index: {}]
  %s1 = inlined_call_operand.vmem [shape: bf16[1152,128], index: 1, kind: input, shape index: {}]
  %s2 = inlined_call_operand.vmem [shape: f32[1,128], index: 2, kind: input, shape index: {}]
  %s3 = inlined_call_operand.vmem [shape: f32[8,128], index: 3, kind: output, shape index: {}]
  %s4 = sld [smem:[#allocation0]]
  $region22: #{forward.101} parent=0
    _
  %s6 = ssub.s32 1, %s4
  %s7 = scalar_select 0, %s6, %s4
  // Predicated region
  $region2: #{forward.101} parent=0 // pred_check
    _
  $region3: #{forward.101} parent=0 // pred_check_branch
    %9 = sbr.rel (0) target = $region5
  $region4: #{forward.101} parent=0 // pred_region
    _
  $region5: #{forward.101} parent=0 // pred_fallthru
    _
  // Predicated region
  $region6: #{forward.101} parent=0 // pred_check
    _
  $region7: #{forward.101} parent=0 // pred_check_branch
    %11 = sbr.rel (0) target = $region9
  $region8: #{forward.101} parent=0 // pred_region
    _
  $region9: #{forward.101} parent=0 // pred_fallthru
    _
  // Predicated region
  $region10: #{forward.101} parent=0 // pred_check
    _
  $region11: #{forward.101} parent=0 // pred_check_branch
    %13 = sbr.rel (0) target = $region13
  $region12: #{forward.101} parent=0 // pred_region
    _
  $region13: #{forward.101} parent=0 // pred_fallthru
    _
  %v15 = vld [vmem:[%s0] sm:$0xff]
  %v16 = vld [vmem:[%s0 + $0x8] sm:$0xff]
  %v17 = vld [vmem:[%s0 + $0x10] sm:$0xff]
  %v18 = vld [vmem:[%s0 + $0x18] sm:$0xff]
  %v19 = vld [vmem:[%s0 + $0x20] sm:$0xf]
  %v20 = vld [vmem:[%s1] sm:$0xf]
  %v21 = vld [vmem:[%s1 + $0x4] sm:$0xf]
  %v22 = vld [vmem:[%s1 + $0x8] sm:$0xf]
  %v23 = vld [vmem:[%s1 + $0xc] sm:$0xf]
  %v24 = vld [vmem:[%s1 + $0x10] sm:$0xf]
  %v25 = vld [vmem:[%s1 + $0x14] sm:$0xf]
  %v26 = vld [vmem:[%s1 + $0x18] sm:$0xf]
  %v27 = vld [vmem:[%s1 + $0x1c] sm:$0xf]
  %v28 = vld [vmem:[%s1 + $0x20] sm:$0xf]
  %v29 = vld [vmem:[%s1 + $0x24] sm:$0xf]
  %v30 = vld [vmem:[%s1 + $0x28] sm:$0xf]
  %v31 = vld [vmem:[%s1 + $0x2c] sm:$0xf]
  %v32 = vld [vmem:[%s1 + $0x30] sm:$0xf]
  %v33 = vld [vmem:[%s1 + $0x34] sm:$0xf]
  %v34 = vld [vmem:[%s1 + $0x38] sm:$0xf]
  %v35 = vld [vmem:[%s1 + $0x3c] sm:$0xf]
  %v36 = vld [vmem:[%s1 + $0x40] sm:$0xf]
  %v37 = vld [vmem:[%s1 + $0x44] sm:$0xf]
  %v38 = vld [vmem:[%s1 + $0x48] sm:$0xf]
  %v39 = vld [vmem:[%s1 + $0x4c] sm:$0xf]
  %v40 = vld [vmem:[%s1 + $0x50] sm:$0xf]
  %v41 = vld [vmem:[%s1 + $0x54] sm:$0xf]
  %v42 = vld [vmem:[%s1 + $0x58] sm:$0xf]
  %v43 = vld [vmem:[%s1 + $0x5c] sm:$0xf]
  %v44 = vld [vmem:[%s1 + $0x60] sm:$0xf]
  %v45 = vld [vmem:[%s1 + $0x64] sm:$0xf]
  %v46 = vld [vmem:[%s1 + $0x68] sm:$0xf]
  %v47 = vld [vmem:[%s1 + $0x6c] sm:$0xf]
  %v48 = vld [vmem:[%s1 + $0x70] sm:$0xf]
  %v49 = vld [vmem:[%s1 + $0x74] sm:$0xf]
  %v50 = vld [vmem:[%s1 + $0x78] sm:$0xf]
  %v51 = vld [vmem:[%s1 + $0x7c] sm:$0xf]
  %v52 = vld [vmem:[%s1 + $0x80] sm:$0xf]
  %v53 = vld [vmem:[%s1 + $0x84] sm:$0xf]
  %v54 = vld [vmem:[%s1 + $0x88] sm:$0xf]
  %v55 = vld [vmem:[%s1 + $0x8c] sm:$0xf]
  %v56 = vld [vmem:[%s1 + $0x90] sm:$0xf]
  %v57 = vld [vmem:[%s1 + $0x94] sm:$0xf]
  %v58 = vld [vmem:[%s1 + $0x98] sm:$0xf]
  %v59 = vld [vmem:[%s1 + $0x9c] sm:$0xf]
  %v60 = vld [vmem:[%s1 + $0xa0] sm:$0xf]
  %v61 = vld [vmem:[%s1 + $0xa4] sm:$0xf]
  %v62 = vld [vmem:[%s1 + $0xa8] sm:$0xf]
  %v63 = vld [vmem:[%s1 + $0xac] sm:$0xf]
  %v64 = vld [vmem:[%s1 + $0xb0] sm:$0xf]
  %v65 = vld [vmem:[%s1 + $0xb4] sm:$0xf]
  %v66 = vld [vmem:[%s1 + $0xb8] sm:$0xf]
  %v67 = vld [vmem:[%s1 + $0xbc] sm:$0xf]
  %v68 = vld [vmem:[%s1 + $0xc0] sm:$0xf]
  %v69 = vld [vmem:[%s1 + $0xc4] sm:$0xf]
  %v70 = vld [vmem:[%s1 + $0xc8] sm:$0xf]
  %v71 = vld [vmem:[%s1 + $0xcc] sm:$0xf]
  %v72 = vld [vmem:[%s1 + $0xd0] sm:$0xf]
  %v73 = vld [vmem:[%s1 + $0xd4] sm:$0xf]
  %v74 = vld [vmem:[%s1 + $0xd8] sm:$0xf]
  %v75 = vld [vmem:[%s1 + $0xdc] sm:$0xf]
  %v76 = vld [vmem:[%s1 + $0xe0] sm:$0xf]
  %v77 = vld [vmem:[%s1 + $0xe4] sm:$0xf]
  %v78 = vld [vmem:[%s1 + $0xe8] sm:$0xf]
  %v79 = vld [vmem:[%s1 + $0xec] sm:$0xf]
  %v80 = vld [vmem:[%s1 + $0xf0] sm:$0xf]
  %v81 = vld [vmem:[%s1 + $0xf4] sm:$0xf]
  %v82 = vld [vmem:[%s1 + $0xf8] sm:$0xf]
  %v83 = vld [vmem:[%s1 + $0xfc] sm:$0xf]
  %v84 = vld [vmem:[%s1 + $0x100] sm:$0xf]
  %v85 = vld [vmem:[%s1 + $0x104] sm:$0xf]
  %v86 = vld [vmem:[%s1 + $0x108] sm:$0xf]
  %v87 = vld [vmem:[%s1 + $0x10c] sm:$0xf]
  %v88 = vld [vmem:[%s1 + $0x110] sm:$0xf]
  %v89 = vld [vmem:[%s1 + $0x114] sm:$0xf]
  %v90 = vld [vmem:[%s1 + $0x118] sm:$0xf]
  %v91 = vld [vmem:[%s1 + $0x11c] sm:$0xf]
  %v92 = vld [vmem:[%s1 + $0x120] sm:$0xf]
  %v93 = vld [vmem:[%s1 + $0x124] sm:$0xf]
  %v94 = vld [vmem:[%s1 + $0x128] sm:$0xf]
  %v95 = vld [vmem:[%s1 + $0x12c] sm:$0xf]
  %v96 = vld [vmem:[%s1 + $0x130] sm:$0xf]
  %v97 = vld [vmem:[%s1 + $0x134] sm:$0xf]
  %v98 = vld [vmem:[%s1 + $0x138] sm:$0xf]
  %v99 = vld [vmem:[%s1 + $0x13c] sm:$0xf]
  %v100 = vld [vmem:[%s1 + $0x140] sm:$0xf]
  %v101 = vld [vmem:[%s1 + $0x144] sm:$0xf]
  %v102 = vld [vmem:[%s1 + $0x148] sm:$0xf]
  %v103 = vld [vmem:[%s1 + $0x14c] sm:$0xf]
  %v104 = vld [vmem:[%s1 + $0x150] sm:$0xf]
  %v105 = vld [vmem:[%s1 + $0x154] sm:$0xf]
  %v106 = vld [vmem:[%s1 + $0x158] sm:$0xf]
  %v107 = vld [vmem:[%s1 + $0x15c] sm:$0xf]
  %v108 = vld [vmem:[%s1 + $0x160] sm:$0xf]
  %v109 = vld [vmem:[%s1 + $0x164] sm:$0xf]
  %v110 = vld [vmem:[%s1 + $0x168] sm:$0xf]
  %v111 = vld [vmem:[%s1 + $0x16c] sm:$0xf]
  %v112 = vld [vmem:[%s1 + $0x170] sm:$0xf]
  %v113 = vld [vmem:[%s1 + $0x174] sm:$0xf]
  %v114 = vld [vmem:[%s1 + $0x178] sm:$0xf]
  %v115 = vld [vmem:[%s1 + $0x17c] sm:$0xf]
  %v116 = vld [vmem:[%s1 + $0x180] sm:$0xf]
  %v117 = vld [vmem:[%s1 + $0x184] sm:$0xf]
  %v118 = vld [vmem:[%s1 + $0x188] sm:$0xf]
  %v119 = vld [vmem:[%s1 + $0x18c] sm:$0xf]
  %v120 = vld [vmem:[%s1 + $0x190] sm:$0xf]
  %v121 = vld [vmem:[%s1 + $0x194] sm:$0xf]
  %v122 = vld [vmem:[%s1 + $0x198] sm:$0xf]
  %v123 = vld [vmem:[%s1 + $0x19c] sm:$0xf]
  %v124 = vld [vmem:[%s1 + $0x1a0] sm:$0xf]
  %v125 = vld [vmem:[%s1 + $0x1a4] sm:$0xf]
  %v126 = vld [vmem:[%s1 + $0x1a8] sm:$0xf]
  %v127 = vld [vmem:[%s1 + $0x1ac] sm:$0xf]
  %v128 = vld [vmem:[%s1 + $0x1b0] sm:$0xf]
  %v129 = vld [vmem:[%s1 + $0x1b4] sm:$0xf]
  %v130 = vld [vmem:[%s1 + $0x1b8] sm:$0xf]
  %v131 = vld [vmem:[%s1 + $0x1bc] sm:$0xf]
  %v132 = vld [vmem:[%s1 + $0x1c0] sm:$0xf]
  %v133 = vld [vmem:[%s1 + $0x1c4] sm:$0xf]
  %v134 = vld [vmem:[%s1 + $0x1c8] sm:$0xf]
  %v135 = vld [vmem:[%s1 + $0x1cc] sm:$0xf]
  %v136 = vld [vmem:[%s1 + $0x1d0] sm:$0xf]
  %v137 = vld [vmem:[%s1 + $0x1d4] sm:$0xf]
  %v138 = vld [vmem:[%s1 + $0x1d8] sm:$0xf]
  %v139 = vld [vmem:[%s1 + $0x1dc] sm:$0xf]
  %v140 = vld [vmem:[%s1 + $0x1e0] sm:$0xf]
  %v141 = vld [vmem:[%s1 + $0x1e4] sm:$0xf]
  %v142 = vld [vmem:[%s1 + $0x1e8] sm:$0xf]
  %v143 = vld [vmem:[%s1 + $0x1ec] sm:$0xf]
  %v144 = vld [vmem:[%s1 + $0x1f0] sm:$0xf]
  %v145 = vld [vmem:[%s1 + $0x1f4] sm:$0xf]
  %v146 = vld [vmem:[%s1 + $0x1f8] sm:$0xf]
  %v147 = vld [vmem:[%s1 + $0x1fc] sm:$0xf]
  %v148 = vld [vmem:[%s1 + $0x200] sm:$0xf]
  %v149 = vld [vmem:[%s1 + $0x204] sm:$0xf]
  %v150 = vld [vmem:[%s1 + $0x208] sm:$0xf]
  %v151 = vld [vmem:[%s1 + $0x20c] sm:$0xf]
  %v152 = vld [vmem:[%s1 + $0x210] sm:$0xf]
  %v153 = vld [vmem:[%s1 + $0x214] sm:$0xf]
  %v154 = vld [vmem:[%s1 + $0x218] sm:$0xf]
  %v155 = vld [vmem:[%s1 + $0x21c] sm:$0xf]
  %v156 = vld [vmem:[%s1 + $0x220] sm:$0xf]
  %v157 = vld [vmem:[%s1 + $0x224] sm:$0xf]
  %v158 = vld [vmem:[%s1 + $0x228] sm:$0xf]
  %v159 = vld [vmem:[%s1 + $0x22c] sm:$0xf]
  %v160 = vld [vmem:[%s1 + $0x230] sm:$0xf]
  %v161 = vld [vmem:[%s1 + $0x234] sm:$0xf]
  %v162 = vld [vmem:[%s1 + $0x238] sm:$0xf]
  %v163 = vld [vmem:[%s1 + $0x23c] sm:$0xf]
  %v164 = vld [vmem:[%s2] sm:$0x1]
  %v166 = vlaneseq
  %v167 = vshrl.u32 %v166, 7
  %v168 = vsub.s32 0, %v167
  %v169 = vrot.slane %v164, %v168
  %v176 = vunpack.c.l.b16 %v15
  %v177 = vunpack.c.h.b16 %v15
  %v178 = vunpack.c.l.b16 %v16
  %v179 = vunpack.c.h.b16 %v16
  %v180 = vunpack.c.l.b16 %v17
  %v181 = vunpack.c.h.b16 %v17
  %v182 = vunpack.c.l.b16 %v18
  %v183 = vunpack.c.h.b16 %v18
  %v184 = vunpack.c.l.b16 %v19
  %v185 = vpack.c.b16 %v176, %v176
  %v186 = vpack.c.b16 %v177, %v177
  %v187 = vpack.c.b16 %v178, %v178
  %v188 = vpack.c.b16 %v179, %v179
  %v189 = vpack.c.b16 %v180, %v180
  %v190 = vpack.c.b16 %v181, %v181
  %v191 = vpack.c.b16 %v182, %v182
  %v192 = vpack.c.b16 %v183, %v183
  %v193 = vpack.c.b16 %v184, %v184
  %v347 = vunpack.c.l.b16 %v20
  %v348 = vunpack.c.l.b16 %v21
  %v349 = vunpack.c.l.b16 %v22
  %v350 = vunpack.c.l.b16 %v23
  %v351 = vunpack.c.l.b16 %v24
  %v352 = vunpack.c.l.b16 %v25
  %v353 = vunpack.c.l.b16 %v26
  %v354 = vunpack.c.l.b16 %v27
  %v355 = vunpack.c.l.b16 %v28
  %v356 = vunpack.c.l.b16 %v29
  %v357 = vunpack.c.l.b16 %v30
  %v358 = vunpack.c.l.b16 %v31
  %v359 = vunpack.c.l.b16 %v32
  %v360 = vunpack.c.l.b16 %v33
  %v361 = vunpack.c.l.b16 %v34
  %v362 = vunpack.c.l.b16 %v35
  %v363 = vunpack.c.l.b16 %v36
  %v364 = vunpack.c.l.b16 %v37
  %v365 = vunpack.c.l.b16 %v38
  %v366 = vunpack.c.l.b16 %v39
  %v367 = vunpack.c.l.b16 %v40
  %v368 = vunpack.c.l.b16 %v41
  %v369 = vunpack.c.l.b16 %v42
  %v370 = vunpack.c.l.b16 %v43
  %v371 = vunpack.c.l.b16 %v44
  %v372 = vunpack.c.l.b16 %v45
  %v373 = vunpack.c.l.b16 %v46
  %v374 = vunpack.c.l.b16 %v47
  %v375 = vunpack.c.l.b16 %v48
  %v376 = vunpack.c.l.b16 %v49
  %v377 = vunpack.c.l.b16 %v50
  %v378 = vunpack.c.l.b16 %v51
  %v379 = vunpack.c.l.b16 %v52
  %v380 = vunpack.c.l.b16 %v53
  %v381 = vunpack.c.l.b16 %v54
  %v382 = vunpack.c.l.b16 %v55
  %v383 = vunpack.c.l.b16 %v56
  %v384 = vunpack.c.l.b16 %v57
  %v385 = vunpack.c.l.b16 %v58
  %v386 = vunpack.c.l.b16 %v59
  %v387 = vunpack.c.l.b16 %v60
  %v388 = vunpack.c.l.b16 %v61
  %v389 = vunpack.c.l.b16 %v62
  %v390 = vunpack.c.l.b16 %v63
  %v391 = vunpack.c.l.b16 %v64
  %v392 = vunpack.c.l.b16 %v65
  %v393 = vunpack.c.l.b16 %v66
  %v394 = vunpack.c.l.b16 %v67
  %v395 = vunpack.c.l.b16 %v68
  %v396 = vunpack.c.l.b16 %v69
  %v397 = vunpack.c.l.b16 %v70
  %v398 = vunpack.c.l.b16 %v71
  %v399 = vunpack.c.l.b16 %v72
  %v400 = vunpack.c.l.b16 %v73
  %v401 = vunpack.c.l.b16 %v74
  %v402 = vunpack.c.l.b16 %v75
  %v403 = vunpack.c.l.b16 %v76
  %v404 = vunpack.c.l.b16 %v77
  %v405 = vunpack.c.l.b16 %v78
  %v406 = vunpack.c.l.b16 %v79
  %v407 = vunpack.c.l.b16 %v80
  %v408 = vunpack.c.l.b16 %v81
  %v409 = vunpack.c.l.b16 %v82
  %v410 = vunpack.c.l.b16 %v83
  %v411 = vunpack.c.l.b16 %v84
  %v412 = vunpack.c.l.b16 %v85
  %v413 = vunpack.c.l.b16 %v86
  %v414 = vunpack.c.l.b16 %v87
  %v415 = vunpack.c.l.b16 %v88
  %v416 = vunpack.c.l.b16 %v89
  %v417 = vunpack.c.l.b16 %v90
  %v418 = vunpack.c.l.b16 %v91
  %v419 = vunpack.c.l.b16 %v92
  %v420 = vunpack.c.l.b16 %v93
  %v421 = vunpack.c.l.b16 %v94
  %v422 = vunpack.c.l.b16 %v95
  %v423 = vunpack.c.l.b16 %v96
  %v424 = vunpack.c.l.b16 %v97
  %v425 = vunpack.c.l.b16 %v98
  %v426 = vunpack.c.l.b16 %v99
  %v427 = vunpack.c.l.b16 %v100
  %v428 = vunpack.c.l.b16 %v101
  %v429 = vunpack.c.l.b16 %v102
  %v430 = vunpack.c.l.b16 %v103
  %v431 = vunpack.c.l.b16 %v104
  %v432 = vunpack.c.l.b16 %v105
  %v433 = vunpack.c.l.b16 %v106
  %v434 = vunpack.c.l.b16 %v107
  %v435 = vunpack.c.l.b16 %v108
  %v436 = vunpack.c.l.b16 %v109
  %v437 = vunpack.c.l.b16 %v110
  %v438 = vunpack.c.l.b16 %v111
  %v439 = vunpack.c.l.b16 %v112
  %v440 = vunpack.c.l.b16 %v113
  %v441 = vunpack.c.l.b16 %v114
  %v442 = vunpack.c.l.b16 %v115
  %v443 = vunpack.c.l.b16 %v116
  %v444 = vunpack.c.l.b16 %v117
  %v445 = vunpack.c.l.b16 %v118
  %v446 = vunpack.c.l.b16 %v119
  %v447 = vunpack.c.l.b16 %v120
  %v448 = vunpack.c.l.b16 %v121
  %v449 = vunpack.c.l.b16 %v122
  %v450 = vunpack.c.l.b16 %v123
  %v451 = vunpack.c.l.b16 %v124
  %v452 = vunpack.c.l.b16 %v125
  %v453 = vunpack.c.l.b16 %v126
  %v454 = vunpack.c.l.b16 %v127
  %v455 = vunpack.c.l.b16 %v128
  %v456 = vunpack.c.l.b16 %v129
  %v457 = vunpack.c.l.b16 %v130
  %v458 = vunpack.c.l.b16 %v131
  %v459 = vunpack.c.l.b16 %v132
  %v460 = vunpack.c.l.b16 %v133
  %v461 = vunpack.c.l.b16 %v134
  %v462 = vunpack.c.l.b16 %v135
  %v463 = vunpack.c.l.b16 %v136
  %v464 = vunpack.c.l.b16 %v137
  %v465 = vunpack.c.l.b16 %v138
  %v466 = vunpack.c.l.b16 %v139
  %v467 = vunpack.c.l.b16 %v140
  %v468 = vunpack.c.l.b16 %v141
  %v469 = vunpack.c.l.b16 %v142
  %v470 = vunpack.c.l.b16 %v143
  %v471 = vunpack.c.l.b16 %v144
  %v472 = vunpack.c.l.b16 %v145
  %v473 = vunpack.c.l.b16 %v146
  %v474 = vunpack.c.l.b16 %v147
  %v475 = vunpack.c.l.b16 %v148
  %v476 = vunpack.c.l.b16 %v149
  %v477 = vunpack.c.l.b16 %v150
  %v478 = vunpack.c.l.b16 %v151
  %v479 = vunpack.c.l.b16 %v152
  %v480 = vunpack.c.l.b16 %v153
  %v481 = vunpack.c.l.b16 %v154
  %v482 = vunpack.c.l.b16 %v155
  %v483 = vunpack.c.l.b16 %v156
  %v484 = vunpack.c.l.b16 %v157
  %v485 = vunpack.c.l.b16 %v158
  %v486 = vunpack.c.l.b16 %v159
  %v487 = vunpack.c.l.b16 %v160
  %v488 = vunpack.c.l.b16 %v161
  %v489 = vunpack.c.l.b16 %v162
  %v490 = vunpack.c.l.b16 %v163
  %v491 = vpack.c.b16 %v348, %v347
  %v492 = vpack.c.b16 %v350, %v349
  %v493 = vpack.c.b16 %v352, %v351
  %v494 = vpack.c.b16 %v354, %v353
  %v495 = vpack.c.b16 %v356, %v355
  %v496 = vpack.c.b16 %v358, %v357
  %v497 = vpack.c.b16 %v360, %v359
  %v498 = vpack.c.b16 %v362, %v361
  %v499 = vpack.c.b16 %v364, %v363
  %v500 = vpack.c.b16 %v366, %v365
  %v501 = vpack.c.b16 %v368, %v367
  %v502 = vpack.c.b16 %v370, %v369
  %v503 = vpack.c.b16 %v372, %v371
  %v504 = vpack.c.b16 %v374, %v373
  %v505 = vpack.c.b16 %v376, %v375
  %v506 = vpack.c.b16 %v378, %v377
  %v507 = vpack.c.b16 %v380, %v379
  %v508 = vpack.c.b16 %v382, %v381
  %v509 = vpack.c.b16 %v384, %v383
  %v510 = vpack.c.b16 %v386, %v385
  %v511 = vpack.c.b16 %v388, %v387
  %v512 = vpack.c.b16 %v390, %v389
  %v513 = vpack.c.b16 %v392, %v391
  %v514 = vpack.c.b16 %v394, %v393
  %v515 = vpack.c.b16 %v396, %v395
  %v516 = vpack.c.b16 %v398, %v397
  %v517 = vpack.c.b16 %v400, %v399
  %v518 = vpack.c.b16 %v402, %v401
  %v519 = vpack.c.b16 %v404, %v403
  %v520 = vpack.c.b16 %v406, %v405
  %v521 = vpack.c.b16 %v408, %v407
  %v522 = vpack.c.b16 %v410, %v409
  %v523 = vpack.c.b16 %v412, %v411
  %v524 = vpack.c.b16 %v414, %v413
  %v525 = vpack.c.b16 %v416, %v415
  %v526 = vpack.c.b16 %v418, %v417
  %v527 = vpack.c.b16 %v420, %v419
  %v528 = vpack.c.b16 %v422, %v421
  %v529 = vpack.c.b16 %v424, %v423
  %v530 = vpack.c.b16 %v426, %v425
  %v531 = vpack.c.b16 %v428, %v427
  %v532 = vpack.c.b16 %v430, %v429
  %v533 = vpack.c.b16 %v432, %v431
  %v534 = vpack.c.b16 %v434, %v433
  %v535 = vpack.c.b16 %v436, %v435
  %v536 = vpack.c.b16 %v438, %v437
  %v537 = vpack.c.b16 %v440, %v439
  %v538 = vpack.c.b16 %v442, %v441
  %v539 = vpack.c.b16 %v444, %v443
  %v540 = vpack.c.b16 %v446, %v445
  %v541 = vpack.c.b16 %v448, %v447
  %v542 = vpack.c.b16 %v450, %v449
  %v543 = vpack.c.b16 %v452, %v451
  %v544 = vpack.c.b16 %v454, %v453
  %v545 = vpack.c.b16 %v456, %v455
  %v546 = vpack.c.b16 %v458, %v457
  %v547 = vpack.c.b16 %v460, %v459
  %v548 = vpack.c.b16 %v462, %v461
  %v549 = vpack.c.b16 %v464, %v463
  %v550 = vpack.c.b16 %v466, %v465
  %v551 = vpack.c.b16 %v468, %v467
  %v552 = vpack.c.b16 %v470, %v469
  %v553 = vpack.c.b16 %v472, %v471
  %v554 = vpack.c.b16 %v474, %v473
  %v555 = vpack.c.b16 %v476, %v475
  %v556 = vpack.c.b16 %v478, %v477
  %v557 = vpack.c.b16 %v480, %v479
  %v558 = vpack.c.b16 %v482, %v481
  %v559 = vpack.c.b16 %v484, %v483
  %v560 = vpack.c.b16 %v486, %v485
  %v561 = vpack.c.b16 %v488, %v487
  %v562 = vpack.c.b16 %v490, %v489
  %635 = vmatprep.subr.bf16.mxu0 0
  %636 = vmatpush1.bf16.msra.mxu0 %v498
  %637 = vmatprep.subr.bf16.mxu0 0
  %638 = vmatpush1.bf16.msra.mxu0 %v497
  %639 = vmatprep.subr.bf16.mxu0 0
  %640 = vmatpush1.bf16.msra.mxu0 %v496
  %641 = vmatprep.subr.bf16.mxu0 0
  %642 = vmatpush1.bf16.msra.mxu0 %v495
  %643 = vmatprep.subr.bf16.mxu0 0
  %644 = vmatpush1.bf16.msra.mxu0 %v494
  %645 = vmatprep.subr.bf16.mxu0 0
  %646 = vmatpush1.bf16.msra.mxu0 %v493
  %647 = vmatprep.subr.bf16.mxu0 0
  %648 = vmatpush1.bf16.msra.mxu0 %v492
  %649 = vmatprep.subr.bf16.mxu0 0
  %650 = vmatpush1.bf16.msra.mxu0 %v491
  %651 = vmatprep.subr.bf16.mxu0 0
  %652 = vmatpush2.bf16.msra.mxu0 %v506
  %653 = vmatprep.subr.bf16.mxu0 0
  %654 = vmatpush2.bf16.msra.mxu0 %v505
  %655 = vmatprep.subr.bf16.mxu0 0
  %656 = vmatpush2.bf16.msra.mxu0 %v504
  %657 = vmatprep.subr.bf16.mxu0 0
  %658 = vmatpush2.bf16.msra.mxu0 %v503
  %659 = vmatprep.subr.bf16.mxu0 0
  %660 = vmatpush2.bf16.msra.mxu0 %v502
  %661 = vmatprep.subr.bf16.mxu0 0
  %662 = vmatpush2.bf16.msra.mxu0 %v501
  %663 = vmatprep.subr.bf16.mxu0 0
  %664 = vmatpush2.bf16.msra.mxu0 %v500
  %665 = vmatprep.subr.bf16.mxu0 0
  %666 = vmatpush2.bf16.msra.mxu0 %v499
  %667 = vmatprep.mubr.bf16.mxu0 %v186
  %668 = vmatmul.mubr.bf16.gmra.mxu0 %v185
  %v669 = vpop.f32.mrf.mxu0
  %v670 = vadd.f32 %v169, %v669
  %v671 = vpop.f32.mrf.mxu0
  %v672 = vpop.f32.mrf.mxu0
  %v673 = vpop.f32.mrf.mxu0
  %674 = vdwg.mxu0
  %675 = vmatprep.subr.bf16.mxu0 0
  %676 = vmatpush1.bf16.msra.mxu0 %v514
  %677 = vmatprep.subr.bf16.mxu0 0
  %678 = vmatpush1.bf16.msra.mxu0 %v513
  %679 = vmatprep.subr.bf16.mxu0 0
  %680 = vmatpush1.bf16.msra.mxu0 %v512
  %681 = vmatprep.subr.bf16.mxu0 0
  %682 = vmatpush1.bf16.msra.mxu0 %v511
  %683 = vmatprep.subr.bf16.mxu0 0
  %684 = vmatpush1.bf16.msra.mxu0 %v510
  %685 = vmatprep.subr.bf16.mxu0 0
  %686 = vmatpush1.bf16.msra.mxu0 %v509
  %687 = vmatprep.subr.bf16.mxu0 0
  %688 = vmatpush1.bf16.msra.mxu0 %v508
  %689 = vmatprep.subr.bf16.mxu0 0
  %690 = vmatpush1.bf16.msra.mxu0 %v507
  %691 = vmatprep.subr.bf16.mxu0 0
  %692 = vmatpush2.bf16.msra.mxu0 %v522
  %693 = vmatprep.subr.bf16.mxu0 0
  %694 = vmatpush2.bf16.msra.mxu0 %v521
  %695 = vmatprep.subr.bf16.mxu0 0
  %696 = vmatpush2.bf16.msra.mxu0 %v520
  %697 = vmatprep.subr.bf16.mxu0 0
  %698 = vmatpush2.bf16.msra.mxu0 %v519
  %699 = vmatprep.subr.bf16.mxu0 0
  %700 = vmatpush2.bf16.msra.mxu0 %v518
  %701 = vmatprep.subr.bf16.mxu0 0
  %702 = vmatpush2.bf16.msra.mxu0 %v517
  %703 = vmatprep.subr.bf16.mxu0 0
  %704 = vmatpush2.bf16.msra.mxu0 %v516
  %705 = vmatprep.subr.bf16.mxu0 0
  %706 = vmatpush2.bf16.msra.mxu0 %v515
  %707 = vmatprep.mubr.bf16.mxu0 %v188
  %708 = vmatmul.mubr.bf16.gmra.mxu0 %v187
  %v709 = vpop.f32.mrf.mxu0
  %v710 = vadd.f32 %v670, %v709
  %v711 = vpop.f32.mrf.mxu0
  %v712 = vpop.f32.mrf.mxu0
  %v713 = vpop.f32.mrf.mxu0
  %714 = vdwg.mxu0
  %715 = vmatprep.subr.bf16.mxu0 0
  %716 = vmatpush1.bf16.msra.mxu0 %v530
  %717 = vmatprep.subr.bf16.mxu0 0
  %718 = vmatpush1.bf16.msra.mxu0 %v529
  %719 = vmatprep.subr.bf16.mxu0 0
  %720 = vmatpush1.bf16.msra.mxu0 %v528
  %721 = vmatprep.subr.bf16.mxu0 0
  %722 = vmatpush1.bf16.msra.mxu0 %v527
  %723 = vmatprep.subr.bf16.mxu0 0
  %724 = vmatpush1.bf16.msra.mxu0 %v526
  %725 = vmatprep.subr.bf16.mxu0 0
  %726 = vmatpush1.bf16.msra.mxu0 %v525
  %727 = vmatprep.subr.bf16.mxu0 0
  %728 = vmatpush1.bf16.msra.mxu0 %v524
  %729 = vmatprep.subr.bf16.mxu0 0
  %730 = vmatpush1.bf16.msra.mxu0 %v523
  %731 = vmatprep.subr.bf16.mxu0 0
  %732 = vmatpush2.bf16.msra.mxu0 %v538
  %733 = vmatprep.subr.bf16.mxu0 0
  %734 = vmatpush2.bf16.msra.mxu0 %v537
  %735 = vmatprep.subr.bf16.mxu0 0
  %736 = vmatpush2.bf16.msra.mxu0 %v536
  %737 = vmatprep.subr.bf16.mxu0 0
  %738 = vmatpush2.bf16.msra.mxu0 %v535
  %739 = vmatprep.subr.bf16.mxu0 0
  %740 = vmatpush2.bf16.msra.mxu0 %v534
  %741 = vmatprep.subr.bf16.mxu0 0
  %742 = vmatpush2.bf16.msra.mxu0 %v533
  %743 = vmatprep.subr.bf16.mxu0 0
  %744 = vmatpush2.bf16.msra.mxu0 %v532
  %745 = vmatprep.subr.bf16.mxu0 0
  %746 = vmatpush2.bf16.msra.mxu0 %v531
  %747 = vmatprep.mubr.bf16.mxu0 %v190
  %748 = vmatmul.mubr.bf16.gmra.mxu0 %v189
  %v749 = vpop.f32.mrf.mxu0
  %v750 = vadd.f32 %v710, %v749
  %v751 = vpop.f32.mrf.mxu0
  %v752 = vpop.f32.mrf.mxu0
  %v753 = vpop.f32.mrf.mxu0
  %754 = vdwg.mxu0
  %755 = vmatprep.subr.bf16.mxu0 0
  %756 = vmatpush1.bf16.msra.mxu0 %v546
  %757 = vmatprep.subr.bf16.mxu0 0
  %758 = vmatpush1.bf16.msra.mxu0 %v545
  %759 = vmatprep.subr.bf16.mxu0 0
  %760 = vmatpush1.bf16.msra.mxu0 %v544
  %761 = vmatprep.subr.bf16.mxu0 0
  %762 = vmatpush1.bf16.msra.mxu0 %v543
  %763 = vmatprep.subr.bf16.mxu0 0
  %764 = vmatpush1.bf16.msra.mxu0 %v542
  %765 = vmatprep.subr.bf16.mxu0 0
  %766 = vmatpush1.bf16.msra.mxu0 %v541
  %767 = vmatprep.subr.bf16.mxu0 0
  %768 = vmatpush1.bf16.msra.mxu0 %v540
  %769 = vmatprep.subr.bf16.mxu0 0
  %770 = vmatpush1.bf16.msra.mxu0 %v539
  %771 = vmatprep.subr.bf16.mxu0 0
  %772 = vmatpush2.bf16.msra.mxu0 %v554
  %773 = vmatprep.subr.bf16.mxu0 0
  %774 = vmatpush2.bf16.msra.mxu0 %v553
  %775 = vmatprep.subr.bf16.mxu0 0
  %776 = vmatpush2.bf16.msra.mxu0 %v552
  %777 = vmatprep.subr.bf16.mxu0 0
  %778 = vmatpush2.bf16.msra.mxu0 %v551
  %779 = vmatprep.subr.bf16.mxu0 0
  %780 = vmatpush2.bf16.msra.mxu0 %v550
  %781 = vmatprep.subr.bf16.mxu0 0
  %782 = vmatpush2.bf16.msra.mxu0 %v549
  %783 = vmatprep.subr.bf16.mxu0 0
  %784 = vmatpush2.bf16.msra.mxu0 %v548
  %785 = vmatprep.subr.bf16.mxu0 0
  %786 = vmatpush2.bf16.msra.mxu0 %v547
  %787 = vmatprep.mubr.bf16.mxu0 %v192
  %788 = vmatmul.mubr.bf16.gmra.mxu0 %v191
  %v789 = vpop.f32.mrf.mxu0
  %v790 = vadd.f32 %v750, %v789
  %v791 = vpop.f32.mrf.mxu0
  %v792 = vpop.f32.mrf.mxu0
  %v793 = vpop.f32.mrf.mxu0
  %794 = vdwg.mxu0
  %795 = vmatprep.subr.bf16.mxu0 0
  %796 = vmatpush1.bf16.msra.mxu0 %v562
  %797 = vmatprep.subr.bf16.mxu0 0
  %798 = vmatpush1.bf16.msra.mxu0 %v561
  %799 = vmatprep.subr.bf16.mxu0 0
  %800 = vmatpush1.bf16.msra.mxu0 %v560
  %801 = vmatprep.subr.bf16.mxu0 0
  %802 = vmatpush1.bf16.msra.mxu0 %v559
  %803 = vmatprep.subr.bf16.mxu0 0
  %804 = vmatpush1.bf16.msra.mxu0 %v558
  %805 = vmatprep.subr.bf16.mxu0 0
  %806 = vmatpush1.bf16.msra.mxu0 %v557
  %807 = vmatprep.subr.bf16.mxu0 0
  %808 = vmatpush1.bf16.msra.mxu0 %v556
  %809 = vmatprep.subr.bf16.mxu0 0
  %810 = vmatpush1.bf16.msra.mxu0 %v555
  %811 = vmatprep.subr.bf16.mxu0 0
  %812 = vmatpush2.bf16.msra.mxu0 0
  %813 = vmatprep.subr.bf16.mxu0 0
  %814 = vmatpush2.bf16.msra.mxu0 0
  %815 = vmatprep.subr.bf16.mxu0 0
  %816 = vmatpush2.bf16.msra.mxu0 0
  %817 = vmatprep.subr.bf16.mxu0 0
  %818 = vmatpush2.bf16.msra.mxu0 0
  %819 = vmatprep.subr.bf16.mxu0 0
  %820 = vmatpush2.bf16.msra.mxu0 0
  %821 = vmatprep.subr.bf16.mxu0 0
  %822 = vmatpush2.bf16.msra.mxu0 0
  %823 = vmatprep.subr.bf16.mxu0 0
  %824 = vmatpush2.bf16.msra.mxu0 0
  %825 = vmatprep.subr.bf16.mxu0 0
  %826 = vmatpush2.bf16.msra.mxu0 0
  %827 = vmatprep.mubr.bf16.mxu0 0
  %828 = vmatmul.mubr.bf16.gmra.mxu0 %v193
  %v829 = vpop.f32.mrf.mxu0
  %v830 = vadd.f32 %v790, %v829
  %v831 = vpop.f32.mrf.mxu0
  %v832 = vpop.f32.mrf.mxu0
  %v833 = vpop.f32.mrf.mxu0
  %834 = vdwg.mxu0
  %v835 = vmax.f32 %v830, 0.0
  %836 = vst [vmem:[%s3] sm:$0xff] %v835
  // Predicated region
  $region14: #{forward.101} parent=0 // pred_check
    _
  $region15: #{forward.101} parent=0 // pred_check_branch
    %838 = sbr.rel (0) target = $region17
  $region16: #{forward.101} parent=0 // pred_region
    _
  $region17: #{forward.101} parent=0 // pred_fallthru
    _
  // Predicated region
  $region18: #{forward.101} parent=0 // pred_check
    _
  $region19: #{forward.101} parent=0 // pred_check_branch
    %840 = sbr.rel (0) target = $region21
  $region20: #{forward.101} parent=0 // pred_region
    _
  $region21: #{forward.101} parent=0 // pred_fallthru
    _

// kernel: forward.99
$region0: #{forward.99}
  #allocation0 [shape = 'u32[]', space=smem, size = 0x4, offset = 0x4, fixed_abs, tag = 'smem constant byte address 0x4 - core index']
  #allocation1 [shape = 'u32[144,128]{1,0:T(1,128)}', space=vmem, size = 0x12000, scoped, tag = 'internal scratch']
  %s0 = inlined_call_operand.vmem [shape: f32[8,256], index: 0, kind: input, shape index: {}]
  %s1 = inlined_call_operand.vmem [shape: bf16[256,512], index: 1, kind: input, shape index: {}]
  %s2 = inlined_call_operand.vmem [shape: f32[1,512], index: 2, kind: input, shape index: {}]
  %s3 = inlined_call_operand.vmem [shape: f32[8,512], index: 3, kind: output, shape index: {}]
  %s4 = sld [smem:[#allocation0]]
  $region22: #{forward.99} parent=0
    _
  %s6 = ssub.s32 1, %s4
  %s7 = scalar_select 0, %s6, %s4
  // Predicated region
  $region2: #{forward.99} parent=0 // pred_check
    _
  $region3: #{forward.99} parent=0 // pred_check_branch
    %9 = sbr.rel (0) target = $region5
  $region4: #{forward.99} parent=0 // pred_region
    _
  $region5: #{forward.99} parent=0 // pred_fallthru
    _
  // Predicated region
  $region6: #{forward.99} parent=0 // pred_check
    _
  $region7: #{forward.99} parent=0 // pred_check_branch
    %11 = sbr.rel (0) target = $region9
  $region8: #{forward.99} parent=0 // pred_region
    _
  $region9: #{forward.99} parent=0 // pred_fallthru
    _
  // Predicated region
  $region10: #{forward.99} parent=0 // pred_check
    _
  $region11: #{forward.99} parent=0 // pred_check_branch
    %13 = sbr.rel (0) target = $region13
  $region12: #{forward.99} parent=0 // pred_region
    _
  $region13: #{forward.99} parent=0 // pred_fallthru
    _
  %v14 = vld [vmem:[%s0] sm:$0xff]
  %v15 = vld [vmem:[%s0 + $0x8] sm:$0xff]
  %v16 = vpack.c.bf16 %v14, %v14
  %v17 = vpack.c.bf16 %v15, %v15
  %v18 = vld [vmem:[%s1] sm:$0xff]
  %v19 = vld [vmem:[%s1 + $0x8] sm:$0xff]
  %v20 = vld [vmem:[%s1 + $0x10] sm:$0xff]
  %v21 = vld [vmem:[%s1 + $0x18] sm:$0xff]
  %v22 = vld [vmem:[%s1 + $0x20] sm:$0xff]
  %v23 = vld [vmem:[%s1 + $0x28] sm:$0xff]
  %v24 = vld [vmem:[%s1 + $0x30] sm:$0xff]
  %v25 = vld [vmem:[%s1 + $0x38] sm:$0xff]
  %v26 = vld [vmem:[%s1 + $0x40] sm:$0xff]
  %v27 = vld [vmem:[%s1 + $0x48] sm:$0xff]
  %v28 = vld [vmem:[%s1 + $0x50] sm:$0xff]
  %v29 = vld [vmem:[%s1 + $0x58] sm:$0xff]
  %v30 = vld [vmem:[%s1 + $0x60] sm:$0xff]
  %v31 = vld [vmem:[%s1 + $0x68] sm:$0xff]
  %v32 = vld [vmem:[%s1 + $0x70] sm:$0xff]
  %v33 = vld [vmem:[%s1 + $0x78] sm:$0xff]
  %v34 = vld [vmem:[%s1 + $0x80] sm:$0xff]
  %v35 = vld [vmem:[%s1 + $0x88] sm:$0xff]
  %v36 = vld [vmem:[%s1 + $0x90] sm:$0xff]
  %v37 = vld [vmem:[%s1 + $0x98] sm:$0xff]
  %v38 = vld [vmem:[%s1 + $0xa0] sm:$0xff]
  %v39 = vld [vmem:[%s1 + $0xa8] sm:$0xff]
  %v40 = vld [vmem:[%s1 + $0xb0] sm:$0xff]
  %v41 = vld [vmem:[%s1 + $0xb8] sm:$0xff]
  %v42 = vld [vmem:[%s1 + $0xc0] sm:$0xff]
  %v43 = vld [vmem:[%s1 + $0xc8] sm:$0xff]
  %v44 = vld [vmem:[%s1 + $0xd0] sm:$0xff]
  %v45 = vld [vmem:[%s1 + $0xd8] sm:$0xff]
  %v46 = vld [vmem:[%s1 + $0xe0] sm:$0xff]
  %v47 = vld [vmem:[%s1 + $0xe8] sm:$0xff]
  %v48 = vld [vmem:[%s1 + $0xf0] sm:$0xff]
  %v49 = vld [vmem:[%s1 + $0xf8] sm:$0xff]
  %v50 = vld [vmem:[%s1 + $0x100] sm:$0xff]
  %v51 = vld [vmem:[%s1 + $0x108] sm:$0xff]
  %v52 = vld [vmem:[%s1 + $0x110] sm:$0xff]
  %v53 = vld [vmem:[%s1 + $0x118] sm:$0xff]
  %v54 = vld [vmem:[%s1 + $0x120] sm:$0xff]
  %v55 = vld [vmem:[%s1 + $0x128] sm:$0xff]
  %v56 = vld [vmem:[%s1 + $0x130] sm:$0xff]
  %v57 = vld [vmem:[%s1 + $0x138] sm:$0xff]
  %v58 = vld [vmem:[%s1 + $0x140] sm:$0xff]
  %v59 = vld [vmem:[%s1 + $0x148] sm:$0xff]
  %v60 = vld [vmem:[%s1 + $0x150] sm:$0xff]
  %v61 = vld [vmem:[%s1 + $0x158] sm:$0xff]
  %v62 = vld [vmem:[%s1 + $0x160] sm:$0xff]
  %v63 = vld [vmem:[%s1 + $0x168] sm:$0xff]
  %v64 = vld [vmem:[%s1 + $0x170] sm:$0xff]
  %v65 = vld [vmem:[%s1 + $0x178] sm:$0xff]
  %v66 = vld [vmem:[%s1 + $0x180] sm:$0xff]
  %v67 = vld [vmem:[%s1 + $0x188] sm:$0xff]
  %v68 = vld [vmem:[%s1 + $0x190] sm:$0xff]
  %v69 = vld [vmem:[%s1 + $0x198] sm:$0xff]
  %v70 = vld [vmem:[%s1 + $0x1a0] sm:$0xff]
  %v71 = vld [vmem:[%s1 + $0x1a8] sm:$0xff]
  %v72 = vld [vmem:[%s1 + $0x1b0] sm:$0xff]
  %v73 = vld [vmem:[%s1 + $0x1b8] sm:$0xff]
  %v74 = vld [vmem:[%s1 + $0x1c0] sm:$0xff]
  %v75 = vld [vmem:[%s1 + $0x1c8] sm:$0xff]
  %v76 = vld [vmem:[%s1 + $0x1d0] sm:$0xff]
  %v77 = vld [vmem:[%s1 + $0x1d8] sm:$0xff]
  %v78 = vld [vmem:[%s1 + $0x1e0] sm:$0xff]
  %v79 = vld [vmem:[%s1 + $0x1e8] sm:$0xff]
  %v80 = vld [vmem:[%s1 + $0x1f0] sm:$0xff]
  %v81 = vld [vmem:[%s1 + $0x1f8] sm:$0xff]
  %v82 = vld [vmem:[%s2] sm:$0xf]
  %v84 = vlaneseq
  %v85 = vshrl.u32 %v84, 7
  %v86 = vsub.s32 0, %v85
  %v87 = vrot.slane %v82, %v86
  %v88 = vlaneseq
  %v89 = vshrl.u32 %v88, 7
  %v90 = vsub.s32 1, %v89
  %v91 = vrot.slane %v82, %v90
  %v92 = vlaneseq
  %v93 = vshrl.u32 %v92, 7
  %v94 = vsub.s32 2, %v93
  %v95 = vrot.slane %v82, %v94
  %v96 = vlaneseq
  %v97 = vshrl.u32 %v96, 7
  %v98 = vsub.s32 3, %v97
  %v99 = vrot.slane %v82, %v98
  %v168 = vunpack.c.l.b16 %v18
  %v169 = vunpack.c.h.b16 %v18
  %v170 = vunpack.c.l.b16 %v19
  %v171 = vunpack.c.h.b16 %v19
  %v172 = vunpack.c.l.b16 %v20
  %v173 = vunpack.c.h.b16 %v20
  %v174 = vunpack.c.l.b16 %v21
  %v175 = vunpack.c.h.b16 %v21
  %v176 = vunpack.c.l.b16 %v22
  %v177 = vunpack.c.h.b16 %v22
  %v178 = vunpack.c.l.b16 %v23
  %v179 = vunpack.c.h.b16 %v23
  %v180 = vunpack.c.l.b16 %v24
  %v181 = vunpack.c.h.b16 %v24
  %v182 = vunpack.c.l.b16 %v25
  %v183 = vunpack.c.h.b16 %v25
  %v184 = vunpack.c.l.b16 %v26
  %v185 = vunpack.c.h.b16 %v26
  %v186 = vunpack.c.l.b16 %v27
  %v187 = vunpack.c.h.b16 %v27
  %v188 = vunpack.c.l.b16 %v28
  %v189 = vunpack.c.h.b16 %v28
  %v190 = vunpack.c.l.b16 %v29
  %v191 = vunpack.c.h.b16 %v29
  %v192 = vunpack.c.l.b16 %v30
  %v193 = vunpack.c.h.b16 %v30
  %v194 = vunpack.c.l.b16 %v31
  %v195 = vunpack.c.h.b16 %v31
  %v196 = vunpack.c.l.b16 %v32
  %v197 = vunpack.c.h.b16 %v32
  %v198 = vunpack.c.l.b16 %v33
  %v199 = vunpack.c.h.b16 %v33
  %v200 = vunpack.c.l.b16 %v34
  %v201 = vunpack.c.h.b16 %v34
  %v202 = vunpack.c.l.b16 %v35
  %v203 = vunpack.c.h.b16 %v35
  %v204 = vunpack.c.l.b16 %v36
  %v205 = vunpack.c.h.b16 %v36
  %v206 = vunpack.c.l.b16 %v37
  %v207 = vunpack.c.h.b16 %v37
  %v208 = vunpack.c.l.b16 %v38
  %v209 = vunpack.c.h.b16 %v38
  %v210 = vunpack.c.l.b16 %v39
  %v211 = vunpack.c.h.b16 %v39
  %v212 = vunpack.c.l.b16 %v40
  %v213 = vunpack.c.h.b16 %v40
  %v214 = vunpack.c.l.b16 %v41
  %v215 = vunpack.c.h.b16 %v41
  %v216 = vunpack.c.l.b16 %v42
  %v217 = vunpack.c.h.b16 %v42
  %v218 = vunpack.c.l.b16 %v43
  %v219 = vunpack.c.h.b16 %v43
  %v220 = vunpack.c.l.b16 %v44
  %v221 = vunpack.c.h.b16 %v44
  %v222 = vunpack.c.l.b16 %v45
  %v223 = vunpack.c.h.b16 %v45
  %v224 = vunpack.c.l.b16 %v46
  %v225 = vunpack.c.h.b16 %v46
  %v226 = vunpack.c.l.b16 %v47
  %v227 = vunpack.c.h.b16 %v47
  %v228 = vunpack.c.l.b16 %v48
  %v229 = vunpack.c.h.b16 %v48
  %v230 = vunpack.c.l.b16 %v49
  %v231 = vunpack.c.h.b16 %v49
  %v232 = vunpack.c.l.b16 %v50
  %v233 = vunpack.c.h.b16 %v50
  %v234 = vunpack.c.l.b16 %v51
  %v235 = vunpack.c.h.b16 %v51
  %v236 = vunpack.c.l.b16 %v52
  %v237 = vunpack.c.h.b16 %v52
  %v238 = vunpack.c.l.b16 %v53
  %v239 = vunpack.c.h.b16 %v53
  %v240 = vunpack.c.l.b16 %v54
  %v241 = vunpack.c.h.b16 %v54
  %v242 = vunpack.c.l.b16 %v55
  %v243 = vunpack.c.h.b16 %v55
  %v244 = vunpack.c.l.b16 %v56
  %v245 = vunpack.c.h.b16 %v56
  %v246 = vunpack.c.l.b16 %v57
  %v247 = vunpack.c.h.b16 %v57
  %v248 = vunpack.c.l.b16 %v58
  %v249 = vunpack.c.h.b16 %v58
  %v250 = vunpack.c.l.b16 %v59
  %v251 = vunpack.c.h.b16 %v59
  %v252 = vunpack.c.l.b16 %v60
  %v253 = vunpack.c.h.b16 %v60
  %v254 = vunpack.c.l.b16 %v61
  %v255 = vunpack.c.h.b16 %v61
  %v256 = vunpack.c.l.b16 %v62
  %v257 = vunpack.c.h.b16 %v62
  %v258 = vunpack.c.l.b16 %v63
  %v259 = vunpack.c.h.b16 %v63
  %v260 = vunpack.c.l.b16 %v64
  %v261 = vunpack.c.h.b16 %v64
  %v262 = vunpack.c.l.b16 %v65
  %v263 = vunpack.c.h.b16 %v65
  %v264 = vunpack.c.l.b16 %v66
  %v265 = vunpack.c.h.b16 %v66
  %v266 = vunpack.c.l.b16 %v67
  %v267 = vunpack.c.h.b16 %v67
  %v268 = vunpack.c.l.b16 %v68
  %v269 = vunpack.c.h.b16 %v68
  %v270 = vunpack.c.l.b16 %v69
  %v271 = vunpack.c.h.b16 %v69
  %v272 = vunpack.c.l.b16 %v70
  %v273 = vunpack.c.h.b16 %v70
  %v274 = vunpack.c.l.b16 %v71
  %v275 = vunpack.c.h.b16 %v71
  %v276 = vunpack.c.l.b16 %v72
  %v277 = vunpack.c.h.b16 %v72
  %v278 = vunpack.c.l.b16 %v73
  %v279 = vunpack.c.h.b16 %v73
  %v280 = vunpack.c.l.b16 %v74
  %v281 = vunpack.c.h.b16 %v74
  %v282 = vunpack.c.l.b16 %v75
  %v283 = vunpack.c.h.b16 %v75
  %v284 = vunpack.c.l.b16 %v76
  %v285 = vunpack.c.h.b16 %v76
  %v286 = vunpack.c.l.b16 %v77
  %v287 = vunpack.c.h.b16 %v77
  %v288 = vunpack.c.l.b16 %v78
  %v289 = vunpack.c.h.b16 %v78
  %v290 = vunpack.c.l.b16 %v79
  %v291 = vunpack.c.h.b16 %v79
  %v292 = vunpack.c.l.b16 %v80
  %v293 = vunpack.c.h.b16 %v80
  %v294 = vunpack.c.l.b16 %v81
  %v295 = vunpack.c.h.b16 %v81
  %v296 = vpack.c.b16 %v172, %v168
  %v297 = vpack.c.b16 %v173, %v169
  %v298 = vpack.c.b16 %v174, %v170
  %v299 = vpack.c.b16 %v175, %v171
  %v300 = vpack.c.b16 %v180, %v176
  %v301 = vpack.c.b16 %v181, %v177
  %v302 = vpack.c.b16 %v182, %v178
  %v303 = vpack.c.b16 %v183, %v179
  %v304 = vpack.c.b16 %v188, %v184
  %v305 = vpack.c.b16 %v189, %v185
  %v306 = vpack.c.b16 %v190, %v186
  %v307 = vpack.c.b16 %v191, %v187
  %v308 = vpack.c.b16 %v196, %v192
  %v309 = vpack.c.b16 %v197, %v193
  %v310 = vpack.c.b16 %v198, %v194
  %v311 = vpack.c.b16 %v199, %v195
  %v312 = vpack.c.b16 %v204, %v200
  %v313 = vpack.c.b16 %v205, %v201
  %v314 = vpack.c.b16 %v206, %v202
  %v315 = vpack.c.b16 %v207, %v203
  %v316 = vpack.c.b16 %v212, %v208
  %v317 = vpack.c.b16 %v213, %v209
  %v318 = vpack.c.b16 %v214, %v210
  %v319 = vpack.c.b16 %v215, %v211
  %v320 = vpack.c.b16 %v220, %v216
  %v321 = vpack.c.b16 %v221, %v217
  %v322 = vpack.c.b16 %v222, %v218
  %v323 = vpack.c.b16 %v223, %v219
  %v324 = vpack.c.b16 %v228, %v224
  %v325 = vpack.c.b16 %v229, %v225
  %v326 = vpack.c.b16 %v230, %v226
  %v327 = vpack.c.b16 %v231, %v227
  %v328 = vpack.c.b16 %v236, %v232
  %v329 = vpack.c.b16 %v237, %v233
  %v330 = vpack.c.b16 %v238, %v234
  %v331 = vpack.c.b16 %v239, %v235
  %v332 = vpack.c.b16 %v244, %v240
  %v333 = vpack.c.b16 %v245, %v241
  %v334 = vpack.c.b16 %v246, %v242
  %v335 = vpack.c.b16 %v247, %v243
  %v336 = vpack.c.b16 %v252, %v248
  %v337 = vpack.c.b16 %v253, %v249
  %v338 = vpack.c.b16 %v254, %v250
  %v339 = vpack.c.b16 %v255, %v251
  %v340 = vpack.c.b16 %v260, %v256
  %v341 = vpack.c.b16 %v261, %v257
  %v342 = vpack.c.b16 %v262, %v258
  %v343 = vpack.c.b16 %v263, %v259
  %v344 = vpack.c.b16 %v268, %v264
  %v345 = vpack.c.b16 %v269, %v265
  %v346 = vpack.c.b16 %v270, %v266
  %v347 = vpack.c.b16 %v271, %v267
  %v348 = vpack.c.b16 %v276, %v272
  %v349 = vpack.c.b16 %v277, %v273
  %v350 = vpack.c.b16 %v278, %v274
  %v351 = vpack.c.b16 %v279, %v275
  %v352 = vpack.c.b16 %v284, %v280
  %v353 = vpack.c.b16 %v285, %v281
  %v354 = vpack.c.b16 %v286, %v282
  %v355 = vpack.c.b16 %v287, %v283
  %v356 = vpack.c.b16 %v292, %v288
  %v357 = vpack.c.b16 %v293, %v289
  %v358 = vpack.c.b16 %v294, %v290
  %v359 = vpack.c.b16 %v295, %v291
  %424 = vmatprep.subr.bf16.mxu0 %v325
  %425 = vmatpush1.bf16.msra.mxu0 %v324
  %426 = vmatprep.subr.bf16.mxu0 %v321
  %427 = vmatpush1.bf16.msra.mxu0 %v320
  %428 = vmatprep.subr.bf16.mxu0 %v317
  %429 = vmatpush1.bf16.msra.mxu0 %v316
  %430 = vmatprep.subr.bf16.mxu0 %v313
  %431 = vmatpush1.bf16.msra.mxu0 %v312
  %432 = vmatprep.subr.bf16.mxu0 %v309
  %433 = vmatpush1.bf16.msra.mxu0 %v308
  %434 = vmatprep.subr.bf16.mxu0 %v305
  %435 = vmatpush1.bf16.msra.mxu0 %v304
  %436 = vmatprep.subr.bf16.mxu0 %v301
  %437 = vmatpush1.bf16.msra.mxu0 %v300
  %438 = vmatprep.subr.bf16.mxu0 %v297
  %439 = vmatpush1.bf16.msra.mxu0 %v296
  %440 = vmatprep.subr.bf16.mxu0 %v357
  %441 = vmatpush2.bf16.msra.mxu0 %v356
  %442 = vmatprep.subr.bf16.mxu0 %v353
  %443 = vmatpush2.bf16.msra.mxu0 %v352
  %444 = vmatprep.subr.bf16.mxu0 %v349
  %445 = vmatpush2.bf16.msra.mxu0 %v348
  %446 = vmatprep.subr.bf16.mxu0 %v345
  %447 = vmatpush2.bf16.msra.mxu0 %v344
  %448 = vmatprep.subr.bf16.mxu0 %v341
  %449 = vmatpush2.bf16.msra.mxu0 %v340
  %450 = vmatprep.subr.bf16.mxu0 %v337
  %451 = vmatpush2.bf16.msra.mxu0 %v336
  %452 = vmatprep.subr.bf16.mxu0 %v333
  %453 = vmatpush2.bf16.msra.mxu0 %v332
  %454 = vmatprep.subr.bf16.mxu0 %v329
  %455 = vmatpush2.bf16.msra.mxu0 %v328
  %456 = vmatprep.mubr.bf16.mxu0 %v17
  %457 = vmatmul.mubr.bf16.gmra.mxu0 %v16
  %v458 = vpop.f32.mrf.mxu0
  %v459 = vadd.f32 %v87, %v458
  %v460 = vpop.f32.mrf.mxu0
  %v461 = vadd.f32 %v91, %v460
  %v462 = vpop.f32.mrf.mxu0
  %v463 = vpop.f32.mrf.mxu0
  %464 = vdwg.mxu0
  %465 = vmatprep.subr.bf16.mxu0 %v327
  %466 = vmatpush1.bf16.msra.mxu0 %v326
  %467 = vmatprep.subr.bf16.mxu0 %v323
  %468 = vmatpush1.bf16.msra.mxu0 %v322
  %469 = vmatprep.subr.bf16.mxu0 %v319
  %470 = vmatpush1.bf16.msra.mxu0 %v318
  %471 = vmatprep.subr.bf16.mxu0 %v315
  %472 = vmatpush1.bf16.msra.mxu0 %v314
  %473 = vmatprep.subr.bf16.mxu0 %v311
  %474 = vmatpush1.bf16.msra.mxu0 %v310
  %475 = vmatprep.subr.bf16.mxu0 %v307
  %476 = vmatpush1.bf16.msra.mxu0 %v306
  %477 = vmatprep.subr.bf16.mxu0 %v303
  %478 = vmatpush1.bf16.msra.mxu0 %v302
  %479 = vmatprep.subr.bf16.mxu0 %v299
  %480 = vmatpush1.bf16.msra.mxu0 %v298
  %481 = vmatprep.subr.bf16.mxu0 %v359
  %482 = vmatpush2.bf16.msra.mxu0 %v358
  %483 = vmatprep.subr.bf16.mxu0 %v355
  %484 = vmatpush2.bf16.msra.mxu0 %v354
  %485 = vmatprep.subr.bf16.mxu0 %v351
  %486 = vmatpush2.bf16.msra.mxu0 %v350
  %487 = vmatprep.subr.bf16.mxu0 %v347
  %488 = vmatpush2.bf16.msra.mxu0 %v346
  %489 = vmatprep.subr.bf16.mxu0 %v343
  %490 = vmatpush2.bf16.msra.mxu0 %v342
  %491 = vmatprep.subr.bf16.mxu0 %v339
  %492 = vmatpush2.bf16.msra.mxu0 %v338
  %493 = vmatprep.subr.bf16.mxu0 %v335
  %494 = vmatpush2.bf16.msra.mxu0 %v334
  %495 = vmatprep.subr.bf16.mxu0 %v331
  %496 = vmatpush2.bf16.msra.mxu0 %v330
  %497 = vmatprep.mubr.bf16.mxu0 %v17
  %498 = vmatmul.mubr.bf16.gmra.mxu0 %v16
  %v499 = vpop.f32.mrf.mxu0
  %v500 = vadd.f32 %v95, %v499
  %v501 = vpop.f32.mrf.mxu0
  %v502 = vadd.f32 %v99, %v501
  %v503 = vpop.f32.mrf.mxu0
  %v504 = vpop.f32.mrf.mxu0
  %505 = vdwg.mxu0
  %506 = vst [vmem:[%s3] sm:$0xff] %v459
  %507 = vst [vmem:[%s3 + $0x8] sm:$0xff] %v461
  %508 = vst [vmem:[%s3 + $0x10] sm:$0xff] %v500
  %509 = vst [vmem:[%s3 + $0x18] sm:$0xff] %v502
  // Predicated region
  $region14: #{forward.99} parent=0 // pred_check
    _
  $region15: #{forward.99} parent=0 // pred_check_branch
    %511 = sbr.rel (0) target = $region17
  $region16: #{forward.99} parent=0 // pred_region
    _
  $region17: #{forward.99} parent=0 // pred_fallthru
    _
  // Predicated region
  $region18: #{forward.99} parent=0 // pred_check
    _
  $region19: #{forward.99} parent=0 // pred_check_branch
    %513 = sbr.rel (0) target = $region21
  $region20: #{forward.99} parent=0 // pred_region
    _
  $region21: #{forward.99} parent=0 // pred_fallthru
    _

// kernel: forward.102
$region0: #{forward.102}
  #allocation0 [shape = 'u32[]', space=smem, size = 0x4, offset = 0x4, fixed_abs, tag = 'smem constant byte address 0x4 - core index']
  #allocation1 [shape = 'u32[144,128]{1,0:T(1,128)}', space=vmem, size = 0x12000, scoped, tag = 'internal scratch']
  %s0 = inlined_call_operand.vmem [shape: f32[8,128], index: 0, kind: input, shape index: {}]
  %s1 = inlined_call_operand.vmem [shape: bf16[128,512], index: 1, kind: input, shape index: {}]
  %s2 = inlined_call_operand.vmem [shape: f32[1,512], index: 2, kind: input, shape index: {}]
  %s3 = inlined_call_operand.vmem [shape: f32[8,512], index: 3, kind: input, shape index: {}]
  %s4 = inlined_call_operand.vmem [shape: f32[8,512], index: 4, kind: output, shape index: {}]
  %s5 = sld [smem:[#allocation0]]
  $region26: #{forward.102} parent=0
    _
  %s7 = ssub.s32 1, %s5
  %s8 = scalar_select 0, %s7, %s5
  // Predicated region
  $region2: #{forward.102} parent=0 // pred_check
    _
  $region3: #{forward.102} parent=0 // pred_check_branch
    %10 = sbr.rel (0) target = $region5
  $region4: #{forward.102} parent=0 // pred_region
    _
  $region5: #{forward.102} parent=0 // pred_fallthru
    _
  // Predicated region
  $region6: #{forward.102} parent=0 // pred_check
    _
  $region7: #{forward.102} parent=0 // pred_check_branch
    %12 = sbr.rel (0) target = $region9
  $region8: #{forward.102} parent=0 // pred_region
    _
  $region9: #{forward.102} parent=0 // pred_fallthru
    _
  // Predicated region
  $region10: #{forward.102} parent=0 // pred_check
    _
  $region11: #{forward.102} parent=0 // pred_check_branch
    %14 = sbr.rel (0) target = $region13
  $region12: #{forward.102} parent=0 // pred_region
    _
  $region13: #{forward.102} parent=0 // pred_fallthru
    _
  // Predicated region
  $region14: #{forward.102} parent=0 // pred_check
    _
  $region15: #{forward.102} parent=0 // pred_check_branch
    %16 = sbr.rel (0) target = $region17
  $region16: #{forward.102} parent=0 // pred_region
    _
  $region17: #{forward.102} parent=0 // pred_fallthru
    _
  %v18 = vld [vmem:[%s0] sm:$0xff]
  %v19 = vpack.c.bf16 %v18, %v18
  %v20 = vld [vmem:[%s1] sm:$0xff]
  %v21 = vld [vmem:[%s1 + $0x8] sm:$0xff]
  %v22 = vld [vmem:[%s1 + $0x10] sm:$0xff]
  %v23 = vld [vmem:[%s1 + $0x18] sm:$0xff]
  %v24 = vld [vmem:[%s1 + $0x20] sm:$0xff]
  %v25 = vld [vmem:[%s1 + $0x28] sm:$0xff]
  %v26 = vld [vmem:[%s1 + $0x30] sm:$0xff]
  %v27 = vld [vmem:[%s1 + $0x38] sm:$0xff]
  %v28 = vld [vmem:[%s1 + $0x40] sm:$0xff]
  %v29 = vld [vmem:[%s1 + $0x48] sm:$0xff]
  %v30 = vld [vmem:[%s1 + $0x50] sm:$0xff]
  %v31 = vld [vmem:[%s1 + $0x58] sm:$0xff]
  %v32 = vld [vmem:[%s1 + $0x60] sm:$0xff]
  %v33 = vld [vmem:[%s1 + $0x68] sm:$0xff]
  %v34 = vld [vmem:[%s1 + $0x70] sm:$0xff]
  %v35 = vld [vmem:[%s1 + $0x78] sm:$0xff]
  %v36 = vld [vmem:[%s1 + $0x80] sm:$0xff]
  %v37 = vld [vmem:[%s1 + $0x88] sm:$0xff]
  %v38 = vld [vmem:[%s1 + $0x90] sm:$0xff]
  %v39 = vld [vmem:[%s1 + $0x98] sm:$0xff]
  %v40 = vld [vmem:[%s1 + $0xa0] sm:$0xff]
  %v41 = vld [vmem:[%s1 + $0xa8] sm:$0xff]
  %v42 = vld [vmem:[%s1 + $0xb0] sm:$0xff]
  %v43 = vld [vmem:[%s1 + $0xb8] sm:$0xff]
  %v44 = vld [vmem:[%s1 + $0xc0] sm:$0xff]
  %v45 = vld [vmem:[%s1 + $0xc8] sm:$0xff]
  %v46 = vld [vmem:[%s1 + $0xd0] sm:$0xff]
  %v47 = vld [vmem:[%s1 + $0xd8] sm:$0xff]
  %v48 = vld [vmem:[%s1 + $0xe0] sm:$0xff]
  %v49 = vld [vmem:[%s1 + $0xe8] sm:$0xff]
  %v50 = vld [vmem:[%s1 + $0xf0] sm:$0xff]
  %v51 = vld [vmem:[%s1 + $0xf8] sm:$0xff]
  %v52 = vld [vmem:[%s2] sm:$0xf]
  %v54 = vlaneseq
  %v55 = vshrl.u32 %v54, 7
  %v56 = vsub.s32 0, %v55
  %v57 = vrot.slane %v52, %v56
  %v58 = vlaneseq
  %v59 = vshrl.u32 %v58, 7
  %v60 = vsub.s32 1, %v59
  %v61 = vrot.slane %v52, %v60
  %v62 = vlaneseq
  %v63 = vshrl.u32 %v62, 7
  %v64 = vsub.s32 2, %v63
  %v65 = vrot.slane %v52, %v64
  %v66 = vlaneseq
  %v67 = vshrl.u32 %v66, 7
  %v68 = vsub.s32 3, %v67
  %v69 = vrot.slane %v52, %v68
  %v106 = vunpack.c.l.b16 %v20
  %v107 = vunpack.c.h.b16 %v20
  %v108 = vunpack.c.l.b16 %v21
  %v109 = vunpack.c.h.b16 %v21
  %v110 = vunpack.c.l.b16 %v22
  %v111 = vunpack.c.h.b16 %v22
  %v112 = vunpack.c.l.b16 %v23
  %v113 = vunpack.c.h.b16 %v23
  %v114 = vunpack.c.l.b16 %v24
  %v115 = vunpack.c.h.b16 %v24
  %v116 = vunpack.c.l.b16 %v25
  %v117 = vunpack.c.h.b16 %v25
  %v118 = vunpack.c.l.b16 %v26
  %v119 = vunpack.c.h.b16 %v26
  %v120 = vunpack.c.l.b16 %v27
  %v121 = vunpack.c.h.b16 %v27
  %v122 = vunpack.c.l.b16 %v28
  %v123 = vunpack.c.h.b16 %v28
  %v124 = vunpack.c.l.b16 %v29
  %v125 = vunpack.c.h.b16 %v29
  %v126 = vunpack.c.l.b16 %v30
  %v127 = vunpack.c.h.b16 %v30
  %v128 = vunpack.c.l.b16 %v31
  %v129 = vunpack.c.h.b16 %v31
  %v130 = vunpack.c.l.b16 %v32
  %v131 = vunpack.c.h.b16 %v32
  %v132 = vunpack.c.l.b16 %v33
  %v133 = vunpack.c.h.b16 %v33
  %v134 = vunpack.c.l.b16 %v34
  %v135 = vunpack.c.h.b16 %v34
  %v136 = vunpack.c.l.b16 %v35
  %v137 = vunpack.c.h.b16 %v35
  %v138 = vunpack.c.l.b16 %v36
  %v139 = vunpack.c.h.b16 %v36
  %v140 = vunpack.c.l.b16 %v37
  %v141 = vunpack.c.h.b16 %v37
  %v142 = vunpack.c.l.b16 %v38
  %v143 = vunpack.c.h.b16 %v38
  %v144 = vunpack.c.l.b16 %v39
  %v145 = vunpack.c.h.b16 %v39
  %v146 = vunpack.c.l.b16 %v40
  %v147 = vunpack.c.h.b16 %v40
  %v148 = vunpack.c.l.b16 %v41
  %v149 = vunpack.c.h.b16 %v41
  %v150 = vunpack.c.l.b16 %v42
  %v151 = vunpack.c.h.b16 %v42
  %v152 = vunpack.c.l.b16 %v43
  %v153 = vunpack.c.h.b16 %v43
  %v154 = vunpack.c.l.b16 %v44
  %v155 = vunpack.c.h.b16 %v44
  %v156 = vunpack.c.l.b16 %v45
  %v157 = vunpack.c.h.b16 %v45
  %v158 = vunpack.c.l.b16 %v46
  %v159 = vunpack.c.h.b16 %v46
  %v160 = vunpack.c.l.b16 %v47
  %v161 = vunpack.c.h.b16 %v47
  %v162 = vunpack.c.l.b16 %v48
  %v163 = vunpack.c.h.b16 %v48
  %v164 = vunpack.c.l.b16 %v49
  %v165 = vunpack.c.h.b16 %v49
  %v166 = vunpack.c.l.b16 %v50
  %v167 = vunpack.c.h.b16 %v50
  %v168 = vunpack.c.l.b16 %v51
  %v169 = vunpack.c.h.b16 %v51
  %v170 = vpack.c.b16 %v110, %v106
  %v171 = vpack.c.b16 %v111, %v107
  %v172 = vpack.c.b16 %v112, %v108
  %v173 = vpack.c.b16 %v113, %v109
  %v174 = vpack.c.b16 %v118, %v114
  %v175 = vpack.c.b16 %v119, %v115
  %v176 = vpack.c.b16 %v120, %v116
  %v177 = vpack.c.b16 %v121, %v117
  %v178 = vpack.c.b16 %v126, %v122
  %v179 = vpack.c.b16 %v127, %v123
  %v180 = vpack.c.b16 %v128, %v124
  %v181 = vpack.c.b16 %v129, %v125
  %v182 = vpack.c.b16 %v134, %v130
  %v183 = vpack.c.b16 %v135, %v131
  %v184 = vpack.c.b16 %v136, %v132
  %v185 = vpack.c.b16 %v137, %v133
  %v186 = vpack.c.b16 %v142, %v138
  %v187 = vpack.c.b16 %v143, %v139
  %v188 = vpack.c.b16 %v144, %v140
  %v189 = vpack.c.b16 %v145, %v141
  %v190 = vpack.c.b16 %v150, %v146
  %v191 = vpack.c.b16 %v151, %v147
  %v192 = vpack.c.b16 %v152, %v148
  %v193 = vpack.c.b16 %v153, %v149
  %v194 = vpack.c.b16 %v158, %v154
  %v195 = vpack.c.b16 %v159, %v155
  %v196 = vpack.c.b16 %v160, %v156
  %v197 = vpack.c.b16 %v161, %v157
  %v198 = vpack.c.b16 %v166, %v162
  %v199 = vpack.c.b16 %v167, %v163
  %v200 = vpack.c.b16 %v168, %v164
  %v201 = vpack.c.b16 %v169, %v165
  %234 = vmatprep.subr.bf16.mxu0 %v199
  %235 = vmatpush1.bf16.msra.mxu0 %v198
  %236 = vmatprep.subr.bf16.mxu0 %v195
  %237 = vmatpush1.bf16.msra.mxu0 %v194
  %238 = vmatprep.subr.bf16.mxu0 %v191
  %239 = vmatpush1.bf16.msra.mxu0 %v190
  %240 = vmatprep.subr.bf16.mxu0 %v187
  %241 = vmatpush1.bf16.msra.mxu0 %v186
  %242 = vmatprep.subr.bf16.mxu0 %v183
  %243 = vmatpush1.bf16.msra.mxu0 %v182
  %244 = vmatprep.subr.bf16.mxu0 %v179
  %245 = vmatpush1.bf16.msra.mxu0 %v178
  %246 = vmatprep.subr.bf16.mxu0 %v175
  %247 = vmatpush1.bf16.msra.mxu0 %v174
  %248 = vmatprep.subr.bf16.mxu0 %v171
  %249 = vmatpush1.bf16.msra.mxu0 %v170
  %250 = vmatprep.subr.bf16.mxu0 0
  %251 = vmatpush2.bf16.msra.mxu0 0
  %252 = vmatprep.subr.bf16.mxu0 0
  %253 = vmatpush2.bf16.msra.mxu0 0
  %254 = vmatprep.subr.bf16.mxu0 0
  %255 = vmatpush2.bf16.msra.mxu0 0
  %256 = vmatprep.subr.bf16.mxu0 0
  %257 = vmatpush2.bf16.msra.mxu0 0
  %258 = vmatprep.subr.bf16.mxu0 0
  %259 = vmatpush2.bf16.msra.mxu0 0
  %260 = vmatprep.subr.bf16.mxu0 0
  %261 = vmatpush2.bf16.msra.mxu0 0
  %262 = vmatprep.subr.bf16.mxu0 0
  %263 = vmatpush2.bf16.msra.mxu0 0
  %264 = vmatprep.subr.bf16.mxu0 0
  %265 = vmatpush2.bf16.msra.mxu0 0
  %266 = vmatprep.mubr.bf16.mxu0 0
  %267 = vmatmul.mubr.bf16.gmra.mxu0 %v19
  %v268 = vpop.f32.mrf.mxu0
  %v269 = vadd.f32 %v57, %v268
  %v270 = vpop.f32.mrf.mxu0
  %v271 = vadd.f32 %v61, %v270
  %v272 = vpop.f32.mrf.mxu0
  %v273 = vpop.f32.mrf.mxu0
  %274 = vdwg.mxu0
  %275 = vmatprep.subr.bf16.mxu0 %v201
  %276 = vmatpush1.bf16.msra.mxu0 %v200
  %277 = vmatprep.subr.bf16.mxu0 %v197
  %278 = vmatpush1.bf16.msra.mxu0 %v196
  %279 = vmatprep.subr.bf16.mxu0 %v193
  %280 = vmatpush1.bf16.msra.mxu0 %v192
  %281 = vmatprep.subr.bf16.mxu0 %v189
  %282 = vmatpush1.bf16.msra.mxu0 %v188
  %283 = vmatprep.subr.bf16.mxu0 %v185
  %284 = vmatpush1.bf16.msra.mxu0 %v184
  %285 = vmatprep.subr.bf16.mxu0 %v181
  %286 = vmatpush1.bf16.msra.mxu0 %v180
  %287 = vmatprep.subr.bf16.mxu0 %v177
  %288 = vmatpush1.bf16.msra.mxu0 %v176
  %289 = vmatprep.subr.bf16.mxu0 %v173
  %290 = vmatpush1.bf16.msra.mxu0 %v172
  %291 = vmatprep.subr.bf16.mxu0 0
  %292 = vmatpush2.bf16.msra.mxu0 0
  %293 = vmatprep.subr.bf16.mxu0 0
  %294 = vmatpush2.bf16.msra.mxu0 0
  %295 = vmatprep.subr.bf16.mxu0 0
  %296 = vmatpush2.bf16.msra.mxu0 0
  %297 = vmatprep.subr.bf16.mxu0 0
  %298 = vmatpush2.bf16.msra.mxu0 0
  %299 = vmatprep.subr.bf16.mxu0 0
  %300 = vmatpush2.bf16.msra.mxu0 0
  %301 = vmatprep.subr.bf16.mxu0 0
  %302 = vmatpush2.bf16.msra.mxu0 0
  %303 = vmatprep.subr.bf16.mxu0 0
  %304 = vmatpush2.bf16.msra.mxu0 0
  %305 = vmatprep.subr.bf16.mxu0 0
  %306 = vmatpush2.bf16.msra.mxu0 0
  %307 = vmatprep.mubr.bf16.mxu0 0
  %308 = vmatmul.mubr.bf16.gmra.mxu0 %v19
  %v309 = vpop.f32.mrf.mxu0
  %v310 = vadd.f32 %v65, %v309
  %v311 = vpop.f32.mrf.mxu0
  %v312 = vadd.f32 %v69, %v311
  %v313 = vpop.f32.mrf.mxu0
  %v314 = vpop.f32.mrf.mxu0
  %315 = vdwg.mxu0
  %v316 = vld [vmem:[%s3] sm:$0xff]
  %v317 = vld [vmem:[%s3 + $0x8] sm:$0xff]
  %v318 = vld [vmem:[%s3 + $0x10] sm:$0xff]
  %v319 = vld [vmem:[%s3 + $0x18] sm:$0xff]
  %v320 = vadd.f32 %v269, %v316
  %v321 = vadd.f32 %v271, %v317
  %v322 = vadd.f32 %v310, %v318
  %v323 = vadd.f32 %v312, %v319
  %v324 = vmax.f32 %v320, 0.0
  %v325 = vmax.f32 %v321, 0.0
  %v326 = vmax.f32 %v322, 0.0
  %v327 = vmax.f32 %v323, 0.0
  %328 = vst [vmem:[%s4] sm:$0xff] %v324
  %329 = vst [vmem:[%s4 + $0x8] sm:$0xff] %v325
  %330 = vst [vmem:[%s4 + $0x10] sm:$0xff] %v326
  %331 = vst [vmem:[%s4 + $0x18] sm:$0xff] %v327
  // Predicated region
  $region18: #{forward.102} parent=0 // pred_check
    _
  $region19: #{forward.102} parent=0 // pred_check_branch
    %333 = sbr.rel (0) target = $region21
  $region20: #{forward.102} parent=0 // pred_region
    _
  $region21: #{forward.102} parent=0 // pred_fallthru
    _
  // Predicated region
  $region22: #{forward.102} parent=0 // pred_check
    _
  $region23: #{forward.102} parent=0 // pred_check_branch
    %335 = sbr.rel (0) target = $region25
  $region24: #{forward.102} parent=0 // pred_region
    _
  $region25: #{forward.102} parent=0 // pred_fallthru
    _

// kernel: forward.103
$region0: #{forward.103}
  #allocation0 [shape = 'u32[]', space=smem, size = 0x4, offset = 0x4, fixed_abs, tag = 'smem constant byte address 0x4 - core index']
  #allocation1 [shape = 'u32[144,128]{1,0:T(1,128)}', space=vmem, size = 0x12000, scoped, tag = 'internal scratch']
  %s0 = inlined_call_operand.vmem [shape: f32[8,512], index: 0, kind: input, shape index: {}]
  %s1 = inlined_call_operand.vmem [shape: bf16[512,128], index: 1, kind: input, shape index: {}]
  %s2 = inlined_call_operand.vmem [shape: f32[1,128], index: 2, kind: input, shape index: {}]
  %s3 = inlined_call_operand.vmem [shape: f32[8,128], index: 3, kind: output, shape index: {}]
  %s4 = sld [smem:[#allocation0]]
  $region22: #{forward.103} parent=0
    _
  %s6 = ssub.s32 1, %s4
  %s7 = scalar_select 0, %s6, %s4
  // Predicated region
  $region2: #{forward.103} parent=0 // pred_check
    _
  $region3: #{forward.103} parent=0 // pred_check_branch
    %9 = sbr.rel (0) target = $region5
  $region4: #{forward.103} parent=0 // pred_region
    _
  $region5: #{forward.103} parent=0 // pred_fallthru
    _
  // Predicated region
  $region6: #{forward.103} parent=0 // pred_check
    _
  $region7: #{forward.103} parent=0 // pred_check_branch
    %11 = sbr.rel (0) target = $region9
  $region8: #{forward.103} parent=0 // pred_region
    _
  $region9: #{forward.103} parent=0 // pred_fallthru
    _
  // Predicated region
  $region10: #{forward.103} parent=0 // pred_check
    _
  $region11: #{forward.103} parent=0 // pred_check_branch
    %13 = sbr.rel (0) target = $region13
  $region12: #{forward.103} parent=0 // pred_region
    _
  $region13: #{forward.103} parent=0 // pred_fallthru
    _
  %v15 = vld [vmem:[%s0] sm:$0xff]
  %v16 = vld [vmem:[%s0 + $0x8] sm:$0xff]
  %v17 = vld [vmem:[%s0 + $0x10] sm:$0xff]
  %v18 = vld [vmem:[%s0 + $0x18] sm:$0xff]
  %v19 = vpack.c.bf16 %v15, %v15
  %v20 = vpack.c.bf16 %v16, %v16
  %v21 = vpack.c.bf16 %v17, %v17
  %v22 = vpack.c.bf16 %v18, %v18
  %v23 = vld [vmem:[%s1] sm:$0xf]
  %v24 = vld [vmem:[%s1 + $0x4] sm:$0xf]
  %v25 = vld [vmem:[%s1 + $0x8] sm:$0xf]
  %v26 = vld [vmem:[%s1 + $0xc] sm:$0xf]
  %v27 = vld [vmem:[%s1 + $0x10] sm:$0xf]
  %v28 = vld [vmem:[%s1 + $0x14] sm:$0xf]
  %v29 = vld [vmem:[%s1 + $0x18] sm:$0xf]
  %v30 = vld [vmem:[%s1 + $0x1c] sm:$0xf]
  %v31 = vld [vmem:[%s1 + $0x20] sm:$0xf]
  %v32 = vld [vmem:[%s1 + $0x24] sm:$0xf]
  %v33 = vld [vmem:[%s1 + $0x28] sm:$0xf]
  %v34 = vld [vmem:[%s1 + $0x2c] sm:$0xf]
  %v35 = vld [vmem:[%s1 + $0x30] sm:$0xf]
  %v36 = vld [vmem:[%s1 + $0x34] sm:$0xf]
  %v37 = vld [vmem:[%s1 + $0x38] sm:$0xf]
  %v38 = vld [vmem:[%s1 + $0x3c] sm:$0xf]
  %v39 = vld [vmem:[%s1 + $0x40] sm:$0xf]
  %v40 = vld [vmem:[%s1 + $0x44] sm:$0xf]
  %v41 = vld [vmem:[%s1 + $0x48] sm:$0xf]
  %v42 = vld [vmem:[%s1 + $0x4c] sm:$0xf]
  %v43 = vld [vmem:[%s1 + $0x50] sm:$0xf]
  %v44 = vld [vmem:[%s1 + $0x54] sm:$0xf]
  %v45 = vld [vmem:[%s1 + $0x58] sm:$0xf]
  %v46 = vld [vmem:[%s1 + $0x5c] sm:$0xf]
  %v47 = vld [vmem:[%s1 + $0x60] sm:$0xf]
  %v48 = vld [vmem:[%s1 + $0x64] sm:$0xf]
  %v49 = vld [vmem:[%s1 + $0x68] sm:$0xf]
  %v50 = vld [vmem:[%s1 + $0x6c] sm:$0xf]
  %v51 = vld [vmem:[%s1 + $0x70] sm:$0xf]
  %v52 = vld [vmem:[%s1 + $0x74] sm:$0xf]
  %v53 = vld [vmem:[%s1 + $0x78] sm:$0xf]
  %v54 = vld [vmem:[%s1 + $0x7c] sm:$0xf]
  %v55 = vld [vmem:[%s1 + $0x80] sm:$0xf]
  %v56 = vld [vmem:[%s1 + $0x84] sm:$0xf]
  %v57 = vld [vmem:[%s1 + $0x88] sm:$0xf]
  %v58 = vld [vmem:[%s1 + $0x8c] sm:$0xf]
  %v59 = vld [vmem:[%s1 + $0x90] sm:$0xf]
  %v60 = vld [vmem:[%s1 + $0x94] sm:$0xf]
  %v61 = vld [vmem:[%s1 + $0x98] sm:$0xf]
  %v62 = vld [vmem:[%s1 + $0x9c] sm:$0xf]
  %v63 = vld [vmem:[%s1 + $0xa0] sm:$0xf]
  %v64 = vld [vmem:[%s1 + $0xa4] sm:$0xf]
  %v65 = vld [vmem:[%s1 + $0xa8] sm:$0xf]
  %v66 = vld [vmem:[%s1 + $0xac] sm:$0xf]
  %v67 = vld [vmem:[%s1 + $0xb0] sm:$0xf]
  %v68 = vld [vmem:[%s1 + $0xb4] sm:$0xf]
  %v69 = vld [vmem:[%s1 + $0xb8] sm:$0xf]
  %v70 = vld [vmem:[%s1 + $0xbc] sm:$0xf]
  %v71 = vld [vmem:[%s1 + $0xc0] sm:$0xf]
  %v72 = vld [vmem:[%s1 + $0xc4] sm:$0xf]
  %v73 = vld [vmem:[%s1 + $0xc8] sm:$0xf]
  %v74 = vld [vmem:[%s1 + $0xcc] sm:$0xf]
  %v75 = vld [vmem:[%s1 + $0xd0] sm:$0xf]
  %v76 = vld [vmem:[%s1 + $0xd4] sm:$0xf]
  %v77 = vld [vmem:[%s1 + $0xd8] sm:$0xf]
  %v78 = vld [vmem:[%s1 + $0xdc] sm:$0xf]
  %v79 = vld [vmem:[%s1 + $0xe0] sm:$0xf]
  %v80 = vld [vmem:[%s1 + $0xe4] sm:$0xf]
  %v81 = vld [vmem:[%s1 + $0xe8] sm:$0xf]
  %v82 = vld [vmem:[%s1 + $0xec] sm:$0xf]
  %v83 = vld [vmem:[%s1 + $0xf0] sm:$0xf]
  %v84 = vld [vmem:[%s1 + $0xf4] sm:$0xf]
  %v85 = vld [vmem:[%s1 + $0xf8] sm:$0xf]
  %v86 = vld [vmem:[%s1 + $0xfc] sm:$0xf]
  %v87 = vld [vmem:[%s2] sm:$0x1]
  %v89 = vlaneseq
  %v90 = vshrl.u32 %v89, 7
  %v91 = vsub.s32 0, %v90
  %v92 = vrot.slane %v87, %v91
  %v158 = vunpack.c.l.b16 %v23
  %v159 = vunpack.c.l.b16 %v24
  %v160 = vunpack.c.l.b16 %v25
  %v161 = vunpack.c.l.b16 %v26
  %v162 = vunpack.c.l.b16 %v27
  %v163 = vunpack.c.l.b16 %v28
  %v164 = vunpack.c.l.b16 %v29
  %v165 = vunpack.c.l.b16 %v30
  %v166 = vunpack.c.l.b16 %v31
  %v167 = vunpack.c.l.b16 %v32
  %v168 = vunpack.c.l.b16 %v33
  %v169 = vunpack.c.l.b16 %v34
  %v170 = vunpack.c.l.b16 %v35
  %v171 = vunpack.c.l.b16 %v36
  %v172 = vunpack.c.l.b16 %v37
  %v173 = vunpack.c.l.b16 %v38
  %v174 = vunpack.c.l.b16 %v39
  %v175 = vunpack.c.l.b16 %v40
  %v176 = vunpack.c.l.b16 %v41
  %v177 = vunpack.c.l.b16 %v42
  %v178 = vunpack.c.l.b16 %v43
  %v179 = vunpack.c.l.b16 %v44
  %v180 = vunpack.c.l.b16 %v45
  %v181 = vunpack.c.l.b16 %v46
  %v182 = vunpack.c.l.b16 %v47
  %v183 = vunpack.c.l.b16 %v48
  %v184 = vunpack.c.l.b16 %v49
  %v185 = vunpack.c.l.b16 %v50
  %v186 = vunpack.c.l.b16 %v51
  %v187 = vunpack.c.l.b16 %v52
  %v188 = vunpack.c.l.b16 %v53
  %v189 = vunpack.c.l.b16 %v54
  %v190 = vunpack.c.l.b16 %v55
  %v191 = vunpack.c.l.b16 %v56
  %v192 = vunpack.c.l.b16 %v57
  %v193 = vunpack.c.l.b16 %v58
  %v194 = vunpack.c.l.b16 %v59
  %v195 = vunpack.c.l.b16 %v60
  %v196 = vunpack.c.l.b16 %v61
  %v197 = vunpack.c.l.b16 %v62
  %v198 = vunpack.c.l.b16 %v63
  %v199 = vunpack.c.l.b16 %v64
  %v200 = vunpack.c.l.b16 %v65
  %v201 = vunpack.c.l.b16 %v66
  %v202 = vunpack.c.l.b16 %v67
  %v203 = vunpack.c.l.b16 %v68
  %v204 = vunpack.c.l.b16 %v69
  %v205 = vunpack.c.l.b16 %v70
  %v206 = vunpack.c.l.b16 %v71
  %v207 = vunpack.c.l.b16 %v72
  %v208 = vunpack.c.l.b16 %v73
  %v209 = vunpack.c.l.b16 %v74
  %v210 = vunpack.c.l.b16 %v75
  %v211 = vunpack.c.l.b16 %v76
  %v212 = vunpack.c.l.b16 %v77
  %v213 = vunpack.c.l.b16 %v78
  %v214 = vunpack.c.l.b16 %v79
  %v215 = vunpack.c.l.b16 %v80
  %v216 = vunpack.c.l.b16 %v81
  %v217 = vunpack.c.l.b16 %v82
  %v218 = vunpack.c.l.b16 %v83
  %v219 = vunpack.c.l.b16 %v84
  %v220 = vunpack.c.l.b16 %v85
  %v221 = vunpack.c.l.b16 %v86
  %v222 = vpack.c.b16 %v159, %v158
  %v223 = vpack.c.b16 %v161, %v160
  %v224 = vpack.c.b16 %v163, %v162
  %v225 = vpack.c.b16 %v165, %v164
  %v226 = vpack.c.b16 %v167, %v166
  %v227 = vpack.c.b16 %v169, %v168
  %v228 = vpack.c.b16 %v171, %v170
  %v229 = vpack.c.b16 %v173, %v172
  %v230 = vpack.c.b16 %v175, %v174
  %v231 = vpack.c.b16 %v177, %v176
  %v232 = vpack.c.b16 %v179, %v178
  %v233 = vpack.c.b16 %v181, %v180
  %v234 = vpack.c.b16 %v183, %v182
  %v235 = vpack.c.b16 %v185, %v184
  %v236 = vpack.c.b16 %v187, %v186
  %v237 = vpack.c.b16 %v189, %v188
  %v238 = vpack.c.b16 %v191, %v190
  %v239 = vpack.c.b16 %v193, %v192
  %v240 = vpack.c.b16 %v195, %v194
  %v241 = vpack.c.b16 %v197, %v196
  %v242 = vpack.c.b16 %v199, %v198
  %v243 = vpack.c.b16 %v201, %v200
  %v244 = vpack.c.b16 %v203, %v202
  %v245 = vpack.c.b16 %v205, %v204
  %v246 = vpack.c.b16 %v207, %v206
  %v247 = vpack.c.b16 %v209, %v208
  %v248 = vpack.c.b16 %v211, %v210
  %v249 = vpack.c.b16 %v213, %v212
  %v250 = vpack.c.b16 %v215, %v214
  %v251 = vpack.c.b16 %v217, %v216
  %v252 = vpack.c.b16 %v219, %v218
  %v253 = vpack.c.b16 %v221, %v220
  %286 = vmatprep.subr.bf16.mxu0 0
  %287 = vmatpush1.bf16.msra.mxu0 %v229
  %288 = vmatprep.subr.bf16.mxu0 0
  %289 = vmatpush1.bf16.msra.mxu0 %v228
  %290 = vmatprep.subr.bf16.mxu0 0
  %291 = vmatpush1.bf16.msra.mxu0 %v227
  %292 = vmatprep.subr.bf16.mxu0 0
  %293 = vmatpush1.bf16.msra.mxu0 %v226
  %294 = vmatprep.subr.bf16.mxu0 0
  %295 = vmatpush1.bf16.msra.mxu0 %v225
  %296 = vmatprep.subr.bf16.mxu0 0
  %297 = vmatpush1.bf16.msra.mxu0 %v224
  %298 = vmatprep.subr.bf16.mxu0 0
  %299 = vmatpush1.bf16.msra.mxu0 %v223
  %300 = vmatprep.subr.bf16.mxu0 0
  %301 = vmatpush1.bf16.msra.mxu0 %v222
  %302 = vmatprep.subr.bf16.mxu0 0
  %303 = vmatpush2.bf16.msra.mxu0 %v237
  %304 = vmatprep.subr.bf16.mxu0 0
  %305 = vmatpush2.bf16.msra.mxu0 %v236
  %306 = vmatprep.subr.bf16.mxu0 0
  %307 = vmatpush2.bf16.msra.mxu0 %v235
  %308 = vmatprep.subr.bf16.mxu0 0
  %309 = vmatpush2.bf16.msra.mxu0 %v234
  %310 = vmatprep.subr.bf16.mxu0 0
  %311 = vmatpush2.bf16.msra.mxu0 %v233
  %312 = vmatprep.subr.bf16.mxu0 0
  %313 = vmatpush2.bf16.msra.mxu0 %v232
  %314 = vmatprep.subr.bf16.mxu0 0
  %315 = vmatpush2.bf16.msra.mxu0 %v231
  %316 = vmatprep.subr.bf16.mxu0 0
  %317 = vmatpush2.bf16.msra.mxu0 %v230
  %318 = vmatprep.mubr.bf16.mxu0 %v20
  %319 = vmatmul.mubr.bf16.gmra.mxu0 %v19
  %v320 = vpop.f32.mrf.mxu0
  %v321 = vadd.f32 %v92, %v320
  %v322 = vpop.f32.mrf.mxu0
  %v323 = vpop.f32.mrf.mxu0
  %v324 = vpop.f32.mrf.mxu0
  %325 = vdwg.mxu0
  %326 = vmatprep.subr.bf16.mxu0 0
  %327 = vmatpush1.bf16.msra.mxu0 %v245
  %328 = vmatprep.subr.bf16.mxu0 0
  %329 = vmatpush1.bf16.msra.mxu0 %v244
  %330 = vmatprep.subr.bf16.mxu0 0
  %331 = vmatpush1.bf16.msra.mxu0 %v243
  %332 = vmatprep.subr.bf16.mxu0 0
  %333 = vmatpush1.bf16.msra.mxu0 %v242
  %334 = vmatprep.subr.bf16.mxu0 0
  %335 = vmatpush1.bf16.msra.mxu0 %v241
  %336 = vmatprep.subr.bf16.mxu0 0
  %337 = vmatpush1.bf16.msra.mxu0 %v240
  %338 = vmatprep.subr.bf16.mxu0 0
  %339 = vmatpush1.bf16.msra.mxu0 %v239
  %340 = vmatprep.subr.bf16.mxu0 0
  %341 = vmatpush1.bf16.msra.mxu0 %v238
  %342 = vmatprep.subr.bf16.mxu0 0
  %343 = vmatpush2.bf16.msra.mxu0 %v253
  %344 = vmatprep.subr.bf16.mxu0 0
  %345 = vmatpush2.bf16.msra.mxu0 %v252
  %346 = vmatprep.subr.bf16.mxu0 0
  %347 = vmatpush2.bf16.msra.mxu0 %v251
  %348 = vmatprep.subr.bf16.mxu0 0
  %349 = vmatpush2.bf16.msra.mxu0 %v250
  %350 = vmatprep.subr.bf16.mxu0 0
  %351 = vmatpush2.bf16.msra.mxu0 %v249
  %352 = vmatprep.subr.bf16.mxu0 0
  %353 = vmatpush2.bf16.msra.mxu0 %v248
  %354 = vmatprep.subr.bf16.mxu0 0
  %355 = vmatpush2.bf16.msra.mxu0 %v247
  %356 = vmatprep.subr.bf16.mxu0 0
  %357 = vmatpush2.bf16.msra.mxu0 %v246
  %358 = vmatprep.mubr.bf16.mxu0 %v22
  %359 = vmatmul.mubr.bf16.gmra.mxu0 %v21
  %v360 = vpop.f32.mrf.mxu0
  %v361 = vadd.f32 %v321, %v360
  %v362 = vpop.f32.mrf.mxu0
  %v363 = vpop.f32.mrf.mxu0
  %v364 = vpop.f32.mrf.mxu0
  %365 = vdwg.mxu0
  %v366 = vmax.f32 %v361, 0.0
  %367 = vst [vmem:[%s3] sm:$0xff] %v366
  // Predicated region
  $region14: #{forward.103} parent=0 // pred_check
    _
  $region15: #{forward.103} parent=0 // pred_check_branch
    %369 = sbr.rel (0) target = $region17
  $region16: #{forward.103} parent=0 // pred_region
    _
  $region17: #{forward.103} parent=0 // pred_fallthru
    _
  // Predicated region
  $region18: #{forward.103} parent=0 // pred_check
    _
  $region19: #{forward.103} parent=0 // pred_check_branch
    %371 = sbr.rel (0) target = $region21
  $region20: #{forward.103} parent=0 // pred_region
    _
  $region21: #{forward.103} parent=0 // pred_fallthru
    _

// kernel: forward.109
$region0: #{forward.109}
  #allocation0 [shape = 'u32[]', space=smem, size = 0x4, offset = 0x4, fixed_abs, tag = 'smem constant byte address 0x4 - core index']
  #allocation1 [shape = 'u32[144,128]{1,0:T(1,128)}', space=vmem, size = 0x12000, scoped, tag = 'internal scratch']
  %s0 = inlined_call_operand.vmem [shape: f32[2,4,512], index: 0, kind: input, shape index: {}]
  %s1 = inlined_call_operand.vmem [shape: f32[512,10], index: 1, kind: input, shape index: {}]
  %s2 = inlined_call_operand.vmem [shape: f32[1,10], index: 2, kind: input, shape index: {}]
  %s3 = inlined_call_operand.hbm [shape: f32[2,4,4], index: 3, kind: output, shape index: {0}]
  %s4 = inlined_call_operand.hbm [shape: f32[2,1,10], index: 4, kind: output, shape index: {1}]
  %5 = xla_tuple %s3, %s4
  %s6 = sld [smem:[#allocation0]]
  $region53: #{forward.109} parent=0
    _
  %s8 = ssub.s32 1, %s6
  %s9 = scalar_select 0, %s8, %s6
  $region1: #{forward.109} parent=0
    #allocation2 [shape = 'u8[4096]{0}', space=vmem, size = 0x1000, scoped, tag = 'output window, operand 0']
    #allocation3 [shape = 's32[2]{0}', space=sflag, size = 0x8, scoped, tag = 'scoped memory for forward.109']
    #allocation4 [shape = 'u8[1024]{0}', space=vmem, size = 0x400, scoped, tag = 'output window, operand 1']
    #allocation5 [shape = 's32[2]{0}', space=sflag, size = 0x8, scoped, tag = 'scoped memory for forward.109']
    %10 = vsyncpa [#allocation3], 0
    %s11 = scalar_lea.sflag [#allocation3], 1
    %12 = vsyncpa %s11, 0
    %13 = vsyncpa [#allocation5], 0
    %s14 = scalar_lea.sflag [#allocation5], 1
    %15 = vsyncpa %s14, 0
    loop: start=0, step=1, limit=4
    $region2: #{forward.109} parent=1 // loop_pre_header
      _
    $region3: #{forward.109} parent=1 // loop_header
      %s17 = sphi 0, %s21
      %p18 = scmp.ge.s32.totalorder %s17, 4
      %s27 = sphi 0, %s29
      %s30 = sphi 0, %s27
      %s31 = sphi 0, %s30
      %s47 = sphi 0, %s31
      %s51 = sphi 0, %s51
      %s53 = sphi 0, %s51
      %s54 = sphi 0, %s53
      %s68 = sphi 0, %s54
      %s72 = sphi 0, %s72
      %s74 = sphi 0, %s72
      %s75 = sphi 0, %s74
      %s89 = sphi 0, %s75
      %s95 = sphi 0, %s97
      %s98 = sphi 0, %s95
      %s99 = sphi 0, %s98
      %s115 = sphi 0, %s99
      %s121 = sphi 0, %s123
      %s124 = sphi 0, %s121
      %s125 = sphi 0, %s124
      %s141 = sphi 0, %s125
    $region4: #{forward.109} parent=1 // loop_header_branch
      %20 = sbr.rel (%p18) target = $region8
    $region5: #{forward.109} parent=1 // loop_body
      %s22 = ssub.s32 %s17, 1
      %s23 = ssub.s32 %s17, 2
      %s24 = sadd.s32 %s17, 1
      %s25 = ssub.s32 %s17, %s24
      %p26 = scmp.eq.s32.totalorder %s25, 0
      %s28 = sadd.s32 %s27, 1
      %s29 = scalar_select %p26, %s27, %s28
      %p32 = pneg %p26
      %p33 = scmp.eq.s32.totalorder %s17, 1
      %p34 = por %p32, %p33
      %p35 = scmp.ne.s32.totalorder %s27, %s30
      %p36 = scmp.eq.s32.totalorder %s17, 0
      %p37 = por %p35, %p36
      %p38 = scmp.ne.s32.totalorder %s27, %s30
      %p39 = scmp.eq.s32.totalorder %s22, 1
      %p40 = por %p38, %p39
      %p41 = scmp.ne.s32.totalorder %s30, %s31
      %p42 = scmp.eq.s32.totalorder %s22, 0
      %p43 = por %p41, %p42
      %p44 = scmp.ne.s32.totalorder %s30, %s31
      %p45 = scmp.eq.s32.totalorder %s23, 1
      %p46 = por %p44, %p45
      %p48 = scmp.ne.s32.totalorder %s31, %s47
      %p49 = scmp.eq.s32.totalorder %s23, 0
      %p50 = por %p48, %p49
      %s52 = sadd.s32 %s51, 1
      %p55 = scmp.eq.s32.totalorder %s17, 1
      %p56 = scmp.ne.s32.totalorder %s51, %s53
      %p57 = scmp.eq.s32.totalorder %s17, 0
      %p58 = por %p56, %p57
      %p59 = scmp.ne.s32.totalorder %s51, %s53
      %p60 = scmp.eq.s32.totalorder %s22, 1
      %p61 = por %p59, %p60
      %p62 = scmp.ne.s32.totalorder %s53, %s54
      %p63 = scmp.eq.s32.totalorder %s22, 0
      %p64 = por %p62, %p63
      %p65 = scmp.ne.s32.totalorder %s53, %s54
      %p66 = scmp.eq.s32.totalorder %s23, 1
      %p67 = por %p65, %p66
      %p69 = scmp.ne.s32.totalorder %s54, %s68
      %p70 = scmp.eq.s32.totalorder %s23, 0
      %p71 = por %p69, %p70
      %s73 = sadd.s32 %s72, 1
      %p76 = scmp.eq.s32.totalorder %s17, 1
      %p77 = scmp.ne.s32.totalorder %s72, %s74
      %p78 = scmp.eq.s32.totalorder %s17, 0
      %p79 = por %p77, %p78
      %p80 = scmp.ne.s32.totalorder %s72, %s74
      %p81 = scmp.eq.s32.totalorder %s22, 1
      %p82 = por %p80, %p81
      %p83 = scmp.ne.s32.totalorder %s74, %s75
      %p84 = scmp.eq.s32.totalorder %s22, 0
      %p85 = por %p83, %p84
      %p86 = scmp.ne.s32.totalorder %s74, %s75
      %p87 = scmp.eq.s32.totalorder %s23, 1
      %p88 = por %p86, %p87
      %p90 = scmp.ne.s32.totalorder %s75, %s89
      %p91 = scmp.eq.s32.totalorder %s23, 0
      %p92 = por %p90, %p91
      %s93 = ssub.s32 %s17, %s24
      %p94 = scmp.eq.s32.totalorder %s93, 0
      %s96 = sadd.s32 %s95, 1
      %s97 = scalar_select %p94, %s95, %s96
      %p100 = pneg %p94
      %p101 = scmp.eq.s32.totalorder %s17, 1
      %p102 = por %p100, %p101
      %p103 = scmp.ne.s32.totalorder %s95, %s98
      %p104 = scmp.eq.s32.totalorder %s17, 0
      %p105 = por %p103, %p104
      %p106 = scmp.ne.s32.totalorder %s95, %s98
      %p107 = scmp.eq.s32.totalorder %s22, 1
      %p108 = por %p106, %p107
      %p109 = scmp.ne.s32.totalorder %s98, %s99
      %p110 = scmp.eq.s32.totalorder %s22, 0
      %p111 = por %p109, %p110
      %p112 = scmp.ne.s32.totalorder %s98, %s99
      %p113 = scmp.eq.s32.totalorder %s23, 1
      %p114 = por %p112, %p113
      %p116 = scmp.ne.s32.totalorder %s99, %s115
      %p117 = scmp.eq.s32.totalorder %s23, 0
      %p118 = por %p116, %p117
      %s119 = ssub.s32 %s17, %s24
      %p120 = scmp.eq.s32.totalorder %s119, 0
      %s122 = sadd.s32 %s121, 1
      %s123 = scalar_select %p120, %s121, %s122
      %p126 = pneg %p120
      %p127 = scmp.eq.s32.totalorder %s17, 1
      %p128 = por %p126, %p127
      %p129 = scmp.ne.s32.totalorder %s121, %s124
      %p130 = scmp.eq.s32.totalorder %s17, 0
      %p131 = por %p129, %p130
      %p132 = scmp.ne.s32.totalorder %s121, %s124
      %p133 = scmp.eq.s32.totalorder %s22, 1
      %p134 = por %p132, %p133
      %p135 = scmp.ne.s32.totalorder %s124, %s125
      %p136 = scmp.eq.s32.totalorder %s22, 0
      %p137 = por %p135, %p136
      %p138 = scmp.ne.s32.totalorder %s124, %s125
      %p139 = scmp.eq.s32.totalorder %s23, 1
      %p140 = por %p138, %p139
      %p142 = scmp.ne.s32.totalorder %s125, %s141
      %p143 = scmp.eq.s32.totalorder %s23, 0
      %p144 = por %p142, %p143
      %p145 = scmp.le.s32.totalorder 1, %s17
      %p146 = scmp.lt.s32.totalorder %s17, 3
      %p147 = pnand %p145, %p146
      %p148 = pneg %p147
      // Predicated region
      $region9: #{forward.109} parent=5 // pred_check
        _
      $region10: #{forward.109} parent=5 // pred_check_branch
        %150 = sbr.rel (%p147) target = $region12
      $region11: #{forward.109} parent=5 // pred_region
        %s151 = ssub.s32 %s17, 1
        // Predicated region
        $region13: #{forward.109} parent=11 // pred_check
          %p152 = pneg %p64
        $region14: #{forward.109} parent=11 // pred_check_branch
          %154 = sbr.rel (%p152) target = $region16
        $region15: #{forward.109} parent=11 // pred_region
          _
        $region16: #{forward.109} parent=11 // pred_fallthru
          _
        // Predicated region
        $region17: #{forward.109} parent=11 // pred_check
          %p155 = pneg %p85
        $region18: #{forward.109} parent=11 // pred_check_branch
          %157 = sbr.rel (%p155) target = $region20
        $region19: #{forward.109} parent=11 // pred_region
          _
        $region20: #{forward.109} parent=11 // pred_fallthru
          _
      $region12: #{forward.109} parent=5 // pred_fallthru
        _
      %p158 = scmp.lt.s32.totalorder %s17, 2
      // Predicated region
      $region21: #{forward.109} parent=5 // pred_check
        %p159 = pneg %p158
      $region22: #{forward.109} parent=5 // pred_check_branch
        %161 = sbr.rel (%p159) target = $region24
      $region23: #{forward.109} parent=5 // pred_region
        // Predicated region
        $region25: #{forward.109} parent=23 // pred_check
          %p162 = pneg %p37
        $region26: #{forward.109} parent=23 // pred_check_branch
          %164 = sbr.rel (%p162) target = $region28
        $region27: #{forward.109} parent=23 // pred_region
          %p165 = scmp.lt.s32.totalorder %s17, 1
          %s166 = scalar_select %p165, %s17, 1
          %s167 = smul.addr %s166, 4
          %s168 = smul.addr %s167, 4
          %s169 = scalar_lea.vmem %s0, %s168
        $region28: #{forward.109} parent=23 // pred_fallthru
          _
      $region24: #{forward.109} parent=5 // pred_fallthru
        _
      %p170 = scmp.le.s32.totalorder 1, %s17
      %p171 = scmp.lt.s32.totalorder %s17, 3
      %p172 = pnand %p170, %p171
      %p173 = pneg %p172
      // Predicated region
      $region29: #{forward.109} parent=5 // pred_check
        _
      $region30: #{forward.109} parent=5 // pred_check_branch
        %175 = sbr.rel (%p172) target = $region32
      $region31: #{forward.109} parent=5 // pred_region
        %s176 = ssub.s32 %s17, 1
        %p177 = scmp.lt.s32.totalorder %s22, 1
        %s178 = scalar_select %p177, %s22, 1
        %s179 = smul.addr %s178, 4
        %s180 = smul.addr %s179, 4
        %s181 = scalar_lea.vmem %s0, %s180
        %p182 = pneg %p43
        %p183 = pneg %p40
        %p184 = pneg %p64
        %p185 = pneg %p61
        %p186 = pneg %p85
        %p187 = pneg %p82
        %p188 = pneg %p111
        %p189 = pneg %p108
        %s190 = sand.u32 %s98, 1
        %s191 = scalar_lea.sflag [#allocation3], %s190
        %s192 = sand.u32 %s98, 1
        %s193 = smul.addr %s192, 4
        %s194 = scalar_lea.vmem [#allocation2], %s193
        %p195 = pneg %p137
        %p196 = pneg %p134
        %s197 = sand.u32 %s124, 1
        %s198 = scalar_lea.sflag [#allocation5], %s197
        %s199 = sand.u32 %s124, 1
        %s200 = scalar_lea.vmem [#allocation4], %s199
        %p201 = scmp.lt.s32.totalorder %s22, 1
        %s202 = scalar_select %p201, %s22, 1
        %s203 = smul.addr %s202, 4
        %s204 = smul.addr %s203, 4
        %s205 = scalar_lea.vmem %s0, %s204
        %v206 = vld [vmem:[%s205] sm:$0xff]
        %v207 = vld [vmem:[%s205 + $0x8] sm:$0xff]
        %v208 = vmul.f32 %v206, %v206
        %v209 = vmul.f32 %v207, %v207
        %v212 = vcombine.high %v208, %v208
        %v213 = vcombine.high %v209, %v209
        %vm216 = vcmask 1043456
        %v217 = vsel %vm216, %v208, 0.0
        %v218 = vrot.slane %v217, 4
        %v219 = vadd.f32 %v217, %v218
        %v220 = vrot.slane %v219, 2
        %v221 = vadd.f32 %v219, %v220
        %v222 = vrot.slane %v221, 1
        %v223 = vadd.f32 %v221, %v222
        %v224 = vsel %vm216, %v212, 0.0
        %v225 = vrot.slane %v224, 4
        %v226 = vadd.f32 %v224, %v225
        %v227 = vrot.slane %v226, 2
        %v228 = vadd.f32 %v226, %v227
        %v229 = vrot.slane %v228, 1
        %v230 = vadd.f32 %v228, %v229
        %v231 = vsel %vm216, %v209, 0.0
        %v232 = vrot.slane %v231, 4
        %v233 = vadd.f32 %v231, %v232
        %v234 = vrot.slane %v233, 2
        %v235 = vadd.f32 %v233, %v234
        %v236 = vrot.slane %v235, 1
        %v237 = vadd.f32 %v235, %v236
        %v238 = vsel %vm216, %v213, 0.0
        %v239 = vrot.slane %v238, 4
        %v240 = vadd.f32 %v238, %v239
        %v241 = vrot.slane %v240, 2
        %v242 = vadd.f32 %v240, %v241
        %v243 = vrot.slane %v242, 1
        %v244 = vadd.f32 %v242, %v243
        %v245 = vrsqrt.pop %v223
        %v246 = vmul.f32 %v223, %v245
        %vm247 = vcmp.eq.f32.partialorder %v223, inf
        %v248 = vsel %vm247, %v223, %v246
        %vm249 = vcmp.eq.f32.partialorder %v223, 0.0
        %v250 = vand.u32 %v223, 2147483648
        %v251 = vsel %vm249, %v250, %v248
        %v252 = vrsqrt.pop %v230
        %v253 = vmul.f32 %v230, %v252
        %vm254 = vcmp.eq.f32.partialorder %v230, inf
        %v255 = vsel %vm254, %v230, %v253
        %vm256 = vcmp.eq.f32.partialorder %v230, 0.0
        %v257 = vand.u32 %v230, 2147483648
        %v258 = vsel %vm256, %v257, %v255
        %v259 = vrsqrt.pop %v237
        %v260 = vmul.f32 %v237, %v259
        %vm261 = vcmp.eq.f32.partialorder %v237, inf
        %v262 = vsel %vm261, %v237, %v260
        %vm263 = vcmp.eq.f32.partialorder %v237, 0.0
        %v264 = vand.u32 %v237, 2147483648
        %v265 = vsel %vm263, %v264, %v262
        %v266 = vrsqrt.pop %v244
        %v267 = vmul.f32 %v244, %v266
        %vm268 = vcmp.eq.f32.partialorder %v244, inf
        %v269 = vsel %vm268, %v244, %v267
        %vm270 = vcmp.eq.f32.partialorder %v244, 0.0
        %v271 = vand.u32 %v244, 2147483648
        %v272 = vsel %vm270, %v271, %v269
        %v273 = vmax.f32 %v251, 1e-08
        %v274 = vmax.f32 %v258, 1e-08
        %v275 = vmax.f32 %v265, 1e-08
        %v276 = vmax.f32 %v272, 1e-08
        %v281 = vcombine.low %v273, %v274
        %v282 = vcombine.low %v275, %v276
        %v285 = vrcp.pop %v281
        %v286 = vmul.f32 %v206, %v285
        %v287 = vrcp.pop %v282
        %v288 = vmul.f32 %v207, %v287
        %v291 = vcombine.high %v286, %v286
        %v292 = vcombine.high %v288, %v288
        %295 = vmatprep.subr.mxu0 0.0
        %296 = vmatpush1.xpose.msra.mxu0 0.0
        %297 = vmatprep.subr.mxu0 0.0
        %298 = vmatpush1.xpose.msra.mxu0 0.0
        %299 = vmatprep.subr.mxu0 0.0
        %300 = vmatpush1.xpose.msra.mxu0 0.0
        %301 = vmatprep.subr.mxu0 0.0
        %302 = vmatpush1.xpose.msra.mxu0 0.0
        %303 = vmatprep.subr.mxu0 0.0
        %304 = vmatpush1.xpose.msra.mxu0 0.0
        %305 = vmatprep.subr.mxu0 0.0
        %306 = vmatpush1.xpose.msra.mxu0 0.0
        %307 = vmatprep.subr.mxu0 0.0
        %308 = vmatpush1.xpose.msra.mxu0 0.0
        %309 = vmatprep.subr.mxu0 0.0
        %310 = vmatpush1.xpose.msra.mxu0 0.0
        %311 = vmatprep.subr.mxu0 0.0
        %312 = vmatpush1.xpose.msra.mxu0 0.0
        %313 = vmatprep.subr.mxu0 0.0
        %314 = vmatpush1.xpose.msra.mxu0 0.0
        %315 = vmatprep.subr.mxu0 0.0
        %316 = vmatpush1.xpose.msra.mxu0 0.0
        %317 = vmatprep.subr.mxu0 0.0
        %318 = vmatpush1.xpose.msra.mxu0 0.0
        %319 = vmatprep.subr.mxu0 0.0
        %320 = vmatpush1.xpose.msra.mxu0 0.0
        %321 = vmatprep.subr.mxu0 0.0
        %322 = vmatpush1.xpose.msra.mxu0 0.0
        %323 = vmatprep.subr.mxu0 0.0
        %324 = vmatpush1.xpose.msra.mxu0 0.0
        %325 = vmatprep.subr.mxu0 %v291
        %326 = vmatpush1.xpose.msra.mxu0 %v286
        %327 = vmatprep.subr.mxu0 0.0
        %328 = vmatpush2.xpose.msra.mxu0 0.0
        %329 = vmatprep.subr.mxu0 0.0
        %330 = vmatpush2.xpose.msra.mxu0 0.0
        %331 = vmatprep.subr.mxu0 0.0
        %332 = vmatpush2.xpose.msra.mxu0 0.0
        %333 = vmatprep.subr.mxu0 0.0
        %334 = vmatpush2.xpose.msra.mxu0 0.0
        %335 = vmatprep.subr.mxu0 0.0
        %336 = vmatpush2.xpose.msra.mxu0 0.0
        %337 = vmatprep.subr.mxu0 0.0
        %338 = vmatpush2.xpose.msra.mxu0 0.0
        %339 = vmatprep.subr.mxu0 0.0
        %340 = vmatpush2.xpose.msra.mxu0 0.0
        %341 = vmatprep.subr.mxu0 0.0
        %342 = vmatpush2.xpose.msra.mxu0 0.0
        %343 = vmatprep.subr.mxu0 0.0
        %344 = vmatpush2.xpose.msra.mxu0 0.0
        %345 = vmatprep.subr.mxu0 0.0
        %346 = vmatpush2.xpose.msra.mxu0 0.0
        %347 = vmatprep.subr.mxu0 0.0
        %348 = vmatpush2.xpose.msra.mxu0 0.0
        %349 = vmatprep.subr.mxu0 0.0
        %350 = vmatpush2.xpose.msra.mxu0 0.0
        %351 = vmatprep.subr.mxu0 0.0
        %352 = vmatpush2.xpose.msra.mxu0 0.0
        %353 = vmatprep.subr.mxu0 0.0
        %354 = vmatpush2.xpose.msra.mxu0 0.0
        %355 = vmatprep.subr.mxu0 0.0
        %356 = vmatpush2.xpose.msra.mxu0 0.0
        %357 = vmatprep.subr.mxu0 0.0
        %358 = vmatpush2.xpose.msra.mxu0 0.0
        %359 = vmatprep.mubr.f32.mxu0 %v291
        %360 = vmatmul.mubr.f32.gmra.mxu0 %v286
        %v361 = vpop.f32.mrf.mxu0
        %v362 = vadd.f32 0.0, %v361
        %v363 = vpop.f32.mrf.mxu0
        %364 = vdwg.mxu0
        %365 = vmatprep.subr.mxu0 0.0
        %366 = vmatpush1.xpose.msra.mxu0 0.0
        %367 = vmatprep.subr.mxu0 0.0
        %368 = vmatpush1.xpose.msra.mxu0 0.0
        %369 = vmatprep.subr.mxu0 0.0
        %370 = vmatpush1.xpose.msra.mxu0 0.0
        %371 = vmatprep.subr.mxu0 0.0
        %372 = vmatpush1.xpose.msra.mxu0 0.0
        %373 = vmatprep.subr.mxu0 0.0
        %374 = vmatpush1.xpose.msra.mxu0 0.0
        %375 = vmatprep.subr.mxu0 0.0
        %376 = vmatpush1.xpose.msra.mxu0 0.0
        %377 = vmatprep.subr.mxu0 0.0
        %378 = vmatpush1.xpose.msra.mxu0 0.0
        %379 = vmatprep.subr.mxu0 0.0
        %380 = vmatpush1.xpose.msra.mxu0 0.0
        %381 = vmatprep.subr.mxu0 0.0
        %382 = vmatpush1.xpose.msra.mxu0 0.0
        %383 = vmatprep.subr.mxu0 0.0
        %384 = vmatpush1.xpose.msra.mxu0 0.0
        %385 = vmatprep.subr.mxu0 0.0
        %386 = vmatpush1.xpose.msra.mxu0 0.0
        %387 = vmatprep.subr.mxu0 0.0
        %388 = vmatpush1.xpose.msra.mxu0 0.0
        %389 = vmatprep.subr.mxu0 0.0
        %390 = vmatpush1.xpose.msra.mxu0 0.0
        %391 = vmatprep.subr.mxu0 0.0
        %392 = vmatpush1.xpose.msra.mxu0 0.0
        %393 = vmatprep.subr.mxu0 0.0
        %394 = vmatpush1.xpose.msra.mxu0 0.0
        %395 = vmatprep.subr.mxu0 %v292
        %396 = vmatpush1.xpose.msra.mxu0 %v288
        %397 = vmatprep.subr.mxu0 0.0
        %398 = vmatpush2.xpose.msra.mxu0 0.0
        %399 = vmatprep.subr.mxu0 0.0
        %400 = vmatpush2.xpose.msra.mxu0 0.0
        %401 = vmatprep.subr.mxu0 0.0
        %402 = vmatpush2.xpose.msra.mxu0 0.0
        %403 = vmatprep.subr.mxu0 0.0
        %404 = vmatpush2.xpose.msra.mxu0 0.0
        %405 = vmatprep.subr.mxu0 0.0
        %406 = vmatpush2.xpose.msra.mxu0 0.0
        %407 = vmatprep.subr.mxu0 0.0
        %408 = vmatpush2.xpose.msra.mxu0 0.0
        %409 = vmatprep.subr.mxu0 0.0
        %410 = vmatpush2.xpose.msra.mxu0 0.0
        %411 = vmatprep.subr.mxu0 0.0
        %412 = vmatpush2.xpose.msra.mxu0 0.0
        %413 = vmatprep.subr.mxu0 0.0
        %414 = vmatpush2.xpose.msra.mxu0 0.0
        %415 = vmatprep.subr.mxu0 0.0
        %416 = vmatpush2.xpose.msra.mxu0 0.0
        %417 = vmatprep.subr.mxu0 0.0
        %418 = vmatpush2.xpose.msra.mxu0 0.0
        %419 = vmatprep.subr.mxu0 0.0
        %420 = vmatpush2.xpose.msra.mxu0 0.0
        %421 = vmatprep.subr.mxu0 0.0
        %422 = vmatpush2.xpose.msra.mxu0 0.0
        %423 = vmatprep.subr.mxu0 0.0
        %424 = vmatpush2.xpose.msra.mxu0 0.0
        %425 = vmatprep.subr.mxu0 0.0
        %426 = vmatpush2.xpose.msra.mxu0 0.0
        %427 = vmatprep.subr.mxu0 0.0
        %428 = vmatpush2.xpose.msra.mxu0 0.0
        %429 = vmatprep.mubr.f32.mxu0 %v292
        %430 = vmatmul.mubr.f32.gmra.mxu0 %v288
        %v431 = vpop.f32.mrf.mxu0
        %v432 = vadd.f32 %v362, %v431
        %v433 = vpop.f32.mrf.mxu0
        %434 = vdwg.mxu0
        %vm435 = vcmask 27648
        %436 = vst.msk [vmem:[%s194] sm:$0xf] %vm435, %v432
        %v439 = vcombine.high %v206, %v206
        %v440 = vcombine.high %v207, %v207
        %v443 = vsel %vm216, %v206, 0.0
        %v444 = vrot.slane %v443, 4
        %v445 = vadd.f32 %v443, %v444
        %v446 = vrot.slane %v445, 2
        %v447 = vadd.f32 %v445, %v446
        %v448 = vrot.slane %v447, 1
        %v449 = vadd.f32 %v447, %v448
        %v450 = vsel %vm216, %v439, 0.0
        %v451 = vrot.slane %v450, 4
        %v452 = vadd.f32 %v450, %v451
        %v453 = vrot.slane %v452, 2
        %v454 = vadd.f32 %v452, %v453
        %v455 = vrot.slane %v454, 1
        %v456 = vadd.f32 %v454, %v455
        %v457 = vsel %vm216, %v207, 0.0
        %v458 = vrot.slane %v457, 4
        %v459 = vadd.f32 %v457, %v458
        %v460 = vrot.slane %v459, 2
        %v461 = vadd.f32 %v459, %v460
        %v462 = vrot.slane %v461, 1
        %v463 = vadd.f32 %v461, %v462
        %v464 = vsel %vm216, %v440, 0.0
        %v465 = vrot.slane %v464, 4
        %v466 = vadd.f32 %v464, %v465
        %v467 = vrot.slane %v466, 2
        %v468 = vadd.f32 %v466, %v467
        %v469 = vrot.slane %v468, 1
        %v470 = vadd.f32 %v468, %v469
        %v471 = vrcp.pop 4.0
        %v472 = vmul.f32 %v449, %v471
        %v473 = vmul.f32 %v456, %v471
        %v474 = vmul.f32 %v463, %v471
        %v475 = vmul.f32 %v470, %v471
        %v476 = vld [vmem:[%s1] sm:$0xff]
        %v477 = vld [vmem:[%s1 + $0x8] sm:$0xff]
        %v478 = vld [vmem:[%s1 + $0x10] sm:$0xff]
        %v479 = vld [vmem:[%s1 + $0x18] sm:$0xff]
        %v480 = vld [vmem:[%s1 + $0x20] sm:$0xff]
        %v481 = vld [vmem:[%s1 + $0x28] sm:$0xff]
        %v482 = vld [vmem:[%s1 + $0x30] sm:$0xff]
        %v483 = vld [vmem:[%s1 + $0x38] sm:$0xff]
        %v484 = vld [vmem:[%s1 + $0x40] sm:$0xff]
        %v485 = vld [vmem:[%s1 + $0x48] sm:$0xff]
        %v486 = vld [vmem:[%s1 + $0x50] sm:$0xff]
        %v487 = vld [vmem:[%s1 + $0x58] sm:$0xff]
        %v488 = vld [vmem:[%s1 + $0x60] sm:$0xff]
        %v489 = vld [vmem:[%s1 + $0x68] sm:$0xff]
        %v490 = vld [vmem:[%s1 + $0x70] sm:$0xff]
        %v491 = vld [vmem:[%s1 + $0x78] sm:$0xff]
        %v492 = vld [vmem:[%s1 + $0x80] sm:$0xff]
        %v493 = vld [vmem:[%s1 + $0x88] sm:$0xff]
        %v494 = vld [vmem:[%s1 + $0x90] sm:$0xff]
        %v495 = vld [vmem:[%s1 + $0x98] sm:$0xff]
        %v496 = vld [vmem:[%s1 + $0xa0] sm:$0xff]
        %v497 = vld [vmem:[%s1 + $0xa8] sm:$0xff]
        %v498 = vld [vmem:[%s1 + $0xb0] sm:$0xff]
        %v499 = vld [vmem:[%s1 + $0xb8] sm:$0xff]
        %v500 = vld [vmem:[%s1 + $0xc0] sm:$0xff]
        %v501 = vld [vmem:[%s1 + $0xc8] sm:$0xff]
        %v502 = vld [vmem:[%s1 + $0xd0] sm:$0xff]
        %v503 = vld [vmem:[%s1 + $0xd8] sm:$0xff]
        %v504 = vld [vmem:[%s1 + $0xe0] sm:$0xff]
        %v505 = vld [vmem:[%s1 + $0xe8] sm:$0xff]
        %v506 = vld [vmem:[%s1 + $0xf0] sm:$0xff]
        %v507 = vld [vmem:[%s1 + $0xf8] sm:$0xff]
        %v508 = vld [vmem:[%s1 + $0x100] sm:$0xff]
        %v509 = vld [vmem:[%s1 + $0x108] sm:$0xff]
        %v510 = vld [vmem:[%s1 + $0x110] sm:$0xff]
        %v511 = vld [vmem:[%s1 + $0x118] sm:$0xff]
        %v512 = vld [vmem:[%s1 + $0x120] sm:$0xff]
        %v513 = vld [vmem:[%s1 + $0x128] sm:$0xff]
        %v514 = vld [vmem:[%s1 + $0x130] sm:$0xff]
        %v515 = vld [vmem:[%s1 + $0x138] sm:$0xff]
        %v516 = vld [vmem:[%s1 + $0x140] sm:$0xff]
        %v517 = vld [vmem:[%s1 + $0x148] sm:$0xff]
        %v518 = vld [vmem:[%s1 + $0x150] sm:$0xff]
        %v519 = vld [vmem:[%s1 + $0x158] sm:$0xff]
        %v520 = vld [vmem:[%s1 + $0x160] sm:$0xff]
        %v521 = vld [vmem:[%s1 + $0x168] sm:$0xff]
        %v522 = vld [vmem:[%s1 + $0x170] sm:$0xff]
        %v523 = vld [vmem:[%s1 + $0x178] sm:$0xff]
        %v524 = vld [vmem:[%s1 + $0x180] sm:$0xff]
        %v525 = vld [vmem:[%s1 + $0x188] sm:$0xff]
        %v526 = vld [vmem:[%s1 + $0x190] sm:$0xff]
        %v527 = vld [vmem:[%s1 + $0x198] sm:$0xff]
        %v528 = vld [vmem:[%s1 + $0x1a0] sm:$0xff]
        %v529 = vld [vmem:[%s1 + $0x1a8] sm:$0xff]
        %v530 = vld [vmem:[%s1 + $0x1b0] sm:$0xff]
        %v531 = vld [vmem:[%s1 + $0x1b8] sm:$0xff]
        %v532 = vld [vmem:[%s1 + $0x1c0] sm:$0xff]
        %v533 = vld [vmem:[%s1 + $0x1c8] sm:$0xff]
        %v534 = vld [vmem:[%s1 + $0x1d0] sm:$0xff]
        %v535 = vld [vmem:[%s1 + $0x1d8] sm:$0xff]
        %v536 = vld [vmem:[%s1 + $0x1e0] sm:$0xff]
        %v537 = vld [vmem:[%s1 + $0x1e8] sm:$0xff]
        %v538 = vld [vmem:[%s1 + $0x1f0] sm:$0xff]
        %v539 = vld [vmem:[%s1 + $0x1f8] sm:$0xff]
        %v540 = vld [vmem:[%s2] sm:$0x1]
        %541 = vmatprep.subr.mxu0 0.0
        %542 = vmatpush1.msra.mxu0 %v491
        %543 = vmatprep.subr.mxu0 0.0
        %544 = vmatpush1.msra.mxu0 %v490
        %545 = vmatprep.subr.mxu0 0.0
        %546 = vmatpush1.msra.mxu0 %v489
        %547 = vmatprep.subr.mxu0 0.0
        %548 = vmatpush1.msra.mxu0 %v488
        %549 = vmatprep.subr.mxu0 0.0
        %550 = vmatpush1.msra.mxu0 %v487
        %551 = vmatprep.subr.mxu0 0.0
        %552 = vmatpush1.msra.mxu0 %v486
        %553 = vmatprep.subr.mxu0 0.0
        %554 = vmatpush1.msra.mxu0 %v485
        %555 = vmatprep.subr.mxu0 0.0
        %556 = vmatpush1.msra.mxu0 %v484
        %557 = vmatprep.subr.mxu0 0.0
        %558 = vmatpush1.msra.mxu0 %v483
        %559 = vmatprep.subr.mxu0 0.0
        %560 = vmatpush1.msra.mxu0 %v482
        %561 = vmatprep.subr.mxu0 0.0
        %562 = vmatpush1.msra.mxu0 %v481
        %563 = vmatprep.subr.mxu0 0.0
        %564 = vmatpush1.msra.mxu0 %v480
        %565 = vmatprep.subr.mxu0 0.0
        %566 = vmatpush1.msra.mxu0 %v479
        %567 = vmatprep.subr.mxu0 0.0
        %568 = vmatpush1.msra.mxu0 %v478
        %569 = vmatprep.subr.mxu0 0.0
        %570 = vmatpush1.msra.mxu0 %v477
        %571 = vmatprep.subr.mxu0 0.0
        %572 = vmatpush1.msra.mxu0 %v476
        %573 = vmatprep.subr.mxu0 0.0
        %574 = vmatpush2.msra.mxu0 %v507
        %575 = vmatprep.subr.mxu0 0.0
        %576 = vmatpush2.msra.mxu0 %v506
        %577 = vmatprep.subr.mxu0 0.0
        %578 = vmatpush2.msra.mxu0 %v505
        %579 = vmatprep.subr.mxu0 0.0
        %580 = vmatpush2.msra.mxu0 %v504
        %581 = vmatprep.subr.mxu0 0.0
        %582 = vmatpush2.msra.mxu0 %v503
        %583 = vmatprep.subr.mxu0 0.0
        %584 = vmatpush2.msra.mxu0 %v502
        %585 = vmatprep.subr.mxu0 0.0
        %586 = vmatpush2.msra.mxu0 %v501
        %587 = vmatprep.subr.mxu0 0.0
        %588 = vmatpush2.msra.mxu0 %v500
        %589 = vmatprep.subr.mxu0 0.0
        %590 = vmatpush2.msra.mxu0 %v499
        %591 = vmatprep.subr.mxu0 0.0
        %592 = vmatpush2.msra.mxu0 %v498
        %593 = vmatprep.subr.mxu0 0.0
        %594 = vmatpush2.msra.mxu0 %v497
        %595 = vmatprep.subr.mxu0 0.0
        %596 = vmatpush2.msra.mxu0 %v496
        %597 = vmatprep.subr.mxu0 0.0
        %598 = vmatpush2.msra.mxu0 %v495
        %599 = vmatprep.subr.mxu0 0.0
        %600 = vmatpush2.msra.mxu0 %v494
        %601 = vmatprep.subr.mxu0 0.0
        %602 = vmatpush2.msra.mxu0 %v493
        %603 = vmatprep.subr.mxu0 0.0
        %604 = vmatpush2.msra.mxu0 %v492
        %605 = vmatprep.mubr.f32.mxu0 %v473
        %606 = vmatmul.mubr.f32.gmra.mxu0 %v472
        %v607 = vpop.f32.mrf.mxu0
        %v608 = vadd.f32 %v540, %v607
        %v609 = vpop.f32.mrf.mxu0
        %610 = vdwg.mxu0
        %611 = vmatprep.subr.mxu0 0.0
        %612 = vmatpush1.msra.mxu0 %v523
        %613 = vmatprep.subr.mxu0 0.0
        %614 = vmatpush1.msra.mxu0 %v522
        %615 = vmatprep.subr.mxu0 0.0
        %616 = vmatpush1.msra.mxu0 %v521
        %617 = vmatprep.subr.mxu0 0.0
        %618 = vmatpush1.msra.mxu0 %v520
        %619 = vmatprep.subr.mxu0 0.0
        %620 = vmatpush1.msra.mxu0 %v519
        %621 = vmatprep.subr.mxu0 0.0
        %622 = vmatpush1.msra.mxu0 %v518
        %623 = vmatprep.subr.mxu0 0.0
        %624 = vmatpush1.msra.mxu0 %v517
        %625 = vmatprep.subr.mxu0 0.0
        %626 = vmatpush1.msra.mxu0 %v516
        %627 = vmatprep.subr.mxu0 0.0
        %628 = vmatpush1.msra.mxu0 %v515
        %629 = vmatprep.subr.mxu0 0.0
        %630 = vmatpush1.msra.mxu0 %v514
        %631 = vmatprep.subr.mxu0 0.0
        %632 = vmatpush1.msra.mxu0 %v513
        %633 = vmatprep.subr.mxu0 0.0
        %634 = vmatpush1.msra.mxu0 %v512
        %635 = vmatprep.subr.mxu0 0.0
        %636 = vmatpush1.msra.mxu0 %v511
        %637 = vmatprep.subr.mxu0 0.0
        %638 = vmatpush1.msra.mxu0 %v510
        %639 = vmatprep.subr.mxu0 0.0
        %640 = vmatpush1.msra.mxu0 %v509
        %641 = vmatprep.subr.mxu0 0.0
        %642 = vmatpush1.msra.mxu0 %v508
        %643 = vmatprep.subr.mxu0 0.0
        %644 = vmatpush2.msra.mxu0 %v539
        %645 = vmatprep.subr.mxu0 0.0
        %646 = vmatpush2.msra.mxu0 %v538
        %647 = vmatprep.subr.mxu0 0.0
        %648 = vmatpush2.msra.mxu0 %v537
        %649 = vmatprep.subr.mxu0 0.0
        %650 = vmatpush2.msra.mxu0 %v536
        %651 = vmatprep.subr.mxu0 0.0
        %652 = vmatpush2.msra.mxu0 %v535
        %653 = vmatprep.subr.mxu0 0.0
        %654 = vmatpush2.msra.mxu0 %v534
        %655 = vmatprep.subr.mxu0 0.0
        %656 = vmatpush2.msra.mxu0 %v533
        %657 = vmatprep.subr.mxu0 0.0
        %658 = vmatpush2.msra.mxu0 %v532
        %659 = vmatprep.subr.mxu0 0.0
        %660 = vmatpush2.msra.mxu0 %v531
        %661 = vmatprep.subr.mxu0 0.0
        %662 = vmatpush2.msra.mxu0 %v530
        %663 = vmatprep.subr.mxu0 0.0
        %664 = vmatpush2.msra.mxu0 %v529
        %665 = vmatprep.subr.mxu0 0.0
        %666 = vmatpush2.msra.mxu0 %v528
        %667 = vmatprep.subr.mxu0 0.0
        %668 = vmatpush2.msra.mxu0 %v527
        %669 = vmatprep.subr.mxu0 0.0
        %670 = vmatpush2.msra.mxu0 %v526
        %671 = vmatprep.subr.mxu0 0.0
        %672 = vmatpush2.msra.mxu0 %v525
        %673 = vmatprep.subr.mxu0 0.0
        %674 = vmatpush2.msra.mxu0 %v524
        %675 = vmatprep.mubr.f32.mxu0 %v475
        %676 = vmatmul.mubr.f32.gmra.mxu0 %v474
        %v677 = vpop.f32.mrf.mxu0
        %v678 = vadd.f32 %v608, %v677
        %v679 = vpop.f32.mrf.mxu0
        %680 = vdwg.mxu0
        %vm681 = vcmask 73728
        %682 = vst.msk [vmem:[%s200] sm:$0x1] %vm681, %v678
        %s683 = sand.u32 %s98, 1
        %s684 = scalar_lea.sflag [#allocation3], %s683
        %s685 = sand.u32 %s98, 1
        %s686 = smul.addr %s685, 4
        %s687 = scalar_lea.vmem [#allocation2], %s686
        %s688 = sand.u32 %s124, 1
        %s689 = scalar_lea.sflag [#allocation5], %s688
        %s690 = sand.u32 %s124, 1
        %s691 = scalar_lea.vmem [#allocation4], %s690
        // Predicated region
        $region33: #{forward.109} parent=31 // pred_check
          %p692 = pneg %p108
        $region34: #{forward.109} parent=31 // pred_check_branch
          %694 = sbr.rel (%p692) target = $region36
        $region35: #{forward.109} parent=31 // pred_region
          %s696 = ssub.s32 64, 64
          %697 = vsyncadd %s684, %s696
          %s698 = smul.addr %s22, 64
          %s699 = scalar_lea.hbm %s3, %s698
          %s701 = sshll.u32 %s687, 4
          %s702 = int_to_ptr.vmem [resolvable:$true] %s701
          %704 = dma.vmem_to_hbm [thread:$0]  %s702, 64, %s699, %s684
        $region36: #{forward.109} parent=31 // pred_fallthru
          _
        // Predicated region
        $region37: #{forward.109} parent=31 // pred_check
          %p705 = pneg %p134
        $region38: #{forward.109} parent=31 // pred_check_branch
          %707 = sbr.rel (%p705) target = $region40
        $region39: #{forward.109} parent=31 // pred_region
          %s709 = ssub.s32 16, 16
          %710 = vsyncadd %s689, %s709
          %s711 = smul.addr %s22, 16
          %s712 = scalar_lea.hbm %s4, %s711
          %s714 = sshll.u32 %s691, 4
          %s715 = int_to_ptr.vmem [resolvable:$true] %s714
          %717 = dma.vmem_to_hbm [thread:$0]  %s715, 16, %s712, %s689
        $region40: #{forward.109} parent=31 // pred_fallthru
          _
      $region32: #{forward.109} parent=5 // pred_fallthru
        _
      %p718 = scmp.le.s32.totalorder 2, %s17
      // Predicated region
      $region41: #{forward.109} parent=5 // pred_check
        %p719 = pneg %p718
      $region42: #{forward.109} parent=5 // pred_check_branch
        %721 = sbr.rel (%p719) target = $region44
      $region43: #{forward.109} parent=5 // pred_region
        %s722 = ssub.s32 %s17, 2
        // Predicated region
        $region45: #{forward.109} parent=43 // pred_check
          %p723 = pneg %p114
        $region46: #{forward.109} parent=43 // pred_check_branch
          %725 = sbr.rel (%p723) target = $region48
        $region47: #{forward.109} parent=43 // pred_region
          %s726 = sand.u32 %s99, 1
          %s727 = scalar_lea.sflag [#allocation3], %s726
          %s728 = sand.u32 %s99, 1
          %s729 = smul.addr %s728, 4
          %s730 = scalar_lea.vmem [#allocation2], %s729
          %731 = dma.done %s727, 64
        $region48: #{forward.109} parent=43 // pred_fallthru
          _
        // Predicated region
        $region49: #{forward.109} parent=43 // pred_check
          %p732 = pneg %p140
        $region50: #{forward.109} parent=43 // pred_check_branch
          %734 = sbr.rel (%p732) target = $region52
        $region51: #{forward.109} parent=43 // pred_region
          %s735 = sand.u32 %s125, 1
          %s736 = scalar_lea.sflag [#allocation5], %s735
          %s737 = sand.u32 %s125, 1
          %s738 = scalar_lea.vmem [#allocation4], %s737
          %739 = dma.done %s736, 16
        $region52: #{forward.109} parent=43 // pred_fallthru
          _
      $region44: #{forward.109} parent=5 // pred_fallthru
        _
    $region6: #{forward.109} parent=1 // loop_footer
      %s21 = sadd.s32 1, %s17
    $region7: #{forward.109} parent=1 // loop_footer_branch
      %16 = sbr.rel target = $region3
    $region8: #{forward.109} parent=1 // loop_exit
      _
    %740 = vsyncpa [#allocation3], 1
    %s741 = scalar_lea.sflag [#allocation3], 1
    %742 = vsyncpa %s741, 1
    %743 = vsyncpa [#allocation5], 1
    %s744 = scalar_lea.sflag [#allocation5], 1
    %745 = vsyncpa %s744, 1

</llo_original>
